<compile_context>
chip_gen: v6e
topology: v6e:2x2x1
jax: 0.10.0
libtpu: 0.0.40
codegen_flags: <defaults>
</compile_context>

<pallas_src>
import jax
import jax.numpy as jnp
from jax import lax
from jax.experimental import pallas as pl
from jax.experimental.pallas import tpu as pltpu


_VMEM_LIMIT_BYTES = 32 * 1024 * 1024


def _pick_row_tile(rows, candidates=(512, 256, 128)):
    """Largest candidate tile that still yields >= 2 grid steps (keeps both
    v7x TensorCores busy via the 'parallel' axis); tiny inputs -> one tile."""
    for t in candidates:
        if rows >= 2 * t:
            return t
    smallest = candidates[-1]
    if rows > smallest:
        return smallest
    return max(8, ((rows + 7) // 8) * 8)


# ----------------------------- Pallas kernels ------------------------------

def _conv1_kernel(p_ref, w_ref, b_ref, o_ref):
    # relu(p @ w + b): p (TR, Kp) bf16, w (Kp, 256) bf16, b (1, 256) f32.
    acc = jnp.dot(p_ref[...], w_ref[...], preferred_element_type=jnp.float32)
    o_ref[...] = jnp.maximum(acc + b_ref[...], 0.0).astype(o_ref.dtype)


def _primary_caps_kernel(p_ref, w_ref, b_ref, o_ref):
    # One row tile of the 8 grouped matmuls, fused into one lane-dense store.
    #   p: (G, TR, Kgp) bf16 per-group patches
    #   w: (Kgp, G*J)   bf16 lane-dense stacked weights (cols g*J:(g+1)*J = group g)
    #   b: (1, G*J)     f32
    #   o: (TR, G*J)    f32
    G = p_ref.shape[0]
    J = w_ref.shape[1] // G
    outs = []
    for g in range(G):                                    # static unroll (G=8)
        outs.append(jnp.dot(p_ref[g], w_ref[:, g * J:(g + 1) * J],
                            preferred_element_type=jnp.float32))
    o_ref[...] = jnp.concatenate(outs, axis=-1) + b_ref[...]


def _caps_head_kernel(x_ref, wt_ref, bt_ref, b_out_ref, v_out_ref):
    # Fused MyLinear + dynamic routing for a TILE of batch elements.
    #   x : (TB, M, N)     capsule features, N = num_size on lanes
    #   wt: (M, C*D, N)    MyLinear weight, pre-transposed, VMEM-resident
    #   bt: (C*D, N)       MyLinear bias
    # outputs: b (TB, T, C, N) lane-dense logits, v (TB, T, C, D).
    TB, M, N = x_ref.shape
    T, C, D = v_out_ref.shape[1:]

    # ---- MyLinear: u[tb, c*D+d, n] = bias + sum_m W[m, c*D+d, n] * x[tb, m, n]
    # M == 8 is far below the MXU contraction size -> VPU broadcast-FMAs.
    x = x_ref[...]
    u = bt_ref[...][None]                                 # (1, C*D, N)
    for m in range(M):                                    # static unroll (M=8)
        u = u + wt_ref[m][None] * x[:, m:m + 1, :]        # (TB, C*D, N)
    u4 = u.reshape(TB, C, D, N)

    # ---- dynamic routing, lane-dense (.., C, N) layout, exact divisions ----
    br = jnp.zeros((TB, C, N), jnp.float32)
    for t in range(T):                                    # static unroll (T small)
        mx = jnp.max(br, axis=-1, keepdims=True)
        e = jnp.exp(br - mx)
        cr = e / jnp.sum(e, axis=-1, keepdims=True)       # softmax over capsules
        sr = jnp.sum(cr[:, :, None, :] * u4, axis=-1)     # (TB, C, D)
        # squash: sr/||sr|| * ||sr||^2/(1+||sr||^2) = sr*||sr||/(1+||sr||^2)
        sn2 = jnp.sum(sr * sr, axis=-1, keepdims=True)    # (TB, C, 1)
        vr = sr * jnp.sqrt(sn2) / (1.0 + sn2)
        sm = jnp.sum(u4 * vr[:, :, :, None], axis=2)      # (TB, C, N) agreement
        br = br + sm
        b_out_ref[:, t, :, :] = br
        v_out_ref[:, t, :, :] = vr


# ------------------------------- JAX glue ----------------------------------

def _pad_axis(a, axis, multiple):
    pad = (-a.shape[axis]) % multiple
    if pad == 0:
        return a
    widths = [(0, 0)] * a.ndim
    widths[axis] = (0, pad)
    return jnp.pad(a, widths)


def _im2col_nchw(x, k, stride):
    """x: (B, C, H, W) -> (B, Ho, Wo, C*k*k), patch ordering [ci, kh, kw]."""
    B, C, H, W = x.shape
    Ho = (H - k) // stride + 1
    Wo = (W - k) // stride + 1
    cols = []
    for kh in range(k):
        for kw in range(k):
            cols.append(x[:, :,
                          kh:kh + stride * (Ho - 1) + 1:stride,
                          kw:kw + stride * (Wo - 1) + 1:stride])
    p = jnp.stack(cols, axis=2).reshape(B, C, k, k, Ho, Wo)
    p = p.transpose(0, 4, 5, 1, 2, 3)
    return p.reshape(B, Ho, Wo, C * k * k), Ho, Wo


def _im2col_nhwc(x, k, stride):
    """x: (B, H, W, C) -> (B, Ho, Wo, k*k, C), patch ordering [kh, kw] x C."""
    B, H, W, C = x.shape
    Ho = (H - k) // stride + 1
    Wo = (W - k) // stride + 1
    cols = []
    for kh in range(k):
        for kw in range(k):
            cols.append(x[:,
                          kh:kh + stride * (Ho - 1) + 1:stride,
                          kw:kw + stride * (Wo - 1) + 1:stride, :])
    return jnp.stack(cols, axis=3), Ho, Wo


def base_capsule_net_forward(x, params, *, num_routing_iterations=2):
    w1, b1, wp, bp, wml, bml = (params[k] for k in
                                ("w1", "b1", "wp", "bp", "wml", "bml"))
    B = x.shape[0]

    # ---- conv1 (k=9, s=1) + ReLU : im2col + adaptive row-tiled bf16 matmul ----
    # TODO(synk): the 9x9 strided patch gathers (im2col, here and below) stay in
    # plain JAX; expressing the stride-2 window gather needs a manual-DMA gather
    # kernel, not a BlockSpec.
    patches1, H1, W1 = _im2col_nchw(x, 9, 1)              # (B, H1, W1, Cin*81)
    R1 = B * H1 * W1
    K1 = patches1.shape[-1]
    Co1 = w1.shape[0]
    TR1 = _pick_row_tile(R1)
    P1 = _pad_axis(_pad_axis(patches1.reshape(R1, K1), 0, TR1), 1, 128)
    P1 = P1.astype(jnp.bfloat16)
    W1m = _pad_axis(w1.reshape(Co1, K1).T, 0, 128).astype(jnp.bfloat16)
    R1p, K1p = P1.shape
    y = pl.pallas_call(
        _conv1_kernel,
        out_shape=jax.ShapeDtypeStruct((R1p, Co1), jnp.bfloat16),
        grid=(R1p // TR1,),
        in_specs=[pl.BlockSpec((TR1, K1p), lambda i: (i, 0)),
                  pl.BlockSpec((K1p, Co1), lambda i: (0, 0)),
                  pl.BlockSpec((1, Co1), lambda i: (0, 0))],
        out_specs=pl.BlockSpec((TR1, Co1), lambda i: (i, 0)),
        compiler_params=pltpu.CompilerParams(
            dimension_semantics=("parallel",),
            vmem_limit_bytes=_VMEM_LIMIT_BYTES),
    )(P1, W1m, b1.reshape(1, Co1).astype(jnp.float32))
    y = y[:R1].reshape(B, H1, W1, Co1)                    # NHWC, bf16

    # ---- primary capsules: 32x Conv2d(256->8, k=9, s=2, groups=8) ----
    J, G, Cg, k2, _ = wp.shape                            # (32 convs, 8 grp-out, 32 in/grp, 9, 9)
    patches2, H2, W2 = _im2col_nhwc(y, k2, 2)             # (B, H2, W2, 81, 256) bf16
    R2 = B * H2 * W2
    Kg = k2 * k2 * Cg
    TR2 = _pick_row_tile(R2, candidates=(256, 128))
    Pg = (patches2.reshape(B, H2, W2, k2 * k2, G, Cg)     # per-group patches,
          .transpose(4, 0, 1, 2, 3, 5)                    # inner order [kh,kw,cg]
          .reshape(G, R2, Kg))
    Pg = _pad_axis(_pad_axis(Pg, 1, TR2), 2, 128).astype(jnp.bfloat16)
    # Lane-dense stacked weight: rows [kh,kw,cg], cols g*J+j.
    Wg = _pad_axis(wp.transpose(3, 4, 2, 1, 0).reshape(Kg, G * J), 0, 128)
    Wg = Wg.astype(jnp.bfloat16)
    Bg = bp.T.reshape(1, G * J).astype(jnp.float32)
    R2p, Kgp = Pg.shape[1], Pg.shape[2]
    prim = pl.pallas_call(
        _primary_caps_kernel,
        out_shape=jax.ShapeDtypeStruct((R2p, G * J), jnp.float32),
        grid=(R2p // TR2,),
        in_specs=[pl.BlockSpec((G, TR2, Kgp), lambda r: (0, r, 0)),
                  pl.BlockSpec((Kgp, G * J), lambda r: (0, 0)),
                  pl.BlockSpec((1, G * J), lambda r: (0, 0))],
        out_specs=pl.BlockSpec((TR2, G * J), lambda r: (r, 0)),
        compiler_params=pltpu.CompilerParams(
            dimension_semantics=("parallel",),
            vmem_limit_bytes=_VMEM_LIMIT_BYTES),
    )(Pg, Wg, Bg)
    prim = prim[:R2].reshape(B, H2, W2, G, J)             # [b,h,w,g,j]
    # capsule features x[b, m=g, n=(j,h,w)]  (N on the lane axis downstream)
    xt = prim.transpose(0, 3, 4, 1, 2).reshape(B, G, J * H2 * W2)

    N = J * H2 * W2
    M = G
    C, O = wml.shape[1], wml.shape[3]
    assert wml.shape[0] == N and wml.shape[2] == M
    # TODO(synk): the lane softmax assumes N is the true num_size; if N ever
    # needs padding to a lane multiple, a -inf mask on padded lanes is required.
    assert N % 128 == 0, "num_size must be a lane multiple (128)"
    CD = C * O

    # ---- fused MyLinear + dynamic routing (u never leaves VMEM) ----
    Wt = wml.transpose(2, 1, 3, 0).reshape(M, CD, N).astype(jnp.float32)
    Bt = bml.transpose(1, 2, 0).reshape(CD, N).astype(jnp.float32)
    T = num_routing_iterations
    TB = min(B, 8)                                        # batch tile per grid step
    xt_p = _pad_axis(xt.astype(jnp.float32), 0, TB)
    B_pad = xt_p.shape[0]
    b_raw, v_raw = pl.pallas_call(
        _caps_head_kernel,
        out_shape=(jax.ShapeDtypeStruct((B_pad, T, C, N), jnp.float32),
                   jax.ShapeDtypeStruct((B_pad, T, C, O), jnp.float32)),
        grid=(B_pad // TB,),
        in_specs=[pl.BlockSpec((TB, M, N), lambda b: (b, 0, 0)),
                  pl.BlockSpec((M, CD, N), lambda b: (0, 0, 0)),
                  pl.BlockSpec((CD, N), lambda b: (0, 0))],
        out_specs=(pl.BlockSpec((TB, T, C, N), lambda b: (b, 0, 0, 0)),
                   pl.BlockSpec((TB, T, C, O), lambda b: (b, 0, 0, 0))),
        compiler_params=pltpu.CompilerParams(
            dimension_semantics=("parallel",),
            vmem_limit_bytes=_VMEM_LIMIT_BYTES),
    )(xt_p, Wt, Bt)
    b_out = b_raw[:B].transpose(0, 3, 2, 1)               # (B, N, C, T)
    v_out = v_raw[:B].transpose(0, 2, 3, 1)               # (B, C, D, T)
    return b_out, v_out


# ----------------------- parameters & pure-JAX reference --------------------

def init_params(key, *, in_channel=3, hidden_channels=8, num_classes=10,
                out_dims=16, num_primary_conv_units=32, num_size=128):
    ks = jax.random.split(key, 6)
    groups = 256 // 32
    stdv1 = 1.0 / (in_channel * 81.0) ** 0.5
    stdv2 = 1.0 / ((256 // groups) * 81.0) ** 0.5
    stdv3 = 1.0 / num_classes ** 0.5
    return {
        "w1": jax.random.uniform(ks[0], (256, in_channel, 9, 9), jnp.float32, -stdv1, stdv1),
        "b1": jax.random.uniform(ks[1], (256,), jnp.float32, -stdv1, stdv1),
        "wp": jax.random.uniform(ks[2], (num_primary_conv_units, hidden_channels,
                                         256 // groups, 9, 9), jnp.float32, -stdv2, stdv2),
        "bp": jax.random.uniform(ks[3], (num_primary_conv_units, hidden_channels),
                                 jnp.float32, -stdv2, stdv2),
        "wml": jax.random.uniform(ks[4], (num_size, num_classes, hidden_channels, out_dims),
                                  jnp.float32, -stdv3, stdv3),
        "bml": jax.random.uniform(ks[5], (num_size, num_classes, out_dims),
                                  jnp.float32, -stdv3, stdv3),
    }


def reference_forward(x, params, num_routing_iterations=2):
    w1, b1, wp, bp, wml, bml = (params[k] for k in
                                ("w1", "b1", "wp", "bp", "wml", "bml"))
    dn = ("NCHW", "OIHW", "NCHW")
    y = lax.conv_general_dilated(x, w1, (1, 1), "VALID", dimension_numbers=dn)
    y = jax.nn.relu(y + b1[None, :, None, None])
    groups = y.shape[1] // wp.shape[2]
    outs = []
    for j in range(wp.shape[0]):
        o = lax.conv_general_dilated(y, wp[j], (2, 2), "VALID",
                                     dimension_numbers=dn,
                                     feature_group_count=groups)
        outs.append(o + bp[j][None, :, None, None])
    prim = jnp.stack(outs, axis=0).transpose(1, 0, 3, 4, 2)   # (B, J, H2, W2, G)
    B = x.shape[0]
    xf = prim.reshape(B, -1, wp.shape[1])
    u = jnp.einsum("bnm,ncmo->bnco", xf, wml) + bml
    br = jnp.zeros(u.shape[:-1] + (1,), jnp.float32)
    b_h, v_h = [], []
    for _ in range(num_routing_iterations):
        cr = jax.nn.softmax(br, axis=1)
        sr = jnp.sum(cr * u, axis=1)
        sn = jnp.sqrt(jnp.sum(sr ** 2, axis=-1, keepdims=True))
        vr = sr / sn * (sn ** 2 / (1.0 + sn ** 2))
        sm = jnp.einsum("bncd,bcd->bnc", u, vr)[..., None]
        br = br + sm
        b_h.append(br)
        v_h.append(vr[..., None])
    return jnp.concatenate(b_h, -1), jnp.concatenate(v_h, -1)


# ---------------------------------- main ------------------------------------

if __name__ == "__main__":
    key = jax.random.PRNGKey(0)
    kx, kp = jax.random.split(key)

    # Small input: (B=2, C=3, 19, 19) -> conv1: 11x11 -> primary: 2x2
    # -> num_size = 32 * 2 * 2 = 128 capsules (module rebuilds MyLinear to match).
    B, Cin, H, W = 2, 3, 19, 19
    x = jax.random.normal(kx, (B, Cin, H, W), jnp.float32)
    num_size = 32 * 2 * 2
    params = init_params(kp, num_size=num_size)

    fwd = jax.jit(lambda xx, pp: base_capsule_net_forward(
        xx, pp, num_routing_iterations=2))
    b_out, v_out = fwd(x, params)
    jax.block_until_ready((b_out, v_out))

    assert b_out.shape == (B, num_size, 10, 2)
    assert v_out.shape == (B, 10, 16, 2)

    b_ref, v_ref = reference_forward(x, params, num_routing_iterations=2)
    assert jnp.allclose(b_out, b_ref, atol=2e-3, rtol=2e-3)
    assert jnp.allclose(v_out, v_ref, atol=2e-3, rtol=2e-3)

    print("KERNEL_OK")
</pallas_src>

<mosaic_0001>
module attributes {stable_mosaic.version = 11 : i64} {
  func.func @_conv1_kernel(%arg0: i32, %arg1: memref<128x256xbf16, #tpu.memory_space<vmem>>, %arg2: memref<256x256xbf16, #tpu.memory_space<vmem>>, %arg3: memref<1x256xf32, #tpu.memory_space<vmem>>, %arg4: memref<128x256xbf16, #tpu.memory_space<vmem>>) attributes {dimension_semantics = [#tpu.dimension_semantics<parallel>], iteration_bounds = array<i64: 2>, scalar_prefetch = 0 : i64, scratch_operands = 0 : i64, tpu.core_type = #tpu.core_type<tc>, window_params = [{transform_indices = @transform_0, window_bounds = array<i64: 128, 256>}, {pipeline_mode = #tpu.pipeline_mode<synchronous>, transform_indices = @transform_1, window_bounds = array<i64: 256, 256>}, {pipeline_mode = #tpu.pipeline_mode<synchronous>, transform_indices = @transform_2, window_bounds = array<i64: 1, 256>}, {transform_indices = @transform_3, window_bounds = array<i64: 128, 256>}]} {
    %c0 = arith.constant 0 : index
    %c0_0 = arith.constant 0 : index
    %0 = vector.load %arg1[%c0, %c0_0] : memref<128x256xbf16, #tpu.memory_space<vmem>>, vector<128x256xbf16>
    %c0_1 = arith.constant 0 : index
    %c0_2 = arith.constant 0 : index
    %1 = vector.load %arg2[%c0_1, %c0_2] : memref<256x256xbf16, #tpu.memory_space<vmem>>, vector<256x256xbf16>
    %cst = arith.constant dense<0.000000e+00> : vector<128x256xf32>
    %2 = tpu.matmul %0, %1, %cst {dimension_numbers = #tpu.dot_dimension_numbers<[1], [0], [0], [1], [0, 0, 1, 1], [], []>} : vector<128x256xbf16>, vector<256x256xbf16>, vector<128x256xf32> -> vector<128x256xf32>
    %c0_3 = arith.constant 0 : index
    %c0_4 = arith.constant 0 : index
    %3 = vector.load %arg3[%c0_3, %c0_4] : memref<1x256xf32, #tpu.memory_space<vmem>>, vector<1x256xf32>
    %4 = vector.broadcast %3 : vector<1x256xf32> to vector<128x256xf32>
    %5 = arith.addf %2, %4 : vector<128x256xf32>
    %cst_5 = arith.constant 0.000000e+00 : f32
    %6 = vector.broadcast %cst_5 : f32 to vector<128x256xf32>
    %7 = arith.maximumf %5, %6 : vector<128x256xf32>
    %8 = arith.truncf %7 : vector<128x256xf32> to vector<128x256xbf16>
    %c0_6 = arith.constant 0 : index
    %c0_7 = arith.constant 0 : index
    %9 = vector.load %arg4[%c0_6, %c0_7] : memref<128x256xbf16, #tpu.memory_space<vmem>>, vector<128x256xbf16>
    tpu.vector_store %arg4[%c0_6, %c0_7], %8 {strides = array<i32>} : memref<128x256xbf16, #tpu.memory_space<vmem>>, vector<128x256xbf16>,
    return
  }
  func.func @transform_0(%arg0: i32) -> (i32, i32) {
    %c0_i32 = arith.constant 0 : i32
    %c0_i32_0 = arith.constant 0 : i32
    return %arg0, %c0_i32 : i32, i32
  }
  func.func @transform_1(%arg0: i32) -> (i32, i32) {
    %c0_i32 = arith.constant 0 : i32
    %c0_i32_0 = arith.constant 0 : i32
    %c0_i32_1 = arith.constant 0 : i32
    return %c0_i32, %c0_i32_0 : i32, i32
  }
  func.func @transform_2(%arg0: i32) -> (i32, i32) {
    %c0_i32 = arith.constant 0 : i32
    %c0_i32_0 = arith.constant 0 : i32
    %c0_i32_1 = arith.constant 0 : i32
    return %c0_i32, %c0_i32_0 : i32, i32
  }
  func.func @transform_3(%arg0: i32) -> (i32, i32) {
    %c0_i32 = arith.constant 0 : i32
    %c0_i32_0 = arith.constant 0 : i32
    return %arg0, %c0_i32 : i32, i32
  }
}

module attributes {stable_mosaic.version = 11 : i64} {
  func.func @_primary_caps_kernel(%arg0: i32, %arg1: memref<8x8x2688xbf16, #tpu.memory_space<vmem>>, %arg2: memref<2688x256xbf16, #tpu.memory_space<vmem>>, %arg3: memref<1x256xf32, #tpu.memory_space<vmem>>, %arg4: memref<8x256xf32, #tpu.memory_space<vmem>>) attributes {dimension_semantics = [#tpu.dimension_semantics<parallel>], iteration_bounds = array<i64: 1>, scalar_prefetch = 0 : i64, scratch_operands = 0 : i64, tpu.core_type = #tpu.core_type<tc>, window_params = [{transform_indices = @transform_0, window_bounds = array<i64: 8, 8, 2688>}, {pipeline_mode = #tpu.pipeline_mode<synchronous>, transform_indices = @transform_1, window_bounds = array<i64: 2688, 256>}, {pipeline_mode = #tpu.pipeline_mode<synchronous>, transform_indices = @transform_2, window_bounds = array<i64: 1, 256>}, {transform_indices = @transform_3, window_bounds = array<i64: 8, 256>}]} {
    %c0 = arith.constant 0 : index
    %c0_0 = arith.constant 0 : index
    %c0_1 = arith.constant 0 : index
    %0 = vector.load %arg1[%c0, %c0_0, %c0_1] : memref<8x8x2688xbf16, #tpu.memory_space<vmem>>, vector<1x8x2688xbf16>
    %1 = vector.shape_cast %0 : vector<1x8x2688xbf16> to vector<8x2688xbf16>
    %c0_2 = arith.constant 0 : index
    %c0_3 = arith.constant 0 : index
    %2 = vector.load %arg2[%c0_2, %c0_3] : memref<2688x256xbf16, #tpu.memory_space<vmem>>, vector<2688x32xbf16>
    %cst = arith.constant dense<0.000000e+00> : vector<8x32xf32>
    %3 = tpu.matmul %1, %2, %cst {dimension_numbers = #tpu.dot_dimension_numbers<[1], [0], [0], [1], [0, 0, 1, 1], [], []>} : vector<8x2688xbf16>, vector<2688x32xbf16>, vector<8x32xf32> -> vector<8x32xf32>
    %c1 = arith.constant 1 : index
    %c0_4 = arith.constant 0 : index
    %c0_5 = arith.constant 0 : index
    %4 = vector.load %arg1[%c1, %c0_4, %c0_5] : memref<8x8x2688xbf16, #tpu.memory_space<vmem>>, vector<1x8x2688xbf16>
    %5 = vector.shape_cast %4 : vector<1x8x2688xbf16> to vector<8x2688xbf16>
    %c0_6 = arith.constant 0 : index
    %c32 = arith.constant 32 : index
    %6 = vector.load %arg2[%c0_6, %c32] : memref<2688x256xbf16, #tpu.memory_space<vmem>>, vector<2688x32xbf16>
    %cst_7 = arith.constant dense<0.000000e+00> : vector<8x32xf32>
    %7 = tpu.matmul %5, %6, %cst_7 {dimension_numbers = #tpu.dot_dimension_numbers<[1], [0], [0], [1], [0, 0, 1, 1], [], []>} : vector<8x2688xbf16>, vector<2688x32xbf16>, vector<8x32xf32> -> vector<8x32xf32>
    %c2 = arith.constant 2 : index
    %c0_8 = arith.constant 0 : index
    %c0_9 = arith.constant 0 : index
    %8 = vector.load %arg1[%c2, %c0_8, %c0_9] : memref<8x8x2688xbf16, #tpu.memory_space<vmem>>, vector<1x8x2688xbf16>
    %9 = vector.shape_cast %8 : vector<1x8x2688xbf16> to vector<8x2688xbf16>
    %c0_10 = arith.constant 0 : index
    %c64 = arith.constant 64 : index
    %10 = vector.load %arg2[%c0_10, %c64] : memref<2688x256xbf16, #tpu.memory_space<vmem>>, vector<2688x32xbf16>
    %cst_11 = arith.constant dense<0.000000e+00> : vector<8x32xf32>
    %11 = tpu.matmul %9, %10, %cst_11 {dimension_numbers = #tpu.dot_dimension_numbers<[1], [0], [0], [1], [0, 0, 1, 1], [], []>} : vector<8x2688xbf16>, vector<2688x32xbf16>, vector<8x32xf32> -> vector<8x32xf32>
    %c3 = arith.constant 3 : index
    %c0_12 = arith.constant 0 : index
    %c0_13 = arith.constant 0 : index
    %12 = vector.load %arg1[%c3, %c0_12, %c0_13] : memref<8x8x2688xbf16, #tpu.memory_space<vmem>>, vector<1x8x2688xbf16>
    %13 = vector.shape_cast %12 : vector<1x8x2688xbf16> to vector<8x2688xbf16>
    %c0_14 = arith.constant 0 : index
    %c96 = arith.constant 96 : index
    %14 = vector.load %arg2[%c0_14, %c96] : memref<2688x256xbf16, #tpu.memory_space<vmem>>, vector<2688x32xbf16>
    %cst_15 = arith.constant dense<0.000000e+00> : vector<8x32xf32>
    %15 = tpu.matmul %13, %14, %cst_15 {dimension_numbers = #tpu.dot_dimension_numbers<[1], [0], [0], [1], [0, 0, 1, 1], [], []>} : vector<8x2688xbf16>, vector<2688x32xbf16>, vector<8x32xf32> -> vector<8x32xf32>
    %c4 = arith.constant 4 : index
    %c0_16 = arith.constant 0 : index
    %c0_17 = arith.constant 0 : index
    %16 = vector.load %arg1[%c4, %c0_16, %c0_17] : memref<8x8x2688xbf16, #tpu.memory_space<vmem>>, vector<1x8x2688xbf16>
    %17 = vector.shape_cast %16 : vector<1x8x2688xbf16> to vector<8x2688xbf16>
    %c0_18 = arith.constant 0 : index
    %c128 = arith.constant 128 : index
    %18 = vector.load %arg2[%c0_18, %c128] : memref<2688x256xbf16, #tpu.memory_space<vmem>>, vector<2688x32xbf16>
    %cst_19 = arith.constant dense<0.000000e+00> : vector<8x32xf32>
    %19 = tpu.matmul %17, %18, %cst_19 {dimension_numbers = #tpu.dot_dimension_numbers<[1], [0], [0], [1], [0, 0, 1, 1], [], []>} : vector<8x2688xbf16>, vector<2688x32xbf16>, vector<8x32xf32> -> vector<8x32xf32>
    %c5 = arith.constant 5 : index
    %c0_20 = arith.constant 0 : index
    %c0_21 = arith.constant 0 : index
    %20 = vector.load %arg1[%c5, %c0_20, %c0_21] : memref<8x8x2688xbf16, #tpu.memory_space<vmem>>, vector<1x8x2688xbf16>
    %21 = vector.shape_cast %20 : vector<1x8x2688xbf16> to vector<8x2688xbf16>
    %c0_22 = arith.constant 0 : index
    %c160 = arith.constant 160 : index
    %22 = vector.load %arg2[%c0_22, %c160] : memref<2688x256xbf16, #tpu.memory_space<vmem>>, vector<2688x32xbf16>
    %cst_23 = arith.constant dense<0.000000e+00> : vector<8x32xf32>
    %23 = tpu.matmul %21, %22, %cst_23 {dimension_numbers = #tpu.dot_dimension_numbers<[1], [0], [0], [1], [0, 0, 1, 1], [], []>} : vector<8x2688xbf16>, vector<2688x32xbf16>, vector<8x32xf32> -> vector<8x32xf32>
    %c6 = arith.constant 6 : index
    %c0_24 = arith.constant 0 : index
    %c0_25 = arith.constant 0 : index
    %24 = vector.load %arg1[%c6, %c0_24, %c0_25] : memref<8x8x2688xbf16, #tpu.memory_space<vmem>>, vector<1x8x2688xbf16>
    %25 = vector.shape_cast %24 : vector<1x8x2688xbf16> to vector<8x2688xbf16>
    %c0_26 = arith.constant 0 : index
    %c192 = arith.constant 192 : index
    %26 = vector.load %arg2[%c0_26, %c192] : memref<2688x256xbf16, #tpu.memory_space<vmem>>, vector<2688x32xbf16>
    %cst_27 = arith.constant dense<0.000000e+00> : vector<8x32xf32>
    %27 = tpu.matmul %25, %26, %cst_27 {dimension_numbers = #tpu.dot_dimension_numbers<[1], [0], [0], [1], [0, 0, 1, 1], [], []>} : vector<8x2688xbf16>, vector<2688x32xbf16>, vector<8x32xf32> -> vector<8x32xf32>
    %c7 = arith.constant 7 : index
    %c0_28 = arith.constant 0 : index
    %c0_29 = arith.constant 0 : index
    %28 = vector.load %arg1[%c7, %c0_28, %c0_29] : memref<8x8x2688xbf16, #tpu.memory_space<vmem>>, vector<1x8x2688xbf16>
    %29 = vector.shape_cast %28 : vector<1x8x2688xbf16> to vector<8x2688xbf16>
    %c0_30 = arith.constant 0 : index
    %c224 = arith.constant 224 : index
    %30 = vector.load %arg2[%c0_30, %c224] : memref<2688x256xbf16, #tpu.memory_space<vmem>>, vector<2688x32xbf16>
    %cst_31 = arith.constant dense<0.000000e+00> : vector<8x32xf32>
    %31 = tpu.matmul %29, %30, %cst_31 {dimension_numbers = #tpu.dot_dimension_numbers<[1], [0], [0], [1], [0, 0, 1, 1], [], []>} : vector<8x2688xbf16>, vector<2688x32xbf16>, vector<8x32xf32> -> vector<8x32xf32>
    %32 = tpu.concatenate %3, %7, %11, %15, %19, %23, %27, %31 in 1 : vector<8x32xf32>, vector<8x32xf32>, vector<8x32xf32>, vector<8x32xf32>, vector<8x32xf32>, vector<8x32xf32>, vector<8x32xf32>, vector<8x32xf32> -> vector<8x256xf32>
    %c0_32 = arith.constant 0 : index
    %c0_33 = arith.constant 0 : index
    %33 = vector.load %arg3[%c0_32, %c0_33] : memref<1x256xf32, #tpu.memory_space<vmem>>, vector<1x256xf32>
    %34 = vector.broadcast %33 : vector<1x256xf32> to vector<8x256xf32>
    %35 = arith.addf %32, %34 : vector<8x256xf32>
    %c0_34 = arith.constant 0 : index
    %c0_35 = arith.constant 0 : index
    %36 = vector.load %arg4[%c0_34, %c0_35] : memref<8x256xf32, #tpu.memory_space<vmem>>, vector<8x256xf32>
    tpu.vector_store %arg4[%c0_34, %c0_35], %35 {strides = array<i32>} : memref<8x256xf32, #tpu.memory_space<vmem>>, vector<8x256xf32>,
    return
  }
  func.func @transform_0(%arg0: i32) -> (i32, i32, i32) {
    %c0_i32 = arith.constant 0 : i32
    %c0_i32_0 = arith.constant 0 : i32
    %c0_i32_1 = arith.constant 0 : i32
    return %c0_i32, %arg0, %c0_i32_0 : i32, i32, i32
  }
  func.func @transform_1(%arg0: i32) -> (i32, i32) {
    %c0_i32 = arith.constant 0 : i32
    %c0_i32_0 = arith.constant 0 : i32
    %c0_i32_1 = arith.constant 0 : i32
    return %c0_i32, %c0_i32_0 : i32, i32
  }
  func.func @transform_2(%arg0: i32) -> (i32, i32) {
    %c0_i32 = arith.constant 0 : i32
    %c0_i32_0 = arith.constant 0 : i32
    %c0_i32_1 = arith.constant 0 : i32
    return %c0_i32, %c0_i32_0 : i32, i32
  }
  func.func @transform_3(%arg0: i32) -> (i32, i32) {
    %c0_i32 = arith.constant 0 : i32
    %c0_i32_0 = arith.constant 0 : i32
    return %arg0, %c0_i32 : i32, i32
  }
}

module attributes {stable_mosaic.version = 11 : i64} {
  func.func @_caps_head_kernel(%arg0: i32, %arg1: memref<2x8x128xf32, #tpu.memory_space<vmem>>, %arg2: memref<8x160x128xf32, #tpu.memory_space<vmem>>, %arg3: memref<160x128xf32, #tpu.memory_space<vmem>>, %arg4: memref<2x2x10x128xf32, #tpu.memory_space<vmem>>, %arg5: memref<2x2x10x16xf32, #tpu.memory_space<vmem>>) attributes {dimension_semantics = [#tpu.dimension_semantics<parallel>], iteration_bounds = array<i64: 1>, scalar_prefetch = 0 : i64, scratch_operands = 0 : i64, tpu.core_type = #tpu.core_type<tc>, window_params = [{transform_indices = @transform_0, window_bounds = array<i64: 2, 8, 128>}, {pipeline_mode = #tpu.pipeline_mode<synchronous>, transform_indices = @transform_1, window_bounds = array<i64: 8, 160, 128>}, {pipeline_mode = #tpu.pipeline_mode<synchronous>, transform_indices = @transform_2, window_bounds = array<i64: 160, 128>}, {transform_indices = @transform_3, window_bounds = array<i64: 2, 2, 10, 128>}, {transform_indices = @transform_4, window_bounds = array<i64: 2, 2, 10, 16>}]} {
    %c0 = arith.constant 0 : index
    %c0_0 = arith.constant 0 : index
    %c0_1 = arith.constant 0 : index
    %0 = vector.load %arg1[%c0, %c0_0, %c0_1] : memref<2x8x128xf32, #tpu.memory_space<vmem>>, vector<2x8x128xf32>
    %c0_2 = arith.constant 0 : index
    %c0_3 = arith.constant 0 : index
    %1 = vector.load %arg3[%c0_2, %c0_3] : memref<160x128xf32, #tpu.memory_space<vmem>>, vector<160x128xf32>
    %2 = vector.shape_cast %1 : vector<160x128xf32> to vector<1x160x128xf32>
    %c0_4 = arith.constant 0 : index
    %c0_5 = arith.constant 0 : index
    %c0_6 = arith.constant 0 : index
    %3 = vector.load %arg2[%c0_4, %c0_5, %c0_6] : memref<8x160x128xf32, #tpu.memory_space<vmem>>, vector<1x160x128xf32>
    %4 = vector.shape_cast %3 : vector<1x160x128xf32> to vector<160x128xf32>
    %5 = vector.shape_cast %4 : vector<160x128xf32> to vector<1x160x128xf32>
    %6 = vector.extract_strided_slice %0 {offsets = [0, 0, 0], sizes = [2, 1, 128], strides = [1, 1, 1]} : vector<2x8x128xf32> to vector<2x1x128xf32>
    %7 = vector.broadcast %5 : vector<1x160x128xf32> to vector<2x160x128xf32>
    %8 = vector.broadcast %6 : vector<2x1x128xf32> to vector<2x160x128xf32>
    %9 = arith.mulf %7, %8 : vector<2x160x128xf32>
    %10 = vector.broadcast %2 : vector<1x160x128xf32> to vector<2x160x128xf32>
    %11 = arith.addf %10, %9 : vector<2x160x128xf32>
    %c1 = arith.constant 1 : index
    %c0_7 = arith.constant 0 : index
    %c0_8 = arith.constant 0 : index
    %12 = vector.load %arg2[%c1, %c0_7, %c0_8] : memref<8x160x128xf32, #tpu.memory_space<vmem>>, vector<1x160x128xf32>
    %13 = vector.shape_cast %12 : vector<1x160x128xf32> to vector<160x128xf32>
    %14 = vector.shape_cast %13 : vector<160x128xf32> to vector<1x160x128xf32>
    %15 = vector.extract_strided_slice %0 {offsets = [0, 1, 0], sizes = [2, 1, 128], strides = [1, 1, 1]} : vector<2x8x128xf32> to vector<2x1x128xf32>
    %16 = vector.broadcast %14 : vector<1x160x128xf32> to vector<2x160x128xf32>
    %17 = vector.broadcast %15 : vector<2x1x128xf32> to vector<2x160x128xf32>
    %18 = arith.mulf %16, %17 : vector<2x160x128xf32>
    %19 = arith.addf %11, %18 : vector<2x160x128xf32>
    %c2 = arith.constant 2 : index
    %c0_9 = arith.constant 0 : index
    %c0_10 = arith.constant 0 : index
    %20 = vector.load %arg2[%c2, %c0_9, %c0_10] : memref<8x160x128xf32, #tpu.memory_space<vmem>>, vector<1x160x128xf32>
    %21 = vector.shape_cast %20 : vector<1x160x128xf32> to vector<160x128xf32>
    %22 = vector.shape_cast %21 : vector<160x128xf32> to vector<1x160x128xf32>
    %23 = vector.extract_strided_slice %0 {offsets = [0, 2, 0], sizes = [2, 1, 128], strides = [1, 1, 1]} : vector<2x8x128xf32> to vector<2x1x128xf32>
    %24 = vector.broadcast %22 : vector<1x160x128xf32> to vector<2x160x128xf32>
    %25 = vector.broadcast %23 : vector<2x1x128xf32> to vector<2x160x128xf32>
    %26 = arith.mulf %24, %25 : vector<2x160x128xf32>
    %27 = arith.addf %19, %26 : vector<2x160x128xf32>
    %c3 = arith.constant 3 : index
    %c0_11 = arith.constant 0 : index
    %c0_12 = arith.constant 0 : index
    %28 = vector.load %arg2[%c3, %c0_11, %c0_12] : memref<8x160x128xf32, #tpu.memory_space<vmem>>, vector<1x160x128xf32>
    %29 = vector.shape_cast %28 : vector<1x160x128xf32> to vector<160x128xf32>
    %30 = vector.shape_cast %29 : vector<160x128xf32> to vector<1x160x128xf32>
    %31 = vector.extract_strided_slice %0 {offsets = [0, 3, 0], sizes = [2, 1, 128], strides = [1, 1, 1]} : vector<2x8x128xf32> to vector<2x1x128xf32>
    %32 = vector.broadcast %30 : vector<1x160x128xf32> to vector<2x160x128xf32>
    %33 = vector.broadcast %31 : vector<2x1x128xf32> to vector<2x160x128xf32>
    %34 = arith.mulf %32, %33 : vector<2x160x128xf32>
    %35 = arith.addf %27, %34 : vector<2x160x128xf32>
    %c4 = arith.constant 4 : index
    %c0_13 = arith.constant 0 : index
    %c0_14 = arith.constant 0 : index
    %36 = vector.load %arg2[%c4, %c0_13, %c0_14] : memref<8x160x128xf32, #tpu.memory_space<vmem>>, vector<1x160x128xf32>
    %37 = vector.shape_cast %36 : vector<1x160x128xf32> to vector<160x128xf32>
    %38 = vector.shape_cast %37 : vector<160x128xf32> to vector<1x160x128xf32>
    %39 = vector.extract_strided_slice %0 {offsets = [0, 4, 0], sizes = [2, 1, 128], strides = [1, 1, 1]} : vector<2x8x128xf32> to vector<2x1x128xf32>
    %40 = vector.broadcast %38 : vector<1x160x128xf32> to vector<2x160x128xf32>
    %41 = vector.broadcast %39 : vector<2x1x128xf32> to vector<2x160x128xf32>
    %42 = arith.mulf %40, %41 : vector<2x160x128xf32>
    %43 = arith.addf %35, %42 : vector<2x160x128xf32>
    %c5 = arith.constant 5 : index
    %c0_15 = arith.constant 0 : index
    %c0_16 = arith.constant 0 : index
    %44 = vector.load %arg2[%c5, %c0_15, %c0_16] : memref<8x160x128xf32, #tpu.memory_space<vmem>>, vector<1x160x128xf32>
    %45 = vector.shape_cast %44 : vector<1x160x128xf32> to vector<160x128xf32>
    %46 = vector.shape_cast %45 : vector<160x128xf32> to vector<1x160x128xf32>
    %47 = vector.extract_strided_slice %0 {offsets = [0, 5, 0], sizes = [2, 1, 128], strides = [1, 1, 1]} : vector<2x8x128xf32> to vector<2x1x128xf32>
    %48 = vector.broadcast %46 : vector<1x160x128xf32> to vector<2x160x128xf32>
    %49 = vector.broadcast %47 : vector<2x1x128xf32> to vector<2x160x128xf32>
    %50 = arith.mulf %48, %49 : vector<2x160x128xf32>
    %51 = arith.addf %43, %50 : vector<2x160x128xf32>
    %c6 = arith.constant 6 : index
    %c0_17 = arith.constant 0 : index
    %c0_18 = arith.constant 0 : index
    %52 = vector.load %arg2[%c6, %c0_17, %c0_18] : memref<8x160x128xf32, #tpu.memory_space<vmem>>, vector<1x160x128xf32>
    %53 = vector.shape_cast %52 : vector<1x160x128xf32> to vector<160x128xf32>
    %54 = vector.shape_cast %53 : vector<160x128xf32> to vector<1x160x128xf32>
    %55 = vector.extract_strided_slice %0 {offsets = [0, 6, 0], sizes = [2, 1, 128], strides = [1, 1, 1]} : vector<2x8x128xf32> to vector<2x1x128xf32>
    %56 = vector.broadcast %54 : vector<1x160x128xf32> to vector<2x160x128xf32>
    %57 = vector.broadcast %55 : vector<2x1x128xf32> to vector<2x160x128xf32>
    %58 = arith.mulf %56, %57 : vector<2x160x128xf32>
    %59 = arith.addf %51, %58 : vector<2x160x128xf32>
    %c7 = arith.constant 7 : index
    %c0_19 = arith.constant 0 : index
    %c0_20 = arith.constant 0 : index
    %60 = vector.load %arg2[%c7, %c0_19, %c0_20] : memref<8x160x128xf32, #tpu.memory_space<vmem>>, vector<1x160x128xf32>
    %61 = vector.shape_cast %60 : vector<1x160x128xf32> to vector<160x128xf32>
    %62 = vector.shape_cast %61 : vector<160x128xf32> to vector<1x160x128xf32>
    %63 = vector.extract_strided_slice %0 {offsets = [0, 7, 0], sizes = [2, 1, 128], strides = [1, 1, 1]} : vector<2x8x128xf32> to vector<2x1x128xf32>
    %64 = vector.broadcast %62 : vector<1x160x128xf32> to vector<2x160x128xf32>
    %65 = vector.broadcast %63 : vector<2x1x128xf32> to vector<2x160x128xf32>
    %66 = arith.mulf %64, %65 : vector<2x160x128xf32>
    %67 = arith.addf %59, %66 : vector<2x160x128xf32>
    %68 = vector.shape_cast %67 : vector<2x160x128xf32> to vector<2x10x16x128xf32>
    %cst = arith.constant 0.000000e+00 : f32
    %69 = vector.broadcast %cst : f32 to vector<2x10x128xf32>
    %cst_21 = arith.constant dense<0xFF800000> : vector<2x10xf32>
    %70 = vector.multi_reduction <maximumf>, %69, %cst_21 [2] : vector<2x10x128xf32> to vector<2x10xf32>
    %71 = vector.shape_cast %70 : vector<2x10xf32> to vector<2x10x1xf32>
    %72 = vector.broadcast %71 : vector<2x10x1xf32> to vector<2x10x128xf32>
    %73 = arith.subf %69, %72 : vector<2x10x128xf32>
    %74 = math.exp %73 : vector<2x10x128xf32>
    %cst_22 = arith.constant dense<0.000000e+00> : vector<2x10xf32>
    %75 = vector.multi_reduction <add>, %74, %cst_22 [2] : vector<2x10x128xf32> to vector<2x10xf32>
    %76 = vector.shape_cast %75 : vector<2x10xf32> to vector<2x10x1xf32>
    %77 = vector.broadcast %76 : vector<2x10x1xf32> to vector<2x10x128xf32>
    %78 = arith.divf %74, %77 : vector<2x10x128xf32>
    %79 = vector.shape_cast %78 : vector<2x10x128xf32> to vector<2x10x1x128xf32>
    %80 = vector.broadcast %79 : vector<2x10x1x128xf32> to vector<2x10x16x128xf32>
    %81 = arith.mulf %80, %68 : vector<2x10x16x128xf32>
    %cst_23 = arith.constant dense<0.000000e+00> : vector<2x10x16xf32>
    %82 = vector.multi_reduction <add>, %81, %cst_23 [3] : vector<2x10x16x128xf32> to vector<2x10x16xf32>
    %83 = arith.mulf %82, %82 : vector<2x10x16xf32>
    %cst_24 = arith.constant dense<0.000000e+00> : vector<2x10xf32>
    %84 = vector.multi_reduction <add>, %83, %cst_24 [2] : vector<2x10x16xf32> to vector<2x10xf32>
    %85 = vector.shape_cast %84 : vector<2x10xf32> to vector<2x10x1xf32>
    %86 = math.sqrt %85 : vector<2x10x1xf32>
    %87 = vector.broadcast %86 : vector<2x10x1xf32> to vector<2x10x16xf32>
    %88 = arith.mulf %82, %87 : vector<2x10x16xf32>
    %cst_25 = arith.constant 1.000000e+00 : f32
    %89 = vector.broadcast %cst_25 : f32 to vector<2x10x1xf32>
    %90 = arith.addf %89, %85 : vector<2x10x1xf32>
    %91 = vector.broadcast %90 : vector<2x10x1xf32> to vector<2x10x16xf32>
    %92 = arith.divf %88, %91 : vector<2x10x16xf32>
    %93 = vector.shape_cast %92 : vector<2x10x16xf32> to vector<2x10x16x1xf32>
    %94 = vector.broadcast %93 : vector<2x10x16x1xf32> to vector<2x10x16x128xf32>
    %95 = arith.mulf %68, %94 : vector<2x10x16x128xf32>
    %cst_26 = arith.constant dense<0.000000e+00> : vector<2x10x128xf32>
    %96 = vector.multi_reduction <add>, %95, %cst_26 [2] : vector<2x10x16x128xf32> to vector<2x10x128xf32>
    %97 = arith.addf %69, %96 : vector<2x10x128xf32>
    %c0_27 = arith.constant 0 : index
    %c0_28 = arith.constant 0 : index
    %c0_29 = arith.constant 0 : index
    %c0_30 = arith.constant 0 : index
    %98 = vector.load %arg4[%c0_27, %c0_28, %c0_29, %c0_30] : memref<2x2x10x128xf32, #tpu.memory_space<vmem>>, vector<2x1x10x128xf32>
    %99 = vector.shape_cast %98 : vector<2x1x10x128xf32> to vector<2x10x128xf32>
    %100 = vector.shape_cast %97 : vector<2x10x128xf32> to vector<2x1x10x128xf32>
    tpu.vector_store %arg4[%c0_27, %c0_28, %c0_29, %c0_30], %100 {strides = array<i32>} : memref<2x2x10x128xf32, #tpu.memory_space<vmem>>, vector<2x1x10x128xf32>,
    %c0_31 = arith.constant 0 : index
    %c0_32 = arith.constant 0 : index
    %c0_33 = arith.constant 0 : index
    %c0_34 = arith.constant 0 : index
    %101 = vector.load %arg5[%c0_31, %c0_32, %c0_33, %c0_34] : memref<2x2x10x16xf32, #tpu.memory_space<vmem>>, vector<2x1x10x16xf32>
    %102 = vector.shape_cast %101 : vector<2x1x10x16xf32> to vector<2x10x16xf32>
    %103 = vector.shape_cast %92 : vector<2x10x16xf32> to vector<2x1x10x16xf32>
    tpu.vector_store %arg5[%c0_31, %c0_32, %c0_33, %c0_34], %103 {strides = array<i32>} : memref<2x2x10x16xf32, #tpu.memory_space<vmem>>, vector<2x1x10x16xf32>,
    %cst_35 = arith.constant dense<0xFF800000> : vector<2x10xf32>
    %104 = vector.multi_reduction <maximumf>, %97, %cst_35 [2] : vector<2x10x128xf32> to vector<2x10xf32>
    %105 = vector.shape_cast %104 : vector<2x10xf32> to vector<2x10x1xf32>
    %106 = vector.broadcast %105 : vector<2x10x1xf32> to vector<2x10x128xf32>
    %107 = arith.subf %97, %106 : vector<2x10x128xf32>
    %108 = math.exp %107 : vector<2x10x128xf32>
    %cst_36 = arith.constant dense<0.000000e+00> : vector<2x10xf32>
    %109 = vector.multi_reduction <add>, %108, %cst_36 [2] : vector<2x10x128xf32> to vector<2x10xf32>
    %110 = vector.shape_cast %109 : vector<2x10xf32> to vector<2x10x1xf32>
    %111 = vector.broadcast %110 : vector<2x10x1xf32> to vector<2x10x128xf32>
    %112 = arith.divf %108, %111 : vector<2x10x128xf32>
    %113 = vector.shape_cast %112 : vector<2x10x128xf32> to vector<2x10x1x128xf32>
    %114 = vector.broadcast %113 : vector<2x10x1x128xf32> to vector<2x10x16x128xf32>
    %115 = arith.mulf %114, %68 : vector<2x10x16x128xf32>
    %cst_37 = arith.constant dense<0.000000e+00> : vector<2x10x16xf32>
    %116 = vector.multi_reduction <add>, %115, %cst_37 [3] : vector<2x10x16x128xf32> to vector<2x10x16xf32>
    %117 = arith.mulf %116, %116 : vector<2x10x16xf32>
    %cst_38 = arith.constant dense<0.000000e+00> : vector<2x10xf32>
    %118 = vector.multi_reduction <add>, %117, %cst_38 [2] : vector<2x10x16xf32> to vector<2x10xf32>
    %119 = vector.shape_cast %118 : vector<2x10xf32> to vector<2x10x1xf32>
    %120 = math.sqrt %119 : vector<2x10x1xf32>
    %121 = vector.broadcast %120 : vector<2x10x1xf32> to vector<2x10x16xf32>
    %122 = arith.mulf %116, %121 : vector<2x10x16xf32>
    %cst_39 = arith.constant 1.000000e+00 : f32
    %123 = vector.broadcast %cst_39 : f32 to vector<2x10x1xf32>
    %124 = arith.addf %123, %119 : vector<2x10x1xf32>
    %125 = vector.broadcast %124 : vector<2x10x1xf32> to vector<2x10x16xf32>
    %126 = arith.divf %122, %125 : vector<2x10x16xf32>
    %127 = vector.shape_cast %126 : vector<2x10x16xf32> to vector<2x10x16x1xf32>
    %128 = vector.broadcast %127 : vector<2x10x16x1xf32> to vector<2x10x16x128xf32>
    %129 = arith.mulf %68, %128 : vector<2x10x16x128xf32>
    %cst_40 = arith.constant dense<0.000000e+00> : vector<2x10x128xf32>
    %130 = vector.multi_reduction <add>, %129, %cst_40 [2] : vector<2x10x16x128xf32> to vector<2x10x128xf32>
    %131 = arith.addf %97, %130 : vector<2x10x128xf32>
    %c0_41 = arith.constant 0 : index
    %c1_42 = arith.constant 1 : index
    %c0_43 = arith.constant 0 : index
    %c0_44 = arith.constant 0 : index
    %132 = vector.load %arg4[%c0_41, %c1_42, %c0_43, %c0_44] : memref<2x2x10x128xf32, #tpu.memory_space<vmem>>, vector<2x1x10x128xf32>
    %133 = vector.shape_cast %132 : vector<2x1x10x128xf32> to vector<2x10x128xf32>
    %134 = vector.shape_cast %131 : vector<2x10x128xf32> to vector<2x1x10x128xf32>
    tpu.vector_store %arg4[%c0_41, %c1_42, %c0_43, %c0_44], %134 {strides = array<i32>} : memref<2x2x10x128xf32, #tpu.memory_space<vmem>>, vector<2x1x10x128xf32>,
    %c0_45 = arith.constant 0 : index
    %c1_46 = arith.constant 1 : index
    %c0_47 = arith.constant 0 : index
    %c0_48 = arith.constant 0 : index
    %135 = vector.load %arg5[%c0_45, %c1_46, %c0_47, %c0_48] : memref<2x2x10x16xf32, #tpu.memory_space<vmem>>, vector<2x1x10x16xf32>
    %136 = vector.shape_cast %135 : vector<2x1x10x16xf32> to vector<2x10x16xf32>
    %137 = vector.shape_cast %126 : vector<2x10x16xf32> to vector<2x1x10x16xf32>
    tpu.vector_store %arg5[%c0_45, %c1_46, %c0_47, %c0_48], %137 {strides = array<i32>} : memref<2x2x10x16xf32, #tpu.memory_space<vmem>>, vector<2x1x10x16xf32>,
    return
  }
  func.func @transform_0(%arg0: i32) -> (i32, i32, i32) {
    %c0_i32 = arith.constant 0 : i32
    %c0_i32_0 = arith.constant 0 : i32
    %c0_i32_1 = arith.constant 0 : i32
    return %arg0, %c0_i32, %c0_i32_0 : i32, i32, i32
  }
  func.func @transform_1(%arg0: i32) -> (i32, i32, i32) {
    %c0_i32 = arith.constant 0 : i32
    %c0_i32_0 = arith.constant 0 : i32
    %c0_i32_1 = arith.constant 0 : i32
    %c0_i32_2 = arith.constant 0 : i32
    return %c0_i32, %c0_i32_0, %c0_i32_1 : i32, i32, i32
  }
  func.func @transform_2(%arg0: i32) -> (i32, i32) {
    %c0_i32 = arith.constant 0 : i32
    %c0_i32_0 = arith.constant 0 : i32
    %c0_i32_1 = arith.constant 0 : i32
    return %c0_i32, %c0_i32_0 : i32, i32
  }
  func.func @transform_3(%arg0: i32) -> (i32, i32, i32, i32) {
    %c0_i32 = arith.constant 0 : i32
    %c0_i32_0 = arith.constant 0 : i32
    %c0_i32_1 = arith.constant 0 : i32
    %c0_i32_2 = arith.constant 0 : i32
    return %arg0, %c0_i32, %c0_i32_0, %c0_i32_1 : i32, i32, i32, i32
  }
  func.func @transform_4(%arg0: i32) -> (i32, i32, i32, i32) {
    %c0_i32 = arith.constant 0 : i32
    %c0_i32_0 = arith.constant 0 : i32
    %c0_i32_1 = arith.constant 0 : i32
    %c0_i32_2 = arith.constant 0 : i32
    return %arg0, %c0_i32, %c0_i32_0, %c0_i32_1 : i32, i32, i32, i32
  }
}

</mosaic_0001>

<llo_original>
// kernel: _lambda_.3
$region0: #{_lambda_.3}
  #allocation0 [shape = 'u32[]', space=smem, size = 0x4, offset = 0x4, fixed_abs, tag = 'smem constant byte address 0x4 - core index']
  #allocation1 [shape = 'u32[144,128]{1,0:T(1,128)}', space=vmem, size = 0x12000, scoped, tag = 'internal scratch']
  %s0 = inlined_call_operand.vmem [shape: bf16[256,256], index: 0, kind: input, shape index: {}]
  %s1 = inlined_call_operand.vmem [shape: bf16[256,256], index: 1, kind: input, shape index: {}]
  %s2 = inlined_call_operand.vmem [shape: f32[1,256], index: 2, kind: input, shape index: {}]
  %s3 = inlined_call_operand.vmem [shape: bf16[256,256], index: 3, kind: output, shape index: {}]
  %s4 = sld [smem:[#allocation0]]
  $region45: #{_lambda_.3} parent=0
    _
  %s6 = ssub.s32 1, %s4
  %s7 = scalar_select 0, %s6, %s4
  loop: start=0, step=1, limit=4
  $region2: #{_lambda_.3} parent=0 // loop_pre_header
    _
  $region3: #{_lambda_.3} parent=0 // loop_header
    %s9 = sphi 0, %s13
    %p10 = scmp.ge.s32.totalorder %s9, 4
    %s19 = sphi 0, %s21
    %s22 = sphi 0, %s19
    %s23 = sphi 0, %s22
    %s39 = sphi 0, %s23
    %s43 = sphi 0, %s43
    %s45 = sphi 0, %s43
    %s46 = sphi 0, %s45
    %s60 = sphi 0, %s46
    %s64 = sphi 0, %s64
    %s66 = sphi 0, %s64
    %s67 = sphi 0, %s66
    %s81 = sphi 0, %s67
    %s87 = sphi 0, %s89
    %s90 = sphi 0, %s87
    %s91 = sphi 0, %s90
    %s107 = sphi 0, %s91
  $region4: #{_lambda_.3} parent=0 // loop_header_branch
    %12 = sbr.rel (%p10) target = $region8
  $region5: #{_lambda_.3} parent=0 // loop_body
    %s14 = ssub.s32 %s9, 1
    %s15 = ssub.s32 %s9, 2
    %s16 = sadd.s32 %s9, 1
    %s17 = ssub.s32 %s9, %s16
    %p18 = scmp.eq.s32.totalorder %s17, 0
    %s20 = sadd.s32 %s19, 1
    %s21 = scalar_select %p18, %s19, %s20
    %p24 = pneg %p18
    %p25 = scmp.eq.s32.totalorder %s9, 1
    %p26 = por %p24, %p25
    %p27 = scmp.ne.s32.totalorder %s19, %s22
    %p28 = scmp.eq.s32.totalorder %s9, 0
    %p29 = por %p27, %p28
    %p30 = scmp.ne.s32.totalorder %s19, %s22
    %p31 = scmp.eq.s32.totalorder %s14, 1
    %p32 = por %p30, %p31
    %p33 = scmp.ne.s32.totalorder %s22, %s23
    %p34 = scmp.eq.s32.totalorder %s14, 0
    %p35 = por %p33, %p34
    %p36 = scmp.ne.s32.totalorder %s22, %s23
    %p37 = scmp.eq.s32.totalorder %s15, 1
    %p38 = por %p36, %p37
    %p40 = scmp.ne.s32.totalorder %s23, %s39
    %p41 = scmp.eq.s32.totalorder %s15, 0
    %p42 = por %p40, %p41
    %s44 = sadd.s32 %s43, 1
    %p47 = scmp.eq.s32.totalorder %s9, 1
    %p48 = scmp.ne.s32.totalorder %s43, %s45
    %p49 = scmp.eq.s32.totalorder %s9, 0
    %p50 = por %p48, %p49
    %p51 = scmp.ne.s32.totalorder %s43, %s45
    %p52 = scmp.eq.s32.totalorder %s14, 1
    %p53 = por %p51, %p52
    %p54 = scmp.ne.s32.totalorder %s45, %s46
    %p55 = scmp.eq.s32.totalorder %s14, 0
    %p56 = por %p54, %p55
    %p57 = scmp.ne.s32.totalorder %s45, %s46
    %p58 = scmp.eq.s32.totalorder %s15, 1
    %p59 = por %p57, %p58
    %p61 = scmp.ne.s32.totalorder %s46, %s60
    %p62 = scmp.eq.s32.totalorder %s15, 0
    %p63 = por %p61, %p62
    %s65 = sadd.s32 %s64, 1
    %p68 = scmp.eq.s32.totalorder %s9, 1
    %p69 = scmp.ne.s32.totalorder %s64, %s66
    %p70 = scmp.eq.s32.totalorder %s9, 0
    %p71 = por %p69, %p70
    %p72 = scmp.ne.s32.totalorder %s64, %s66
    %p73 = scmp.eq.s32.totalorder %s14, 1
    %p74 = por %p72, %p73
    %p75 = scmp.ne.s32.totalorder %s66, %s67
    %p76 = scmp.eq.s32.totalorder %s14, 0
    %p77 = por %p75, %p76
    %p78 = scmp.ne.s32.totalorder %s66, %s67
    %p79 = scmp.eq.s32.totalorder %s15, 1
    %p80 = por %p78, %p79
    %p82 = scmp.ne.s32.totalorder %s67, %s81
    %p83 = scmp.eq.s32.totalorder %s15, 0
    %p84 = por %p82, %p83
    %s85 = ssub.s32 %s9, %s16
    %p86 = scmp.eq.s32.totalorder %s85, 0
    %s88 = sadd.s32 %s87, 1
    %s89 = scalar_select %p86, %s87, %s88
    %p92 = pneg %p86
    %p93 = scmp.eq.s32.totalorder %s9, 1
    %p94 = por %p92, %p93
    %p95 = scmp.ne.s32.totalorder %s87, %s90
    %p96 = scmp.eq.s32.totalorder %s9, 0
    %p97 = por %p95, %p96
    %p98 = scmp.ne.s32.totalorder %s87, %s90
    %p99 = scmp.eq.s32.totalorder %s14, 1
    %p100 = por %p98, %p99
    %p101 = scmp.ne.s32.totalorder %s90, %s91
    %p102 = scmp.eq.s32.totalorder %s14, 0
    %p103 = por %p101, %p102
    %p104 = scmp.ne.s32.totalorder %s90, %s91
    %p105 = scmp.eq.s32.totalorder %s15, 1
    %p106 = por %p104, %p105
    %p108 = scmp.ne.s32.totalorder %s91, %s107
    %p109 = scmp.eq.s32.totalorder %s15, 0
    %p110 = por %p108, %p109
    %p111 = scmp.le.s32.totalorder 1, %s9
    %p112 = scmp.lt.s32.totalorder %s9, 3
    %p113 = pnand %p111, %p112
    %p114 = pneg %p113
    // Predicated region
    $region9: #{_lambda_.3} parent=5 // pred_check
      _
    $region10: #{_lambda_.3} parent=5 // pred_check_branch
      %116 = sbr.rel (%p113) target = $region12
    $region11: #{_lambda_.3} parent=5 // pred_region
      %s117 = ssub.s32 %s9, 1
      // Predicated region
      $region13: #{_lambda_.3} parent=11 // pred_check
        %p118 = pneg %p56
      $region14: #{_lambda_.3} parent=11 // pred_check_branch
        %120 = sbr.rel (%p118) target = $region16
      $region15: #{_lambda_.3} parent=11 // pred_region
        _
      $region16: #{_lambda_.3} parent=11 // pred_fallthru
        _
      // Predicated region
      $region17: #{_lambda_.3} parent=11 // pred_check
        %p121 = pneg %p77
      $region18: #{_lambda_.3} parent=11 // pred_check_branch
        %123 = sbr.rel (%p121) target = $region20
      $region19: #{_lambda_.3} parent=11 // pred_region
        _
      $region20: #{_lambda_.3} parent=11 // pred_fallthru
        _
    $region12: #{_lambda_.3} parent=5 // pred_fallthru
      _
    %p124 = scmp.lt.s32.totalorder %s9, 2
    // Predicated region
    $region21: #{_lambda_.3} parent=5 // pred_check
      %p125 = pneg %p124
    $region22: #{_lambda_.3} parent=5 // pred_check_branch
      %127 = sbr.rel (%p125) target = $region24
    $region23: #{_lambda_.3} parent=5 // pred_region
      // Predicated region
      $region25: #{_lambda_.3} parent=23 // pred_check
        %p128 = pneg %p29
      $region26: #{_lambda_.3} parent=23 // pred_check_branch
        %130 = sbr.rel (%p128) target = $region28
      $region27: #{_lambda_.3} parent=23 // pred_region
        %s131 = smul.u32 16, %s9
        %p132 = scmp.lt.s32.totalorder %s131, 31
        %s133 = scalar_select %p132, %s131, 31
        %s134 = smul.addr %s133, 2
        %s135 = smul.addr %s134, 4
        %s136 = scalar_lea.vmem %s0, %s135
        %s137 = smul.u32 16, %s9
      $region28: #{_lambda_.3} parent=23 // pred_fallthru
        _
    $region24: #{_lambda_.3} parent=5 // pred_fallthru
      _
    %p138 = scmp.le.s32.totalorder 1, %s9
    %p139 = scmp.lt.s32.totalorder %s9, 3
    %p140 = pnand %p138, %p139
    %p141 = pneg %p140
    // Predicated region
    $region29: #{_lambda_.3} parent=5 // pred_check
      _
    $region30: #{_lambda_.3} parent=5 // pred_check_branch
      %143 = sbr.rel (%p140) target = $region32
    $region31: #{_lambda_.3} parent=5 // pred_region
      %s144 = ssub.s32 %s9, 1
      %s145 = smul.u32 16, %s14
      %p146 = scmp.lt.s32.totalorder %s145, 31
      %s147 = scalar_select %p146, %s145, 31
      %s148 = smul.addr %s147, 2
      %s149 = smul.addr %s148, 4
      %s150 = scalar_lea.vmem %s0, %s149
      %p151 = pneg %p35
      %p152 = pneg %p32
      %p153 = pneg %p56
      %p154 = pneg %p53
      %p155 = pneg %p77
      %p156 = pneg %p74
      %p157 = pneg %p103
      %p158 = pneg %p100
      %s159 = smul.u32 16, %s14
      %p160 = scmp.lt.s32.totalorder %s159, 31
      %s161 = scalar_select %p160, %s159, 31
      %s162 = smul.addr %s161, 2
      %s163 = smul.addr %s162, 4
      %s164 = scalar_lea.vmem %s3, %s163
      %s165 = smul.u32 16, %s14
      %p166 = scmp.lt.s32.totalorder %s165, 31
      %s167 = scalar_select %p166, %s165, 31
      %s168 = smul.addr %s167, 2
      %s169 = smul.addr %s168, 4
      %s170 = scalar_lea.vmem %s0, %s169
      %s171 = smul.u32 16, %s14
      %s172 = smul.u32 16, %s14
      %p173 = scmp.lt.s32.totalorder %s172, 31
      %s174 = scalar_select %p173, %s172, 31
      %s175 = smul.addr %s174, 2
      %s176 = smul.addr %s175, 4
      %s177 = scalar_lea.vmem %s3, %s176
      %s178 = smul.u32 16, %s14
      %v179 = vld [vmem:[%s170] sm:$0xff]
      %v180 = vld [vmem:[%s170 + $0x8] sm:$0xff]
      %v181 = vld [vmem:[%s170 + $0x10] sm:$0xff]
      %v182 = vld [vmem:[%s170 + $0x18] sm:$0xff]
      %v183 = vld [vmem:[%s170 + $0x20] sm:$0xff]
      %v184 = vld [vmem:[%s170 + $0x28] sm:$0xff]
      %v185 = vld [vmem:[%s170 + $0x30] sm:$0xff]
      %v186 = vld [vmem:[%s170 + $0x38] sm:$0xff]
      %v187 = vld [vmem:[%s170 + $0x40] sm:$0xff]
      %v188 = vld [vmem:[%s170 + $0x48] sm:$0xff]
      %v189 = vld [vmem:[%s170 + $0x50] sm:$0xff]
      %v190 = vld [vmem:[%s170 + $0x58] sm:$0xff]
      %v191 = vld [vmem:[%s170 + $0x60] sm:$0xff]
      %v192 = vld [vmem:[%s170 + $0x68] sm:$0xff]
      %v193 = vld [vmem:[%s170 + $0x70] sm:$0xff]
      %v194 = vld [vmem:[%s170 + $0x78] sm:$0xff]
      %v195 = vld [vmem:[%s1] sm:$0xff]
      %v196 = vld [vmem:[%s1 + $0x8] sm:$0xff]
      %v197 = vld [vmem:[%s1 + $0x10] sm:$0xff]
      %v198 = vld [vmem:[%s1 + $0x18] sm:$0xff]
      %v199 = vld [vmem:[%s1 + $0x20] sm:$0xff]
      %v200 = vld [vmem:[%s1 + $0x28] sm:$0xff]
      %v201 = vld [vmem:[%s1 + $0x30] sm:$0xff]
      %v202 = vld [vmem:[%s1 + $0x38] sm:$0xff]
      %v203 = vld [vmem:[%s1 + $0x40] sm:$0xff]
      %v204 = vld [vmem:[%s1 + $0x48] sm:$0xff]
      %v205 = vld [vmem:[%s1 + $0x50] sm:$0xff]
      %v206 = vld [vmem:[%s1 + $0x58] sm:$0xff]
      %v207 = vld [vmem:[%s1 + $0x60] sm:$0xff]
      %v208 = vld [vmem:[%s1 + $0x68] sm:$0xff]
      %v209 = vld [vmem:[%s1 + $0x70] sm:$0xff]
      %v210 = vld [vmem:[%s1 + $0x78] sm:$0xff]
      %v211 = vld [vmem:[%s1 + $0x80] sm:$0xff]
      %v212 = vld [vmem:[%s1 + $0x88] sm:$0xff]
      %v213 = vld [vmem:[%s1 + $0x90] sm:$0xff]
      %v214 = vld [vmem:[%s1 + $0x98] sm:$0xff]
      %v215 = vld [vmem:[%s1 + $0xa0] sm:$0xff]
      %v216 = vld [vmem:[%s1 + $0xa8] sm:$0xff]
      %v217 = vld [vmem:[%s1 + $0xb0] sm:$0xff]
      %v218 = vld [vmem:[%s1 + $0xb8] sm:$0xff]
      %v219 = vld [vmem:[%s1 + $0xc0] sm:$0xff]
      %v220 = vld [vmem:[%s1 + $0xc8] sm:$0xff]
      %v221 = vld [vmem:[%s1 + $0xd0] sm:$0xff]
      %v222 = vld [vmem:[%s1 + $0xd8] sm:$0xff]
      %v223 = vld [vmem:[%s1 + $0xe0] sm:$0xff]
      %v224 = vld [vmem:[%s1 + $0xe8] sm:$0xff]
      %v225 = vld [vmem:[%s1 + $0xf0] sm:$0xff]
      %v226 = vld [vmem:[%s1 + $0xf8] sm:$0xff]
      %v227 = vld [vmem:[%s2] sm:$0x3]
      %v229 = vlaneseq
      %v230 = vshrl.u32 %v229, 7
      %v231 = vsub.s32 0, %v230
      %v232 = vrot.slane %v227, %v231
      %v233 = vlaneseq
      %v234 = vshrl.u32 %v233, 7
      %v235 = vsub.s32 1, %v234
      %v236 = vrot.slane %v227, %v235
      %v255 = vunpack.c.l.b16 %v179
      %v256 = vunpack.c.h.b16 %v179
      %v257 = vunpack.c.l.b16 %v180
      %v258 = vunpack.c.h.b16 %v180
      %v259 = vunpack.c.l.b16 %v181
      %v260 = vunpack.c.h.b16 %v181
      %v261 = vunpack.c.l.b16 %v182
      %v262 = vunpack.c.h.b16 %v182
      %v263 = vunpack.c.l.b16 %v183
      %v264 = vunpack.c.h.b16 %v183
      %v265 = vunpack.c.l.b16 %v184
      %v266 = vunpack.c.h.b16 %v184
      %v267 = vunpack.c.l.b16 %v185
      %v268 = vunpack.c.h.b16 %v185
      %v269 = vunpack.c.l.b16 %v186
      %v270 = vunpack.c.h.b16 %v186
      %v271 = vunpack.c.l.b16 %v187
      %v272 = vunpack.c.h.b16 %v187
      %v273 = vunpack.c.l.b16 %v188
      %v274 = vunpack.c.h.b16 %v188
      %v275 = vunpack.c.l.b16 %v189
      %v276 = vunpack.c.h.b16 %v189
      %v277 = vunpack.c.l.b16 %v190
      %v278 = vunpack.c.h.b16 %v190
      %v279 = vunpack.c.l.b16 %v191
      %v280 = vunpack.c.h.b16 %v191
      %v281 = vunpack.c.l.b16 %v192
      %v282 = vunpack.c.h.b16 %v192
      %v283 = vunpack.c.l.b16 %v193
      %v284 = vunpack.c.h.b16 %v193
      %v285 = vunpack.c.l.b16 %v194
      %v286 = vunpack.c.h.b16 %v194
      %v287 = vpack.c.b16 %v257, %v255
      %v288 = vpack.c.b16 %v258, %v256
      %v289 = vpack.c.b16 %v261, %v259
      %v290 = vpack.c.b16 %v262, %v260
      %v291 = vpack.c.b16 %v265, %v263
      %v292 = vpack.c.b16 %v266, %v264
      %v293 = vpack.c.b16 %v269, %v267
      %v294 = vpack.c.b16 %v270, %v268
      %v295 = vpack.c.b16 %v273, %v271
      %v296 = vpack.c.b16 %v274, %v272
      %v297 = vpack.c.b16 %v277, %v275
      %v298 = vpack.c.b16 %v278, %v276
      %v299 = vpack.c.b16 %v281, %v279
      %v300 = vpack.c.b16 %v282, %v280
      %v301 = vpack.c.b16 %v285, %v283
      %v302 = vpack.c.b16 %v286, %v284
      %v351 = vunpack.c.l.b16 %v195
      %v352 = vunpack.c.h.b16 %v195
      %v353 = vunpack.c.l.b16 %v196
      %v354 = vunpack.c.h.b16 %v196
      %v355 = vunpack.c.l.b16 %v197
      %v356 = vunpack.c.h.b16 %v197
      %v357 = vunpack.c.l.b16 %v198
      %v358 = vunpack.c.h.b16 %v198
      %v359 = vunpack.c.l.b16 %v199
      %v360 = vunpack.c.h.b16 %v199
      %v361 = vunpack.c.l.b16 %v200
      %v362 = vunpack.c.h.b16 %v200
      %v363 = vunpack.c.l.b16 %v201
      %v364 = vunpack.c.h.b16 %v201
      %v365 = vunpack.c.l.b16 %v202
      %v366 = vunpack.c.h.b16 %v202
      %v367 = vunpack.c.l.b16 %v203
      %v368 = vunpack.c.h.b16 %v203
      %v369 = vunpack.c.l.b16 %v204
      %v370 = vunpack.c.h.b16 %v204
      %v371 = vunpack.c.l.b16 %v205
      %v372 = vunpack.c.h.b16 %v205
      %v373 = vunpack.c.l.b16 %v206
      %v374 = vunpack.c.h.b16 %v206
      %v375 = vunpack.c.l.b16 %v207
      %v376 = vunpack.c.h.b16 %v207
      %v377 = vunpack.c.l.b16 %v208
      %v378 = vunpack.c.h.b16 %v208
      %v379 = vunpack.c.l.b16 %v209
      %v380 = vunpack.c.h.b16 %v209
      %v381 = vunpack.c.l.b16 %v210
      %v382 = vunpack.c.h.b16 %v210
      %v383 = vunpack.c.l.b16 %v211
      %v384 = vunpack.c.h.b16 %v211
      %v385 = vunpack.c.l.b16 %v212
      %v386 = vunpack.c.h.b16 %v212
      %v387 = vunpack.c.l.b16 %v213
      %v388 = vunpack.c.h.b16 %v213
      %v389 = vunpack.c.l.b16 %v214
      %v390 = vunpack.c.h.b16 %v214
      %v391 = vunpack.c.l.b16 %v215
      %v392 = vunpack.c.h.b16 %v215
      %v393 = vunpack.c.l.b16 %v216
      %v394 = vunpack.c.h.b16 %v216
      %v395 = vunpack.c.l.b16 %v217
      %v396 = vunpack.c.h.b16 %v217
      %v397 = vunpack.c.l.b16 %v218
      %v398 = vunpack.c.h.b16 %v218
      %v399 = vunpack.c.l.b16 %v219
      %v400 = vunpack.c.h.b16 %v219
      %v401 = vunpack.c.l.b16 %v220
      %v402 = vunpack.c.h.b16 %v220
      %v403 = vunpack.c.l.b16 %v221
      %v404 = vunpack.c.h.b16 %v221
      %v405 = vunpack.c.l.b16 %v222
      %v406 = vunpack.c.h.b16 %v222
      %v407 = vunpack.c.l.b16 %v223
      %v408 = vunpack.c.h.b16 %v223
      %v409 = vunpack.c.l.b16 %v224
      %v410 = vunpack.c.h.b16 %v224
      %v411 = vunpack.c.l.b16 %v225
      %v412 = vunpack.c.h.b16 %v225
      %v413 = vunpack.c.l.b16 %v226
      %v414 = vunpack.c.h.b16 %v226
      %v415 = vpack.c.b16 %v353, %v351
      %v416 = vpack.c.b16 %v354, %v352
      %v417 = vpack.c.b16 %v357, %v355
      %v418 = vpack.c.b16 %v358, %v356
      %v419 = vpack.c.b16 %v361, %v359
      %v420 = vpack.c.b16 %v362, %v360
      %v421 = vpack.c.b16 %v365, %v363
      %v422 = vpack.c.b16 %v366, %v364
      %v423 = vpack.c.b16 %v369, %v367
      %v424 = vpack.c.b16 %v370, %v368
      %v425 = vpack.c.b16 %v373, %v371
      %v426 = vpack.c.b16 %v374, %v372
      %v427 = vpack.c.b16 %v377, %v375
      %v428 = vpack.c.b16 %v378, %v376
      %v429 = vpack.c.b16 %v381, %v379
      %v430 = vpack.c.b16 %v382, %v380
      %v431 = vpack.c.b16 %v385, %v383
      %v432 = vpack.c.b16 %v386, %v384
      %v433 = vpack.c.b16 %v389, %v387
      %v434 = vpack.c.b16 %v390, %v388
      %v435 = vpack.c.b16 %v393, %v391
      %v436 = vpack.c.b16 %v394, %v392
      %v437 = vpack.c.b16 %v397, %v395
      %v438 = vpack.c.b16 %v398, %v396
      %v439 = vpack.c.b16 %v401, %v399
      %v440 = vpack.c.b16 %v402, %v400
      %v441 = vpack.c.b16 %v405, %v403
      %v442 = vpack.c.b16 %v406, %v404
      %v443 = vpack.c.b16 %v409, %v407
      %v444 = vpack.c.b16 %v410, %v408
      %v445 = vpack.c.b16 %v413, %v411
      %v446 = vpack.c.b16 %v414, %v412
      %479 = vmatprep.subr.bf16.mxu0 %v430
      %480 = vmatpush1.bf16.msra.mxu0 %v429
      %481 = vmatprep.subr.bf16.mxu0 %v428
      %482 = vmatpush1.bf16.msra.mxu0 %v427
      %483 = vmatprep.subr.bf16.mxu0 %v426
      %484 = vmatpush1.bf16.msra.mxu0 %v425
      %485 = vmatprep.subr.bf16.mxu0 %v424
      %486 = vmatpush1.bf16.msra.mxu0 %v423
      %487 = vmatprep.subr.bf16.mxu0 %v422
      %488 = vmatpush1.bf16.msra.mxu0 %v421
      %489 = vmatprep.subr.bf16.mxu0 %v420
      %490 = vmatpush1.bf16.msra.mxu0 %v419
      %491 = vmatprep.subr.bf16.mxu0 %v418
      %492 = vmatpush1.bf16.msra.mxu0 %v417
      %493 = vmatprep.subr.bf16.mxu0 %v416
      %494 = vmatpush1.bf16.msra.mxu0 %v415
      %495 = vmatprep.subr.bf16.mxu0 %v446
      %496 = vmatpush2.bf16.msra.mxu0 %v445
      %497 = vmatprep.subr.bf16.mxu0 %v444
      %498 = vmatpush2.bf16.msra.mxu0 %v443
      %499 = vmatprep.subr.bf16.mxu0 %v442
      %500 = vmatpush2.bf16.msra.mxu0 %v441
      %501 = vmatprep.subr.bf16.mxu0 %v440
      %502 = vmatpush2.bf16.msra.mxu0 %v439
      %503 = vmatprep.subr.bf16.mxu0 %v438
      %504 = vmatpush2.bf16.msra.mxu0 %v437
      %505 = vmatprep.subr.bf16.mxu0 %v436
      %506 = vmatpush2.bf16.msra.mxu0 %v435
      %507 = vmatprep.subr.bf16.mxu0 %v434
      %508 = vmatpush2.bf16.msra.mxu0 %v433
      %509 = vmatprep.subr.bf16.mxu0 %v432
      %510 = vmatpush2.bf16.msra.mxu0 %v431
      %511 = vmatprep.mubr.bf16.mxu0 %v288
      %512 = vmatmul.mubr.bf16.gmra.mxu0 %v287
      %v513 = vpop.f32.mrf.mxu0
      %v514 = vadd.f32 %v232, %v513
      %v515 = vpop.f32.mrf.mxu0
      %v516 = vadd.f32 %v236, %v515
      %v517 = vpop.f32.mrf.mxu0
      %v518 = vadd.f32 %v232, %v517
      %v519 = vpop.f32.mrf.mxu0
      %v520 = vadd.f32 %v236, %v519
      %521 = vmatprep.mubr.bf16.mxu0 %v290
      %522 = vmatmul.mubr.bf16.gmra.mxu0 %v289
      %v523 = vpop.f32.mrf.mxu0
      %v524 = vadd.f32 %v232, %v523
      %v525 = vpop.f32.mrf.mxu0
      %v526 = vadd.f32 %v236, %v525
      %v527 = vpop.f32.mrf.mxu0
      %v528 = vadd.f32 %v232, %v527
      %v529 = vpop.f32.mrf.mxu0
      %v530 = vadd.f32 %v236, %v529
      %531 = vmatprep.mubr.bf16.mxu0 %v292
      %532 = vmatmul.mubr.bf16.gmra.mxu0 %v291
      %v533 = vpop.f32.mrf.mxu0
      %v534 = vadd.f32 %v232, %v533
      %v535 = vpop.f32.mrf.mxu0
      %v536 = vadd.f32 %v236, %v535
      %v537 = vpop.f32.mrf.mxu0
      %v538 = vadd.f32 %v232, %v537
      %v539 = vpop.f32.mrf.mxu0
      %v540 = vadd.f32 %v236, %v539
      %541 = vmatprep.mubr.bf16.mxu0 %v294
      %542 = vmatmul.mubr.bf16.gmra.mxu0 %v293
      %v543 = vpop.f32.mrf.mxu0
      %v544 = vadd.f32 %v232, %v543
      %v545 = vpop.f32.mrf.mxu0
      %v546 = vadd.f32 %v236, %v545
      %v547 = vpop.f32.mrf.mxu0
      %v548 = vadd.f32 %v232, %v547
      %v549 = vpop.f32.mrf.mxu0
      %v550 = vadd.f32 %v236, %v549
      %551 = vmatprep.mubr.bf16.mxu0 %v296
      %552 = vmatmul.mubr.bf16.gmra.mxu0 %v295
      %v553 = vpop.f32.mrf.mxu0
      %v554 = vadd.f32 %v232, %v553
      %v555 = vpop.f32.mrf.mxu0
      %v556 = vadd.f32 %v236, %v555
      %v557 = vpop.f32.mrf.mxu0
      %v558 = vadd.f32 %v232, %v557
      %v559 = vpop.f32.mrf.mxu0
      %v560 = vadd.f32 %v236, %v559
      %561 = vmatprep.mubr.bf16.mxu0 %v298
      %562 = vmatmul.mubr.bf16.gmra.mxu0 %v297
      %v563 = vpop.f32.mrf.mxu0
      %v564 = vadd.f32 %v232, %v563
      %v565 = vpop.f32.mrf.mxu0
      %v566 = vadd.f32 %v236, %v565
      %v567 = vpop.f32.mrf.mxu0
      %v568 = vadd.f32 %v232, %v567
      %v569 = vpop.f32.mrf.mxu0
      %v570 = vadd.f32 %v236, %v569
      %571 = vmatprep.mubr.bf16.mxu0 %v300
      %572 = vmatmul.mubr.bf16.gmra.mxu0 %v299
      %v573 = vpop.f32.mrf.mxu0
      %v574 = vadd.f32 %v232, %v573
      %v575 = vpop.f32.mrf.mxu0
      %v576 = vadd.f32 %v236, %v575
      %v577 = vpop.f32.mrf.mxu0
      %v578 = vadd.f32 %v232, %v577
      %v579 = vpop.f32.mrf.mxu0
      %v580 = vadd.f32 %v236, %v579
      %581 = vmatprep.mubr.bf16.mxu0 %v302
      %582 = vmatmul.mubr.bf16.gmra.mxu0 %v301
      %v583 = vpop.f32.mrf.mxu0
      %v584 = vadd.f32 %v232, %v583
      %v585 = vpop.f32.mrf.mxu0
      %v586 = vadd.f32 %v236, %v585
      %v587 = vpop.f32.mrf.mxu0
      %v588 = vadd.f32 %v232, %v587
      %v589 = vpop.f32.mrf.mxu0
      %v590 = vadd.f32 %v236, %v589
      %591 = vdwg.mxu0
      %v592 = vmax.f32 %v514, 0.0
      %v593 = vmax.f32 %v516, 0.0
      %v594 = vmax.f32 %v518, 0.0
      %v595 = vmax.f32 %v520, 0.0
      %v596 = vmax.f32 %v524, 0.0
      %v597 = vmax.f32 %v526, 0.0
      %v598 = vmax.f32 %v528, 0.0
      %v599 = vmax.f32 %v530, 0.0
      %v600 = vmax.f32 %v534, 0.0
      %v601 = vmax.f32 %v536, 0.0
      %v602 = vmax.f32 %v538, 0.0
      %v603 = vmax.f32 %v540, 0.0
      %v604 = vmax.f32 %v544, 0.0
      %v605 = vmax.f32 %v546, 0.0
      %v606 = vmax.f32 %v548, 0.0
      %v607 = vmax.f32 %v550, 0.0
      %v608 = vmax.f32 %v554, 0.0
      %v609 = vmax.f32 %v556, 0.0
      %v610 = vmax.f32 %v558, 0.0
      %v611 = vmax.f32 %v560, 0.0
      %v612 = vmax.f32 %v564, 0.0
      %v613 = vmax.f32 %v566, 0.0
      %v614 = vmax.f32 %v568, 0.0
      %v615 = vmax.f32 %v570, 0.0
      %v616 = vmax.f32 %v574, 0.0
      %v617 = vmax.f32 %v576, 0.0
      %v618 = vmax.f32 %v578, 0.0
      %v619 = vmax.f32 %v580, 0.0
      %v620 = vmax.f32 %v584, 0.0
      %v621 = vmax.f32 %v586, 0.0
      %v622 = vmax.f32 %v588, 0.0
      %v623 = vmax.f32 %v590, 0.0
      %v624 = vpack.c.bf16 %v594, %v592
      %v625 = vpack.c.bf16 %v595, %v593
      %v626 = vpack.c.bf16 %v598, %v596
      %v627 = vpack.c.bf16 %v599, %v597
      %v628 = vpack.c.bf16 %v602, %v600
      %v629 = vpack.c.bf16 %v603, %v601
      %v630 = vpack.c.bf16 %v606, %v604
      %v631 = vpack.c.bf16 %v607, %v605
      %v632 = vpack.c.bf16 %v610, %v608
      %v633 = vpack.c.bf16 %v611, %v609
      %v634 = vpack.c.bf16 %v614, %v612
      %v635 = vpack.c.bf16 %v615, %v613
      %v636 = vpack.c.bf16 %v618, %v616
      %v637 = vpack.c.bf16 %v619, %v617
      %v638 = vpack.c.bf16 %v622, %v620
      %v639 = vpack.c.bf16 %v623, %v621
      %v656 = vunpack.c.l.b16 %v624
      %v657 = vunpack.c.l.b16 %v625
      %v658 = vunpack.c.h.b16 %v624
      %v659 = vunpack.c.h.b16 %v625
      %v660 = vunpack.c.l.b16 %v626
      %v661 = vunpack.c.l.b16 %v627
      %v662 = vunpack.c.h.b16 %v626
      %v663 = vunpack.c.h.b16 %v627
      %v664 = vunpack.c.l.b16 %v628
      %v665 = vunpack.c.l.b16 %v629
      %v666 = vunpack.c.h.b16 %v628
      %v667 = vunpack.c.h.b16 %v629
      %v668 = vunpack.c.l.b16 %v630
      %v669 = vunpack.c.l.b16 %v631
      %v670 = vunpack.c.h.b16 %v630
      %v671 = vunpack.c.h.b16 %v631
      %v672 = vunpack.c.l.b16 %v632
      %v673 = vunpack.c.l.b16 %v633
      %v674 = vunpack.c.h.b16 %v632
      %v675 = vunpack.c.h.b16 %v633
      %v676 = vunpack.c.l.b16 %v634
      %v677 = vunpack.c.l.b16 %v635
      %v678 = vunpack.c.h.b16 %v634
      %v679 = vunpack.c.h.b16 %v635
      %v680 = vunpack.c.l.b16 %v636
      %v681 = vunpack.c.l.b16 %v637
      %v682 = vunpack.c.h.b16 %v636
      %v683 = vunpack.c.h.b16 %v637
      %v684 = vunpack.c.l.b16 %v638
      %v685 = vunpack.c.l.b16 %v639
      %v686 = vunpack.c.h.b16 %v638
      %v687 = vunpack.c.h.b16 %v639
      %v688 = vpack.c.b16 %v657, %v656
      %v689 = vpack.c.b16 %v659, %v658
      %v690 = vpack.c.b16 %v661, %v660
      %v691 = vpack.c.b16 %v663, %v662
      %v692 = vpack.c.b16 %v665, %v664
      %v693 = vpack.c.b16 %v667, %v666
      %v694 = vpack.c.b16 %v669, %v668
      %v695 = vpack.c.b16 %v671, %v670
      %v696 = vpack.c.b16 %v673, %v672
      %v697 = vpack.c.b16 %v675, %v674
      %v698 = vpack.c.b16 %v677, %v676
      %v699 = vpack.c.b16 %v679, %v678
      %v700 = vpack.c.b16 %v681, %v680
      %v701 = vpack.c.b16 %v683, %v682
      %v702 = vpack.c.b16 %v685, %v684
      %v703 = vpack.c.b16 %v687, %v686
      %720 = vst [vmem:[%s177] sm:$0xff] %v688
      %721 = vst [vmem:[%s177 + $0x8] sm:$0xff] %v689
      %722 = vst [vmem:[%s177 + $0x10] sm:$0xff] %v690
      %723 = vst [vmem:[%s177 + $0x18] sm:$0xff] %v691
      %724 = vst [vmem:[%s177 + $0x20] sm:$0xff] %v692
      %725 = vst [vmem:[%s177 + $0x28] sm:$0xff] %v693
      %726 = vst [vmem:[%s177 + $0x30] sm:$0xff] %v694
      %727 = vst [vmem:[%s177 + $0x38] sm:$0xff] %v695
      %728 = vst [vmem:[%s177 + $0x40] sm:$0xff] %v696
      %729 = vst [vmem:[%s177 + $0x48] sm:$0xff] %v697
      %730 = vst [vmem:[%s177 + $0x50] sm:$0xff] %v698
      %731 = vst [vmem:[%s177 + $0x58] sm:$0xff] %v699
      %732 = vst [vmem:[%s177 + $0x60] sm:$0xff] %v700
      %733 = vst [vmem:[%s177 + $0x68] sm:$0xff] %v701
      %734 = vst [vmem:[%s177 + $0x70] sm:$0xff] %v702
      %735 = vst [vmem:[%s177 + $0x78] sm:$0xff] %v703
      %s736 = smul.u32 16, %s14
      %p737 = scmp.lt.s32.totalorder %s736, 31
      %s738 = scalar_select %p737, %s736, 31
      %s739 = smul.addr %s738, 2
      %s740 = smul.addr %s739, 4
      %s741 = scalar_lea.vmem %s3, %s740
      // Predicated region
      $region33: #{_lambda_.3} parent=31 // pred_check
        %p742 = pneg %p100
      $region34: #{_lambda_.3} parent=31 // pred_check_branch
        %744 = sbr.rel (%p742) target = $region36
      $region35: #{_lambda_.3} parent=31 // pred_region
        %s745 = smul.u32 16, %s14
      $region36: #{_lambda_.3} parent=31 // pred_fallthru
        _
    $region32: #{_lambda_.3} parent=5 // pred_fallthru
      _
    %p746 = scmp.le.s32.totalorder 2, %s9
    // Predicated region
    $region37: #{_lambda_.3} parent=5 // pred_check
      %p747 = pneg %p746
    $region38: #{_lambda_.3} parent=5 // pred_check_branch
      %749 = sbr.rel (%p747) target = $region40
    $region39: #{_lambda_.3} parent=5 // pred_region
      %s750 = ssub.s32 %s9, 2
      // Predicated region
      $region41: #{_lambda_.3} parent=39 // pred_check
        %p751 = pneg %p106
      $region42: #{_lambda_.3} parent=39 // pred_check_branch
        %753 = sbr.rel (%p751) target = $region44
      $region43: #{_lambda_.3} parent=39 // pred_region
        %s754 = smul.u32 16, %s15
        %p755 = scmp.lt.s32.totalorder %s754, 31
        %s756 = scalar_select %p755, %s754, 31
        %s757 = smul.addr %s756, 2
        %s758 = smul.addr %s757, 4
        %s759 = scalar_lea.vmem %s3, %s758
      $region44: #{_lambda_.3} parent=39 // pred_fallthru
        _
    $region40: #{_lambda_.3} parent=5 // pred_fallthru
      _
  $region6: #{_lambda_.3} parent=0 // loop_footer
    %s13 = sadd.s32 1, %s9
  $region7: #{_lambda_.3} parent=0 // loop_footer_branch
    %8 = sbr.rel target = $region3
  $region8: #{_lambda_.3} parent=0 // loop_exit
    _

// kernel: _lambda_.5
$region0: #{_lambda_.5}
  #allocation0 [shape = 'u32[]', space=smem, size = 0x4, offset = 0x4, fixed_abs, tag = 'smem constant byte address 0x4 - core index']
  #allocation1 [shape = 'u32[144,128]{1,0:T(1,128)}', space=vmem, size = 0x12000, scoped, tag = 'internal scratch']
  %s0 = inlined_call_operand.vmem [shape: f32[2,8,128], index: 0, kind: input, shape index: {}]
  %s1 = inlined_call_operand.vmem [shape: f32[8,160,128], index: 1, kind: input, shape index: {}]
  %s2 = inlined_call_operand.vmem [shape: f32[160,128], index: 2, kind: input, shape index: {}]
  %s3 = inlined_call_operand.vmem [shape: f32[2,2,10,128], index: 3, kind: output, shape index: {0}]
  %s4 = inlined_call_operand.vmem [shape: f32[2,2,10,16], index: 4, kind: output, shape index: {1}]
  %5 = xla_tuple %s3, %s4
  %s6 = sld [smem:[#allocation0]]
  $region30: #{_lambda_.5} parent=0
    _
  %s8 = ssub.s32 1, %s6
  %s9 = scalar_select 0, %s8, %s6
  // Predicated region
  $region2: #{_lambda_.5} parent=0 // pred_check
    _
  $region3: #{_lambda_.5} parent=0 // pred_check_branch
    %11 = sbr.rel (0) target = $region5
  $region4: #{_lambda_.5} parent=0 // pred_region
    _
  $region5: #{_lambda_.5} parent=0 // pred_fallthru
    _
  // Predicated region
  $region6: #{_lambda_.5} parent=0 // pred_check
    _
  $region7: #{_lambda_.5} parent=0 // pred_check_branch
    %13 = sbr.rel (0) target = $region9
  $region8: #{_lambda_.5} parent=0 // pred_region
    _
  $region9: #{_lambda_.5} parent=0 // pred_fallthru
    _
  // Predicated region
  $region10: #{_lambda_.5} parent=0 // pred_check
    _
  $region11: #{_lambda_.5} parent=0 // pred_check_branch
    %15 = sbr.rel (0) target = $region13
  $region12: #{_lambda_.5} parent=0 // pred_region
    _
  $region13: #{_lambda_.5} parent=0 // pred_fallthru
    _
  %v16 = vld [vmem:[%s0] sm:$0xff]
  %v17 = vld [vmem:[%s0 + $0x8] sm:$0xff]
  %v18 = vld [vmem:[%s2] sm:$0xff]
  %v19 = vld [vmem:[%s2 + $0x8] sm:$0xff]
  %v20 = vld [vmem:[%s2 + $0x10] sm:$0xff]
  %v21 = vld [vmem:[%s2 + $0x18] sm:$0xff]
  %v22 = vld [vmem:[%s2 + $0x20] sm:$0xff]
  %v23 = vld [vmem:[%s2 + $0x28] sm:$0xff]
  %v24 = vld [vmem:[%s2 + $0x30] sm:$0xff]
  %v25 = vld [vmem:[%s2 + $0x38] sm:$0xff]
  %v26 = vld [vmem:[%s2 + $0x40] sm:$0xff]
  %v27 = vld [vmem:[%s2 + $0x48] sm:$0xff]
  %v28 = vld [vmem:[%s2 + $0x50] sm:$0xff]
  %v29 = vld [vmem:[%s2 + $0x58] sm:$0xff]
  %v30 = vld [vmem:[%s2 + $0x60] sm:$0xff]
  %v31 = vld [vmem:[%s2 + $0x68] sm:$0xff]
  %v32 = vld [vmem:[%s2 + $0x70] sm:$0xff]
  %v33 = vld [vmem:[%s2 + $0x78] sm:$0xff]
  %v34 = vld [vmem:[%s2 + $0x80] sm:$0xff]
  %v35 = vld [vmem:[%s2 + $0x88] sm:$0xff]
  %v36 = vld [vmem:[%s2 + $0x90] sm:$0xff]
  %v37 = vld [vmem:[%s2 + $0x98] sm:$0xff]
  %v38 = vld [vmem:[%s1] sm:$0xff]
  %v39 = vld [vmem:[%s1 + $0x8] sm:$0xff]
  %v40 = vld [vmem:[%s1 + $0x10] sm:$0xff]
  %v41 = vld [vmem:[%s1 + $0x18] sm:$0xff]
  %v42 = vld [vmem:[%s1 + $0x20] sm:$0xff]
  %v43 = vld [vmem:[%s1 + $0x28] sm:$0xff]
  %v44 = vld [vmem:[%s1 + $0x30] sm:$0xff]
  %v45 = vld [vmem:[%s1 + $0x38] sm:$0xff]
  %v46 = vld [vmem:[%s1 + $0x40] sm:$0xff]
  %v47 = vld [vmem:[%s1 + $0x48] sm:$0xff]
  %v48 = vld [vmem:[%s1 + $0x50] sm:$0xff]
  %v49 = vld [vmem:[%s1 + $0x58] sm:$0xff]
  %v50 = vld [vmem:[%s1 + $0x60] sm:$0xff]
  %v51 = vld [vmem:[%s1 + $0x68] sm:$0xff]
  %v52 = vld [vmem:[%s1 + $0x70] sm:$0xff]
  %v53 = vld [vmem:[%s1 + $0x78] sm:$0xff]
  %v54 = vld [vmem:[%s1 + $0x80] sm:$0xff]
  %v55 = vld [vmem:[%s1 + $0x88] sm:$0xff]
  %v56 = vld [vmem:[%s1 + $0x90] sm:$0xff]
  %v57 = vld [vmem:[%s1 + $0x98] sm:$0xff]
  %v58 = vlaneseq
  %v59 = vshrl.u32 %v58, 7
  %v60 = vsub.s32 0, %v59
  %v61 = vrot.slane %v16, %v60
  %v62 = vlaneseq
  %v63 = vshrl.u32 %v62, 7
  %v64 = vsub.s32 0, %v63
  %v65 = vrot.slane %v17, %v64
  %v66 = vmul.f32 %v38, %v61
  %v67 = vmul.f32 %v39, %v61
  %v68 = vmul.f32 %v40, %v61
  %v69 = vmul.f32 %v41, %v61
  %v70 = vmul.f32 %v42, %v61
  %v71 = vmul.f32 %v43, %v61
  %v72 = vmul.f32 %v44, %v61
  %v73 = vmul.f32 %v45, %v61
  %v74 = vmul.f32 %v46, %v61
  %v75 = vmul.f32 %v47, %v61
  %v76 = vmul.f32 %v48, %v61
  %v77 = vmul.f32 %v49, %v61
  %v78 = vmul.f32 %v50, %v61
  %v79 = vmul.f32 %v51, %v61
  %v80 = vmul.f32 %v52, %v61
  %v81 = vmul.f32 %v53, %v61
  %v82 = vmul.f32 %v54, %v61
  %v83 = vmul.f32 %v55, %v61
  %v84 = vmul.f32 %v56, %v61
  %v85 = vmul.f32 %v57, %v61
  %v86 = vmul.f32 %v38, %v65
  %v87 = vmul.f32 %v39, %v65
  %v88 = vmul.f32 %v40, %v65
  %v89 = vmul.f32 %v41, %v65
  %v90 = vmul.f32 %v42, %v65
  %v91 = vmul.f32 %v43, %v65
  %v92 = vmul.f32 %v44, %v65
  %v93 = vmul.f32 %v45, %v65
  %v94 = vmul.f32 %v46, %v65
  %v95 = vmul.f32 %v47, %v65
  %v96 = vmul.f32 %v48, %v65
  %v97 = vmul.f32 %v49, %v65
  %v98 = vmul.f32 %v50, %v65
  %v99 = vmul.f32 %v51, %v65
  %v100 = vmul.f32 %v52, %v65
  %v101 = vmul.f32 %v53, %v65
  %v102 = vmul.f32 %v54, %v65
  %v103 = vmul.f32 %v55, %v65
  %v104 = vmul.f32 %v56, %v65
  %v105 = vmul.f32 %v57, %v65
  %v106 = vadd.f32 %v18, %v66
  %v107 = vadd.f32 %v19, %v67
  %v108 = vadd.f32 %v20, %v68
  %v109 = vadd.f32 %v21, %v69
  %v110 = vadd.f32 %v22, %v70
  %v111 = vadd.f32 %v23, %v71
  %v112 = vadd.f32 %v24, %v72
  %v113 = vadd.f32 %v25, %v73
  %v114 = vadd.f32 %v26, %v74
  %v115 = vadd.f32 %v27, %v75
  %v116 = vadd.f32 %v28, %v76
  %v117 = vadd.f32 %v29, %v77
  %v118 = vadd.f32 %v30, %v78
  %v119 = vadd.f32 %v31, %v79
  %v120 = vadd.f32 %v32, %v80
  %v121 = vadd.f32 %v33, %v81
  %v122 = vadd.f32 %v34, %v82
  %v123 = vadd.f32 %v35, %v83
  %v124 = vadd.f32 %v36, %v84
  %v125 = vadd.f32 %v37, %v85
  %v126 = vadd.f32 %v18, %v86
  %v127 = vadd.f32 %v19, %v87
  %v128 = vadd.f32 %v20, %v88
  %v129 = vadd.f32 %v21, %v89
  %v130 = vadd.f32 %v22, %v90
  %v131 = vadd.f32 %v23, %v91
  %v132 = vadd.f32 %v24, %v92
  %v133 = vadd.f32 %v25, %v93
  %v134 = vadd.f32 %v26, %v94
  %v135 = vadd.f32 %v27, %v95
  %v136 = vadd.f32 %v28, %v96
  %v137 = vadd.f32 %v29, %v97
  %v138 = vadd.f32 %v30, %v98
  %v139 = vadd.f32 %v31, %v99
  %v140 = vadd.f32 %v32, %v100
  %v141 = vadd.f32 %v33, %v101
  %v142 = vadd.f32 %v34, %v102
  %v143 = vadd.f32 %v35, %v103
  %v144 = vadd.f32 %v36, %v104
  %v145 = vadd.f32 %v37, %v105
  %s146 = scalar_lea.vmem %s1, 160
  %v147 = vld [vmem:[%s146] sm:$0xff]
  %v148 = vld [vmem:[%s146 + $0x8] sm:$0xff]
  %v149 = vld [vmem:[%s146 + $0x10] sm:$0xff]
  %v150 = vld [vmem:[%s146 + $0x18] sm:$0xff]
  %v151 = vld [vmem:[%s146 + $0x20] sm:$0xff]
  %v152 = vld [vmem:[%s146 + $0x28] sm:$0xff]
  %v153 = vld [vmem:[%s146 + $0x30] sm:$0xff]
  %v154 = vld [vmem:[%s146 + $0x38] sm:$0xff]
  %v155 = vld [vmem:[%s146 + $0x40] sm:$0xff]
  %v156 = vld [vmem:[%s146 + $0x48] sm:$0xff]
  %v157 = vld [vmem:[%s146 + $0x50] sm:$0xff]
  %v158 = vld [vmem:[%s146 + $0x58] sm:$0xff]
  %v159 = vld [vmem:[%s146 + $0x60] sm:$0xff]
  %v160 = vld [vmem:[%s146 + $0x68] sm:$0xff]
  %v161 = vld [vmem:[%s146 + $0x70] sm:$0xff]
  %v162 = vld [vmem:[%s146 + $0x78] sm:$0xff]
  %v163 = vld [vmem:[%s146 + $0x80] sm:$0xff]
  %v164 = vld [vmem:[%s146 + $0x88] sm:$0xff]
  %v165 = vld [vmem:[%s146 + $0x90] sm:$0xff]
  %v166 = vld [vmem:[%s146 + $0x98] sm:$0xff]
  %v167 = vlaneseq
  %v168 = vshrl.u32 %v167, 7
  %v169 = vsub.s32 1, %v168
  %v170 = vrot.slane %v16, %v169
  %v171 = vlaneseq
  %v172 = vshrl.u32 %v171, 7
  %v173 = vsub.s32 1, %v172
  %v174 = vrot.slane %v17, %v173
  %v175 = vmul.f32 %v147, %v170
  %v176 = vmul.f32 %v148, %v170
  %v177 = vmul.f32 %v149, %v170
  %v178 = vmul.f32 %v150, %v170
  %v179 = vmul.f32 %v151, %v170
  %v180 = vmul.f32 %v152, %v170
  %v181 = vmul.f32 %v153, %v170
  %v182 = vmul.f32 %v154, %v170
  %v183 = vmul.f32 %v155, %v170
  %v184 = vmul.f32 %v156, %v170
  %v185 = vmul.f32 %v157, %v170
  %v186 = vmul.f32 %v158, %v170
  %v187 = vmul.f32 %v159, %v170
  %v188 = vmul.f32 %v160, %v170
  %v189 = vmul.f32 %v161, %v170
  %v190 = vmul.f32 %v162, %v170
  %v191 = vmul.f32 %v163, %v170
  %v192 = vmul.f32 %v164, %v170
  %v193 = vmul.f32 %v165, %v170
  %v194 = vmul.f32 %v166, %v170
  %v195 = vmul.f32 %v147, %v174
  %v196 = vmul.f32 %v148, %v174
  %v197 = vmul.f32 %v149, %v174
  %v198 = vmul.f32 %v150, %v174
  %v199 = vmul.f32 %v151, %v174
  %v200 = vmul.f32 %v152, %v174
  %v201 = vmul.f32 %v153, %v174
  %v202 = vmul.f32 %v154, %v174
  %v203 = vmul.f32 %v155, %v174
  %v204 = vmul.f32 %v156, %v174
  %v205 = vmul.f32 %v157, %v174
  %v206 = vmul.f32 %v158, %v174
  %v207 = vmul.f32 %v159, %v174
  %v208 = vmul.f32 %v160, %v174
  %v209 = vmul.f32 %v161, %v174
  %v210 = vmul.f32 %v162, %v174
  %v211 = vmul.f32 %v163, %v174
  %v212 = vmul.f32 %v164, %v174
  %v213 = vmul.f32 %v165, %v174
  %v214 = vmul.f32 %v166, %v174
  %v215 = vadd.f32 %v106, %v175
  %v216 = vadd.f32 %v107, %v176
  %v217 = vadd.f32 %v108, %v177
  %v218 = vadd.f32 %v109, %v178
  %v219 = vadd.f32 %v110, %v179
  %v220 = vadd.f32 %v111, %v180
  %v221 = vadd.f32 %v112, %v181
  %v222 = vadd.f32 %v113, %v182
  %v223 = vadd.f32 %v114, %v183
  %v224 = vadd.f32 %v115, %v184
  %v225 = vadd.f32 %v116, %v185
  %v226 = vadd.f32 %v117, %v186
  %v227 = vadd.f32 %v118, %v187
  %v228 = vadd.f32 %v119, %v188
  %v229 = vadd.f32 %v120, %v189
  %v230 = vadd.f32 %v121, %v190
  %v231 = vadd.f32 %v122, %v191
  %v232 = vadd.f32 %v123, %v192
  %v233 = vadd.f32 %v124, %v193
  %v234 = vadd.f32 %v125, %v194
  %v235 = vadd.f32 %v126, %v195
  %v236 = vadd.f32 %v127, %v196
  %v237 = vadd.f32 %v128, %v197
  %v238 = vadd.f32 %v129, %v198
  %v239 = vadd.f32 %v130, %v199
  %v240 = vadd.f32 %v131, %v200
  %v241 = vadd.f32 %v132, %v201
  %v242 = vadd.f32 %v133, %v202
  %v243 = vadd.f32 %v134, %v203
  %v244 = vadd.f32 %v135, %v204
  %v245 = vadd.f32 %v136, %v205
  %v246 = vadd.f32 %v137, %v206
  %v247 = vadd.f32 %v138, %v207
  %v248 = vadd.f32 %v139, %v208
  %v249 = vadd.f32 %v140, %v209
  %v250 = vadd.f32 %v141, %v210
  %v251 = vadd.f32 %v142, %v211
  %v252 = vadd.f32 %v143, %v212
  %v253 = vadd.f32 %v144, %v213
  %v254 = vadd.f32 %v145, %v214
  %s255 = scalar_lea.vmem %s1, 320
  %v256 = vld [vmem:[%s255] sm:$0xff]
  %v257 = vld [vmem:[%s255 + $0x8] sm:$0xff]
  %v258 = vld [vmem:[%s255 + $0x10] sm:$0xff]
  %v259 = vld [vmem:[%s255 + $0x18] sm:$0xff]
  %v260 = vld [vmem:[%s255 + $0x20] sm:$0xff]
  %v261 = vld [vmem:[%s255 + $0x28] sm:$0xff]
  %v262 = vld [vmem:[%s255 + $0x30] sm:$0xff]
  %v263 = vld [vmem:[%s255 + $0x38] sm:$0xff]
  %v264 = vld [vmem:[%s255 + $0x40] sm:$0xff]
  %v265 = vld [vmem:[%s255 + $0x48] sm:$0xff]
  %v266 = vld [vmem:[%s255 + $0x50] sm:$0xff]
  %v267 = vld [vmem:[%s255 + $0x58] sm:$0xff]
  %v268 = vld [vmem:[%s255 + $0x60] sm:$0xff]
  %v269 = vld [vmem:[%s255 + $0x68] sm:$0xff]
  %v270 = vld [vmem:[%s255 + $0x70] sm:$0xff]
  %v271 = vld [vmem:[%s255 + $0x78] sm:$0xff]
  %v272 = vld [vmem:[%s255 + $0x80] sm:$0xff]
  %v273 = vld [vmem:[%s255 + $0x88] sm:$0xff]
  %v274 = vld [vmem:[%s255 + $0x90] sm:$0xff]
  %v275 = vld [vmem:[%s255 + $0x98] sm:$0xff]
  %v276 = vlaneseq
  %v277 = vshrl.u32 %v276, 7
  %v278 = vsub.s32 2, %v277
  %v279 = vrot.slane %v16, %v278
  %v280 = vlaneseq
  %v281 = vshrl.u32 %v280, 7
  %v282 = vsub.s32 2, %v281
  %v283 = vrot.slane %v17, %v282
  %v284 = vmul.f32 %v256, %v279
  %v285 = vmul.f32 %v257, %v279
  %v286 = vmul.f32 %v258, %v279
  %v287 = vmul.f32 %v259, %v279
  %v288 = vmul.f32 %v260, %v279
  %v289 = vmul.f32 %v261, %v279
  %v290 = vmul.f32 %v262, %v279
  %v291 = vmul.f32 %v263, %v279
  %v292 = vmul.f32 %v264, %v279
  %v293 = vmul.f32 %v265, %v279
  %v294 = vmul.f32 %v266, %v279
  %v295 = vmul.f32 %v267, %v279
  %v296 = vmul.f32 %v268, %v279
  %v297 = vmul.f32 %v269, %v279
  %v298 = vmul.f32 %v270, %v279
  %v299 = vmul.f32 %v271, %v279
  %v300 = vmul.f32 %v272, %v279
  %v301 = vmul.f32 %v273, %v279
  %v302 = vmul.f32 %v274, %v279
  %v303 = vmul.f32 %v275, %v279
  %v304 = vmul.f32 %v256, %v283
  %v305 = vmul.f32 %v257, %v283
  %v306 = vmul.f32 %v258, %v283
  %v307 = vmul.f32 %v259, %v283
  %v308 = vmul.f32 %v260, %v283
  %v309 = vmul.f32 %v261, %v283
  %v310 = vmul.f32 %v262, %v283
  %v311 = vmul.f32 %v263, %v283
  %v312 = vmul.f32 %v264, %v283
  %v313 = vmul.f32 %v265, %v283
  %v314 = vmul.f32 %v266, %v283
  %v315 = vmul.f32 %v267, %v283
  %v316 = vmul.f32 %v268, %v283
  %v317 = vmul.f32 %v269, %v283
  %v318 = vmul.f32 %v270, %v283
  %v319 = vmul.f32 %v271, %v283
  %v320 = vmul.f32 %v272, %v283
  %v321 = vmul.f32 %v273, %v283
  %v322 = vmul.f32 %v274, %v283
  %v323 = vmul.f32 %v275, %v283
  %v324 = vadd.f32 %v215, %v284
  %v325 = vadd.f32 %v216, %v285
  %v326 = vadd.f32 %v217, %v286
  %v327 = vadd.f32 %v218, %v287
  %v328 = vadd.f32 %v219, %v288
  %v329 = vadd.f32 %v220, %v289
  %v330 = vadd.f32 %v221, %v290
  %v331 = vadd.f32 %v222, %v291
  %v332 = vadd.f32 %v223, %v292
  %v333 = vadd.f32 %v224, %v293
  %v334 = vadd.f32 %v225, %v294
  %v335 = vadd.f32 %v226, %v295
  %v336 = vadd.f32 %v227, %v296
  %v337 = vadd.f32 %v228, %v297
  %v338 = vadd.f32 %v229, %v298
  %v339 = vadd.f32 %v230, %v299
  %v340 = vadd.f32 %v231, %v300
  %v341 = vadd.f32 %v232, %v301
  %v342 = vadd.f32 %v233, %v302
  %v343 = vadd.f32 %v234, %v303
  %v344 = vadd.f32 %v235, %v304
  %v345 = vadd.f32 %v236, %v305
  %v346 = vadd.f32 %v237, %v306
  %v347 = vadd.f32 %v238, %v307
  %v348 = vadd.f32 %v239, %v308
  %v349 = vadd.f32 %v240, %v309
  %v350 = vadd.f32 %v241, %v310
  %v351 = vadd.f32 %v242, %v311
  %v352 = vadd.f32 %v243, %v312
  %v353 = vadd.f32 %v244, %v313
  %v354 = vadd.f32 %v245, %v314
  %v355 = vadd.f32 %v246, %v315
  %v356 = vadd.f32 %v247, %v316
  %v357 = vadd.f32 %v248, %v317
  %v358 = vadd.f32 %v249, %v318
  %v359 = vadd.f32 %v250, %v319
  %v360 = vadd.f32 %v251, %v320
  %v361 = vadd.f32 %v252, %v321
  %v362 = vadd.f32 %v253, %v322
  %v363 = vadd.f32 %v254, %v323
  %s364 = scalar_lea.vmem %s1, 480
  %v365 = vld [vmem:[%s364] sm:$0xff]
  %v366 = vld [vmem:[%s364 + $0x8] sm:$0xff]
  %v367 = vld [vmem:[%s364 + $0x10] sm:$0xff]
  %v368 = vld [vmem:[%s364 + $0x18] sm:$0xff]
  %v369 = vld [vmem:[%s364 + $0x20] sm:$0xff]
  %v370 = vld [vmem:[%s364 + $0x28] sm:$0xff]
  %v371 = vld [vmem:[%s364 + $0x30] sm:$0xff]
  %v372 = vld [vmem:[%s364 + $0x38] sm:$0xff]
  %v373 = vld [vmem:[%s364 + $0x40] sm:$0xff]
  %v374 = vld [vmem:[%s364 + $0x48] sm:$0xff]
  %v375 = vld [vmem:[%s364 + $0x50] sm:$0xff]
  %v376 = vld [vmem:[%s364 + $0x58] sm:$0xff]
  %v377 = vld [vmem:[%s364 + $0x60] sm:$0xff]
  %v378 = vld [vmem:[%s364 + $0x68] sm:$0xff]
  %v379 = vld [vmem:[%s364 + $0x70] sm:$0xff]
  %v380 = vld [vmem:[%s364 + $0x78] sm:$0xff]
  %v381 = vld [vmem:[%s364 + $0x80] sm:$0xff]
  %v382 = vld [vmem:[%s364 + $0x88] sm:$0xff]
  %v383 = vld [vmem:[%s364 + $0x90] sm:$0xff]
  %v384 = vld [vmem:[%s364 + $0x98] sm:$0xff]
  %v385 = vlaneseq
  %v386 = vshrl.u32 %v385, 7
  %v387 = vsub.s32 3, %v386
  %v388 = vrot.slane %v16, %v387
  %v389 = vlaneseq
  %v390 = vshrl.u32 %v389, 7
  %v391 = vsub.s32 3, %v390
  %v392 = vrot.slane %v17, %v391
  %v393 = vmul.f32 %v365, %v388
  %v394 = vmul.f32 %v366, %v388
  %v395 = vmul.f32 %v367, %v388
  %v396 = vmul.f32 %v368, %v388
  %v397 = vmul.f32 %v369, %v388
  %v398 = vmul.f32 %v370, %v388
  %v399 = vmul.f32 %v371, %v388
  %v400 = vmul.f32 %v372, %v388
  %v401 = vmul.f32 %v373, %v388
  %v402 = vmul.f32 %v374, %v388
  %v403 = vmul.f32 %v375, %v388
  %v404 = vmul.f32 %v376, %v388
  %v405 = vmul.f32 %v377, %v388
  %v406 = vmul.f32 %v378, %v388
  %v407 = vmul.f32 %v379, %v388
  %v408 = vmul.f32 %v380, %v388
  %v409 = vmul.f32 %v381, %v388
  %v410 = vmul.f32 %v382, %v388
  %v411 = vmul.f32 %v383, %v388
  %v412 = vmul.f32 %v384, %v388
  %v413 = vmul.f32 %v365, %v392
  %v414 = vmul.f32 %v366, %v392
  %v415 = vmul.f32 %v367, %v392
  %v416 = vmul.f32 %v368, %v392
  %v417 = vmul.f32 %v369, %v392
  %v418 = vmul.f32 %v370, %v392
  %v419 = vmul.f32 %v371, %v392
  %v420 = vmul.f32 %v372, %v392
  %v421 = vmul.f32 %v373, %v392
  %v422 = vmul.f32 %v374, %v392
  %v423 = vmul.f32 %v375, %v392
  %v424 = vmul.f32 %v376, %v392
  %v425 = vmul.f32 %v377, %v392
  %v426 = vmul.f32 %v378, %v392
  %v427 = vmul.f32 %v379, %v392
  %v428 = vmul.f32 %v380, %v392
  %v429 = vmul.f32 %v381, %v392
  %v430 = vmul.f32 %v382, %v392
  %v431 = vmul.f32 %v383, %v392
  %v432 = vmul.f32 %v384, %v392
  %v433 = vadd.f32 %v324, %v393
  %v434 = vadd.f32 %v325, %v394
  %v435 = vadd.f32 %v326, %v395
  %v436 = vadd.f32 %v327, %v396
  %v437 = vadd.f32 %v328, %v397
  %v438 = vadd.f32 %v329, %v398
  %v439 = vadd.f32 %v330, %v399
  %v440 = vadd.f32 %v331, %v400
  %v441 = vadd.f32 %v332, %v401
  %v442 = vadd.f32 %v333, %v402
  %v443 = vadd.f32 %v334, %v403
  %v444 = vadd.f32 %v335, %v404
  %v445 = vadd.f32 %v336, %v405
  %v446 = vadd.f32 %v337, %v406
  %v447 = vadd.f32 %v338, %v407
  %v448 = vadd.f32 %v339, %v408
  %v449 = vadd.f32 %v340, %v409
  %v450 = vadd.f32 %v341, %v410
  %v451 = vadd.f32 %v342, %v411
  %v452 = vadd.f32 %v343, %v412
  %v453 = vadd.f32 %v344, %v413
  %v454 = vadd.f32 %v345, %v414
  %v455 = vadd.f32 %v346, %v415
  %v456 = vadd.f32 %v347, %v416
  %v457 = vadd.f32 %v348, %v417
  %v458 = vadd.f32 %v349, %v418
  %v459 = vadd.f32 %v350, %v419
  %v460 = vadd.f32 %v351, %v420
  %v461 = vadd.f32 %v352, %v421
  %v462 = vadd.f32 %v353, %v422
  %v463 = vadd.f32 %v354, %v423
  %v464 = vadd.f32 %v355, %v424
  %v465 = vadd.f32 %v356, %v425
  %v466 = vadd.f32 %v357, %v426
  %v467 = vadd.f32 %v358, %v427
  %v468 = vadd.f32 %v359, %v428
  %v469 = vadd.f32 %v360, %v429
  %v470 = vadd.f32 %v361, %v430
  %v471 = vadd.f32 %v362, %v431
  %v472 = vadd.f32 %v363, %v432
  %s473 = scalar_lea.vmem %s1, 640
  %v474 = vld [vmem:[%s473] sm:$0xff]
  %v475 = vld [vmem:[%s473 + $0x8] sm:$0xff]
  %v476 = vld [vmem:[%s473 + $0x10] sm:$0xff]
  %v477 = vld [vmem:[%s473 + $0x18] sm:$0xff]
  %v478 = vld [vmem:[%s473 + $0x20] sm:$0xff]
  %v479 = vld [vmem:[%s473 + $0x28] sm:$0xff]
  %v480 = vld [vmem:[%s473 + $0x30] sm:$0xff]
  %v481 = vld [vmem:[%s473 + $0x38] sm:$0xff]
  %v482 = vld [vmem:[%s473 + $0x40] sm:$0xff]
  %v483 = vld [vmem:[%s473 + $0x48] sm:$0xff]
  %v484 = vld [vmem:[%s473 + $0x50] sm:$0xff]
  %v485 = vld [vmem:[%s473 + $0x58] sm:$0xff]
  %v486 = vld [vmem:[%s473 + $0x60] sm:$0xff]
  %v487 = vld [vmem:[%s473 + $0x68] sm:$0xff]
  %v488 = vld [vmem:[%s473 + $0x70] sm:$0xff]
  %v489 = vld [vmem:[%s473 + $0x78] sm:$0xff]
  %v490 = vld [vmem:[%s473 + $0x80] sm:$0xff]
  %v491 = vld [vmem:[%s473 + $0x88] sm:$0xff]
  %v492 = vld [vmem:[%s473 + $0x90] sm:$0xff]
  %v493 = vld [vmem:[%s473 + $0x98] sm:$0xff]
  %v494 = vlaneseq
  %v495 = vshrl.u32 %v494, 7
  %v496 = vsub.s32 4, %v495
  %v497 = vrot.slane %v16, %v496
  %v498 = vlaneseq
  %v499 = vshrl.u32 %v498, 7
  %v500 = vsub.s32 4, %v499
  %v501 = vrot.slane %v17, %v500
  %v502 = vmul.f32 %v474, %v497
  %v503 = vmul.f32 %v475, %v497
  %v504 = vmul.f32 %v476, %v497
  %v505 = vmul.f32 %v477, %v497
  %v506 = vmul.f32 %v478, %v497
  %v507 = vmul.f32 %v479, %v497
  %v508 = vmul.f32 %v480, %v497
  %v509 = vmul.f32 %v481, %v497
  %v510 = vmul.f32 %v482, %v497
  %v511 = vmul.f32 %v483, %v497
  %v512 = vmul.f32 %v484, %v497
  %v513 = vmul.f32 %v485, %v497
  %v514 = vmul.f32 %v486, %v497
  %v515 = vmul.f32 %v487, %v497
  %v516 = vmul.f32 %v488, %v497
  %v517 = vmul.f32 %v489, %v497
  %v518 = vmul.f32 %v490, %v497
  %v519 = vmul.f32 %v491, %v497
  %v520 = vmul.f32 %v492, %v497
  %v521 = vmul.f32 %v493, %v497
  %v522 = vmul.f32 %v474, %v501
  %v523 = vmul.f32 %v475, %v501
  %v524 = vmul.f32 %v476, %v501
  %v525 = vmul.f32 %v477, %v501
  %v526 = vmul.f32 %v478, %v501
  %v527 = vmul.f32 %v479, %v501
  %v528 = vmul.f32 %v480, %v501
  %v529 = vmul.f32 %v481, %v501
  %v530 = vmul.f32 %v482, %v501
  %v531 = vmul.f32 %v483, %v501
  %v532 = vmul.f32 %v484, %v501
  %v533 = vmul.f32 %v485, %v501
  %v534 = vmul.f32 %v486, %v501
  %v535 = vmul.f32 %v487, %v501
  %v536 = vmul.f32 %v488, %v501
  %v537 = vmul.f32 %v489, %v501
  %v538 = vmul.f32 %v490, %v501
  %v539 = vmul.f32 %v491, %v501
  %v540 = vmul.f32 %v492, %v501
  %v541 = vmul.f32 %v493, %v501
  %v542 = vadd.f32 %v433, %v502
  %v543 = vadd.f32 %v434, %v503
  %v544 = vadd.f32 %v435, %v504
  %v545 = vadd.f32 %v436, %v505
  %v546 = vadd.f32 %v437, %v506
  %v547 = vadd.f32 %v438, %v507
  %v548 = vadd.f32 %v439, %v508
  %v549 = vadd.f32 %v440, %v509
  %v550 = vadd.f32 %v441, %v510
  %v551 = vadd.f32 %v442, %v511
  %v552 = vadd.f32 %v443, %v512
  %v553 = vadd.f32 %v444, %v513
  %v554 = vadd.f32 %v445, %v514
  %v555 = vadd.f32 %v446, %v515
  %v556 = vadd.f32 %v447, %v516
  %v557 = vadd.f32 %v448, %v517
  %v558 = vadd.f32 %v449, %v518
  %v559 = vadd.f32 %v450, %v519
  %v560 = vadd.f32 %v451, %v520
  %v561 = vadd.f32 %v452, %v521
  %v562 = vadd.f32 %v453, %v522
  %v563 = vadd.f32 %v454, %v523
  %v564 = vadd.f32 %v455, %v524
  %v565 = vadd.f32 %v456, %v525
  %v566 = vadd.f32 %v457, %v526
  %v567 = vadd.f32 %v458, %v527
  %v568 = vadd.f32 %v459, %v528
  %v569 = vadd.f32 %v460, %v529
  %v570 = vadd.f32 %v461, %v530
  %v571 = vadd.f32 %v462, %v531
  %v572 = vadd.f32 %v463, %v532
  %v573 = vadd.f32 %v464, %v533
  %v574 = vadd.f32 %v465, %v534
  %v575 = vadd.f32 %v466, %v535
  %v576 = vadd.f32 %v467, %v536
  %v577 = vadd.f32 %v468, %v537
  %v578 = vadd.f32 %v469, %v538
  %v579 = vadd.f32 %v470, %v539
  %v580 = vadd.f32 %v471, %v540
  %v581 = vadd.f32 %v472, %v541
  %s582 = scalar_lea.vmem %s1, 800
  %v583 = vld [vmem:[%s582] sm:$0xff]
  %v584 = vld [vmem:[%s582 + $0x8] sm:$0xff]
  %v585 = vld [vmem:[%s582 + $0x10] sm:$0xff]
  %v586 = vld [vmem:[%s582 + $0x18] sm:$0xff]
  %v587 = vld [vmem:[%s582 + $0x20] sm:$0xff]
  %v588 = vld [vmem:[%s582 + $0x28] sm:$0xff]
  %v589 = vld [vmem:[%s582 + $0x30] sm:$0xff]
  %v590 = vld [vmem:[%s582 + $0x38] sm:$0xff]
  %v591 = vld [vmem:[%s582 + $0x40] sm:$0xff]
  %v592 = vld [vmem:[%s582 + $0x48] sm:$0xff]
  %v593 = vld [vmem:[%s582 + $0x50] sm:$0xff]
  %v594 = vld [vmem:[%s582 + $0x58] sm:$0xff]
  %v595 = vld [vmem:[%s582 + $0x60] sm:$0xff]
  %v596 = vld [vmem:[%s582 + $0x68] sm:$0xff]
  %v597 = vld [vmem:[%s582 + $0x70] sm:$0xff]
  %v598 = vld [vmem:[%s582 + $0x78] sm:$0xff]
  %v599 = vld [vmem:[%s582 + $0x80] sm:$0xff]
  %v600 = vld [vmem:[%s582 + $0x88] sm:$0xff]
  %v601 = vld [vmem:[%s582 + $0x90] sm:$0xff]
  %v602 = vld [vmem:[%s582 + $0x98] sm:$0xff]
  %v603 = vlaneseq
  %v604 = vshrl.u32 %v603, 7
  %v605 = vsub.s32 5, %v604
  %v606 = vrot.slane %v16, %v605
  %v607 = vlaneseq
  %v608 = vshrl.u32 %v607, 7
  %v609 = vsub.s32 5, %v608
  %v610 = vrot.slane %v17, %v609
  %v611 = vmul.f32 %v583, %v606
  %v612 = vmul.f32 %v584, %v606
  %v613 = vmul.f32 %v585, %v606
  %v614 = vmul.f32 %v586, %v606
  %v615 = vmul.f32 %v587, %v606
  %v616 = vmul.f32 %v588, %v606
  %v617 = vmul.f32 %v589, %v606
  %v618 = vmul.f32 %v590, %v606
  %v619 = vmul.f32 %v591, %v606
  %v620 = vmul.f32 %v592, %v606
  %v621 = vmul.f32 %v593, %v606
  %v622 = vmul.f32 %v594, %v606
  %v623 = vmul.f32 %v595, %v606
  %v624 = vmul.f32 %v596, %v606
  %v625 = vmul.f32 %v597, %v606
  %v626 = vmul.f32 %v598, %v606
  %v627 = vmul.f32 %v599, %v606
  %v628 = vmul.f32 %v600, %v606
  %v629 = vmul.f32 %v601, %v606
  %v630 = vmul.f32 %v602, %v606
  %v631 = vmul.f32 %v583, %v610
  %v632 = vmul.f32 %v584, %v610
  %v633 = vmul.f32 %v585, %v610
  %v634 = vmul.f32 %v586, %v610
  %v635 = vmul.f32 %v587, %v610
  %v636 = vmul.f32 %v588, %v610
  %v637 = vmul.f32 %v589, %v610
  %v638 = vmul.f32 %v590, %v610
  %v639 = vmul.f32 %v591, %v610
  %v640 = vmul.f32 %v592, %v610
  %v641 = vmul.f32 %v593, %v610
  %v642 = vmul.f32 %v594, %v610
  %v643 = vmul.f32 %v595, %v610
  %v644 = vmul.f32 %v596, %v610
  %v645 = vmul.f32 %v597, %v610
  %v646 = vmul.f32 %v598, %v610
  %v647 = vmul.f32 %v599, %v610
  %v648 = vmul.f32 %v600, %v610
  %v649 = vmul.f32 %v601, %v610
  %v650 = vmul.f32 %v602, %v610
  %v651 = vadd.f32 %v542, %v611
  %v652 = vadd.f32 %v543, %v612
  %v653 = vadd.f32 %v544, %v613
  %v654 = vadd.f32 %v545, %v614
  %v655 = vadd.f32 %v546, %v615
  %v656 = vadd.f32 %v547, %v616
  %v657 = vadd.f32 %v548, %v617
  %v658 = vadd.f32 %v549, %v618
  %v659 = vadd.f32 %v550, %v619
  %v660 = vadd.f32 %v551, %v620
  %v661 = vadd.f32 %v552, %v621
  %v662 = vadd.f32 %v553, %v622
  %v663 = vadd.f32 %v554, %v623
  %v664 = vadd.f32 %v555, %v624
  %v665 = vadd.f32 %v556, %v625
  %v666 = vadd.f32 %v557, %v626
  %v667 = vadd.f32 %v558, %v627
  %v668 = vadd.f32 %v559, %v628
  %v669 = vadd.f32 %v560, %v629
  %v670 = vadd.f32 %v561, %v630
  %v671 = vadd.f32 %v562, %v631
  %v672 = vadd.f32 %v563, %v632
  %v673 = vadd.f32 %v564, %v633
  %v674 = vadd.f32 %v565, %v634
  %v675 = vadd.f32 %v566, %v635
  %v676 = vadd.f32 %v567, %v636
  %v677 = vadd.f32 %v568, %v637
  %v678 = vadd.f32 %v569, %v638
  %v679 = vadd.f32 %v570, %v639
  %v680 = vadd.f32 %v571, %v640
  %v681 = vadd.f32 %v572, %v641
  %v682 = vadd.f32 %v573, %v642
  %v683 = vadd.f32 %v574, %v643
  %v684 = vadd.f32 %v575, %v644
  %v685 = vadd.f32 %v576, %v645
  %v686 = vadd.f32 %v577, %v646
  %v687 = vadd.f32 %v578, %v647
  %v688 = vadd.f32 %v579, %v648
  %v689 = vadd.f32 %v580, %v649
  %v690 = vadd.f32 %v581, %v650
  %s691 = scalar_lea.vmem %s1, 960
  %v692 = vld [vmem:[%s691] sm:$0xff]
  %v693 = vld [vmem:[%s691 + $0x8] sm:$0xff]
  %v694 = vld [vmem:[%s691 + $0x10] sm:$0xff]
  %v695 = vld [vmem:[%s691 + $0x18] sm:$0xff]
  %v696 = vld [vmem:[%s691 + $0x20] sm:$0xff]
  %v697 = vld [vmem:[%s691 + $0x28] sm:$0xff]
  %v698 = vld [vmem:[%s691 + $0x30] sm:$0xff]
  %v699 = vld [vmem:[%s691 + $0x38] sm:$0xff]
  %v700 = vld [vmem:[%s691 + $0x40] sm:$0xff]
  %v701 = vld [vmem:[%s691 + $0x48] sm:$0xff]
  %v702 = vld [vmem:[%s691 + $0x50] sm:$0xff]
  %v703 = vld [vmem:[%s691 + $0x58] sm:$0xff]
  %v704 = vld [vmem:[%s691 + $0x60] sm:$0xff]
  %v705 = vld [vmem:[%s691 + $0x68] sm:$0xff]
  %v706 = vld [vmem:[%s691 + $0x70] sm:$0xff]
  %v707 = vld [vmem:[%s691 + $0x78] sm:$0xff]
  %v708 = vld [vmem:[%s691 + $0x80] sm:$0xff]
  %v709 = vld [vmem:[%s691 + $0x88] sm:$0xff]
  %v710 = vld [vmem:[%s691 + $0x90] sm:$0xff]
  %v711 = vld [vmem:[%s691 + $0x98] sm:$0xff]
  %v712 = vlaneseq
  %v713 = vshrl.u32 %v712, 7
  %v714 = vsub.s32 6, %v713
  %v715 = vrot.slane %v16, %v714
  %v716 = vlaneseq
  %v717 = vshrl.u32 %v716, 7
  %v718 = vsub.s32 6, %v717
  %v719 = vrot.slane %v17, %v718
  %v720 = vmul.f32 %v692, %v715
  %v721 = vmul.f32 %v693, %v715
  %v722 = vmul.f32 %v694, %v715
  %v723 = vmul.f32 %v695, %v715
  %v724 = vmul.f32 %v696, %v715
  %v725 = vmul.f32 %v697, %v715
  %v726 = vmul.f32 %v698, %v715
  %v727 = vmul.f32 %v699, %v715
  %v728 = vmul.f32 %v700, %v715
  %v729 = vmul.f32 %v701, %v715
  %v730 = vmul.f32 %v702, %v715
  %v731 = vmul.f32 %v703, %v715
  %v732 = vmul.f32 %v704, %v715
  %v733 = vmul.f32 %v705, %v715
  %v734 = vmul.f32 %v706, %v715
  %v735 = vmul.f32 %v707, %v715
  %v736 = vmul.f32 %v708, %v715
  %v737 = vmul.f32 %v709, %v715
  %v738 = vmul.f32 %v710, %v715
  %v739 = vmul.f32 %v711, %v715
  %v740 = vmul.f32 %v692, %v719
  %v741 = vmul.f32 %v693, %v719
  %v742 = vmul.f32 %v694, %v719
  %v743 = vmul.f32 %v695, %v719
  %v744 = vmul.f32 %v696, %v719
  %v745 = vmul.f32 %v697, %v719
  %v746 = vmul.f32 %v698, %v719
  %v747 = vmul.f32 %v699, %v719
  %v748 = vmul.f32 %v700, %v719
  %v749 = vmul.f32 %v701, %v719
  %v750 = vmul.f32 %v702, %v719
  %v751 = vmul.f32 %v703, %v719
  %v752 = vmul.f32 %v704, %v719
  %v753 = vmul.f32 %v705, %v719
  %v754 = vmul.f32 %v706, %v719
  %v755 = vmul.f32 %v707, %v719
  %v756 = vmul.f32 %v708, %v719
  %v757 = vmul.f32 %v709, %v719
  %v758 = vmul.f32 %v710, %v719
  %v759 = vmul.f32 %v711, %v719
  %v760 = vadd.f32 %v651, %v720
  %v761 = vadd.f32 %v652, %v721
  %v762 = vadd.f32 %v653, %v722
  %v763 = vadd.f32 %v654, %v723
  %v764 = vadd.f32 %v655, %v724
  %v765 = vadd.f32 %v656, %v725
  %v766 = vadd.f32 %v657, %v726
  %v767 = vadd.f32 %v658, %v727
  %v768 = vadd.f32 %v659, %v728
  %v769 = vadd.f32 %v660, %v729
  %v770 = vadd.f32 %v661, %v730
  %v771 = vadd.f32 %v662, %v731
  %v772 = vadd.f32 %v663, %v732
  %v773 = vadd.f32 %v664, %v733
  %v774 = vadd.f32 %v665, %v734
  %v775 = vadd.f32 %v666, %v735
  %v776 = vadd.f32 %v667, %v736
  %v777 = vadd.f32 %v668, %v737
  %v778 = vadd.f32 %v669, %v738
  %v779 = vadd.f32 %v670, %v739
  %v780 = vadd.f32 %v671, %v740
  %v781 = vadd.f32 %v672, %v741
  %v782 = vadd.f32 %v673, %v742
  %v783 = vadd.f32 %v674, %v743
  %v784 = vadd.f32 %v675, %v744
  %v785 = vadd.f32 %v676, %v745
  %v786 = vadd.f32 %v677, %v746
  %v787 = vadd.f32 %v678, %v747
  %v788 = vadd.f32 %v679, %v748
  %v789 = vadd.f32 %v680, %v749
  %v790 = vadd.f32 %v681, %v750
  %v791 = vadd.f32 %v682, %v751
  %v792 = vadd.f32 %v683, %v752
  %v793 = vadd.f32 %v684, %v753
  %v794 = vadd.f32 %v685, %v754
  %v795 = vadd.f32 %v686, %v755
  %v796 = vadd.f32 %v687, %v756
  %v797 = vadd.f32 %v688, %v757
  %v798 = vadd.f32 %v689, %v758
  %v799 = vadd.f32 %v690, %v759
  %s800 = scalar_lea.vmem %s1, 1120
  %v801 = vld [vmem:[%s800] sm:$0xff]
  %v802 = vld [vmem:[%s800 + $0x8] sm:$0xff]
  %v803 = vld [vmem:[%s800 + $0x10] sm:$0xff]
  %v804 = vld [vmem:[%s800 + $0x18] sm:$0xff]
  %v805 = vld [vmem:[%s800 + $0x20] sm:$0xff]
  %v806 = vld [vmem:[%s800 + $0x28] sm:$0xff]
  %v807 = vld [vmem:[%s800 + $0x30] sm:$0xff]
  %v808 = vld [vmem:[%s800 + $0x38] sm:$0xff]
  %v809 = vld [vmem:[%s800 + $0x40] sm:$0xff]
  %v810 = vld [vmem:[%s800 + $0x48] sm:$0xff]
  %v811 = vld [vmem:[%s800 + $0x50] sm:$0xff]
  %v812 = vld [vmem:[%s800 + $0x58] sm:$0xff]
  %v813 = vld [vmem:[%s800 + $0x60] sm:$0xff]
  %v814 = vld [vmem:[%s800 + $0x68] sm:$0xff]
  %v815 = vld [vmem:[%s800 + $0x70] sm:$0xff]
  %v816 = vld [vmem:[%s800 + $0x78] sm:$0xff]
  %v817 = vld [vmem:[%s800 + $0x80] sm:$0xff]
  %v818 = vld [vmem:[%s800 + $0x88] sm:$0xff]
  %v819 = vld [vmem:[%s800 + $0x90] sm:$0xff]
  %v820 = vld [vmem:[%s800 + $0x98] sm:$0xff]
  %v821 = vlaneseq
  %v822 = vshrl.u32 %v821, 7
  %v823 = vsub.s32 7, %v822
  %v824 = vrot.slane %v16, %v823
  %v825 = vlaneseq
  %v826 = vshrl.u32 %v825, 7
  %v827 = vsub.s32 7, %v826
  %v828 = vrot.slane %v17, %v827
  %v829 = vmul.f32 %v801, %v824
  %v830 = vmul.f32 %v802, %v824
  %v831 = vmul.f32 %v803, %v824
  %v832 = vmul.f32 %v804, %v824
  %v833 = vmul.f32 %v805, %v824
  %v834 = vmul.f32 %v806, %v824
  %v835 = vmul.f32 %v807, %v824
  %v836 = vmul.f32 %v808, %v824
  %v837 = vmul.f32 %v809, %v824
  %v838 = vmul.f32 %v810, %v824
  %v839 = vmul.f32 %v811, %v824
  %v840 = vmul.f32 %v812, %v824
  %v841 = vmul.f32 %v813, %v824
  %v842 = vmul.f32 %v814, %v824
  %v843 = vmul.f32 %v815, %v824
  %v844 = vmul.f32 %v816, %v824
  %v845 = vmul.f32 %v817, %v824
  %v846 = vmul.f32 %v818, %v824
  %v847 = vmul.f32 %v819, %v824
  %v848 = vmul.f32 %v820, %v824
  %v849 = vmul.f32 %v801, %v828
  %v850 = vmul.f32 %v802, %v828
  %v851 = vmul.f32 %v803, %v828
  %v852 = vmul.f32 %v804, %v828
  %v853 = vmul.f32 %v805, %v828
  %v854 = vmul.f32 %v806, %v828
  %v855 = vmul.f32 %v807, %v828
  %v856 = vmul.f32 %v808, %v828
  %v857 = vmul.f32 %v809, %v828
  %v858 = vmul.f32 %v810, %v828
  %v859 = vmul.f32 %v811, %v828
  %v860 = vmul.f32 %v812, %v828
  %v861 = vmul.f32 %v813, %v828
  %v862 = vmul.f32 %v814, %v828
  %v863 = vmul.f32 %v815, %v828
  %v864 = vmul.f32 %v816, %v828
  %v865 = vmul.f32 %v817, %v828
  %v866 = vmul.f32 %v818, %v828
  %v867 = vmul.f32 %v819, %v828
  %v868 = vmul.f32 %v820, %v828
  %v869 = vadd.f32 %v760, %v829
  %v870 = vadd.f32 %v761, %v830
  %v871 = vadd.f32 %v762, %v831
  %v872 = vadd.f32 %v763, %v832
  %v873 = vadd.f32 %v764, %v833
  %v874 = vadd.f32 %v765, %v834
  %v875 = vadd.f32 %v766, %v835
  %v876 = vadd.f32 %v767, %v836
  %v877 = vadd.f32 %v768, %v837
  %v878 = vadd.f32 %v769, %v838
  %v879 = vadd.f32 %v770, %v839
  %v880 = vadd.f32 %v771, %v840
  %v881 = vadd.f32 %v772, %v841
  %v882 = vadd.f32 %v773, %v842
  %v883 = vadd.f32 %v774, %v843
  %v884 = vadd.f32 %v775, %v844
  %v885 = vadd.f32 %v776, %v845
  %v886 = vadd.f32 %v777, %v846
  %v887 = vadd.f32 %v778, %v847
  %v888 = vadd.f32 %v779, %v848
  %v889 = vadd.f32 %v780, %v849
  %v890 = vadd.f32 %v781, %v850
  %v891 = vadd.f32 %v782, %v851
  %v892 = vadd.f32 %v783, %v852
  %v893 = vadd.f32 %v784, %v853
  %v894 = vadd.f32 %v785, %v854
  %v895 = vadd.f32 %v786, %v855
  %v896 = vadd.f32 %v787, %v856
  %v897 = vadd.f32 %v788, %v857
  %v898 = vadd.f32 %v789, %v858
  %v899 = vadd.f32 %v790, %v859
  %v900 = vadd.f32 %v791, %v860
  %v901 = vadd.f32 %v792, %v861
  %v902 = vadd.f32 %v793, %v862
  %v903 = vadd.f32 %v794, %v863
  %v904 = vadd.f32 %v795, %v864
  %v905 = vadd.f32 %v796, %v865
  %v906 = vadd.f32 %v797, %v866
  %v907 = vadd.f32 %v798, %v867
  %v908 = vadd.f32 %v799, %v868
  %909 = vadd.xlane.f32.xlu0 1.0
  %v910 = vpop.xlane.xlu0 %909
  %v911 = vrcp.pop %v910
  %v912 = vmul.f32 1.0, %v911
  %v913 = vmul.f32 %v912, %v869
  %v914 = vmul.f32 %v912, %v870
  %v915 = vmul.f32 %v912, %v871
  %v916 = vmul.f32 %v912, %v872
  %v917 = vmul.f32 %v912, %v873
  %v918 = vmul.f32 %v912, %v874
  %v919 = vmul.f32 %v912, %v875
  %v920 = vmul.f32 %v912, %v876
  %v921 = vmul.f32 %v912, %v877
  %v922 = vmul.f32 %v912, %v878
  %v923 = vmul.f32 %v912, %v879
  %v924 = vmul.f32 %v912, %v880
  %v925 = vmul.f32 %v912, %v881
  %v926 = vmul.f32 %v912, %v882
  %v927 = vmul.f32 %v912, %v883
  %v928 = vmul.f32 %v912, %v884
  %v929 = vmul.f32 %v912, %v885
  %v930 = vmul.f32 %v912, %v886
  %v931 = vmul.f32 %v912, %v887
  %v932 = vmul.f32 %v912, %v888
  %v933 = vmul.f32 %v912, %v889
  %v934 = vmul.f32 %v912, %v890
  %v935 = vmul.f32 %v912, %v891
  %v936 = vmul.f32 %v912, %v892
  %v937 = vmul.f32 %v912, %v893
  %v938 = vmul.f32 %v912, %v894
  %v939 = vmul.f32 %v912, %v895
  %v940 = vmul.f32 %v912, %v896
  %v941 = vmul.f32 %v912, %v897
  %v942 = vmul.f32 %v912, %v898
  %v943 = vmul.f32 %v912, %v899
  %v944 = vmul.f32 %v912, %v900
  %v945 = vmul.f32 %v912, %v901
  %v946 = vmul.f32 %v912, %v902
  %v947 = vmul.f32 %v912, %v903
  %v948 = vmul.f32 %v912, %v904
  %v949 = vmul.f32 %v912, %v905
  %v950 = vmul.f32 %v912, %v906
  %v951 = vmul.f32 %v912, %v907
  %v952 = vmul.f32 %v912, %v908
  %953 = vadd.xlane.f32.xlu0 %v913
  %v954 = vpop.xlane.xlu0 %953
  %955 = vadd.xlane.f32.xlu0 %v914
  %v956 = vpop.xlane.xlu0 %955
  %957 = vadd.xlane.f32.xlu0 %v915
  %v958 = vpop.xlane.xlu0 %957
  %959 = vadd.xlane.f32.xlu0 %v916
  %v960 = vpop.xlane.xlu0 %959
  %961 = vadd.xlane.f32.xlu0 %v917
  %v962 = vpop.xlane.xlu0 %961
  %963 = vadd.xlane.f32.xlu0 %v918
  %v964 = vpop.xlane.xlu0 %963
  %965 = vadd.xlane.f32.xlu0 %v919
  %v966 = vpop.xlane.xlu0 %965
  %967 = vadd.xlane.f32.xlu0 %v920
  %v968 = vpop.xlane.xlu0 %967
  %969 = vadd.xlane.f32.xlu0 %v921
  %v970 = vpop.xlane.xlu0 %969
  %971 = vadd.xlane.f32.xlu0 %v922
  %v972 = vpop.xlane.xlu0 %971
  %973 = vadd.xlane.f32.xlu0 %v923
  %v974 = vpop.xlane.xlu0 %973
  %975 = vadd.xlane.f32.xlu0 %v924
  %v976 = vpop.xlane.xlu0 %975
  %977 = vadd.xlane.f32.xlu0 %v925
  %v978 = vpop.xlane.xlu0 %977
  %979 = vadd.xlane.f32.xlu0 %v926
  %v980 = vpop.xlane.xlu0 %979
  %981 = vadd.xlane.f32.xlu0 %v927
  %v982 = vpop.xlane.xlu0 %981
  %983 = vadd.xlane.f32.xlu0 %v928
  %v984 = vpop.xlane.xlu0 %983
  %985 = vadd.xlane.f32.xlu0 %v929
  %v986 = vpop.xlane.xlu0 %985
  %987 = vadd.xlane.f32.xlu0 %v930
  %v988 = vpop.xlane.xlu0 %987
  %989 = vadd.xlane.f32.xlu0 %v931
  %v990 = vpop.xlane.xlu0 %989
  %991 = vadd.xlane.f32.xlu0 %v932
  %v992 = vpop.xlane.xlu0 %991
  %993 = vadd.xlane.f32.xlu0 %v933
  %v994 = vpop.xlane.xlu0 %993
  %995 = vadd.xlane.f32.xlu0 %v934
  %v996 = vpop.xlane.xlu0 %995
  %997 = vadd.xlane.f32.xlu0 %v935
  %v998 = vpop.xlane.xlu0 %997
  %999 = vadd.xlane.f32.xlu0 %v936
  %v1000 = vpop.xlane.xlu0 %999
  %1001 = vadd.xlane.f32.xlu0 %v937
  %v1002 = vpop.xlane.xlu0 %1001
  %1003 = vadd.xlane.f32.xlu0 %v938
  %v1004 = vpop.xlane.xlu0 %1003
  %1005 = vadd.xlane.f32.xlu0 %v939
  %v1006 = vpop.xlane.xlu0 %1005
  %1007 = vadd.xlane.f32.xlu0 %v940
  %v1008 = vpop.xlane.xlu0 %1007
  %1009 = vadd.xlane.f32.xlu0 %v941
  %v1010 = vpop.xlane.xlu0 %1009
  %1011 = vadd.xlane.f32.xlu0 %v942
  %v1012 = vpop.xlane.xlu0 %1011
  %1013 = vadd.xlane.f32.xlu0 %v943
  %v1014 = vpop.xlane.xlu0 %1013
  %1015 = vadd.xlane.f32.xlu0 %v944
  %v1016 = vpop.xlane.xlu0 %1015
  %1017 = vadd.xlane.f32.xlu0 %v945
  %v1018 = vpop.xlane.xlu0 %1017
  %1019 = vadd.xlane.f32.xlu0 %v946
  %v1020 = vpop.xlane.xlu0 %1019
  %1021 = vadd.xlane.f32.xlu0 %v947
  %v1022 = vpop.xlane.xlu0 %1021
  %1023 = vadd.xlane.f32.xlu0 %v948
  %v1024 = vpop.xlane.xlu0 %1023
  %1025 = vadd.xlane.f32.xlu0 %v949
  %v1026 = vpop.xlane.xlu0 %1025
  %1027 = vadd.xlane.f32.xlu0 %v950
  %v1028 = vpop.xlane.xlu0 %1027
  %1029 = vadd.xlane.f32.xlu0 %v951
  %v1030 = vpop.xlane.xlu0 %1029
  %1031 = vadd.xlane.f32.xlu0 %v952
  %v1032 = vpop.xlane.xlu0 %1031
  %v1033 = vmul.f32 %v954, %v954
  %v1034 = vmul.f32 %v956, %v956
  %v1035 = vmul.f32 %v958, %v958
  %v1036 = vmul.f32 %v960, %v960
  %v1037 = vmul.f32 %v962, %v962
  %v1038 = vmul.f32 %v964, %v964
  %v1039 = vmul.f32 %v966, %v966
  %v1040 = vmul.f32 %v968, %v968
  %v1041 = vmul.f32 %v970, %v970
  %v1042 = vmul.f32 %v972, %v972
  %v1043 = vmul.f32 %v974, %v974
  %v1044 = vmul.f32 %v976, %v976
  %v1045 = vmul.f32 %v978, %v978
  %v1046 = vmul.f32 %v980, %v980
  %v1047 = vmul.f32 %v982, %v982
  %v1048 = vmul.f32 %v984, %v984
  %v1049 = vmul.f32 %v986, %v986
  %v1050 = vmul.f32 %v988, %v988
  %v1051 = vmul.f32 %v990, %v990
  %v1052 = vmul.f32 %v992, %v992
  %v1053 = vmul.f32 %v994, %v994
  %v1054 = vmul.f32 %v996, %v996
  %v1055 = vmul.f32 %v998, %v998
  %v1056 = vmul.f32 %v1000, %v1000
  %v1057 = vmul.f32 %v1002, %v1002
  %v1058 = vmul.f32 %v1004, %v1004
  %v1059 = vmul.f32 %v1006, %v1006
  %v1060 = vmul.f32 %v1008, %v1008
  %v1061 = vmul.f32 %v1010, %v1010
  %v1062 = vmul.f32 %v1012, %v1012
  %v1063 = vmul.f32 %v1014, %v1014
  %v1064 = vmul.f32 %v1016, %v1016
  %v1065 = vmul.f32 %v1018, %v1018
  %v1066 = vmul.f32 %v1020, %v1020
  %v1067 = vmul.f32 %v1022, %v1022
  %v1068 = vmul.f32 %v1024, %v1024
  %v1069 = vmul.f32 %v1026, %v1026
  %v1070 = vmul.f32 %v1028, %v1028
  %v1071 = vmul.f32 %v1030, %v1030
  %v1072 = vmul.f32 %v1032, %v1032
  %v1113 = vlaneseq
  %v1114 = vand.u32 %v1113, 127
  %v1115 = vlaneseq
  %v1116 = vshrl.u32 %v1115, 7
  %v1117 = vsub.s32 %v1114, %v1116
  %v1118 = vrot.slane %v1033, %v1117
  %v1119 = vadd.s32 %v1114, 4294967288
  %v1120 = vlaneseq
  %v1121 = vshrl.u32 %v1120, 7
  %v1122 = vsub.s32 %v1119, %v1121
  %v1123 = vrot.slane %v1034, %v1122
  %vm1124 = vcmask 130112
  %v1125 = vsel %vm1124, %v1123, %v1118
  %v1126 = vlaneseq
  %v1127 = vshrl.u32 %v1126, 7
  %v1128 = vsub.s32 %v1114, %v1127
  %v1129 = vrot.slane %v1035, %v1128
  %v1130 = vlaneseq
  %v1131 = vshrl.u32 %v1130, 7
  %v1132 = vsub.s32 %v1119, %v1131
  %v1133 = vrot.slane %v1036, %v1132
  %v1134 = vsel %vm1124, %v1133, %v1129
  %v1135 = vlaneseq
  %v1136 = vshrl.u32 %v1135, 7
  %v1137 = vsub.s32 %v1114, %v1136
  %v1138 = vrot.slane %v1037, %v1137
  %v1139 = vlaneseq
  %v1140 = vshrl.u32 %v1139, 7
  %v1141 = vsub.s32 %v1119, %v1140
  %v1142 = vrot.slane %v1038, %v1141
  %v1143 = vsel %vm1124, %v1142, %v1138
  %v1144 = vlaneseq
  %v1145 = vshrl.u32 %v1144, 7
  %v1146 = vsub.s32 %v1114, %v1145
  %v1147 = vrot.slane %v1039, %v1146
  %v1148 = vlaneseq
  %v1149 = vshrl.u32 %v1148, 7
  %v1150 = vsub.s32 %v1119, %v1149
  %v1151 = vrot.slane %v1040, %v1150
  %v1152 = vsel %vm1124, %v1151, %v1147
  %v1153 = vlaneseq
  %v1154 = vshrl.u32 %v1153, 7
  %v1155 = vsub.s32 %v1114, %v1154
  %v1156 = vrot.slane %v1041, %v1155
  %v1157 = vlaneseq
  %v1158 = vshrl.u32 %v1157, 7
  %v1159 = vsub.s32 %v1119, %v1158
  %v1160 = vrot.slane %v1042, %v1159
  %v1161 = vsel %vm1124, %v1160, %v1156
  %v1162 = vlaneseq
  %v1163 = vshrl.u32 %v1162, 7
  %v1164 = vsub.s32 %v1114, %v1163
  %v1165 = vrot.slane %v1043, %v1164
  %v1166 = vlaneseq
  %v1167 = vshrl.u32 %v1166, 7
  %v1168 = vsub.s32 %v1119, %v1167
  %v1169 = vrot.slane %v1044, %v1168
  %v1170 = vsel %vm1124, %v1169, %v1165
  %v1171 = vlaneseq
  %v1172 = vshrl.u32 %v1171, 7
  %v1173 = vsub.s32 %v1114, %v1172
  %v1174 = vrot.slane %v1045, %v1173
  %v1175 = vlaneseq
  %v1176 = vshrl.u32 %v1175, 7
  %v1177 = vsub.s32 %v1119, %v1176
  %v1178 = vrot.slane %v1046, %v1177
  %v1179 = vsel %vm1124, %v1178, %v1174
  %v1180 = vlaneseq
  %v1181 = vshrl.u32 %v1180, 7
  %v1182 = vsub.s32 %v1114, %v1181
  %v1183 = vrot.slane %v1047, %v1182
  %v1184 = vlaneseq
  %v1185 = vshrl.u32 %v1184, 7
  %v1186 = vsub.s32 %v1119, %v1185
  %v1187 = vrot.slane %v1048, %v1186
  %v1188 = vsel %vm1124, %v1187, %v1183
  %v1189 = vlaneseq
  %v1190 = vshrl.u32 %v1189, 7
  %v1191 = vsub.s32 %v1114, %v1190
  %v1192 = vrot.slane %v1049, %v1191
  %v1193 = vlaneseq
  %v1194 = vshrl.u32 %v1193, 7
  %v1195 = vsub.s32 %v1119, %v1194
  %v1196 = vrot.slane %v1050, %v1195
  %v1197 = vsel %vm1124, %v1196, %v1192
  %v1198 = vlaneseq
  %v1199 = vshrl.u32 %v1198, 7
  %v1200 = vsub.s32 %v1114, %v1199
  %v1201 = vrot.slane %v1051, %v1200
  %v1202 = vlaneseq
  %v1203 = vshrl.u32 %v1202, 7
  %v1204 = vsub.s32 %v1119, %v1203
  %v1205 = vrot.slane %v1052, %v1204
  %v1206 = vsel %vm1124, %v1205, %v1201
  %v1207 = vlaneseq
  %v1208 = vshrl.u32 %v1207, 7
  %v1209 = vsub.s32 %v1114, %v1208
  %v1210 = vrot.slane %v1053, %v1209
  %v1211 = vlaneseq
  %v1212 = vshrl.u32 %v1211, 7
  %v1213 = vsub.s32 %v1119, %v1212
  %v1214 = vrot.slane %v1054, %v1213
  %v1215 = vsel %vm1124, %v1214, %v1210
  %v1216 = vlaneseq
  %v1217 = vshrl.u32 %v1216, 7
  %v1218 = vsub.s32 %v1114, %v1217
  %v1219 = vrot.slane %v1055, %v1218
  %v1220 = vlaneseq
  %v1221 = vshrl.u32 %v1220, 7
  %v1222 = vsub.s32 %v1119, %v1221
  %v1223 = vrot.slane %v1056, %v1222
  %v1224 = vsel %vm1124, %v1223, %v1219
  %v1225 = vlaneseq
  %v1226 = vshrl.u32 %v1225, 7
  %v1227 = vsub.s32 %v1114, %v1226
  %v1228 = vrot.slane %v1057, %v1227
  %v1229 = vlaneseq
  %v1230 = vshrl.u32 %v1229, 7
  %v1231 = vsub.s32 %v1119, %v1230
  %v1232 = vrot.slane %v1058, %v1231
  %v1233 = vsel %vm1124, %v1232, %v1228
  %v1234 = vlaneseq
  %v1235 = vshrl.u32 %v1234, 7
  %v1236 = vsub.s32 %v1114, %v1235
  %v1237 = vrot.slane %v1059, %v1236
  %v1238 = vlaneseq
  %v1239 = vshrl.u32 %v1238, 7
  %v1240 = vsub.s32 %v1119, %v1239
  %v1241 = vrot.slane %v1060, %v1240
  %v1242 = vsel %vm1124, %v1241, %v1237
  %v1243 = vlaneseq
  %v1244 = vshrl.u32 %v1243, 7
  %v1245 = vsub.s32 %v1114, %v1244
  %v1246 = vrot.slane %v1061, %v1245
  %v1247 = vlaneseq
  %v1248 = vshrl.u32 %v1247, 7
  %v1249 = vsub.s32 %v1119, %v1248
  %v1250 = vrot.slane %v1062, %v1249
  %v1251 = vsel %vm1124, %v1250, %v1246
  %v1252 = vlaneseq
  %v1253 = vshrl.u32 %v1252, 7
  %v1254 = vsub.s32 %v1114, %v1253
  %v1255 = vrot.slane %v1063, %v1254
  %v1256 = vlaneseq
  %v1257 = vshrl.u32 %v1256, 7
  %v1258 = vsub.s32 %v1119, %v1257
  %v1259 = vrot.slane %v1064, %v1258
  %v1260 = vsel %vm1124, %v1259, %v1255
  %v1261 = vlaneseq
  %v1262 = vshrl.u32 %v1261, 7
  %v1263 = vsub.s32 %v1114, %v1262
  %v1264 = vrot.slane %v1065, %v1263
  %v1265 = vlaneseq
  %v1266 = vshrl.u32 %v1265, 7
  %v1267 = vsub.s32 %v1119, %v1266
  %v1268 = vrot.slane %v1066, %v1267
  %v1269 = vsel %vm1124, %v1268, %v1264
  %v1270 = vlaneseq
  %v1271 = vshrl.u32 %v1270, 7
  %v1272 = vsub.s32 %v1114, %v1271
  %v1273 = vrot.slane %v1067, %v1272
  %v1274 = vlaneseq
  %v1275 = vshrl.u32 %v1274, 7
  %v1276 = vsub.s32 %v1119, %v1275
  %v1277 = vrot.slane %v1068, %v1276
  %v1278 = vsel %vm1124, %v1277, %v1273
  %v1279 = vlaneseq
  %v1280 = vshrl.u32 %v1279, 7
  %v1281 = vsub.s32 %v1114, %v1280
  %v1282 = vrot.slane %v1069, %v1281
  %v1283 = vlaneseq
  %v1284 = vshrl.u32 %v1283, 7
  %v1285 = vsub.s32 %v1119, %v1284
  %v1286 = vrot.slane %v1070, %v1285
  %v1287 = vsel %vm1124, %v1286, %v1282
  %v1288 = vlaneseq
  %v1289 = vshrl.u32 %v1288, 7
  %v1290 = vsub.s32 %v1114, %v1289
  %v1291 = vrot.slane %v1071, %v1290
  %v1292 = vlaneseq
  %v1293 = vshrl.u32 %v1292, 7
  %v1294 = vsub.s32 %v1119, %v1293
  %v1295 = vrot.slane %v1072, %v1294
  %v1296 = vsel %vm1124, %v1295, %v1291
  %vm1297 = vcmask 1041409
  %v1298 = vsel %vm1297, %v1134, %v1125
  %vm1299 = vcmask 1042434
  %v1300 = vsel %vm1299, %v1143, %v1298
  %vm1301 = vcmask 1043459
  %v1302 = vsel %vm1301, %v1152, %v1300
  %vm1303 = vcmask 1044484
  %v1304 = vsel %vm1303, %v1161, %v1302
  %vm1305 = vcmask 1045509
  %v1306 = vsel %vm1305, %v1170, %v1304
  %vm1307 = vcmask 1046534
  %v1308 = vsel %vm1307, %v1179, %v1306
  %vm1309 = vcmask 1047559
  %v1310 = vsel %vm1309, %v1188, %v1308
  %v1311 = vsel %vm1297, %v1206, %v1197
  %v1312 = vsel %vm1297, %v1224, %v1215
  %v1313 = vsel %vm1299, %v1233, %v1312
  %v1314 = vsel %vm1301, %v1242, %v1313
  %v1315 = vsel %vm1303, %v1251, %v1314
  %v1316 = vsel %vm1305, %v1260, %v1315
  %v1317 = vsel %vm1307, %v1269, %v1316
  %v1318 = vsel %vm1309, %v1278, %v1317
  %v1319 = vsel %vm1297, %v1296, %v1287
  %vm1324 = vcmask 130048
  %v1325 = vsel %vm1324, %v1310, 0.0
  %1326 = vadd.xlane.f32.xlu0 %v1325
  %v1327 = vpop.xlane.xlu0 %1326
  %vm1328 = vcmask 123904
  %v1329 = vsel %vm1328, %v1311, 0.0
  %1330 = vadd.xlane.f32.xlu0 %v1329
  %v1331 = vpop.xlane.xlu0 %1330
  %v1332 = vsel %vm1324, %v1318, 0.0
  %1333 = vadd.xlane.f32.xlu0 %v1332
  %v1334 = vpop.xlane.xlu0 %1333
  %v1335 = vsel %vm1328, %v1319, 0.0
  %1336 = vadd.xlane.f32.xlu0 %v1335
  %v1337 = vpop.xlane.xlu0 %1336
  %v1338 = vrsqrt.pop %v1327
  %v1339 = vmul.f32 %v1327, %v1338
  %vm1340 = vcmp.eq.f32.partialorder %v1327, inf
  %v1341 = vsel %vm1340, %v1327, %v1339
  %vm1342 = vcmp.eq.f32.partialorder %v1327, 0.0
  %v1343 = vand.u32 %v1327, 2147483648
  %v1344 = vsel %vm1342, %v1343, %v1341
  %v1345 = vrsqrt.pop %v1331
  %v1346 = vmul.f32 %v1331, %v1345
  %vm1347 = vcmp.eq.f32.partialorder %v1331, inf
  %v1348 = vsel %vm1347, %v1331, %v1346
  %vm1349 = vcmp.eq.f32.partialorder %v1331, 0.0
  %v1350 = vand.u32 %v1331, 2147483648
  %v1351 = vsel %vm1349, %v1350, %v1348
  %v1352 = vrsqrt.pop %v1334
  %v1353 = vmul.f32 %v1334, %v1352
  %vm1354 = vcmp.eq.f32.partialorder %v1334, inf
  %v1355 = vsel %vm1354, %v1334, %v1353
  %vm1356 = vcmp.eq.f32.partialorder %v1334, 0.0
  %v1357 = vand.u32 %v1334, 2147483648
  %v1358 = vsel %vm1356, %v1357, %v1355
  %v1359 = vrsqrt.pop %v1337
  %v1360 = vmul.f32 %v1337, %v1359
  %vm1361 = vcmp.eq.f32.partialorder %v1337, inf
  %v1362 = vsel %vm1361, %v1337, %v1360
  %vm1363 = vcmp.eq.f32.partialorder %v1337, 0.0
  %v1364 = vand.u32 %v1337, 2147483648
  %v1365 = vsel %vm1363, %v1364, %v1362
  %v1370 = vlaneseq
  %v1371 = vshrl.u32 %v1370, 7
  %v1372 = vsub.s32 0, %v1371
  %v1373 = vrot.slane %v1344, %v1372
  %v1374 = vlaneseq
  %v1375 = vshrl.u32 %v1374, 7
  %v1376 = vsub.s32 1, %v1375
  %v1377 = vrot.slane %v1344, %v1376
  %v1378 = vlaneseq
  %v1379 = vshrl.u32 %v1378, 7
  %v1380 = vsub.s32 2, %v1379
  %v1381 = vrot.slane %v1344, %v1380
  %v1382 = vlaneseq
  %v1383 = vshrl.u32 %v1382, 7
  %v1384 = vsub.s32 3, %v1383
  %v1385 = vrot.slane %v1344, %v1384
  %v1386 = vlaneseq
  %v1387 = vshrl.u32 %v1386, 7
  %v1388 = vsub.s32 4, %v1387
  %v1389 = vrot.slane %v1344, %v1388
  %v1390 = vlaneseq
  %v1391 = vshrl.u32 %v1390, 7
  %v1392 = vsub.s32 5, %v1391
  %v1393 = vrot.slane %v1344, %v1392
  %v1394 = vlaneseq
  %v1395 = vshrl.u32 %v1394, 7
  %v1396 = vsub.s32 6, %v1395
  %v1397 = vrot.slane %v1344, %v1396
  %v1398 = vlaneseq
  %v1399 = vshrl.u32 %v1398, 7
  %v1400 = vsub.s32 7, %v1399
  %v1401 = vrot.slane %v1344, %v1400
  %v1402 = vlaneseq
  %v1403 = vshrl.u32 %v1402, 7
  %v1404 = vsub.s32 0, %v1403
  %v1405 = vrot.slane %v1351, %v1404
  %v1406 = vlaneseq
  %v1407 = vshrl.u32 %v1406, 7
  %v1408 = vsub.s32 1, %v1407
  %v1409 = vrot.slane %v1351, %v1408
  %v1410 = vlaneseq
  %v1411 = vshrl.u32 %v1410, 7
  %v1412 = vsub.s32 0, %v1411
  %v1413 = vrot.slane %v1358, %v1412
  %v1414 = vlaneseq
  %v1415 = vshrl.u32 %v1414, 7
  %v1416 = vsub.s32 1, %v1415
  %v1417 = vrot.slane %v1358, %v1416
  %v1418 = vlaneseq
  %v1419 = vshrl.u32 %v1418, 7
  %v1420 = vsub.s32 2, %v1419
  %v1421 = vrot.slane %v1358, %v1420
  %v1422 = vlaneseq
  %v1423 = vshrl.u32 %v1422, 7
  %v1424 = vsub.s32 3, %v1423
  %v1425 = vrot.slane %v1358, %v1424
  %v1426 = vlaneseq
  %v1427 = vshrl.u32 %v1426, 7
  %v1428 = vsub.s32 4, %v1427
  %v1429 = vrot.slane %v1358, %v1428
  %v1430 = vlaneseq
  %v1431 = vshrl.u32 %v1430, 7
  %v1432 = vsub.s32 5, %v1431
  %v1433 = vrot.slane %v1358, %v1432
  %v1434 = vlaneseq
  %v1435 = vshrl.u32 %v1434, 7
  %v1436 = vsub.s32 6, %v1435
  %v1437 = vrot.slane %v1358, %v1436
  %v1438 = vlaneseq
  %v1439 = vshrl.u32 %v1438, 7
  %v1440 = vsub.s32 7, %v1439
  %v1441 = vrot.slane %v1358, %v1440
  %v1442 = vlaneseq
  %v1443 = vshrl.u32 %v1442, 7
  %v1444 = vsub.s32 0, %v1443
  %v1445 = vrot.slane %v1365, %v1444
  %v1446 = vlaneseq
  %v1447 = vshrl.u32 %v1446, 7
  %v1448 = vsub.s32 1, %v1447
  %v1449 = vrot.slane %v1365, %v1448
  %v1470 = vmul.f32 %v954, %v1373
  %v1471 = vmul.f32 %v956, %v1373
  %v1472 = vmul.f32 %v958, %v1377
  %v1473 = vmul.f32 %v960, %v1377
  %v1474 = vmul.f32 %v962, %v1381
  %v1475 = vmul.f32 %v964, %v1381
  %v1476 = vmul.f32 %v966, %v1385
  %v1477 = vmul.f32 %v968, %v1385
  %v1478 = vmul.f32 %v970, %v1389
  %v1479 = vmul.f32 %v972, %v1389
  %v1480 = vmul.f32 %v974, %v1393
  %v1481 = vmul.f32 %v976, %v1393
  %v1482 = vmul.f32 %v978, %v1397
  %v1483 = vmul.f32 %v980, %v1397
  %v1484 = vmul.f32 %v982, %v1401
  %v1485 = vmul.f32 %v984, %v1401
  %v1486 = vmul.f32 %v986, %v1405
  %v1487 = vmul.f32 %v988, %v1405
  %v1488 = vmul.f32 %v990, %v1409
  %v1489 = vmul.f32 %v992, %v1409
  %v1490 = vmul.f32 %v994, %v1413
  %v1491 = vmul.f32 %v996, %v1413
  %v1492 = vmul.f32 %v998, %v1417
  %v1493 = vmul.f32 %v1000, %v1417
  %v1494 = vmul.f32 %v1002, %v1421
  %v1495 = vmul.f32 %v1004, %v1421
  %v1496 = vmul.f32 %v1006, %v1425
  %v1497 = vmul.f32 %v1008, %v1425
  %v1498 = vmul.f32 %v1010, %v1429
  %v1499 = vmul.f32 %v1012, %v1429
  %v1500 = vmul.f32 %v1014, %v1433
  %v1501 = vmul.f32 %v1016, %v1433
  %v1502 = vmul.f32 %v1018, %v1437
  %v1503 = vmul.f32 %v1020, %v1437
  %v1504 = vmul.f32 %v1022, %v1441
  %v1505 = vmul.f32 %v1024, %v1441
  %v1506 = vmul.f32 %v1026, %v1445
  %v1507 = vmul.f32 %v1028, %v1445
  %v1508 = vmul.f32 %v1030, %v1449
  %v1509 = vmul.f32 %v1032, %v1449
  %v1510 = vadd.f32 %v1327, 1.0
  %v1511 = vadd.f32 %v1331, 1.0
  %v1512 = vadd.f32 %v1334, 1.0
  %v1513 = vadd.f32 %v1337, 1.0
  %v1518 = vlaneseq
  %v1519 = vshrl.u32 %v1518, 7
  %v1520 = vsub.s32 0, %v1519
  %v1521 = vrot.slane %v1510, %v1520
  %v1522 = vlaneseq
  %v1523 = vshrl.u32 %v1522, 7
  %v1524 = vsub.s32 1, %v1523
  %v1525 = vrot.slane %v1510, %v1524
  %v1526 = vlaneseq
  %v1527 = vshrl.u32 %v1526, 7
  %v1528 = vsub.s32 2, %v1527
  %v1529 = vrot.slane %v1510, %v1528
  %v1530 = vlaneseq
  %v1531 = vshrl.u32 %v1530, 7
  %v1532 = vsub.s32 3, %v1531
  %v1533 = vrot.slane %v1510, %v1532
  %v1534 = vlaneseq
  %v1535 = vshrl.u32 %v1534, 7
  %v1536 = vsub.s32 4, %v1535
  %v1537 = vrot.slane %v1510, %v1536
  %v1538 = vlaneseq
  %v1539 = vshrl.u32 %v1538, 7
  %v1540 = vsub.s32 5, %v1539
  %v1541 = vrot.slane %v1510, %v1540
  %v1542 = vlaneseq
  %v1543 = vshrl.u32 %v1542, 7
  %v1544 = vsub.s32 6, %v1543
  %v1545 = vrot.slane %v1510, %v1544
  %v1546 = vlaneseq
  %v1547 = vshrl.u32 %v1546, 7
  %v1548 = vsub.s32 7, %v1547
  %v1549 = vrot.slane %v1510, %v1548
  %v1550 = vlaneseq
  %v1551 = vshrl.u32 %v1550, 7
  %v1552 = vsub.s32 0, %v1551
  %v1553 = vrot.slane %v1511, %v1552
  %v1554 = vlaneseq
  %v1555 = vshrl.u32 %v1554, 7
  %v1556 = vsub.s32 1, %v1555
  %v1557 = vrot.slane %v1511, %v1556
  %v1558 = vlaneseq
  %v1559 = vshrl.u32 %v1558, 7
  %v1560 = vsub.s32 0, %v1559
  %v1561 = vrot.slane %v1512, %v1560
  %v1562 = vlaneseq
  %v1563 = vshrl.u32 %v1562, 7
  %v1564 = vsub.s32 1, %v1563
  %v1565 = vrot.slane %v1512, %v1564
  %v1566 = vlaneseq
  %v1567 = vshrl.u32 %v1566, 7
  %v1568 = vsub.s32 2, %v1567
  %v1569 = vrot.slane %v1512, %v1568
  %v1570 = vlaneseq
  %v1571 = vshrl.u32 %v1570, 7
  %v1572 = vsub.s32 3, %v1571
  %v1573 = vrot.slane %v1512, %v1572
  %v1574 = vlaneseq
  %v1575 = vshrl.u32 %v1574, 7
  %v1576 = vsub.s32 4, %v1575
  %v1577 = vrot.slane %v1512, %v1576
  %v1578 = vlaneseq
  %v1579 = vshrl.u32 %v1578, 7
  %v1580 = vsub.s32 5, %v1579
  %v1581 = vrot.slane %v1512, %v1580
  %v1582 = vlaneseq
  %v1583 = vshrl.u32 %v1582, 7
  %v1584 = vsub.s32 6, %v1583
  %v1585 = vrot.slane %v1512, %v1584
  %v1586 = vlaneseq
  %v1587 = vshrl.u32 %v1586, 7
  %v1588 = vsub.s32 7, %v1587
  %v1589 = vrot.slane %v1512, %v1588
  %v1590 = vlaneseq
  %v1591 = vshrl.u32 %v1590, 7
  %v1592 = vsub.s32 0, %v1591
  %v1593 = vrot.slane %v1513, %v1592
  %v1594 = vlaneseq
  %v1595 = vshrl.u32 %v1594, 7
  %v1596 = vsub.s32 1, %v1595
  %v1597 = vrot.slane %v1513, %v1596
  %v1618 = vrcp.pop %v1521
  %v1619 = vmul.f32 %v1470, %v1618
  %v1620 = vmul.f32 %v1471, %v1618
  %v1621 = vrcp.pop %v1525
  %v1622 = vmul.f32 %v1472, %v1621
  %v1623 = vmul.f32 %v1473, %v1621
  %v1624 = vrcp.pop %v1529
  %v1625 = vmul.f32 %v1474, %v1624
  %v1626 = vmul.f32 %v1475, %v1624
  %v1627 = vrcp.pop %v1533
  %v1628 = vmul.f32 %v1476, %v1627
  %v1629 = vmul.f32 %v1477, %v1627
  %v1630 = vrcp.pop %v1537
  %v1631 = vmul.f32 %v1478, %v1630
  %v1632 = vmul.f32 %v1479, %v1630
  %v1633 = vrcp.pop %v1541
  %v1634 = vmul.f32 %v1480, %v1633
  %v1635 = vmul.f32 %v1481, %v1633
  %v1636 = vrcp.pop %v1545
  %v1637 = vmul.f32 %v1482, %v1636
  %v1638 = vmul.f32 %v1483, %v1636
  %v1639 = vrcp.pop %v1549
  %v1640 = vmul.f32 %v1484, %v1639
  %v1641 = vmul.f32 %v1485, %v1639
  %v1642 = vrcp.pop %v1553
  %v1643 = vmul.f32 %v1486, %v1642
  %v1644 = vmul.f32 %v1487, %v1642
  %v1645 = vrcp.pop %v1557
  %v1646 = vmul.f32 %v1488, %v1645
  %v1647 = vmul.f32 %v1489, %v1645
  %v1648 = vrcp.pop %v1561
  %v1649 = vmul.f32 %v1490, %v1648
  %v1650 = vmul.f32 %v1491, %v1648
  %v1651 = vrcp.pop %v1565
  %v1652 = vmul.f32 %v1492, %v1651
  %v1653 = vmul.f32 %v1493, %v1651
  %v1654 = vrcp.pop %v1569
  %v1655 = vmul.f32 %v1494, %v1654
  %v1656 = vmul.f32 %v1495, %v1654
  %v1657 = vrcp.pop %v1573
  %v1658 = vmul.f32 %v1496, %v1657
  %v1659 = vmul.f32 %v1497, %v1657
  %v1660 = vrcp.pop %v1577
  %v1661 = vmul.f32 %v1498, %v1660
  %v1662 = vmul.f32 %v1499, %v1660
  %v1663 = vrcp.pop %v1581
  %v1664 = vmul.f32 %v1500, %v1663
  %v1665 = vmul.f32 %v1501, %v1663
  %v1666 = vrcp.pop %v1585
  %v1667 = vmul.f32 %v1502, %v1666
  %v1668 = vmul.f32 %v1503, %v1666
  %v1669 = vrcp.pop %v1589
  %v1670 = vmul.f32 %v1504, %v1669
  %v1671 = vmul.f32 %v1505, %v1669
  %v1672 = vrcp.pop %v1593
  %v1673 = vmul.f32 %v1506, %v1672
  %v1674 = vmul.f32 %v1507, %v1672
  %v1675 = vrcp.pop %v1597
  %v1676 = vmul.f32 %v1508, %v1675
  %v1677 = vmul.f32 %v1509, %v1675
  %1679 = vset.pattern.permute.xlu0 0
  %1680 = vperm.xlu0 %1679, %v1619
  %v1681 = vpop.permute.xlu0 %1680
  %1684 = vset.pattern.permute.xlu0 0
  %1685 = vperm.xlu0 %1684, %v1620
  %v1686 = vpop.permute.xlu0 %1685
  %1689 = vset.pattern.permute.xlu0 0
  %1690 = vperm.xlu0 %1689, %v1622
  %v1691 = vpop.permute.xlu0 %1690
  %1694 = vset.pattern.permute.xlu0 0
  %1695 = vperm.xlu0 %1694, %v1623
  %v1696 = vpop.permute.xlu0 %1695
  %1699 = vset.pattern.permute.xlu0 0
  %1700 = vperm.xlu0 %1699, %v1625
  %v1701 = vpop.permute.xlu0 %1700
  %1704 = vset.pattern.permute.xlu0 0
  %1705 = vperm.xlu0 %1704, %v1626
  %v1706 = vpop.permute.xlu0 %1705
  %1709 = vset.pattern.permute.xlu0 0
  %1710 = vperm.xlu0 %1709, %v1628
  %v1711 = vpop.permute.xlu0 %1710
  %1714 = vset.pattern.permute.xlu0 0
  %1715 = vperm.xlu0 %1714, %v1629
  %v1716 = vpop.permute.xlu0 %1715
  %1719 = vset.pattern.permute.xlu0 0
  %1720 = vperm.xlu0 %1719, %v1631
  %v1721 = vpop.permute.xlu0 %1720
  %1724 = vset.pattern.permute.xlu0 0
  %1725 = vperm.xlu0 %1724, %v1632
  %v1726 = vpop.permute.xlu0 %1725
  %1729 = vset.pattern.permute.xlu0 0
  %1730 = vperm.xlu0 %1729, %v1634
  %v1731 = vpop.permute.xlu0 %1730
  %1734 = vset.pattern.permute.xlu0 0
  %1735 = vperm.xlu0 %1734, %v1635
  %v1736 = vpop.permute.xlu0 %1735
  %1739 = vset.pattern.permute.xlu0 0
  %1740 = vperm.xlu0 %1739, %v1637
  %v1741 = vpop.permute.xlu0 %1740
  %1744 = vset.pattern.permute.xlu0 0
  %1745 = vperm.xlu0 %1744, %v1638
  %v1746 = vpop.permute.xlu0 %1745
  %1749 = vset.pattern.permute.xlu0 0
  %1750 = vperm.xlu0 %1749, %v1640
  %v1751 = vpop.permute.xlu0 %1750
  %1754 = vset.pattern.permute.xlu0 0
  %1755 = vperm.xlu0 %1754, %v1641
  %v1756 = vpop.permute.xlu0 %1755
  %1759 = vset.pattern.permute.xlu0 0
  %1760 = vperm.xlu0 %1759, %v1643
  %v1761 = vpop.permute.xlu0 %1760
  %1764 = vset.pattern.permute.xlu0 0
  %1765 = vperm.xlu0 %1764, %v1644
  %v1766 = vpop.permute.xlu0 %1765
  %1769 = vset.pattern.permute.xlu0 0
  %1770 = vperm.xlu0 %1769, %v1646
  %v1771 = vpop.permute.xlu0 %1770
  %1774 = vset.pattern.permute.xlu0 0
  %1775 = vperm.xlu0 %1774, %v1647
  %v1776 = vpop.permute.xlu0 %1775
  %1779 = vset.pattern.permute.xlu0 0
  %1780 = vperm.xlu0 %1779, %v1649
  %v1781 = vpop.permute.xlu0 %1780
  %1784 = vset.pattern.permute.xlu0 0
  %1785 = vperm.xlu0 %1784, %v1650
  %v1786 = vpop.permute.xlu0 %1785
  %1789 = vset.pattern.permute.xlu0 0
  %1790 = vperm.xlu0 %1789, %v1652
  %v1791 = vpop.permute.xlu0 %1790
  %1794 = vset.pattern.permute.xlu0 0
  %1795 = vperm.xlu0 %1794, %v1653
  %v1796 = vpop.permute.xlu0 %1795
  %1799 = vset.pattern.permute.xlu0 0
  %1800 = vperm.xlu0 %1799, %v1655
  %v1801 = vpop.permute.xlu0 %1800
  %1804 = vset.pattern.permute.xlu0 0
  %1805 = vperm.xlu0 %1804, %v1656
  %v1806 = vpop.permute.xlu0 %1805
  %1809 = vset.pattern.permute.xlu0 0
  %1810 = vperm.xlu0 %1809, %v1658
  %v1811 = vpop.permute.xlu0 %1810
  %1814 = vset.pattern.permute.xlu0 0
  %1815 = vperm.xlu0 %1814, %v1659
  %v1816 = vpop.permute.xlu0 %1815
  %1819 = vset.pattern.permute.xlu0 0
  %1820 = vperm.xlu0 %1819, %v1661
  %v1821 = vpop.permute.xlu0 %1820
  %1824 = vset.pattern.permute.xlu0 0
  %1825 = vperm.xlu0 %1824, %v1662
  %v1826 = vpop.permute.xlu0 %1825
  %1829 = vset.pattern.permute.xlu0 0
  %1830 = vperm.xlu0 %1829, %v1664
  %v1831 = vpop.permute.xlu0 %1830
  %1834 = vset.pattern.permute.xlu0 0
  %1835 = vperm.xlu0 %1834, %v1665
  %v1836 = vpop.permute.xlu0 %1835
  %1839 = vset.pattern.permute.xlu0 0
  %1840 = vperm.xlu0 %1839, %v1667
  %v1841 = vpop.permute.xlu0 %1840
  %1844 = vset.pattern.permute.xlu0 0
  %1845 = vperm.xlu0 %1844, %v1668
  %v1846 = vpop.permute.xlu0 %1845
  %1849 = vset.pattern.permute.xlu0 0
  %1850 = vperm.xlu0 %1849, %v1670
  %v1851 = vpop.permute.xlu0 %1850
  %1854 = vset.pattern.permute.xlu0 0
  %1855 = vperm.xlu0 %1854, %v1671
  %v1856 = vpop.permute.xlu0 %1855
  %1859 = vset.pattern.permute.xlu0 0
  %1860 = vperm.xlu0 %1859, %v1673
  %v1861 = vpop.permute.xlu0 %1860
  %1864 = vset.pattern.permute.xlu0 0
  %1865 = vperm.xlu0 %1864, %v1674
  %v1866 = vpop.permute.xlu0 %1865
  %1869 = vset.pattern.permute.xlu0 0
  %1870 = vperm.xlu0 %1869, %v1676
  %v1871 = vpop.permute.xlu0 %1870
  %1874 = vset.pattern.permute.xlu0 0
  %1875 = vperm.xlu0 %1874, %v1677
  %v1876 = vpop.permute.xlu0 %1875
  %v1878 = vmul.f32 %v869, %v1681
  %v1879 = vmul.f32 %v870, %v1686
  %v1880 = vmul.f32 %v871, %v1691
  %v1881 = vmul.f32 %v872, %v1696
  %v1882 = vmul.f32 %v873, %v1701
  %v1883 = vmul.f32 %v874, %v1706
  %v1884 = vmul.f32 %v875, %v1711
  %v1885 = vmul.f32 %v876, %v1716
  %v1886 = vmul.f32 %v877, %v1721
  %v1887 = vmul.f32 %v878, %v1726
  %v1888 = vmul.f32 %v879, %v1731
  %v1889 = vmul.f32 %v880, %v1736
  %v1890 = vmul.f32 %v881, %v1741
  %v1891 = vmul.f32 %v882, %v1746
  %v1892 = vmul.f32 %v883, %v1751
  %v1893 = vmul.f32 %v884, %v1756
  %v1894 = vmul.f32 %v885, %v1761
  %v1895 = vmul.f32 %v886, %v1766
  %v1896 = vmul.f32 %v887, %v1771
  %v1897 = vmul.f32 %v888, %v1776
  %v1898 = vmul.f32 %v889, %v1781
  %v1899 = vmul.f32 %v890, %v1786
  %v1900 = vmul.f32 %v891, %v1791
  %v1901 = vmul.f32 %v892, %v1796
  %v1902 = vmul.f32 %v893, %v1801
  %v1903 = vmul.f32 %v894, %v1806
  %v1904 = vmul.f32 %v895, %v1811
  %v1905 = vmul.f32 %v896, %v1816
  %v1906 = vmul.f32 %v897, %v1821
  %v1907 = vmul.f32 %v898, %v1826
  %v1908 = vmul.f32 %v899, %v1831
  %v1909 = vmul.f32 %v900, %v1836
  %v1910 = vmul.f32 %v901, %v1841
  %v1911 = vmul.f32 %v902, %v1846
  %v1912 = vmul.f32 %v903, %v1851
  %v1913 = vmul.f32 %v904, %v1856
  %v1914 = vmul.f32 %v905, %v1861
  %v1915 = vmul.f32 %v906, %v1866
  %v1916 = vmul.f32 %v907, %v1871
  %v1917 = vmul.f32 %v908, %v1876
  %v1918 = vadd.f32 %v1878, %v1879
  %v1919 = vrot.slane %v1918, 4
  %v1920 = vadd.f32 %v1918, %v1919
  %v1921 = vrot.slane %v1920, 2
  %v1922 = vadd.f32 %v1920, %v1921
  %v1923 = vrot.slane %v1922, 1
  %v1924 = vadd.f32 %v1922, %v1923
  %v1925 = vadd.f32 %v1880, %v1881
  %v1926 = vrot.slane %v1925, 4
  %v1927 = vadd.f32 %v1925, %v1926
  %v1928 = vrot.slane %v1927, 2
  %v1929 = vadd.f32 %v1927, %v1928
  %v1930 = vrot.slane %v1929, 1
  %v1931 = vadd.f32 %v1929, %v1930
  %v1932 = vadd.f32 %v1882, %v1883
  %v1933 = vrot.slane %v1932, 4
  %v1934 = vadd.f32 %v1932, %v1933
  %v1935 = vrot.slane %v1934, 2
  %v1936 = vadd.f32 %v1934, %v1935
  %v1937 = vrot.slane %v1936, 1
  %v1938 = vadd.f32 %v1936, %v1937
  %v1939 = vadd.f32 %v1884, %v1885
  %v1940 = vrot.slane %v1939, 4
  %v1941 = vadd.f32 %v1939, %v1940
  %v1942 = vrot.slane %v1941, 2
  %v1943 = vadd.f32 %v1941, %v1942
  %v1944 = vrot.slane %v1943, 1
  %v1945 = vadd.f32 %v1943, %v1944
  %v1946 = vadd.f32 %v1886, %v1887
  %v1947 = vrot.slane %v1946, 4
  %v1948 = vadd.f32 %v1946, %v1947
  %v1949 = vrot.slane %v1948, 2
  %v1950 = vadd.f32 %v1948, %v1949
  %v1951 = vrot.slane %v1950, 1
  %v1952 = vadd.f32 %v1950, %v1951
  %v1953 = vadd.f32 %v1888, %v1889
  %v1954 = vrot.slane %v1953, 4
  %v1955 = vadd.f32 %v1953, %v1954
  %v1956 = vrot.slane %v1955, 2
  %v1957 = vadd.f32 %v1955, %v1956
  %v1958 = vrot.slane %v1957, 1
  %v1959 = vadd.f32 %v1957, %v1958
  %v1960 = vadd.f32 %v1890, %v1891
  %v1961 = vrot.slane %v1960, 4
  %v1962 = vadd.f32 %v1960, %v1961
  %v1963 = vrot.slane %v1962, 2
  %v1964 = vadd.f32 %v1962, %v1963
  %v1965 = vrot.slane %v1964, 1
  %v1966 = vadd.f32 %v1964, %v1965
  %v1967 = vadd.f32 %v1892, %v1893
  %v1968 = vrot.slane %v1967, 4
  %v1969 = vadd.f32 %v1967, %v1968
  %v1970 = vrot.slane %v1969, 2
  %v1971 = vadd.f32 %v1969, %v1970
  %v1972 = vrot.slane %v1971, 1
  %v1973 = vadd.f32 %v1971, %v1972
  %v1974 = vadd.f32 %v1894, %v1895
  %v1975 = vrot.slane %v1974, 4
  %v1976 = vadd.f32 %v1974, %v1975
  %v1977 = vrot.slane %v1976, 2
  %v1978 = vadd.f32 %v1976, %v1977
  %v1979 = vrot.slane %v1978, 1
  %v1980 = vadd.f32 %v1978, %v1979
  %v1981 = vadd.f32 %v1896, %v1897
  %v1982 = vrot.slane %v1981, 4
  %v1983 = vadd.f32 %v1981, %v1982
  %v1984 = vrot.slane %v1983, 2
  %v1985 = vadd.f32 %v1983, %v1984
  %v1986 = vrot.slane %v1985, 1
  %v1987 = vadd.f32 %v1985, %v1986
  %v1988 = vadd.f32 %v1898, %v1899
  %v1989 = vrot.slane %v1988, 4
  %v1990 = vadd.f32 %v1988, %v1989
  %v1991 = vrot.slane %v1990, 2
  %v1992 = vadd.f32 %v1990, %v1991
  %v1993 = vrot.slane %v1992, 1
  %v1994 = vadd.f32 %v1992, %v1993
  %v1995 = vadd.f32 %v1900, %v1901
  %v1996 = vrot.slane %v1995, 4
  %v1997 = vadd.f32 %v1995, %v1996
  %v1998 = vrot.slane %v1997, 2
  %v1999 = vadd.f32 %v1997, %v1998
  %v2000 = vrot.slane %v1999, 1
  %v2001 = vadd.f32 %v1999, %v2000
  %v2002 = vadd.f32 %v1902, %v1903
  %v2003 = vrot.slane %v2002, 4
  %v2004 = vadd.f32 %v2002, %v2003
  %v2005 = vrot.slane %v2004, 2
  %v2006 = vadd.f32 %v2004, %v2005
  %v2007 = vrot.slane %v2006, 1
  %v2008 = vadd.f32 %v2006, %v2007
  %v2009 = vadd.f32 %v1904, %v1905
  %v2010 = vrot.slane %v2009, 4
  %v2011 = vadd.f32 %v2009, %v2010
  %v2012 = vrot.slane %v2011, 2
  %v2013 = vadd.f32 %v2011, %v2012
  %v2014 = vrot.slane %v2013, 1
  %v2015 = vadd.f32 %v2013, %v2014
  %v2016 = vadd.f32 %v1906, %v1907
  %v2017 = vrot.slane %v2016, 4
  %v2018 = vadd.f32 %v2016, %v2017
  %v2019 = vrot.slane %v2018, 2
  %v2020 = vadd.f32 %v2018, %v2019
  %v2021 = vrot.slane %v2020, 1
  %v2022 = vadd.f32 %v2020, %v2021
  %v2023 = vadd.f32 %v1908, %v1909
  %v2024 = vrot.slane %v2023, 4
  %v2025 = vadd.f32 %v2023, %v2024
  %v2026 = vrot.slane %v2025, 2
  %v2027 = vadd.f32 %v2025, %v2026
  %v2028 = vrot.slane %v2027, 1
  %v2029 = vadd.f32 %v2027, %v2028
  %v2030 = vadd.f32 %v1910, %v1911
  %v2031 = vrot.slane %v2030, 4
  %v2032 = vadd.f32 %v2030, %v2031
  %v2033 = vrot.slane %v2032, 2
  %v2034 = vadd.f32 %v2032, %v2033
  %v2035 = vrot.slane %v2034, 1
  %v2036 = vadd.f32 %v2034, %v2035
  %v2037 = vadd.f32 %v1912, %v1913
  %v2038 = vrot.slane %v2037, 4
  %v2039 = vadd.f32 %v2037, %v2038
  %v2040 = vrot.slane %v2039, 2
  %v2041 = vadd.f32 %v2039, %v2040
  %v2042 = vrot.slane %v2041, 1
  %v2043 = vadd.f32 %v2041, %v2042
  %v2044 = vadd.f32 %v1914, %v1915
  %v2045 = vrot.slane %v2044, 4
  %v2046 = vadd.f32 %v2044, %v2045
  %v2047 = vrot.slane %v2046, 2
  %v2048 = vadd.f32 %v2046, %v2047
  %v2049 = vrot.slane %v2048, 1
  %v2050 = vadd.f32 %v2048, %v2049
  %v2051 = vadd.f32 %v1916, %v1917
  %v2052 = vrot.slane %v2051, 4
  %v2053 = vadd.f32 %v2051, %v2052
  %v2054 = vrot.slane %v2053, 2
  %v2055 = vadd.f32 %v2053, %v2054
  %v2056 = vrot.slane %v2055, 1
  %v2057 = vadd.f32 %v2055, %v2056
  %v2058 = vadd.f32 %v1924, 0.0
  %v2059 = vadd.f32 %v1931, 0.0
  %v2060 = vadd.f32 %v1938, 0.0
  %v2061 = vadd.f32 %v1945, 0.0
  %v2062 = vadd.f32 %v1952, 0.0
  %v2063 = vadd.f32 %v1959, 0.0
  %v2064 = vadd.f32 %v1966, 0.0
  %v2065 = vadd.f32 %v1973, 0.0
  %v2066 = vadd.f32 %v1980, 0.0
  %v2067 = vadd.f32 %v1987, 0.0
  %v2068 = vadd.f32 %v1994, 0.0
  %v2069 = vadd.f32 %v2001, 0.0
  %v2070 = vadd.f32 %v2008, 0.0
  %v2071 = vadd.f32 %v2015, 0.0
  %v2072 = vadd.f32 %v2022, 0.0
  %v2073 = vadd.f32 %v2029, 0.0
  %v2074 = vadd.f32 %v2036, 0.0
  %v2075 = vadd.f32 %v2043, 0.0
  %v2076 = vadd.f32 %v2050, 0.0
  %v2077 = vadd.f32 %v2057, 0.0
  %v2098 = vsel %vm1297, %v2059, %v2058
  %v2099 = vsel %vm1299, %v2060, %v2098
  %v2100 = vsel %vm1301, %v2061, %v2099
  %v2101 = vsel %vm1303, %v2062, %v2100
  %v2102 = vsel %vm1305, %v2063, %v2101
  %v2103 = vsel %vm1307, %v2064, %v2102
  %v2104 = vsel %vm1309, %v2065, %v2103
  %v2105 = vsel %vm1297, %v2067, %v2066
  %v2106 = vsel %vm1297, %v2069, %v2068
  %v2107 = vsel %vm1299, %v2070, %v2106
  %v2108 = vsel %vm1301, %v2071, %v2107
  %v2109 = vsel %vm1303, %v2072, %v2108
  %v2110 = vsel %vm1305, %v2073, %v2109
  %v2111 = vsel %vm1307, %v2074, %v2110
  %v2112 = vsel %vm1309, %v2075, %v2111
  %v2113 = vsel %vm1297, %v2077, %v2076
  %2118 = vst [vmem:[%s3] sm:$0xff] %v2104
  %2119 = vst [vmem:[%s3 + $0x8] sm:$0x3] %v2105
  %2120 = vst [vmem:[%s3 + $0x20] sm:$0xff] %v2112
  %2121 = vst [vmem:[%s3 + $0x28] sm:$0x3] %v2113
  %v2122 = vlaneseq
  %v2123 = vshrl.u32 %v2122, 7
  %v2124 = vsub.s32 %v1114, %v2123
  %v2125 = vrot.slane %v1681, %v2124
  %v2126 = vlaneseq
  %v2127 = vshrl.u32 %v2126, 7
  %v2128 = vsub.s32 %v1119, %v2127
  %v2129 = vrot.slane %v1686, %v2128
  %v2130 = vsel %vm1124, %v2129, %v2125
  %v2131 = vlaneseq
  %v2132 = vshrl.u32 %v2131, 7
  %v2133 = vsub.s32 %v1114, %v2132
  %v2134 = vrot.slane %v1691, %v2133
  %v2135 = vlaneseq
  %v2136 = vshrl.u32 %v2135, 7
  %v2137 = vsub.s32 %v1119, %v2136
  %v2138 = vrot.slane %v1696, %v2137
  %v2139 = vsel %vm1124, %v2138, %v2134
  %v2140 = vlaneseq
  %v2141 = vshrl.u32 %v2140, 7
  %v2142 = vsub.s32 %v1114, %v2141
  %v2143 = vrot.slane %v1701, %v2142
  %v2144 = vlaneseq
  %v2145 = vshrl.u32 %v2144, 7
  %v2146 = vsub.s32 %v1119, %v2145
  %v2147 = vrot.slane %v1706, %v2146
  %v2148 = vsel %vm1124, %v2147, %v2143
  %v2149 = vlaneseq
  %v2150 = vshrl.u32 %v2149, 7
  %v2151 = vsub.s32 %v1114, %v2150
  %v2152 = vrot.slane %v1711, %v2151
  %v2153 = vlaneseq
  %v2154 = vshrl.u32 %v2153, 7
  %v2155 = vsub.s32 %v1119, %v2154
  %v2156 = vrot.slane %v1716, %v2155
  %v2157 = vsel %vm1124, %v2156, %v2152
  %v2158 = vlaneseq
  %v2159 = vshrl.u32 %v2158, 7
  %v2160 = vsub.s32 %v1114, %v2159
  %v2161 = vrot.slane %v1721, %v2160
  %v2162 = vlaneseq
  %v2163 = vshrl.u32 %v2162, 7
  %v2164 = vsub.s32 %v1119, %v2163
  %v2165 = vrot.slane %v1726, %v2164
  %v2166 = vsel %vm1124, %v2165, %v2161
  %v2167 = vlaneseq
  %v2168 = vshrl.u32 %v2167, 7
  %v2169 = vsub.s32 %v1114, %v2168
  %v2170 = vrot.slane %v1731, %v2169
  %v2171 = vlaneseq
  %v2172 = vshrl.u32 %v2171, 7
  %v2173 = vsub.s32 %v1119, %v2172
  %v2174 = vrot.slane %v1736, %v2173
  %v2175 = vsel %vm1124, %v2174, %v2170
  %v2176 = vlaneseq
  %v2177 = vshrl.u32 %v2176, 7
  %v2178 = vsub.s32 %v1114, %v2177
  %v2179 = vrot.slane %v1741, %v2178
  %v2180 = vlaneseq
  %v2181 = vshrl.u32 %v2180, 7
  %v2182 = vsub.s32 %v1119, %v2181
  %v2183 = vrot.slane %v1746, %v2182
  %v2184 = vsel %vm1124, %v2183, %v2179
  %v2185 = vlaneseq
  %v2186 = vshrl.u32 %v2185, 7
  %v2187 = vsub.s32 %v1114, %v2186
  %v2188 = vrot.slane %v1751, %v2187
  %v2189 = vlaneseq
  %v2190 = vshrl.u32 %v2189, 7
  %v2191 = vsub.s32 %v1119, %v2190
  %v2192 = vrot.slane %v1756, %v2191
  %v2193 = vsel %vm1124, %v2192, %v2188
  %v2194 = vlaneseq
  %v2195 = vshrl.u32 %v2194, 7
  %v2196 = vsub.s32 %v1114, %v2195
  %v2197 = vrot.slane %v1761, %v2196
  %v2198 = vlaneseq
  %v2199 = vshrl.u32 %v2198, 7
  %v2200 = vsub.s32 %v1119, %v2199
  %v2201 = vrot.slane %v1766, %v2200
  %v2202 = vsel %vm1124, %v2201, %v2197
  %v2203 = vlaneseq
  %v2204 = vshrl.u32 %v2203, 7
  %v2205 = vsub.s32 %v1114, %v2204
  %v2206 = vrot.slane %v1771, %v2205
  %v2207 = vlaneseq
  %v2208 = vshrl.u32 %v2207, 7
  %v2209 = vsub.s32 %v1119, %v2208
  %v2210 = vrot.slane %v1776, %v2209
  %v2211 = vsel %vm1124, %v2210, %v2206
  %v2212 = vlaneseq
  %v2213 = vshrl.u32 %v2212, 7
  %v2214 = vsub.s32 %v1114, %v2213
  %v2215 = vrot.slane %v1781, %v2214
  %v2216 = vlaneseq
  %v2217 = vshrl.u32 %v2216, 7
  %v2218 = vsub.s32 %v1119, %v2217
  %v2219 = vrot.slane %v1786, %v2218
  %v2220 = vsel %vm1124, %v2219, %v2215
  %v2221 = vlaneseq
  %v2222 = vshrl.u32 %v2221, 7
  %v2223 = vsub.s32 %v1114, %v2222
  %v2224 = vrot.slane %v1791, %v2223
  %v2225 = vlaneseq
  %v2226 = vshrl.u32 %v2225, 7
  %v2227 = vsub.s32 %v1119, %v2226
  %v2228 = vrot.slane %v1796, %v2227
  %v2229 = vsel %vm1124, %v2228, %v2224
  %v2230 = vlaneseq
  %v2231 = vshrl.u32 %v2230, 7
  %v2232 = vsub.s32 %v1114, %v2231
  %v2233 = vrot.slane %v1801, %v2232
  %v2234 = vlaneseq
  %v2235 = vshrl.u32 %v2234, 7
  %v2236 = vsub.s32 %v1119, %v2235
  %v2237 = vrot.slane %v1806, %v2236
  %v2238 = vsel %vm1124, %v2237, %v2233
  %v2239 = vlaneseq
  %v2240 = vshrl.u32 %v2239, 7
  %v2241 = vsub.s32 %v1114, %v2240
  %v2242 = vrot.slane %v1811, %v2241
  %v2243 = vlaneseq
  %v2244 = vshrl.u32 %v2243, 7
  %v2245 = vsub.s32 %v1119, %v2244
  %v2246 = vrot.slane %v1816, %v2245
  %v2247 = vsel %vm1124, %v2246, %v2242
  %v2248 = vlaneseq
  %v2249 = vshrl.u32 %v2248, 7
  %v2250 = vsub.s32 %v1114, %v2249
  %v2251 = vrot.slane %v1821, %v2250
  %v2252 = vlaneseq
  %v2253 = vshrl.u32 %v2252, 7
  %v2254 = vsub.s32 %v1119, %v2253
  %v2255 = vrot.slane %v1826, %v2254
  %v2256 = vsel %vm1124, %v2255, %v2251
  %v2257 = vlaneseq
  %v2258 = vshrl.u32 %v2257, 7
  %v2259 = vsub.s32 %v1114, %v2258
  %v2260 = vrot.slane %v1831, %v2259
  %v2261 = vlaneseq
  %v2262 = vshrl.u32 %v2261, 7
  %v2263 = vsub.s32 %v1119, %v2262
  %v2264 = vrot.slane %v1836, %v2263
  %v2265 = vsel %vm1124, %v2264, %v2260
  %v2266 = vlaneseq
  %v2267 = vshrl.u32 %v2266, 7
  %v2268 = vsub.s32 %v1114, %v2267
  %v2269 = vrot.slane %v1841, %v2268
  %v2270 = vlaneseq
  %v2271 = vshrl.u32 %v2270, 7
  %v2272 = vsub.s32 %v1119, %v2271
  %v2273 = vrot.slane %v1846, %v2272
  %v2274 = vsel %vm1124, %v2273, %v2269
  %v2275 = vlaneseq
  %v2276 = vshrl.u32 %v2275, 7
  %v2277 = vsub.s32 %v1114, %v2276
  %v2278 = vrot.slane %v1851, %v2277
  %v2279 = vlaneseq
  %v2280 = vshrl.u32 %v2279, 7
  %v2281 = vsub.s32 %v1119, %v2280
  %v2282 = vrot.slane %v1856, %v2281
  %v2283 = vsel %vm1124, %v2282, %v2278
  %v2284 = vlaneseq
  %v2285 = vshrl.u32 %v2284, 7
  %v2286 = vsub.s32 %v1114, %v2285
  %v2287 = vrot.slane %v1861, %v2286
  %v2288 = vlaneseq
  %v2289 = vshrl.u32 %v2288, 7
  %v2290 = vsub.s32 %v1119, %v2289
  %v2291 = vrot.slane %v1866, %v2290
  %v2292 = vsel %vm1124, %v2291, %v2287
  %v2293 = vlaneseq
  %v2294 = vshrl.u32 %v2293, 7
  %v2295 = vsub.s32 %v1114, %v2294
  %v2296 = vrot.slane %v1871, %v2295
  %v2297 = vlaneseq
  %v2298 = vshrl.u32 %v2297, 7
  %v2299 = vsub.s32 %v1119, %v2298
  %v2300 = vrot.slane %v1876, %v2299
  %v2301 = vsel %vm1124, %v2300, %v2296
  %v2302 = vsel %vm1297, %v2139, %v2130
  %v2303 = vsel %vm1299, %v2148, %v2302
  %v2304 = vsel %vm1301, %v2157, %v2303
  %v2305 = vsel %vm1303, %v2166, %v2304
  %v2306 = vsel %vm1305, %v2175, %v2305
  %v2307 = vsel %vm1307, %v2184, %v2306
  %v2308 = vsel %vm1309, %v2193, %v2307
  %v2309 = vsel %vm1297, %v2211, %v2202
  %v2310 = vsel %vm1297, %v2229, %v2220
  %v2311 = vsel %vm1299, %v2238, %v2310
  %v2312 = vsel %vm1301, %v2247, %v2311
  %v2313 = vsel %vm1303, %v2256, %v2312
  %v2314 = vsel %vm1305, %v2265, %v2313
  %v2315 = vsel %vm1307, %v2274, %v2314
  %v2316 = vsel %vm1309, %v2283, %v2315
  %v2317 = vsel %vm1297, %v2301, %v2292
  %2322 = vst.msk [vmem:[%s4] sm:$0xff] %vm1324, %v2308
  %2323 = vst.msk [vmem:[%s4 + $0x8] sm:$0x3] %vm1328, %v2309
  %2324 = vst.msk [vmem:[%s4 + $0x20] sm:$0xff] %vm1324, %v2316
  %2325 = vst.msk [vmem:[%s4 + $0x28] sm:$0x3] %vm1328, %v2317
  %2326 = vmax.xlane.f32.xlu0 %v2104
  %v2327 = vpop.xlane.xlu0 %2326
  %vm2328 = vcmask 1041408
  %v2329 = vsel %vm2328, %v2105, -inf
  %2330 = vmax.xlane.f32.xlu0 %v2329
  %v2331 = vpop.xlane.xlu0 %2330
  %2332 = vmax.xlane.f32.xlu0 %v2112
  %v2333 = vpop.xlane.xlu0 %2332
  %v2334 = vsel %vm2328, %v2113, -inf
  %2335 = vmax.xlane.f32.xlu0 %v2334
  %v2336 = vpop.xlane.xlu0 %2335
  %v2341 = vrot.slane %v2327, 1
  %v2342 = vrot.slane %v2327, 2
  %v2343 = vrot.slane %v2327, 3
  %v2344 = vrot.slane %v2327, 4
  %v2345 = vrot.slane %v2327, 5
  %v2346 = vrot.slane %v2327, 6
  %v2347 = vrot.slane %v2327, 7
  %v2348 = vrot.slane %v2331, 1
  %v2349 = vrot.slane %v2333, 1
  %v2350 = vrot.slane %v2333, 2
  %v2351 = vrot.slane %v2333, 3
  %v2352 = vrot.slane %v2333, 4
  %v2353 = vrot.slane %v2333, 5
  %v2354 = vrot.slane %v2333, 6
  %v2355 = vrot.slane %v2333, 7
  %v2356 = vrot.slane %v2336, 1
  %v2377 = vsub.f32 %v2058, %v2327
  %v2378 = vsub.f32 %v2059, %v2341
  %v2379 = vsub.f32 %v2060, %v2342
  %v2380 = vsub.f32 %v2061, %v2343
  %v2381 = vsub.f32 %v2062, %v2344
  %v2382 = vsub.f32 %v2063, %v2345
  %v2383 = vsub.f32 %v2064, %v2346
  %v2384 = vsub.f32 %v2065, %v2347
  %v2385 = vsub.f32 %v2066, %v2331
  %v2386 = vsub.f32 %v2067, %v2348
  %v2387 = vsub.f32 %v2068, %v2333
  %v2388 = vsub.f32 %v2069, %v2349
  %v2389 = vsub.f32 %v2070, %v2350
  %v2390 = vsub.f32 %v2071, %v2351
  %v2391 = vsub.f32 %v2072, %v2352
  %v2392 = vsub.f32 %v2073, %v2353
  %v2393 = vsub.f32 %v2074, %v2354
  %v2394 = vsub.f32 %v2075, %v2355
  %v2395 = vsub.f32 %v2076, %v2336
  %v2396 = vsub.f32 %v2077, %v2356
  %v2397 = vmul.f32 %v2377, 1.442695
  %v2398 = vpow.pop %v2397
  %v2399 = vmul.f32 %v2378, 1.442695
  %v2400 = vpow.pop %v2399
  %v2401 = vmul.f32 %v2379, 1.442695
  %v2402 = vpow.pop %v2401
  %v2403 = vmul.f32 %v2380, 1.442695
  %v2404 = vpow.pop %v2403
  %v2405 = vmul.f32 %v2381, 1.442695
  %v2406 = vpow.pop %v2405
  %v2407 = vmul.f32 %v2382, 1.442695
  %v2408 = vpow.pop %v2407
  %v2409 = vmul.f32 %v2383, 1.442695
  %v2410 = vpow.pop %v2409
  %v2411 = vmul.f32 %v2384, 1.442695
  %v2412 = vpow.pop %v2411
  %v2413 = vmul.f32 %v2385, 1.442695
  %v2414 = vpow.pop %v2413
  %v2415 = vmul.f32 %v2386, 1.442695
  %v2416 = vpow.pop %v2415
  %v2417 = vmul.f32 %v2387, 1.442695
  %v2418 = vpow.pop %v2417
  %v2419 = vmul.f32 %v2388, 1.442695
  %v2420 = vpow.pop %v2419
  %v2421 = vmul.f32 %v2389, 1.442695
  %v2422 = vpow.pop %v2421
  %v2423 = vmul.f32 %v2390, 1.442695
  %v2424 = vpow.pop %v2423
  %v2425 = vmul.f32 %v2391, 1.442695
  %v2426 = vpow.pop %v2425
  %v2427 = vmul.f32 %v2392, 1.442695
  %v2428 = vpow.pop %v2427
  %v2429 = vmul.f32 %v2393, 1.442695
  %v2430 = vpow.pop %v2429
  %v2431 = vmul.f32 %v2394, 1.442695
  %v2432 = vpow.pop %v2431
  %v2433 = vmul.f32 %v2395, 1.442695
  %v2434 = vpow.pop %v2433
  %v2435 = vmul.f32 %v2396, 1.442695
  %v2436 = vpow.pop %v2435
  %v2457 = vrot.slane %v2400, 7
  %v2458 = vsel %vm1297, %v2457, %v2398
  %v2459 = vrot.slane %v2402, 6
  %v2460 = vsel %vm1299, %v2459, %v2458
  %v2461 = vrot.slane %v2404, 5
  %v2462 = vsel %vm1301, %v2461, %v2460
  %v2463 = vrot.slane %v2406, 4
  %v2464 = vsel %vm1303, %v2463, %v2462
  %v2465 = vrot.slane %v2408, 3
  %v2466 = vsel %vm1305, %v2465, %v2464
  %v2467 = vrot.slane %v2410, 2
  %v2468 = vsel %vm1307, %v2467, %v2466
  %v2469 = vrot.slane %v2412, 1
  %v2470 = vsel %vm1309, %v2469, %v2468
  %v2471 = vrot.slane %v2416, 7
  %v2472 = vsel %vm1297, %v2471, %v2414
  %v2473 = vrot.slane %v2420, 7
  %v2474 = vsel %vm1297, %v2473, %v2418
  %v2475 = vrot.slane %v2422, 6
  %v2476 = vsel %vm1299, %v2475, %v2474
  %v2477 = vrot.slane %v2424, 5
  %v2478 = vsel %vm1301, %v2477, %v2476
  %v2479 = vrot.slane %v2426, 4
  %v2480 = vsel %vm1303, %v2479, %v2478
  %v2481 = vrot.slane %v2428, 3
  %v2482 = vsel %vm1305, %v2481, %v2480
  %v2483 = vrot.slane %v2430, 2
  %v2484 = vsel %vm1307, %v2483, %v2482
  %v2485 = vrot.slane %v2432, 1
  %v2486 = vsel %vm1309, %v2485, %v2484
  %v2487 = vrot.slane %v2436, 7
  %v2488 = vsel %vm1297, %v2487, %v2434
  %2493 = vadd.xlane.f32.xlu0 %v2470
  %v2494 = vpop.xlane.xlu0 %2493
  %v2495 = vsel %vm2328, %v2472, 0.0
  %2496 = vadd.xlane.f32.xlu0 %v2495
  %v2497 = vpop.xlane.xlu0 %2496
  %2498 = vadd.xlane.f32.xlu0 %v2486
  %v2499 = vpop.xlane.xlu0 %2498
  %v2500 = vsel %vm2328, %v2488, 0.0
  %2501 = vadd.xlane.f32.xlu0 %v2500
  %v2502 = vpop.xlane.xlu0 %2501
  %v2507 = vrot.slane %v2494, 1
  %v2508 = vrot.slane %v2494, 2
  %v2509 = vrot.slane %v2494, 3
  %v2510 = vrot.slane %v2494, 4
  %v2511 = vrot.slane %v2494, 5
  %v2512 = vrot.slane %v2494, 6
  %v2513 = vrot.slane %v2494, 7
  %v2514 = vrot.slane %v2497, 1
  %v2515 = vrot.slane %v2499, 1
  %v2516 = vrot.slane %v2499, 2
  %v2517 = vrot.slane %v2499, 3
  %v2518 = vrot.slane %v2499, 4
  %v2519 = vrot.slane %v2499, 5
  %v2520 = vrot.slane %v2499, 6
  %v2521 = vrot.slane %v2499, 7
  %v2522 = vrot.slane %v2502, 1
  %v2543 = vrcp.pop %v2494
  %v2544 = vmul.f32 %v2398, %v2543
  %v2545 = vrcp.pop %v2507
  %v2546 = vmul.f32 %v2400, %v2545
  %v2547 = vrcp.pop %v2508
  %v2548 = vmul.f32 %v2402, %v2547
  %v2549 = vrcp.pop %v2509
  %v2550 = vmul.f32 %v2404, %v2549
  %v2551 = vrcp.pop %v2510
  %v2552 = vmul.f32 %v2406, %v2551
  %v2553 = vrcp.pop %v2511
  %v2554 = vmul.f32 %v2408, %v2553
  %v2555 = vrcp.pop %v2512
  %v2556 = vmul.f32 %v2410, %v2555
  %v2557 = vrcp.pop %v2513
  %v2558 = vmul.f32 %v2412, %v2557
  %v2559 = vrcp.pop %v2497
  %v2560 = vmul.f32 %v2414, %v2559
  %v2561 = vrcp.pop %v2514
  %v2562 = vmul.f32 %v2416, %v2561
  %v2563 = vrcp.pop %v2499
  %v2564 = vmul.f32 %v2418, %v2563
  %v2565 = vrcp.pop %v2515
  %v2566 = vmul.f32 %v2420, %v2565
  %v2567 = vrcp.pop %v2516
  %v2568 = vmul.f32 %v2422, %v2567
  %v2569 = vrcp.pop %v2517
  %v2570 = vmul.f32 %v2424, %v2569
  %v2571 = vrcp.pop %v2518
  %v2572 = vmul.f32 %v2426, %v2571
  %v2573 = vrcp.pop %v2519
  %v2574 = vmul.f32 %v2428, %v2573
  %v2575 = vrcp.pop %v2520
  %v2576 = vmul.f32 %v2430, %v2575
  %v2577 = vrcp.pop %v2521
  %v2578 = vmul.f32 %v2432, %v2577
  %v2579 = vrcp.pop %v2502
  %v2580 = vmul.f32 %v2434, %v2579
  %v2581 = vrcp.pop %v2522
  %v2582 = vmul.f32 %v2436, %v2581
  %v2583 = vlaneseq
  %v2584 = vshrl.u32 %v2583, 7
  %v2585 = vsub.s32 0, %v2584
  %v2586 = vrot.slane %v2544, %v2585
  %v2587 = vlaneseq
  %v2588 = vshrl.u32 %v2587, 7
  %v2589 = vsub.s32 0, %v2588
  %v2590 = vrot.slane %v2546, %v2589
  %v2591 = vlaneseq
  %v2592 = vshrl.u32 %v2591, 7
  %v2593 = vsub.s32 0, %v2592
  %v2594 = vrot.slane %v2548, %v2593
  %v2595 = vlaneseq
  %v2596 = vshrl.u32 %v2595, 7
  %v2597 = vsub.s32 0, %v2596
  %v2598 = vrot.slane %v2550, %v2597
  %v2599 = vlaneseq
  %v2600 = vshrl.u32 %v2599, 7
  %v2601 = vsub.s32 0, %v2600
  %v2602 = vrot.slane %v2552, %v2601
  %v2603 = vlaneseq
  %v2604 = vshrl.u32 %v2603, 7
  %v2605 = vsub.s32 0, %v2604
  %v2606 = vrot.slane %v2554, %v2605
  %v2607 = vlaneseq
  %v2608 = vshrl.u32 %v2607, 7
  %v2609 = vsub.s32 0, %v2608
  %v2610 = vrot.slane %v2556, %v2609
  %v2611 = vlaneseq
  %v2612 = vshrl.u32 %v2611, 7
  %v2613 = vsub.s32 0, %v2612
  %v2614 = vrot.slane %v2558, %v2613
  %v2615 = vlaneseq
  %v2616 = vshrl.u32 %v2615, 7
  %v2617 = vsub.s32 0, %v2616
  %v2618 = vrot.slane %v2560, %v2617
  %v2619 = vlaneseq
  %v2620 = vshrl.u32 %v2619, 7
  %v2621 = vsub.s32 0, %v2620
  %v2622 = vrot.slane %v2562, %v2621
  %v2623 = vlaneseq
  %v2624 = vshrl.u32 %v2623, 7
  %v2625 = vsub.s32 0, %v2624
  %v2626 = vrot.slane %v2564, %v2625
  %v2627 = vlaneseq
  %v2628 = vshrl.u32 %v2627, 7
  %v2629 = vsub.s32 0, %v2628
  %v2630 = vrot.slane %v2566, %v2629
  %v2631 = vlaneseq
  %v2632 = vshrl.u32 %v2631, 7
  %v2633 = vsub.s32 0, %v2632
  %v2634 = vrot.slane %v2568, %v2633
  %v2635 = vlaneseq
  %v2636 = vshrl.u32 %v2635, 7
  %v2637 = vsub.s32 0, %v2636
  %v2638 = vrot.slane %v2570, %v2637
  %v2639 = vlaneseq
  %v2640 = vshrl.u32 %v2639, 7
  %v2641 = vsub.s32 0, %v2640
  %v2642 = vrot.slane %v2572, %v2641
  %v2643 = vlaneseq
  %v2644 = vshrl.u32 %v2643, 7
  %v2645 = vsub.s32 0, %v2644
  %v2646 = vrot.slane %v2574, %v2645
  %v2647 = vlaneseq
  %v2648 = vshrl.u32 %v2647, 7
  %v2649 = vsub.s32 0, %v2648
  %v2650 = vrot.slane %v2576, %v2649
  %v2651 = vlaneseq
  %v2652 = vshrl.u32 %v2651, 7
  %v2653 = vsub.s32 0, %v2652
  %v2654 = vrot.slane %v2578, %v2653
  %v2655 = vlaneseq
  %v2656 = vshrl.u32 %v2655, 7
  %v2657 = vsub.s32 0, %v2656
  %v2658 = vrot.slane %v2580, %v2657
  %v2659 = vlaneseq
  %v2660 = vshrl.u32 %v2659, 7
  %v2661 = vsub.s32 0, %v2660
  %v2662 = vrot.slane %v2582, %v2661
  %v2663 = vmul.f32 %v2586, %v869
  %v2664 = vmul.f32 %v2586, %v870
  %v2665 = vmul.f32 %v2590, %v871
  %v2666 = vmul.f32 %v2590, %v872
  %v2667 = vmul.f32 %v2594, %v873
  %v2668 = vmul.f32 %v2594, %v874
  %v2669 = vmul.f32 %v2598, %v875
  %v2670 = vmul.f32 %v2598, %v876
  %v2671 = vmul.f32 %v2602, %v877
  %v2672 = vmul.f32 %v2602, %v878
  %v2673 = vmul.f32 %v2606, %v879
  %v2674 = vmul.f32 %v2606, %v880
  %v2675 = vmul.f32 %v2610, %v881
  %v2676 = vmul.f32 %v2610, %v882
  %v2677 = vmul.f32 %v2614, %v883
  %v2678 = vmul.f32 %v2614, %v884
  %v2679 = vmul.f32 %v2618, %v885
  %v2680 = vmul.f32 %v2618, %v886
  %v2681 = vmul.f32 %v2622, %v887
  %v2682 = vmul.f32 %v2622, %v888
  %v2683 = vmul.f32 %v2626, %v889
  %v2684 = vmul.f32 %v2626, %v890
  %v2685 = vmul.f32 %v2630, %v891
  %v2686 = vmul.f32 %v2630, %v892
  %v2687 = vmul.f32 %v2634, %v893
  %v2688 = vmul.f32 %v2634, %v894
  %v2689 = vmul.f32 %v2638, %v895
  %v2690 = vmul.f32 %v2638, %v896
  %v2691 = vmul.f32 %v2642, %v897
  %v2692 = vmul.f32 %v2642, %v898
  %v2693 = vmul.f32 %v2646, %v899
  %v2694 = vmul.f32 %v2646, %v900
  %v2695 = vmul.f32 %v2650, %v901
  %v2696 = vmul.f32 %v2650, %v902
  %v2697 = vmul.f32 %v2654, %v903
  %v2698 = vmul.f32 %v2654, %v904
  %v2699 = vmul.f32 %v2658, %v905
  %v2700 = vmul.f32 %v2658, %v906
  %v2701 = vmul.f32 %v2662, %v907
  %v2702 = vmul.f32 %v2662, %v908
  %2703 = vadd.xlane.f32.xlu0 %v2663
  %v2704 = vpop.xlane.xlu0 %2703
  %2705 = vadd.xlane.f32.xlu0 %v2664
  %v2706 = vpop.xlane.xlu0 %2705
  %2707 = vadd.xlane.f32.xlu0 %v2665
  %v2708 = vpop.xlane.xlu0 %2707
  %2709 = vadd.xlane.f32.xlu0 %v2666
  %v2710 = vpop.xlane.xlu0 %2709
  %2711 = vadd.xlane.f32.xlu0 %v2667
  %v2712 = vpop.xlane.xlu0 %2711
  %2713 = vadd.xlane.f32.xlu0 %v2668
  %v2714 = vpop.xlane.xlu0 %2713
  %2715 = vadd.xlane.f32.xlu0 %v2669
  %v2716 = vpop.xlane.xlu0 %2715
  %2717 = vadd.xlane.f32.xlu0 %v2670
  %v2718 = vpop.xlane.xlu0 %2717
  %2719 = vadd.xlane.f32.xlu0 %v2671
  %v2720 = vpop.xlane.xlu0 %2719
  %2721 = vadd.xlane.f32.xlu0 %v2672
  %v2722 = vpop.xlane.xlu0 %2721
  %2723 = vadd.xlane.f32.xlu0 %v2673
  %v2724 = vpop.xlane.xlu0 %2723
  %2725 = vadd.xlane.f32.xlu0 %v2674
  %v2726 = vpop.xlane.xlu0 %2725
  %2727 = vadd.xlane.f32.xlu0 %v2675
  %v2728 = vpop.xlane.xlu0 %2727
  %2729 = vadd.xlane.f32.xlu0 %v2676
  %v2730 = vpop.xlane.xlu0 %2729
  %2731 = vadd.xlane.f32.xlu0 %v2677
  %v2732 = vpop.xlane.xlu0 %2731
  %2733 = vadd.xlane.f32.xlu0 %v2678
  %v2734 = vpop.xlane.xlu0 %2733
  %2735 = vadd.xlane.f32.xlu0 %v2679
  %v2736 = vpop.xlane.xlu0 %2735
  %2737 = vadd.xlane.f32.xlu0 %v2680
  %v2738 = vpop.xlane.xlu0 %2737
  %2739 = vadd.xlane.f32.xlu0 %v2681
  %v2740 = vpop.xlane.xlu0 %2739
  %2741 = vadd.xlane.f32.xlu0 %v2682
  %v2742 = vpop.xlane.xlu0 %2741
  %2743 = vadd.xlane.f32.xlu0 %v2683
  %v2744 = vpop.xlane.xlu0 %2743
  %2745 = vadd.xlane.f32.xlu0 %v2684
  %v2746 = vpop.xlane.xlu0 %2745
  %2747 = vadd.xlane.f32.xlu0 %v2685
  %v2748 = vpop.xlane.xlu0 %2747
  %2749 = vadd.xlane.f32.xlu0 %v2686
  %v2750 = vpop.xlane.xlu0 %2749
  %2751 = vadd.xlane.f32.xlu0 %v2687
  %v2752 = vpop.xlane.xlu0 %2751
  %2753 = vadd.xlane.f32.xlu0 %v2688
  %v2754 = vpop.xlane.xlu0 %2753
  %2755 = vadd.xlane.f32.xlu0 %v2689
  %v2756 = vpop.xlane.xlu0 %2755
  %2757 = vadd.xlane.f32.xlu0 %v2690
  %v2758 = vpop.xlane.xlu0 %2757
  %2759 = vadd.xlane.f32.xlu0 %v2691
  %v2760 = vpop.xlane.xlu0 %2759
  %2761 = vadd.xlane.f32.xlu0 %v2692
  %v2762 = vpop.xlane.xlu0 %2761
  %2763 = vadd.xlane.f32.xlu0 %v2693
  %v2764 = vpop.xlane.xlu0 %2763
  %2765 = vadd.xlane.f32.xlu0 %v2694
  %v2766 = vpop.xlane.xlu0 %2765
  %2767 = vadd.xlane.f32.xlu0 %v2695
  %v2768 = vpop.xlane.xlu0 %2767
  %2769 = vadd.xlane.f32.xlu0 %v2696
  %v2770 = vpop.xlane.xlu0 %2769
  %2771 = vadd.xlane.f32.xlu0 %v2697
  %v2772 = vpop.xlane.xlu0 %2771
  %2773 = vadd.xlane.f32.xlu0 %v2698
  %v2774 = vpop.xlane.xlu0 %2773
  %2775 = vadd.xlane.f32.xlu0 %v2699
  %v2776 = vpop.xlane.xlu0 %2775
  %2777 = vadd.xlane.f32.xlu0 %v2700
  %v2778 = vpop.xlane.xlu0 %2777
  %2779 = vadd.xlane.f32.xlu0 %v2701
  %v2780 = vpop.xlane.xlu0 %2779
  %2781 = vadd.xlane.f32.xlu0 %v2702
  %v2782 = vpop.xlane.xlu0 %2781
  %v2783 = vmul.f32 %v2704, %v2704
  %v2784 = vmul.f32 %v2706, %v2706
  %v2785 = vmul.f32 %v2708, %v2708
  %v2786 = vmul.f32 %v2710, %v2710
  %v2787 = vmul.f32 %v2712, %v2712
  %v2788 = vmul.f32 %v2714, %v2714
  %v2789 = vmul.f32 %v2716, %v2716
  %v2790 = vmul.f32 %v2718, %v2718
  %v2791 = vmul.f32 %v2720, %v2720
  %v2792 = vmul.f32 %v2722, %v2722
  %v2793 = vmul.f32 %v2724, %v2724
  %v2794 = vmul.f32 %v2726, %v2726
  %v2795 = vmul.f32 %v2728, %v2728
  %v2796 = vmul.f32 %v2730, %v2730
  %v2797 = vmul.f32 %v2732, %v2732
  %v2798 = vmul.f32 %v2734, %v2734
  %v2799 = vmul.f32 %v2736, %v2736
  %v2800 = vmul.f32 %v2738, %v2738
  %v2801 = vmul.f32 %v2740, %v2740
  %v2802 = vmul.f32 %v2742, %v2742
  %v2803 = vmul.f32 %v2744, %v2744
  %v2804 = vmul.f32 %v2746, %v2746
  %v2805 = vmul.f32 %v2748, %v2748
  %v2806 = vmul.f32 %v2750, %v2750
  %v2807 = vmul.f32 %v2752, %v2752
  %v2808 = vmul.f32 %v2754, %v2754
  %v2809 = vmul.f32 %v2756, %v2756
  %v2810 = vmul.f32 %v2758, %v2758
  %v2811 = vmul.f32 %v2760, %v2760
  %v2812 = vmul.f32 %v2762, %v2762
  %v2813 = vmul.f32 %v2764, %v2764
  %v2814 = vmul.f32 %v2766, %v2766
  %v2815 = vmul.f32 %v2768, %v2768
  %v2816 = vmul.f32 %v2770, %v2770
  %v2817 = vmul.f32 %v2772, %v2772
  %v2818 = vmul.f32 %v2774, %v2774
  %v2819 = vmul.f32 %v2776, %v2776
  %v2820 = vmul.f32 %v2778, %v2778
  %v2821 = vmul.f32 %v2780, %v2780
  %v2822 = vmul.f32 %v2782, %v2782
  %v2863 = vlaneseq
  %v2864 = vshrl.u32 %v2863, 7
  %v2865 = vsub.s32 %v1114, %v2864
  %v2866 = vrot.slane %v2783, %v2865
  %v2867 = vlaneseq
  %v2868 = vshrl.u32 %v2867, 7
  %v2869 = vsub.s32 %v1119, %v2868
  %v2870 = vrot.slane %v2784, %v2869
  %v2871 = vsel %vm1124, %v2870, %v2866
  %v2872 = vlaneseq
  %v2873 = vshrl.u32 %v2872, 7
  %v2874 = vsub.s32 %v1114, %v2873
  %v2875 = vrot.slane %v2785, %v2874
  %v2876 = vlaneseq
  %v2877 = vshrl.u32 %v2876, 7
  %v2878 = vsub.s32 %v1119, %v2877
  %v2879 = vrot.slane %v2786, %v2878
  %v2880 = vsel %vm1124, %v2879, %v2875
  %v2881 = vlaneseq
  %v2882 = vshrl.u32 %v2881, 7
  %v2883 = vsub.s32 %v1114, %v2882
  %v2884 = vrot.slane %v2787, %v2883
  %v2885 = vlaneseq
  %v2886 = vshrl.u32 %v2885, 7
  %v2887 = vsub.s32 %v1119, %v2886
  %v2888 = vrot.slane %v2788, %v2887
  %v2889 = vsel %vm1124, %v2888, %v2884
  %v2890 = vlaneseq
  %v2891 = vshrl.u32 %v2890, 7
  %v2892 = vsub.s32 %v1114, %v2891
  %v2893 = vrot.slane %v2789, %v2892
  %v2894 = vlaneseq
  %v2895 = vshrl.u32 %v2894, 7
  %v2896 = vsub.s32 %v1119, %v2895
  %v2897 = vrot.slane %v2790, %v2896
  %v2898 = vsel %vm1124, %v2897, %v2893
  %v2899 = vlaneseq
  %v2900 = vshrl.u32 %v2899, 7
  %v2901 = vsub.s32 %v1114, %v2900
  %v2902 = vrot.slane %v2791, %v2901
  %v2903 = vlaneseq
  %v2904 = vshrl.u32 %v2903, 7
  %v2905 = vsub.s32 %v1119, %v2904
  %v2906 = vrot.slane %v2792, %v2905
  %v2907 = vsel %vm1124, %v2906, %v2902
  %v2908 = vlaneseq
  %v2909 = vshrl.u32 %v2908, 7
  %v2910 = vsub.s32 %v1114, %v2909
  %v2911 = vrot.slane %v2793, %v2910
  %v2912 = vlaneseq
  %v2913 = vshrl.u32 %v2912, 7
  %v2914 = vsub.s32 %v1119, %v2913
  %v2915 = vrot.slane %v2794, %v2914
  %v2916 = vsel %vm1124, %v2915, %v2911
  %v2917 = vlaneseq
  %v2918 = vshrl.u32 %v2917, 7
  %v2919 = vsub.s32 %v1114, %v2918
  %v2920 = vrot.slane %v2795, %v2919
  %v2921 = vlaneseq
  %v2922 = vshrl.u32 %v2921, 7
  %v2923 = vsub.s32 %v1119, %v2922
  %v2924 = vrot.slane %v2796, %v2923
  %v2925 = vsel %vm1124, %v2924, %v2920
  %v2926 = vlaneseq
  %v2927 = vshrl.u32 %v2926, 7
  %v2928 = vsub.s32 %v1114, %v2927
  %v2929 = vrot.slane %v2797, %v2928
  %v2930 = vlaneseq
  %v2931 = vshrl.u32 %v2930, 7
  %v2932 = vsub.s32 %v1119, %v2931
  %v2933 = vrot.slane %v2798, %v2932
  %v2934 = vsel %vm1124, %v2933, %v2929
  %v2935 = vlaneseq
  %v2936 = vshrl.u32 %v2935, 7
  %v2937 = vsub.s32 %v1114, %v2936
  %v2938 = vrot.slane %v2799, %v2937
  %v2939 = vlaneseq
  %v2940 = vshrl.u32 %v2939, 7
  %v2941 = vsub.s32 %v1119, %v2940
  %v2942 = vrot.slane %v2800, %v2941
  %v2943 = vsel %vm1124, %v2942, %v2938
  %v2944 = vlaneseq
  %v2945 = vshrl.u32 %v2944, 7
  %v2946 = vsub.s32 %v1114, %v2945
  %v2947 = vrot.slane %v2801, %v2946
  %v2948 = vlaneseq
  %v2949 = vshrl.u32 %v2948, 7
  %v2950 = vsub.s32 %v1119, %v2949
  %v2951 = vrot.slane %v2802, %v2950
  %v2952 = vsel %vm1124, %v2951, %v2947
  %v2953 = vlaneseq
  %v2954 = vshrl.u32 %v2953, 7
  %v2955 = vsub.s32 %v1114, %v2954
  %v2956 = vrot.slane %v2803, %v2955
  %v2957 = vlaneseq
  %v2958 = vshrl.u32 %v2957, 7
  %v2959 = vsub.s32 %v1119, %v2958
  %v2960 = vrot.slane %v2804, %v2959
  %v2961 = vsel %vm1124, %v2960, %v2956
  %v2962 = vlaneseq
  %v2963 = vshrl.u32 %v2962, 7
  %v2964 = vsub.s32 %v1114, %v2963
  %v2965 = vrot.slane %v2805, %v2964
  %v2966 = vlaneseq
  %v2967 = vshrl.u32 %v2966, 7
  %v2968 = vsub.s32 %v1119, %v2967
  %v2969 = vrot.slane %v2806, %v2968
  %v2970 = vsel %vm1124, %v2969, %v2965
  %v2971 = vlaneseq
  %v2972 = vshrl.u32 %v2971, 7
  %v2973 = vsub.s32 %v1114, %v2972
  %v2974 = vrot.slane %v2807, %v2973
  %v2975 = vlaneseq
  %v2976 = vshrl.u32 %v2975, 7
  %v2977 = vsub.s32 %v1119, %v2976
  %v2978 = vrot.slane %v2808, %v2977
  %v2979 = vsel %vm1124, %v2978, %v2974
  %v2980 = vlaneseq
  %v2981 = vshrl.u32 %v2980, 7
  %v2982 = vsub.s32 %v1114, %v2981
  %v2983 = vrot.slane %v2809, %v2982
  %v2984 = vlaneseq
  %v2985 = vshrl.u32 %v2984, 7
  %v2986 = vsub.s32 %v1119, %v2985
  %v2987 = vrot.slane %v2810, %v2986
  %v2988 = vsel %vm1124, %v2987, %v2983
  %v2989 = vlaneseq
  %v2990 = vshrl.u32 %v2989, 7
  %v2991 = vsub.s32 %v1114, %v2990
  %v2992 = vrot.slane %v2811, %v2991
  %v2993 = vlaneseq
  %v2994 = vshrl.u32 %v2993, 7
  %v2995 = vsub.s32 %v1119, %v2994
  %v2996 = vrot.slane %v2812, %v2995
  %v2997 = vsel %vm1124, %v2996, %v2992
  %v2998 = vlaneseq
  %v2999 = vshrl.u32 %v2998, 7
  %v3000 = vsub.s32 %v1114, %v2999
  %v3001 = vrot.slane %v2813, %v3000
  %v3002 = vlaneseq
  %v3003 = vshrl.u32 %v3002, 7
  %v3004 = vsub.s32 %v1119, %v3003
  %v3005 = vrot.slane %v2814, %v3004
  %v3006 = vsel %vm1124, %v3005, %v3001
  %v3007 = vlaneseq
  %v3008 = vshrl.u32 %v3007, 7
  %v3009 = vsub.s32 %v1114, %v3008
  %v3010 = vrot.slane %v2815, %v3009
  %v3011 = vlaneseq
  %v3012 = vshrl.u32 %v3011, 7
  %v3013 = vsub.s32 %v1119, %v3012
  %v3014 = vrot.slane %v2816, %v3013
  %v3015 = vsel %vm1124, %v3014, %v3010
  %v3016 = vlaneseq
  %v3017 = vshrl.u32 %v3016, 7
  %v3018 = vsub.s32 %v1114, %v3017
  %v3019 = vrot.slane %v2817, %v3018
  %v3020 = vlaneseq
  %v3021 = vshrl.u32 %v3020, 7
  %v3022 = vsub.s32 %v1119, %v3021
  %v3023 = vrot.slane %v2818, %v3022
  %v3024 = vsel %vm1124, %v3023, %v3019
  %v3025 = vlaneseq
  %v3026 = vshrl.u32 %v3025, 7
  %v3027 = vsub.s32 %v1114, %v3026
  %v3028 = vrot.slane %v2819, %v3027
  %v3029 = vlaneseq
  %v3030 = vshrl.u32 %v3029, 7
  %v3031 = vsub.s32 %v1119, %v3030
  %v3032 = vrot.slane %v2820, %v3031
  %v3033 = vsel %vm1124, %v3032, %v3028
  %v3034 = vlaneseq
  %v3035 = vshrl.u32 %v3034, 7
  %v3036 = vsub.s32 %v1114, %v3035
  %v3037 = vrot.slane %v2821, %v3036
  %v3038 = vlaneseq
  %v3039 = vshrl.u32 %v3038, 7
  %v3040 = vsub.s32 %v1119, %v3039
  %v3041 = vrot.slane %v2822, %v3040
  %v3042 = vsel %vm1124, %v3041, %v3037
  %v3043 = vsel %vm1297, %v2880, %v2871
  %v3044 = vsel %vm1299, %v2889, %v3043
  %v3045 = vsel %vm1301, %v2898, %v3044
  %v3046 = vsel %vm1303, %v2907, %v3045
  %v3047 = vsel %vm1305, %v2916, %v3046
  %v3048 = vsel %vm1307, %v2925, %v3047
  %v3049 = vsel %vm1309, %v2934, %v3048
  %v3050 = vsel %vm1297, %v2952, %v2943
  %v3051 = vsel %vm1297, %v2970, %v2961
  %v3052 = vsel %vm1299, %v2979, %v3051
  %v3053 = vsel %vm1301, %v2988, %v3052
  %v3054 = vsel %vm1303, %v2997, %v3053
  %v3055 = vsel %vm1305, %v3006, %v3054
  %v3056 = vsel %vm1307, %v3015, %v3055
  %v3057 = vsel %vm1309, %v3024, %v3056
  %v3058 = vsel %vm1297, %v3042, %v3033
  %v3063 = vsel %vm1324, %v3049, 0.0
  %3064 = vadd.xlane.f32.xlu0 %v3063
  %v3065 = vpop.xlane.xlu0 %3064
  %v3066 = vsel %vm1328, %v3050, 0.0
  %3067 = vadd.xlane.f32.xlu0 %v3066
  %v3068 = vpop.xlane.xlu0 %3067
  %v3069 = vsel %vm1324, %v3057, 0.0
  %3070 = vadd.xlane.f32.xlu0 %v3069
  %v3071 = vpop.xlane.xlu0 %3070
  %v3072 = vsel %vm1328, %v3058, 0.0
  %3073 = vadd.xlane.f32.xlu0 %v3072
  %v3074 = vpop.xlane.xlu0 %3073
  %v3075 = vrsqrt.pop %v3065
  %v3076 = vmul.f32 %v3065, %v3075
  %vm3077 = vcmp.eq.f32.partialorder %v3065, inf
  %v3078 = vsel %vm3077, %v3065, %v3076
  %vm3079 = vcmp.eq.f32.partialorder %v3065, 0.0
  %v3080 = vand.u32 %v3065, 2147483648
  %v3081 = vsel %vm3079, %v3080, %v3078
  %v3082 = vrsqrt.pop %v3068
  %v3083 = vmul.f32 %v3068, %v3082
  %vm3084 = vcmp.eq.f32.partialorder %v3068, inf
  %v3085 = vsel %vm3084, %v3068, %v3083
  %vm3086 = vcmp.eq.f32.partialorder %v3068, 0.0
  %v3087 = vand.u32 %v3068, 2147483648
  %v3088 = vsel %vm3086, %v3087, %v3085
  %v3089 = vrsqrt.pop %v3071
  %v3090 = vmul.f32 %v3071, %v3089
  %vm3091 = vcmp.eq.f32.partialorder %v3071, inf
  %v3092 = vsel %vm3091, %v3071, %v3090
  %vm3093 = vcmp.eq.f32.partialorder %v3071, 0.0
  %v3094 = vand.u32 %v3071, 2147483648
  %v3095 = vsel %vm3093, %v3094, %v3092
  %v3096 = vrsqrt.pop %v3074
  %v3097 = vmul.f32 %v3074, %v3096
  %vm3098 = vcmp.eq.f32.partialorder %v3074, inf
  %v3099 = vsel %vm3098, %v3074, %v3097
  %vm3100 = vcmp.eq.f32.partialorder %v3074, 0.0
  %v3101 = vand.u32 %v3074, 2147483648
  %v3102 = vsel %vm3100, %v3101, %v3099
  %v3107 = vlaneseq
  %v3108 = vshrl.u32 %v3107, 7
  %v3109 = vsub.s32 0, %v3108
  %v3110 = vrot.slane %v3081, %v3109
  %v3111 = vlaneseq
  %v3112 = vshrl.u32 %v3111, 7
  %v3113 = vsub.s32 1, %v3112
  %v3114 = vrot.slane %v3081, %v3113
  %v3115 = vlaneseq
  %v3116 = vshrl.u32 %v3115, 7
  %v3117 = vsub.s32 2, %v3116
  %v3118 = vrot.slane %v3081, %v3117
  %v3119 = vlaneseq
  %v3120 = vshrl.u32 %v3119, 7
  %v3121 = vsub.s32 3, %v3120
  %v3122 = vrot.slane %v3081, %v3121
  %v3123 = vlaneseq
  %v3124 = vshrl.u32 %v3123, 7
  %v3125 = vsub.s32 4, %v3124
  %v3126 = vrot.slane %v3081, %v3125
  %v3127 = vlaneseq
  %v3128 = vshrl.u32 %v3127, 7
  %v3129 = vsub.s32 5, %v3128
  %v3130 = vrot.slane %v3081, %v3129
  %v3131 = vlaneseq
  %v3132 = vshrl.u32 %v3131, 7
  %v3133 = vsub.s32 6, %v3132
  %v3134 = vrot.slane %v3081, %v3133
  %v3135 = vlaneseq
  %v3136 = vshrl.u32 %v3135, 7
  %v3137 = vsub.s32 7, %v3136
  %v3138 = vrot.slane %v3081, %v3137
  %v3139 = vlaneseq
  %v3140 = vshrl.u32 %v3139, 7
  %v3141 = vsub.s32 0, %v3140
  %v3142 = vrot.slane %v3088, %v3141
  %v3143 = vlaneseq
  %v3144 = vshrl.u32 %v3143, 7
  %v3145 = vsub.s32 1, %v3144
  %v3146 = vrot.slane %v3088, %v3145
  %v3147 = vlaneseq
  %v3148 = vshrl.u32 %v3147, 7
  %v3149 = vsub.s32 0, %v3148
  %v3150 = vrot.slane %v3095, %v3149
  %v3151 = vlaneseq
  %v3152 = vshrl.u32 %v3151, 7
  %v3153 = vsub.s32 1, %v3152
  %v3154 = vrot.slane %v3095, %v3153
  %v3155 = vlaneseq
  %v3156 = vshrl.u32 %v3155, 7
  %v3157 = vsub.s32 2, %v3156
  %v3158 = vrot.slane %v3095, %v3157
  %v3159 = vlaneseq
  %v3160 = vshrl.u32 %v3159, 7
  %v3161 = vsub.s32 3, %v3160
  %v3162 = vrot.slane %v3095, %v3161
  %v3163 = vlaneseq
  %v3164 = vshrl.u32 %v3163, 7
  %v3165 = vsub.s32 4, %v3164
  %v3166 = vrot.slane %v3095, %v3165
  %v3167 = vlaneseq
  %v3168 = vshrl.u32 %v3167, 7
  %v3169 = vsub.s32 5, %v3168
  %v3170 = vrot.slane %v3095, %v3169
  %v3171 = vlaneseq
  %v3172 = vshrl.u32 %v3171, 7
  %v3173 = vsub.s32 6, %v3172
  %v3174 = vrot.slane %v3095, %v3173
  %v3175 = vlaneseq
  %v3176 = vshrl.u32 %v3175, 7
  %v3177 = vsub.s32 7, %v3176
  %v3178 = vrot.slane %v3095, %v3177
  %v3179 = vlaneseq
  %v3180 = vshrl.u32 %v3179, 7
  %v3181 = vsub.s32 0, %v3180
  %v3182 = vrot.slane %v3102, %v3181
  %v3183 = vlaneseq
  %v3184 = vshrl.u32 %v3183, 7
  %v3185 = vsub.s32 1, %v3184
  %v3186 = vrot.slane %v3102, %v3185
  %v3207 = vmul.f32 %v2704, %v3110
  %v3208 = vmul.f32 %v2706, %v3110
  %v3209 = vmul.f32 %v2708, %v3114
  %v3210 = vmul.f32 %v2710, %v3114
  %v3211 = vmul.f32 %v2712, %v3118
  %v3212 = vmul.f32 %v2714, %v3118
  %v3213 = vmul.f32 %v2716, %v3122
  %v3214 = vmul.f32 %v2718, %v3122
  %v3215 = vmul.f32 %v2720, %v3126
  %v3216 = vmul.f32 %v2722, %v3126
  %v3217 = vmul.f32 %v2724, %v3130
  %v3218 = vmul.f32 %v2726, %v3130
  %v3219 = vmul.f32 %v2728, %v3134
  %v3220 = vmul.f32 %v2730, %v3134
  %v3221 = vmul.f32 %v2732, %v3138
  %v3222 = vmul.f32 %v2734, %v3138
  %v3223 = vmul.f32 %v2736, %v3142
  %v3224 = vmul.f32 %v2738, %v3142
  %v3225 = vmul.f32 %v2740, %v3146
  %v3226 = vmul.f32 %v2742, %v3146
  %v3227 = vmul.f32 %v2744, %v3150
  %v3228 = vmul.f32 %v2746, %v3150
  %v3229 = vmul.f32 %v2748, %v3154
  %v3230 = vmul.f32 %v2750, %v3154
  %v3231 = vmul.f32 %v2752, %v3158
  %v3232 = vmul.f32 %v2754, %v3158
  %v3233 = vmul.f32 %v2756, %v3162
  %v3234 = vmul.f32 %v2758, %v3162
  %v3235 = vmul.f32 %v2760, %v3166
  %v3236 = vmul.f32 %v2762, %v3166
  %v3237 = vmul.f32 %v2764, %v3170
  %v3238 = vmul.f32 %v2766, %v3170
  %v3239 = vmul.f32 %v2768, %v3174
  %v3240 = vmul.f32 %v2770, %v3174
  %v3241 = vmul.f32 %v2772, %v3178
  %v3242 = vmul.f32 %v2774, %v3178
  %v3243 = vmul.f32 %v2776, %v3182
  %v3244 = vmul.f32 %v2778, %v3182
  %v3245 = vmul.f32 %v2780, %v3186
  %v3246 = vmul.f32 %v2782, %v3186
  %v3247 = vadd.f32 %v3065, 1.0
  %v3248 = vadd.f32 %v3068, 1.0
  %v3249 = vadd.f32 %v3071, 1.0
  %v3250 = vadd.f32 %v3074, 1.0
  %v3255 = vlaneseq
  %v3256 = vshrl.u32 %v3255, 7
  %v3257 = vsub.s32 0, %v3256
  %v3258 = vrot.slane %v3247, %v3257
  %v3259 = vlaneseq
  %v3260 = vshrl.u32 %v3259, 7
  %v3261 = vsub.s32 1, %v3260
  %v3262 = vrot.slane %v3247, %v3261
  %v3263 = vlaneseq
  %v3264 = vshrl.u32 %v3263, 7
  %v3265 = vsub.s32 2, %v3264
  %v3266 = vrot.slane %v3247, %v3265
  %v3267 = vlaneseq
  %v3268 = vshrl.u32 %v3267, 7
  %v3269 = vsub.s32 3, %v3268
  %v3270 = vrot.slane %v3247, %v3269
  %v3271 = vlaneseq
  %v3272 = vshrl.u32 %v3271, 7
  %v3273 = vsub.s32 4, %v3272
  %v3274 = vrot.slane %v3247, %v3273
  %v3275 = vlaneseq
  %v3276 = vshrl.u32 %v3275, 7
  %v3277 = vsub.s32 5, %v3276
  %v3278 = vrot.slane %v3247, %v3277
  %v3279 = vlaneseq
  %v3280 = vshrl.u32 %v3279, 7
  %v3281 = vsub.s32 6, %v3280
  %v3282 = vrot.slane %v3247, %v3281
  %v3283 = vlaneseq
  %v3284 = vshrl.u32 %v3283, 7
  %v3285 = vsub.s32 7, %v3284
  %v3286 = vrot.slane %v3247, %v3285
  %v3287 = vlaneseq
  %v3288 = vshrl.u32 %v3287, 7
  %v3289 = vsub.s32 0, %v3288
  %v3290 = vrot.slane %v3248, %v3289
  %v3291 = vlaneseq
  %v3292 = vshrl.u32 %v3291, 7
  %v3293 = vsub.s32 1, %v3292
  %v3294 = vrot.slane %v3248, %v3293
  %v3295 = vlaneseq
  %v3296 = vshrl.u32 %v3295, 7
  %v3297 = vsub.s32 0, %v3296
  %v3298 = vrot.slane %v3249, %v3297
  %v3299 = vlaneseq
  %v3300 = vshrl.u32 %v3299, 7
  %v3301 = vsub.s32 1, %v3300
  %v3302 = vrot.slane %v3249, %v3301
  %v3303 = vlaneseq
  %v3304 = vshrl.u32 %v3303, 7
  %v3305 = vsub.s32 2, %v3304
  %v3306 = vrot.slane %v3249, %v3305
  %v3307 = vlaneseq
  %v3308 = vshrl.u32 %v3307, 7
  %v3309 = vsub.s32 3, %v3308
  %v3310 = vrot.slane %v3249, %v3309
  %v3311 = vlaneseq
  %v3312 = vshrl.u32 %v3311, 7
  %v3313 = vsub.s32 4, %v3312
  %v3314 = vrot.slane %v3249, %v3313
  %v3315 = vlaneseq
  %v3316 = vshrl.u32 %v3315, 7
  %v3317 = vsub.s32 5, %v3316
  %v3318 = vrot.slane %v3249, %v3317
  %v3319 = vlaneseq
  %v3320 = vshrl.u32 %v3319, 7
  %v3321 = vsub.s32 6, %v3320
  %v3322 = vrot.slane %v3249, %v3321
  %v3323 = vlaneseq
  %v3324 = vshrl.u32 %v3323, 7
  %v3325 = vsub.s32 7, %v3324
  %v3326 = vrot.slane %v3249, %v3325
  %v3327 = vlaneseq
  %v3328 = vshrl.u32 %v3327, 7
  %v3329 = vsub.s32 0, %v3328
  %v3330 = vrot.slane %v3250, %v3329
  %v3331 = vlaneseq
  %v3332 = vshrl.u32 %v3331, 7
  %v3333 = vsub.s32 1, %v3332
  %v3334 = vrot.slane %v3250, %v3333
  %v3355 = vrcp.pop %v3258
  %v3356 = vmul.f32 %v3207, %v3355
  %v3357 = vmul.f32 %v3208, %v3355
  %v3358 = vrcp.pop %v3262
  %v3359 = vmul.f32 %v3209, %v3358
  %v3360 = vmul.f32 %v3210, %v3358
  %v3361 = vrcp.pop %v3266
  %v3362 = vmul.f32 %v3211, %v3361
  %v3363 = vmul.f32 %v3212, %v3361
  %v3364 = vrcp.pop %v3270
  %v3365 = vmul.f32 %v3213, %v3364
  %v3366 = vmul.f32 %v3214, %v3364
  %v3367 = vrcp.pop %v3274
  %v3368 = vmul.f32 %v3215, %v3367
  %v3369 = vmul.f32 %v3216, %v3367
  %v3370 = vrcp.pop %v3278
  %v3371 = vmul.f32 %v3217, %v3370
  %v3372 = vmul.f32 %v3218, %v3370
  %v3373 = vrcp.pop %v3282
  %v3374 = vmul.f32 %v3219, %v3373
  %v3375 = vmul.f32 %v3220, %v3373
  %v3376 = vrcp.pop %v3286
  %v3377 = vmul.f32 %v3221, %v3376
  %v3378 = vmul.f32 %v3222, %v3376
  %v3379 = vrcp.pop %v3290
  %v3380 = vmul.f32 %v3223, %v3379
  %v3381 = vmul.f32 %v3224, %v3379
  %v3382 = vrcp.pop %v3294
  %v3383 = vmul.f32 %v3225, %v3382
  %v3384 = vmul.f32 %v3226, %v3382
  %v3385 = vrcp.pop %v3298
  %v3386 = vmul.f32 %v3227, %v3385
  %v3387 = vmul.f32 %v3228, %v3385
  %v3388 = vrcp.pop %v3302
  %v3389 = vmul.f32 %v3229, %v3388
  %v3390 = vmul.f32 %v3230, %v3388
  %v3391 = vrcp.pop %v3306
  %v3392 = vmul.f32 %v3231, %v3391
  %v3393 = vmul.f32 %v3232, %v3391
  %v3394 = vrcp.pop %v3310
  %v3395 = vmul.f32 %v3233, %v3394
  %v3396 = vmul.f32 %v3234, %v3394
  %v3397 = vrcp.pop %v3314
  %v3398 = vmul.f32 %v3235, %v3397
  %v3399 = vmul.f32 %v3236, %v3397
  %v3400 = vrcp.pop %v3318
  %v3401 = vmul.f32 %v3237, %v3400
  %v3402 = vmul.f32 %v3238, %v3400
  %v3403 = vrcp.pop %v3322
  %v3404 = vmul.f32 %v3239, %v3403
  %v3405 = vmul.f32 %v3240, %v3403
  %v3406 = vrcp.pop %v3326
  %v3407 = vmul.f32 %v3241, %v3406
  %v3408 = vmul.f32 %v3242, %v3406
  %v3409 = vrcp.pop %v3330
  %v3410 = vmul.f32 %v3243, %v3409
  %v3411 = vmul.f32 %v3244, %v3409
  %v3412 = vrcp.pop %v3334
  %v3413 = vmul.f32 %v3245, %v3412
  %v3414 = vmul.f32 %v3246, %v3412
  %3416 = vset.pattern.permute.xlu0 0
  %3417 = vperm.xlu0 %3416, %v3356
  %v3418 = vpop.permute.xlu0 %3417
  %3421 = vset.pattern.permute.xlu0 0
  %3422 = vperm.xlu0 %3421, %v3357
  %v3423 = vpop.permute.xlu0 %3422
  %3426 = vset.pattern.permute.xlu0 0
  %3427 = vperm.xlu0 %3426, %v3359
  %v3428 = vpop.permute.xlu0 %3427
  %3431 = vset.pattern.permute.xlu0 0
  %3432 = vperm.xlu0 %3431, %v3360
  %v3433 = vpop.permute.xlu0 %3432
  %3436 = vset.pattern.permute.xlu0 0
  %3437 = vperm.xlu0 %3436, %v3362
  %v3438 = vpop.permute.xlu0 %3437
  %3441 = vset.pattern.permute.xlu0 0
  %3442 = vperm.xlu0 %3441, %v3363
  %v3443 = vpop.permute.xlu0 %3442
  %3446 = vset.pattern.permute.xlu0 0
  %3447 = vperm.xlu0 %3446, %v3365
  %v3448 = vpop.permute.xlu0 %3447
  %3451 = vset.pattern.permute.xlu0 0
  %3452 = vperm.xlu0 %3451, %v3366
  %v3453 = vpop.permute.xlu0 %3452
  %3456 = vset.pattern.permute.xlu0 0
  %3457 = vperm.xlu0 %3456, %v3368
  %v3458 = vpop.permute.xlu0 %3457
  %3461 = vset.pattern.permute.xlu0 0
  %3462 = vperm.xlu0 %3461, %v3369
  %v3463 = vpop.permute.xlu0 %3462
  %3466 = vset.pattern.permute.xlu0 0
  %3467 = vperm.xlu0 %3466, %v3371
  %v3468 = vpop.permute.xlu0 %3467
  %3471 = vset.pattern.permute.xlu0 0
  %3472 = vperm.xlu0 %3471, %v3372
  %v3473 = vpop.permute.xlu0 %3472
  %3476 = vset.pattern.permute.xlu0 0
  %3477 = vperm.xlu0 %3476, %v3374
  %v3478 = vpop.permute.xlu0 %3477
  %3481 = vset.pattern.permute.xlu0 0
  %3482 = vperm.xlu0 %3481, %v3375
  %v3483 = vpop.permute.xlu0 %3482
  %3486 = vset.pattern.permute.xlu0 0
  %3487 = vperm.xlu0 %3486, %v3377
  %v3488 = vpop.permute.xlu0 %3487
  %3491 = vset.pattern.permute.xlu0 0
  %3492 = vperm.xlu0 %3491, %v3378
  %v3493 = vpop.permute.xlu0 %3492
  %3496 = vset.pattern.permute.xlu0 0
  %3497 = vperm.xlu0 %3496, %v3380
  %v3498 = vpop.permute.xlu0 %3497
  %3501 = vset.pattern.permute.xlu0 0
  %3502 = vperm.xlu0 %3501, %v3381
  %v3503 = vpop.permute.xlu0 %3502
  %3506 = vset.pattern.permute.xlu0 0
  %3507 = vperm.xlu0 %3506, %v3383
  %v3508 = vpop.permute.xlu0 %3507
  %3511 = vset.pattern.permute.xlu0 0
  %3512 = vperm.xlu0 %3511, %v3384
  %v3513 = vpop.permute.xlu0 %3512
  %3516 = vset.pattern.permute.xlu0 0
  %3517 = vperm.xlu0 %3516, %v3386
  %v3518 = vpop.permute.xlu0 %3517
  %3521 = vset.pattern.permute.xlu0 0
  %3522 = vperm.xlu0 %3521, %v3387
  %v3523 = vpop.permute.xlu0 %3522
  %3526 = vset.pattern.permute.xlu0 0
  %3527 = vperm.xlu0 %3526, %v3389
  %v3528 = vpop.permute.xlu0 %3527
  %3531 = vset.pattern.permute.xlu0 0
  %3532 = vperm.xlu0 %3531, %v3390
  %v3533 = vpop.permute.xlu0 %3532
  %3536 = vset.pattern.permute.xlu0 0
  %3537 = vperm.xlu0 %3536, %v3392
  %v3538 = vpop.permute.xlu0 %3537
  %3541 = vset.pattern.permute.xlu0 0
  %3542 = vperm.xlu0 %3541, %v3393
  %v3543 = vpop.permute.xlu0 %3542
  %3546 = vset.pattern.permute.xlu0 0
  %3547 = vperm.xlu0 %3546, %v3395
  %v3548 = vpop.permute.xlu0 %3547
  %3551 = vset.pattern.permute.xlu0 0
  %3552 = vperm.xlu0 %3551, %v3396
  %v3553 = vpop.permute.xlu0 %3552
  %3556 = vset.pattern.permute.xlu0 0
  %3557 = vperm.xlu0 %3556, %v3398
  %v3558 = vpop.permute.xlu0 %3557
  %3561 = vset.pattern.permute.xlu0 0
  %3562 = vperm.xlu0 %3561, %v3399
  %v3563 = vpop.permute.xlu0 %3562
  %3566 = vset.pattern.permute.xlu0 0
  %3567 = vperm.xlu0 %3566, %v3401
  %v3568 = vpop.permute.xlu0 %3567
  %3571 = vset.pattern.permute.xlu0 0
  %3572 = vperm.xlu0 %3571, %v3402
  %v3573 = vpop.permute.xlu0 %3572
  %3576 = vset.pattern.permute.xlu0 0
  %3577 = vperm.xlu0 %3576, %v3404
  %v3578 = vpop.permute.xlu0 %3577
  %3581 = vset.pattern.permute.xlu0 0
  %3582 = vperm.xlu0 %3581, %v3405
  %v3583 = vpop.permute.xlu0 %3582
  %3586 = vset.pattern.permute.xlu0 0
  %3587 = vperm.xlu0 %3586, %v3407
  %v3588 = vpop.permute.xlu0 %3587
  %3591 = vset.pattern.permute.xlu0 0
  %3592 = vperm.xlu0 %3591, %v3408
  %v3593 = vpop.permute.xlu0 %3592
  %3596 = vset.pattern.permute.xlu0 0
  %3597 = vperm.xlu0 %3596, %v3410
  %v3598 = vpop.permute.xlu0 %3597
  %3601 = vset.pattern.permute.xlu0 0
  %3602 = vperm.xlu0 %3601, %v3411
  %v3603 = vpop.permute.xlu0 %3602
  %3606 = vset.pattern.permute.xlu0 0
  %3607 = vperm.xlu0 %3606, %v3413
  %v3608 = vpop.permute.xlu0 %3607
  %3611 = vset.pattern.permute.xlu0 0
  %3612 = vperm.xlu0 %3611, %v3414
  %v3613 = vpop.permute.xlu0 %3612
  %v3615 = vmul.f32 %v869, %v3418
  %v3616 = vmul.f32 %v870, %v3423
  %v3617 = vmul.f32 %v871, %v3428
  %v3618 = vmul.f32 %v872, %v3433
  %v3619 = vmul.f32 %v873, %v3438
  %v3620 = vmul.f32 %v874, %v3443
  %v3621 = vmul.f32 %v875, %v3448
  %v3622 = vmul.f32 %v876, %v3453
  %v3623 = vmul.f32 %v877, %v3458
  %v3624 = vmul.f32 %v878, %v3463
  %v3625 = vmul.f32 %v879, %v3468
  %v3626 = vmul.f32 %v880, %v3473
  %v3627 = vmul.f32 %v881, %v3478
  %v3628 = vmul.f32 %v882, %v3483
  %v3629 = vmul.f32 %v883, %v3488
  %v3630 = vmul.f32 %v884, %v3493
  %v3631 = vmul.f32 %v885, %v3498
  %v3632 = vmul.f32 %v886, %v3503
  %v3633 = vmul.f32 %v887, %v3508
  %v3634 = vmul.f32 %v888, %v3513
  %v3635 = vmul.f32 %v889, %v3518
  %v3636 = vmul.f32 %v890, %v3523
  %v3637 = vmul.f32 %v891, %v3528
  %v3638 = vmul.f32 %v892, %v3533
  %v3639 = vmul.f32 %v893, %v3538
  %v3640 = vmul.f32 %v894, %v3543
  %v3641 = vmul.f32 %v895, %v3548
  %v3642 = vmul.f32 %v896, %v3553
  %v3643 = vmul.f32 %v897, %v3558
  %v3644 = vmul.f32 %v898, %v3563
  %v3645 = vmul.f32 %v899, %v3568
  %v3646 = vmul.f32 %v900, %v3573
  %v3647 = vmul.f32 %v901, %v3578
  %v3648 = vmul.f32 %v902, %v3583
  %v3649 = vmul.f32 %v903, %v3588
  %v3650 = vmul.f32 %v904, %v3593
  %v3651 = vmul.f32 %v905, %v3598
  %v3652 = vmul.f32 %v906, %v3603
  %v3653 = vmul.f32 %v907, %v3608
  %v3654 = vmul.f32 %v908, %v3613
  %v3655 = vadd.f32 %v3615, %v3616
  %v3656 = vrot.slane %v3655, 4
  %v3657 = vadd.f32 %v3655, %v3656
  %v3658 = vrot.slane %v3657, 2
  %v3659 = vadd.f32 %v3657, %v3658
  %v3660 = vrot.slane %v3659, 1
  %v3661 = vadd.f32 %v3659, %v3660
  %v3662 = vadd.f32 %v3617, %v3618
  %v3663 = vrot.slane %v3662, 4
  %v3664 = vadd.f32 %v3662, %v3663
  %v3665 = vrot.slane %v3664, 2
  %v3666 = vadd.f32 %v3664, %v3665
  %v3667 = vrot.slane %v3666, 1
  %v3668 = vadd.f32 %v3666, %v3667
  %v3669 = vadd.f32 %v3619, %v3620
  %v3670 = vrot.slane %v3669, 4
  %v3671 = vadd.f32 %v3669, %v3670
  %v3672 = vrot.slane %v3671, 2
  %v3673 = vadd.f32 %v3671, %v3672
  %v3674 = vrot.slane %v3673, 1
  %v3675 = vadd.f32 %v3673, %v3674
  %v3676 = vadd.f32 %v3621, %v3622
  %v3677 = vrot.slane %v3676, 4
  %v3678 = vadd.f32 %v3676, %v3677
  %v3679 = vrot.slane %v3678, 2
  %v3680 = vadd.f32 %v3678, %v3679
  %v3681 = vrot.slane %v3680, 1
  %v3682 = vadd.f32 %v3680, %v3681
  %v3683 = vadd.f32 %v3623, %v3624
  %v3684 = vrot.slane %v3683, 4
  %v3685 = vadd.f32 %v3683, %v3684
  %v3686 = vrot.slane %v3685, 2
  %v3687 = vadd.f32 %v3685, %v3686
  %v3688 = vrot.slane %v3687, 1
  %v3689 = vadd.f32 %v3687, %v3688
  %v3690 = vadd.f32 %v3625, %v3626
  %v3691 = vrot.slane %v3690, 4
  %v3692 = vadd.f32 %v3690, %v3691
  %v3693 = vrot.slane %v3692, 2
  %v3694 = vadd.f32 %v3692, %v3693
  %v3695 = vrot.slane %v3694, 1
  %v3696 = vadd.f32 %v3694, %v3695
  %v3697 = vadd.f32 %v3627, %v3628
  %v3698 = vrot.slane %v3697, 4
  %v3699 = vadd.f32 %v3697, %v3698
  %v3700 = vrot.slane %v3699, 2
  %v3701 = vadd.f32 %v3699, %v3700
  %v3702 = vrot.slane %v3701, 1
  %v3703 = vadd.f32 %v3701, %v3702
  %v3704 = vadd.f32 %v3629, %v3630
  %v3705 = vrot.slane %v3704, 4
  %v3706 = vadd.f32 %v3704, %v3705
  %v3707 = vrot.slane %v3706, 2
  %v3708 = vadd.f32 %v3706, %v3707
  %v3709 = vrot.slane %v3708, 1
  %v3710 = vadd.f32 %v3708, %v3709
  %v3711 = vadd.f32 %v3631, %v3632
  %v3712 = vrot.slane %v3711, 4
  %v3713 = vadd.f32 %v3711, %v3712
  %v3714 = vrot.slane %v3713, 2
  %v3715 = vadd.f32 %v3713, %v3714
  %v3716 = vrot.slane %v3715, 1
  %v3717 = vadd.f32 %v3715, %v3716
  %v3718 = vadd.f32 %v3633, %v3634
  %v3719 = vrot.slane %v3718, 4
  %v3720 = vadd.f32 %v3718, %v3719
  %v3721 = vrot.slane %v3720, 2
  %v3722 = vadd.f32 %v3720, %v3721
  %v3723 = vrot.slane %v3722, 1
  %v3724 = vadd.f32 %v3722, %v3723
  %v3725 = vadd.f32 %v3635, %v3636
  %v3726 = vrot.slane %v3725, 4
  %v3727 = vadd.f32 %v3725, %v3726
  %v3728 = vrot.slane %v3727, 2
  %v3729 = vadd.f32 %v3727, %v3728
  %v3730 = vrot.slane %v3729, 1
  %v3731 = vadd.f32 %v3729, %v3730
  %v3732 = vadd.f32 %v3637, %v3638
  %v3733 = vrot.slane %v3732, 4
  %v3734 = vadd.f32 %v3732, %v3733
  %v3735 = vrot.slane %v3734, 2
  %v3736 = vadd.f32 %v3734, %v3735
  %v3737 = vrot.slane %v3736, 1
  %v3738 = vadd.f32 %v3736, %v3737
  %v3739 = vadd.f32 %v3639, %v3640
  %v3740 = vrot.slane %v3739, 4
  %v3741 = vadd.f32 %v3739, %v3740
  %v3742 = vrot.slane %v3741, 2
  %v3743 = vadd.f32 %v3741, %v3742
  %v3744 = vrot.slane %v3743, 1
  %v3745 = vadd.f32 %v3743, %v3744
  %v3746 = vadd.f32 %v3641, %v3642
  %v3747 = vrot.slane %v3746, 4
  %v3748 = vadd.f32 %v3746, %v3747
  %v3749 = vrot.slane %v3748, 2
  %v3750 = vadd.f32 %v3748, %v3749
  %v3751 = vrot.slane %v3750, 1
  %v3752 = vadd.f32 %v3750, %v3751
  %v3753 = vadd.f32 %v3643, %v3644
  %v3754 = vrot.slane %v3753, 4
  %v3755 = vadd.f32 %v3753, %v3754
  %v3756 = vrot.slane %v3755, 2
  %v3757 = vadd.f32 %v3755, %v3756
  %v3758 = vrot.slane %v3757, 1
  %v3759 = vadd.f32 %v3757, %v3758
  %v3760 = vadd.f32 %v3645, %v3646
  %v3761 = vrot.slane %v3760, 4
  %v3762 = vadd.f32 %v3760, %v3761
  %v3763 = vrot.slane %v3762, 2
  %v3764 = vadd.f32 %v3762, %v3763
  %v3765 = vrot.slane %v3764, 1
  %v3766 = vadd.f32 %v3764, %v3765
  %v3767 = vadd.f32 %v3647, %v3648
  %v3768 = vrot.slane %v3767, 4
  %v3769 = vadd.f32 %v3767, %v3768
  %v3770 = vrot.slane %v3769, 2
  %v3771 = vadd.f32 %v3769, %v3770
  %v3772 = vrot.slane %v3771, 1
  %v3773 = vadd.f32 %v3771, %v3772
  %v3774 = vadd.f32 %v3649, %v3650
  %v3775 = vrot.slane %v3774, 4
  %v3776 = vadd.f32 %v3774, %v3775
  %v3777 = vrot.slane %v3776, 2
  %v3778 = vadd.f32 %v3776, %v3777
  %v3779 = vrot.slane %v3778, 1
  %v3780 = vadd.f32 %v3778, %v3779
  %v3781 = vadd.f32 %v3651, %v3652
  %v3782 = vrot.slane %v3781, 4
  %v3783 = vadd.f32 %v3781, %v3782
  %v3784 = vrot.slane %v3783, 2
  %v3785 = vadd.f32 %v3783, %v3784
  %v3786 = vrot.slane %v3785, 1
  %v3787 = vadd.f32 %v3785, %v3786
  %v3788 = vadd.f32 %v3653, %v3654
  %v3789 = vrot.slane %v3788, 4
  %v3790 = vadd.f32 %v3788, %v3789
  %v3791 = vrot.slane %v3790, 2
  %v3792 = vadd.f32 %v3790, %v3791
  %v3793 = vrot.slane %v3792, 1
  %v3794 = vadd.f32 %v3792, %v3793
  %v3795 = vadd.f32 %v2058, %v3661
  %v3796 = vadd.f32 %v2059, %v3668
  %v3797 = vadd.f32 %v2060, %v3675
  %v3798 = vadd.f32 %v2061, %v3682
  %v3799 = vadd.f32 %v2062, %v3689
  %v3800 = vadd.f32 %v2063, %v3696
  %v3801 = vadd.f32 %v2064, %v3703
  %v3802 = vadd.f32 %v2065, %v3710
  %v3803 = vadd.f32 %v2066, %v3717
  %v3804 = vadd.f32 %v2067, %v3724
  %v3805 = vadd.f32 %v2068, %v3731
  %v3806 = vadd.f32 %v2069, %v3738
  %v3807 = vadd.f32 %v2070, %v3745
  %v3808 = vadd.f32 %v2071, %v3752
  %v3809 = vadd.f32 %v2072, %v3759
  %v3810 = vadd.f32 %v2073, %v3766
  %v3811 = vadd.f32 %v2074, %v3773
  %v3812 = vadd.f32 %v2075, %v3780
  %v3813 = vadd.f32 %v2076, %v3787
  %v3814 = vadd.f32 %v2077, %v3794
  %v3835 = vsel %vm1297, %v3796, %v3795
  %v3836 = vsel %vm1299, %v3797, %v3835
  %v3837 = vsel %vm1301, %v3798, %v3836
  %v3838 = vsel %vm1303, %v3799, %v3837
  %v3839 = vsel %vm1305, %v3800, %v3838
  %v3840 = vsel %vm1307, %v3801, %v3839
  %v3841 = vsel %vm1309, %v3802, %v3840
  %v3842 = vsel %vm1297, %v3804, %v3803
  %v3843 = vsel %vm1297, %v3806, %v3805
  %v3844 = vsel %vm1299, %v3807, %v3843
  %v3845 = vsel %vm1301, %v3808, %v3844
  %v3846 = vsel %vm1303, %v3809, %v3845
  %v3847 = vsel %vm1305, %v3810, %v3846
  %v3848 = vsel %vm1307, %v3811, %v3847
  %v3849 = vsel %vm1309, %v3812, %v3848
  %v3850 = vsel %vm1297, %v3814, %v3813
  %s3855 = scalar_lea.vmem %s3, 16
  %3856 = vst [vmem:[%s3855] sm:$0xff] %v3841
  %3857 = vst [vmem:[%s3855 + $0x8] sm:$0x3] %v3842
  %3858 = vst [vmem:[%s3855 + $0x20] sm:$0xff] %v3849
  %3859 = vst [vmem:[%s3855 + $0x28] sm:$0x3] %v3850
  %v3860 = vlaneseq
  %v3861 = vshrl.u32 %v3860, 7
  %v3862 = vsub.s32 %v1114, %v3861
  %v3863 = vrot.slane %v3418, %v3862
  %v3864 = vlaneseq
  %v3865 = vshrl.u32 %v3864, 7
  %v3866 = vsub.s32 %v1119, %v3865
  %v3867 = vrot.slane %v3423, %v3866
  %v3868 = vsel %vm1124, %v3867, %v3863
  %v3869 = vlaneseq
  %v3870 = vshrl.u32 %v3869, 7
  %v3871 = vsub.s32 %v1114, %v3870
  %v3872 = vrot.slane %v3428, %v3871
  %v3873 = vlaneseq
  %v3874 = vshrl.u32 %v3873, 7
  %v3875 = vsub.s32 %v1119, %v3874
  %v3876 = vrot.slane %v3433, %v3875
  %v3877 = vsel %vm1124, %v3876, %v3872
  %v3878 = vlaneseq
  %v3879 = vshrl.u32 %v3878, 7
  %v3880 = vsub.s32 %v1114, %v3879
  %v3881 = vrot.slane %v3438, %v3880
  %v3882 = vlaneseq
  %v3883 = vshrl.u32 %v3882, 7
  %v3884 = vsub.s32 %v1119, %v3883
  %v3885 = vrot.slane %v3443, %v3884
  %v3886 = vsel %vm1124, %v3885, %v3881
  %v3887 = vlaneseq
  %v3888 = vshrl.u32 %v3887, 7
  %v3889 = vsub.s32 %v1114, %v3888
  %v3890 = vrot.slane %v3448, %v3889
  %v3891 = vlaneseq
  %v3892 = vshrl.u32 %v3891, 7
  %v3893 = vsub.s32 %v1119, %v3892
  %v3894 = vrot.slane %v3453, %v3893
  %v3895 = vsel %vm1124, %v3894, %v3890
  %v3896 = vlaneseq
  %v3897 = vshrl.u32 %v3896, 7
  %v3898 = vsub.s32 %v1114, %v3897
  %v3899 = vrot.slane %v3458, %v3898
  %v3900 = vlaneseq
  %v3901 = vshrl.u32 %v3900, 7
  %v3902 = vsub.s32 %v1119, %v3901
  %v3903 = vrot.slane %v3463, %v3902
  %v3904 = vsel %vm1124, %v3903, %v3899
  %v3905 = vlaneseq
  %v3906 = vshrl.u32 %v3905, 7
  %v3907 = vsub.s32 %v1114, %v3906
  %v3908 = vrot.slane %v3468, %v3907
  %v3909 = vlaneseq
  %v3910 = vshrl.u32 %v3909, 7
  %v3911 = vsub.s32 %v1119, %v3910
  %v3912 = vrot.slane %v3473, %v3911
  %v3913 = vsel %vm1124, %v3912, %v3908
  %v3914 = vlaneseq
  %v3915 = vshrl.u32 %v3914, 7
  %v3916 = vsub.s32 %v1114, %v3915
  %v3917 = vrot.slane %v3478, %v3916
  %v3918 = vlaneseq
  %v3919 = vshrl.u32 %v3918, 7
  %v3920 = vsub.s32 %v1119, %v3919
  %v3921 = vrot.slane %v3483, %v3920
  %v3922 = vsel %vm1124, %v3921, %v3917
  %v3923 = vlaneseq
  %v3924 = vshrl.u32 %v3923, 7
  %v3925 = vsub.s32 %v1114, %v3924
  %v3926 = vrot.slane %v3488, %v3925
  %v3927 = vlaneseq
  %v3928 = vshrl.u32 %v3927, 7
  %v3929 = vsub.s32 %v1119, %v3928
  %v3930 = vrot.slane %v3493, %v3929
  %v3931 = vsel %vm1124, %v3930, %v3926
  %v3932 = vlaneseq
  %v3933 = vshrl.u32 %v3932, 7
  %v3934 = vsub.s32 %v1114, %v3933
  %v3935 = vrot.slane %v3498, %v3934
  %v3936 = vlaneseq
  %v3937 = vshrl.u32 %v3936, 7
  %v3938 = vsub.s32 %v1119, %v3937
  %v3939 = vrot.slane %v3503, %v3938
  %v3940 = vsel %vm1124, %v3939, %v3935
  %v3941 = vlaneseq
  %v3942 = vshrl.u32 %v3941, 7
  %v3943 = vsub.s32 %v1114, %v3942
  %v3944 = vrot.slane %v3508, %v3943
  %v3945 = vlaneseq
  %v3946 = vshrl.u32 %v3945, 7
  %v3947 = vsub.s32 %v1119, %v3946
  %v3948 = vrot.slane %v3513, %v3947
  %v3949 = vsel %vm1124, %v3948, %v3944
  %v3950 = vlaneseq
  %v3951 = vshrl.u32 %v3950, 7
  %v3952 = vsub.s32 %v1114, %v3951
  %v3953 = vrot.slane %v3518, %v3952
  %v3954 = vlaneseq
  %v3955 = vshrl.u32 %v3954, 7
  %v3956 = vsub.s32 %v1119, %v3955
  %v3957 = vrot.slane %v3523, %v3956
  %v3958 = vsel %vm1124, %v3957, %v3953
  %v3959 = vlaneseq
  %v3960 = vshrl.u32 %v3959, 7
  %v3961 = vsub.s32 %v1114, %v3960
  %v3962 = vrot.slane %v3528, %v3961
  %v3963 = vlaneseq
  %v3964 = vshrl.u32 %v3963, 7
  %v3965 = vsub.s32 %v1119, %v3964
  %v3966 = vrot.slane %v3533, %v3965
  %v3967 = vsel %vm1124, %v3966, %v3962
  %v3968 = vlaneseq
  %v3969 = vshrl.u32 %v3968, 7
  %v3970 = vsub.s32 %v1114, %v3969
  %v3971 = vrot.slane %v3538, %v3970
  %v3972 = vlaneseq
  %v3973 = vshrl.u32 %v3972, 7
  %v3974 = vsub.s32 %v1119, %v3973
  %v3975 = vrot.slane %v3543, %v3974
  %v3976 = vsel %vm1124, %v3975, %v3971
  %v3977 = vlaneseq
  %v3978 = vshrl.u32 %v3977, 7
  %v3979 = vsub.s32 %v1114, %v3978
  %v3980 = vrot.slane %v3548, %v3979
  %v3981 = vlaneseq
  %v3982 = vshrl.u32 %v3981, 7
  %v3983 = vsub.s32 %v1119, %v3982
  %v3984 = vrot.slane %v3553, %v3983
  %v3985 = vsel %vm1124, %v3984, %v3980
  %v3986 = vlaneseq
  %v3987 = vshrl.u32 %v3986, 7
  %v3988 = vsub.s32 %v1114, %v3987
  %v3989 = vrot.slane %v3558, %v3988
  %v3990 = vlaneseq
  %v3991 = vshrl.u32 %v3990, 7
  %v3992 = vsub.s32 %v1119, %v3991
  %v3993 = vrot.slane %v3563, %v3992
  %v3994 = vsel %vm1124, %v3993, %v3989
  %v3995 = vlaneseq
  %v3996 = vshrl.u32 %v3995, 7
  %v3997 = vsub.s32 %v1114, %v3996
  %v3998 = vrot.slane %v3568, %v3997
  %v3999 = vlaneseq
  %v4000 = vshrl.u32 %v3999, 7
  %v4001 = vsub.s32 %v1119, %v4000
  %v4002 = vrot.slane %v3573, %v4001
  %v4003 = vsel %vm1124, %v4002, %v3998
  %v4004 = vlaneseq
  %v4005 = vshrl.u32 %v4004, 7
  %v4006 = vsub.s32 %v1114, %v4005
  %v4007 = vrot.slane %v3578, %v4006
  %v4008 = vlaneseq
  %v4009 = vshrl.u32 %v4008, 7
  %v4010 = vsub.s32 %v1119, %v4009
  %v4011 = vrot.slane %v3583, %v4010
  %v4012 = vsel %vm1124, %v4011, %v4007
  %v4013 = vlaneseq
  %v4014 = vshrl.u32 %v4013, 7
  %v4015 = vsub.s32 %v1114, %v4014
  %v4016 = vrot.slane %v3588, %v4015
  %v4017 = vlaneseq
  %v4018 = vshrl.u32 %v4017, 7
  %v4019 = vsub.s32 %v1119, %v4018
  %v4020 = vrot.slane %v3593, %v4019
  %v4021 = vsel %vm1124, %v4020, %v4016
  %v4022 = vlaneseq
  %v4023 = vshrl.u32 %v4022, 7
  %v4024 = vsub.s32 %v1114, %v4023
  %v4025 = vrot.slane %v3598, %v4024
  %v4026 = vlaneseq
  %v4027 = vshrl.u32 %v4026, 7
  %v4028 = vsub.s32 %v1119, %v4027
  %v4029 = vrot.slane %v3603, %v4028
  %v4030 = vsel %vm1124, %v4029, %v4025
  %v4031 = vlaneseq
  %v4032 = vshrl.u32 %v4031, 7
  %v4033 = vsub.s32 %v1114, %v4032
  %v4034 = vrot.slane %v3608, %v4033
  %v4035 = vlaneseq
  %v4036 = vshrl.u32 %v4035, 7
  %v4037 = vsub.s32 %v1119, %v4036
  %v4038 = vrot.slane %v3613, %v4037
  %v4039 = vsel %vm1124, %v4038, %v4034
  %v4040 = vsel %vm1297, %v3877, %v3868
  %v4041 = vsel %vm1299, %v3886, %v4040
  %v4042 = vsel %vm1301, %v3895, %v4041
  %v4043 = vsel %vm1303, %v3904, %v4042
  %v4044 = vsel %vm1305, %v3913, %v4043
  %v4045 = vsel %vm1307, %v3922, %v4044
  %v4046 = vsel %vm1309, %v3931, %v4045
  %v4047 = vsel %vm1297, %v3949, %v3940
  %v4048 = vsel %vm1297, %v3967, %v3958
  %v4049 = vsel %vm1299, %v3976, %v4048
  %v4050 = vsel %vm1301, %v3985, %v4049
  %v4051 = vsel %vm1303, %v3994, %v4050
  %v4052 = vsel %vm1305, %v4003, %v4051
  %v4053 = vsel %vm1307, %v4012, %v4052
  %v4054 = vsel %vm1309, %v4021, %v4053
  %v4055 = vsel %vm1297, %v4039, %v4030
  %s4060 = scalar_lea.vmem %s4, 16
  %4061 = vst.msk [vmem:[%s4060] sm:$0xff] %vm1324, %v4046
  %4062 = vst.msk [vmem:[%s4060 + $0x8] sm:$0x3] %vm1328, %v4047
  %4063 = vst.msk [vmem:[%s4060 + $0x20] sm:$0xff] %vm1324, %v4054
  %4064 = vst.msk [vmem:[%s4060 + $0x28] sm:$0x3] %vm1328, %v4055
  // Predicated region
  $region14: #{_lambda_.5} parent=0 // pred_check
    _
  $region15: #{_lambda_.5} parent=0 // pred_check_branch
    %4066 = sbr.rel (0) target = $region17
  $region16: #{_lambda_.5} parent=0 // pred_region
    _
  $region17: #{_lambda_.5} parent=0 // pred_fallthru
    _
  // Predicated region
  $region18: #{_lambda_.5} parent=0 // pred_check
    _
  $region19: #{_lambda_.5} parent=0 // pred_check_branch
    %4068 = sbr.rel (0) target = $region21
  $region20: #{_lambda_.5} parent=0 // pred_region
    _
  $region21: #{_lambda_.5} parent=0 // pred_fallthru
    _
  // Predicated region
  $region22: #{_lambda_.5} parent=0 // pred_check
    _
  $region23: #{_lambda_.5} parent=0 // pred_check_branch
    %4070 = sbr.rel (0) target = $region25
  $region24: #{_lambda_.5} parent=0 // pred_region
    _
  $region25: #{_lambda_.5} parent=0 // pred_fallthru
    _
  // Predicated region
  $region26: #{_lambda_.5} parent=0 // pred_check
    _
  $region27: #{_lambda_.5} parent=0 // pred_check_branch
    %4072 = sbr.rel (0) target = $region29
  $region28: #{_lambda_.5} parent=0 // pred_region
    _
  $region29: #{_lambda_.5} parent=0 // pred_fallthru
    _

// kernel: _lambda_.4
$region0: #{_lambda_.4}
  #allocation0 [shape = 'u32[]', space=smem, size = 0x4, offset = 0x4, fixed_abs, tag = 'smem constant byte address 0x4 - core index']
  #allocation1 [shape = 'u32[144,128]{1,0:T(1,128)}', space=vmem, size = 0x12000, scoped, tag = 'internal scratch']
  %s0 = inlined_call_operand.vmem [shape: bf16[8,8,2688], index: 0, kind: input, shape index: {}]
  %s1 = inlined_call_operand.vmem [shape: bf16[2688,256], index: 1, kind: input, shape index: {}]
  %s2 = inlined_call_operand.vmem [shape: f32[1,256], index: 2, kind: input, shape index: {}]
  %s3 = inlined_call_operand.vmem [shape: f32[8,256], index: 3, kind: output, shape index: {}]
  %s4 = sld [smem:[#allocation0]]
  $region22: #{_lambda_.4} parent=0
    _
  %s6 = ssub.s32 1, %s4
  %s7 = scalar_select 0, %s6, %s4
  // Predicated region
  $region2: #{_lambda_.4} parent=0 // pred_check
    _
  $region3: #{_lambda_.4} parent=0 // pred_check_branch
    %9 = sbr.rel (0) target = $region5
  $region4: #{_lambda_.4} parent=0 // pred_region
    _
  $region5: #{_lambda_.4} parent=0 // pred_fallthru
    _
  // Predicated region
  $region6: #{_lambda_.4} parent=0 // pred_check
    _
  $region7: #{_lambda_.4} parent=0 // pred_check_branch
    %11 = sbr.rel (0) target = $region9
  $region8: #{_lambda_.4} parent=0 // pred_region
    _
  $region9: #{_lambda_.4} parent=0 // pred_fallthru
    _
  // Predicated region
  $region10: #{_lambda_.4} parent=0 // pred_check
    _
  $region11: #{_lambda_.4} parent=0 // pred_check_branch
    %13 = sbr.rel (0) target = $region13
  $region12: #{_lambda_.4} parent=0 // pred_region
    _
  $region13: #{_lambda_.4} parent=0 // pred_fallthru
    _
  %v15 = vld [vmem:[%s0] sm:$0xff]
  %v16 = vld [vmem:[%s0 + $0x8] sm:$0xff]
  %v17 = vld [vmem:[%s0 + $0x10] sm:$0xff]
  %v18 = vld [vmem:[%s0 + $0x18] sm:$0xff]
  %v19 = vld [vmem:[%s0 + $0x20] sm:$0xff]
  %v20 = vld [vmem:[%s0 + $0x28] sm:$0xff]
  %v21 = vld [vmem:[%s0 + $0x30] sm:$0xff]
  %v22 = vld [vmem:[%s0 + $0x38] sm:$0xff]
  %v23 = vld [vmem:[%s0 + $0x40] sm:$0xff]
  %v24 = vld [vmem:[%s0 + $0x48] sm:$0xff]
  %v25 = vld [vmem:[%s0 + $0x50] sm:$0xf]
  %v26 = vld [vmem:[%s1] sm:$0xf]
  %v27 = vld [vmem:[%s1 + $0x8] sm:$0xf]
  %v28 = vld [vmem:[%s1 + $0x10] sm:$0xf]
  %v29 = vld [vmem:[%s1 + $0x18] sm:$0xf]
  %v30 = vld [vmem:[%s1 + $0x20] sm:$0xf]
  %v31 = vld [vmem:[%s1 + $0x28] sm:$0xf]
  %v32 = vld [vmem:[%s1 + $0x30] sm:$0xf]
  %v33 = vld [vmem:[%s1 + $0x38] sm:$0xf]
  %v34 = vld [vmem:[%s1 + $0x40] sm:$0xf]
  %v35 = vld [vmem:[%s1 + $0x48] sm:$0xf]
  %v36 = vld [vmem:[%s1 + $0x50] sm:$0xf]
  %v37 = vld [vmem:[%s1 + $0x58] sm:$0xf]
  %v38 = vld [vmem:[%s1 + $0x60] sm:$0xf]
  %v39 = vld [vmem:[%s1 + $0x68] sm:$0xf]
  %v40 = vld [vmem:[%s1 + $0x70] sm:$0xf]
  %v41 = vld [vmem:[%s1 + $0x78] sm:$0xf]
  %v42 = vld [vmem:[%s1 + $0x80] sm:$0xf]
  %v43 = vld [vmem:[%s1 + $0x88] sm:$0xf]
  %v44 = vld [vmem:[%s1 + $0x90] sm:$0xf]
  %v45 = vld [vmem:[%s1 + $0x98] sm:$0xf]
  %v46 = vld [vmem:[%s1 + $0xa0] sm:$0xf]
  %v47 = vld [vmem:[%s1 + $0xa8] sm:$0xf]
  %v48 = vld [vmem:[%s1 + $0xb0] sm:$0xf]
  %v49 = vld [vmem:[%s1 + $0xb8] sm:$0xf]
  %v50 = vld [vmem:[%s1 + $0xc0] sm:$0xf]
  %v51 = vld [vmem:[%s1 + $0xc8] sm:$0xf]
  %v52 = vld [vmem:[%s1 + $0xd0] sm:$0xf]
  %v53 = vld [vmem:[%s1 + $0xd8] sm:$0xf]
  %v54 = vld [vmem:[%s1 + $0xe0] sm:$0xf]
  %v55 = vld [vmem:[%s1 + $0xe8] sm:$0xf]
  %v56 = vld [vmem:[%s1 + $0xf0] sm:$0xf]
  %v57 = vld [vmem:[%s1 + $0xf8] sm:$0xf]
  %v58 = vld [vmem:[%s1 + $0x100] sm:$0xf]
  %v59 = vld [vmem:[%s1 + $0x108] sm:$0xf]
  %v60 = vld [vmem:[%s1 + $0x110] sm:$0xf]
  %v61 = vld [vmem:[%s1 + $0x118] sm:$0xf]
  %v62 = vld [vmem:[%s1 + $0x120] sm:$0xf]
  %v63 = vld [vmem:[%s1 + $0x128] sm:$0xf]
  %v64 = vld [vmem:[%s1 + $0x130] sm:$0xf]
  %v65 = vld [vmem:[%s1 + $0x138] sm:$0xf]
  %v66 = vld [vmem:[%s1 + $0x140] sm:$0xf]
  %v67 = vld [vmem:[%s1 + $0x148] sm:$0xf]
  %v68 = vld [vmem:[%s1 + $0x150] sm:$0xf]
  %v69 = vld [vmem:[%s1 + $0x158] sm:$0xf]
  %v70 = vld [vmem:[%s1 + $0x160] sm:$0xf]
  %v71 = vld [vmem:[%s1 + $0x168] sm:$0xf]
  %v72 = vld [vmem:[%s1 + $0x170] sm:$0xf]
  %v73 = vld [vmem:[%s1 + $0x178] sm:$0xf]
  %v74 = vld [vmem:[%s1 + $0x180] sm:$0xf]
  %v75 = vld [vmem:[%s1 + $0x188] sm:$0xf]
  %v76 = vld [vmem:[%s1 + $0x190] sm:$0xf]
  %v77 = vld [vmem:[%s1 + $0x198] sm:$0xf]
  %v78 = vld [vmem:[%s1 + $0x1a0] sm:$0xf]
  %v79 = vld [vmem:[%s1 + $0x1a8] sm:$0xf]
  %v80 = vld [vmem:[%s1 + $0x1b0] sm:$0xf]
  %v81 = vld [vmem:[%s1 + $0x1b8] sm:$0xf]
  %v82 = vld [vmem:[%s1 + $0x1c0] sm:$0xf]
  %v83 = vld [vmem:[%s1 + $0x1c8] sm:$0xf]
  %v84 = vld [vmem:[%s1 + $0x1d0] sm:$0xf]
  %v85 = vld [vmem:[%s1 + $0x1d8] sm:$0xf]
  %v86 = vld [vmem:[%s1 + $0x1e0] sm:$0xf]
  %v87 = vld [vmem:[%s1 + $0x1e8] sm:$0xf]
  %v88 = vld [vmem:[%s1 + $0x1f0] sm:$0xf]
  %v89 = vld [vmem:[%s1 + $0x1f8] sm:$0xf]
  %v90 = vld [vmem:[%s1 + $0x200] sm:$0xf]
  %v91 = vld [vmem:[%s1 + $0x208] sm:$0xf]
  %v92 = vld [vmem:[%s1 + $0x210] sm:$0xf]
  %v93 = vld [vmem:[%s1 + $0x218] sm:$0xf]
  %v94 = vld [vmem:[%s1 + $0x220] sm:$0xf]
  %v95 = vld [vmem:[%s1 + $0x228] sm:$0xf]
  %v96 = vld [vmem:[%s1 + $0x230] sm:$0xf]
  %v97 = vld [vmem:[%s1 + $0x238] sm:$0xf]
  %v98 = vld [vmem:[%s1 + $0x240] sm:$0xf]
  %v99 = vld [vmem:[%s1 + $0x248] sm:$0xf]
  %v100 = vld [vmem:[%s1 + $0x250] sm:$0xf]
  %v101 = vld [vmem:[%s1 + $0x258] sm:$0xf]
  %v102 = vld [vmem:[%s1 + $0x260] sm:$0xf]
  %v103 = vld [vmem:[%s1 + $0x268] sm:$0xf]
  %v104 = vld [vmem:[%s1 + $0x270] sm:$0xf]
  %v105 = vld [vmem:[%s1 + $0x278] sm:$0xf]
  %v106 = vld [vmem:[%s1 + $0x280] sm:$0xf]
  %v107 = vld [vmem:[%s1 + $0x288] sm:$0xf]
  %v108 = vld [vmem:[%s1 + $0x290] sm:$0xf]
  %v109 = vld [vmem:[%s1 + $0x298] sm:$0xf]
  %v110 = vld [vmem:[%s1 + $0x2a0] sm:$0xf]
  %v111 = vld [vmem:[%s1 + $0x2a8] sm:$0xf]
  %v112 = vld [vmem:[%s1 + $0x2b0] sm:$0xf]
  %v113 = vld [vmem:[%s1 + $0x2b8] sm:$0xf]
  %v114 = vld [vmem:[%s1 + $0x2c0] sm:$0xf]
  %v115 = vld [vmem:[%s1 + $0x2c8] sm:$0xf]
  %v116 = vld [vmem:[%s1 + $0x2d0] sm:$0xf]
  %v117 = vld [vmem:[%s1 + $0x2d8] sm:$0xf]
  %v118 = vld [vmem:[%s1 + $0x2e0] sm:$0xf]
  %v119 = vld [vmem:[%s1 + $0x2e8] sm:$0xf]
  %v120 = vld [vmem:[%s1 + $0x2f0] sm:$0xf]
  %v121 = vld [vmem:[%s1 + $0x2f8] sm:$0xf]
  %v122 = vld [vmem:[%s1 + $0x300] sm:$0xf]
  %v123 = vld [vmem:[%s1 + $0x308] sm:$0xf]
  %v124 = vld [vmem:[%s1 + $0x310] sm:$0xf]
  %v125 = vld [vmem:[%s1 + $0x318] sm:$0xf]
  %v126 = vld [vmem:[%s1 + $0x320] sm:$0xf]
  %v127 = vld [vmem:[%s1 + $0x328] sm:$0xf]
  %v128 = vld [vmem:[%s1 + $0x330] sm:$0xf]
  %v129 = vld [vmem:[%s1 + $0x338] sm:$0xf]
  %v130 = vld [vmem:[%s1 + $0x340] sm:$0xf]
  %v131 = vld [vmem:[%s1 + $0x348] sm:$0xf]
  %v132 = vld [vmem:[%s1 + $0x350] sm:$0xf]
  %v133 = vld [vmem:[%s1 + $0x358] sm:$0xf]
  %v134 = vld [vmem:[%s1 + $0x360] sm:$0xf]
  %v135 = vld [vmem:[%s1 + $0x368] sm:$0xf]
  %v136 = vld [vmem:[%s1 + $0x370] sm:$0xf]
  %v137 = vld [vmem:[%s1 + $0x378] sm:$0xf]
  %v138 = vld [vmem:[%s1 + $0x380] sm:$0xf]
  %v139 = vld [vmem:[%s1 + $0x388] sm:$0xf]
  %v140 = vld [vmem:[%s1 + $0x390] sm:$0xf]
  %v141 = vld [vmem:[%s1 + $0x398] sm:$0xf]
  %v142 = vld [vmem:[%s1 + $0x3a0] sm:$0xf]
  %v143 = vld [vmem:[%s1 + $0x3a8] sm:$0xf]
  %v144 = vld [vmem:[%s1 + $0x3b0] sm:$0xf]
  %v145 = vld [vmem:[%s1 + $0x3b8] sm:$0xf]
  %v146 = vld [vmem:[%s1 + $0x3c0] sm:$0xf]
  %v147 = vld [vmem:[%s1 + $0x3c8] sm:$0xf]
  %v148 = vld [vmem:[%s1 + $0x3d0] sm:$0xf]
  %v149 = vld [vmem:[%s1 + $0x3d8] sm:$0xf]
  %v150 = vld [vmem:[%s1 + $0x3e0] sm:$0xf]
  %v151 = vld [vmem:[%s1 + $0x3e8] sm:$0xf]
  %v152 = vld [vmem:[%s1 + $0x3f0] sm:$0xf]
  %v153 = vld [vmem:[%s1 + $0x3f8] sm:$0xf]
  %v154 = vld [vmem:[%s1 + $0x400] sm:$0xf]
  %v155 = vld [vmem:[%s1 + $0x408] sm:$0xf]
  %v156 = vld [vmem:[%s1 + $0x410] sm:$0xf]
  %v157 = vld [vmem:[%s1 + $0x418] sm:$0xf]
  %v158 = vld [vmem:[%s1 + $0x420] sm:$0xf]
  %v159 = vld [vmem:[%s1 + $0x428] sm:$0xf]
  %v160 = vld [vmem:[%s1 + $0x430] sm:$0xf]
  %v161 = vld [vmem:[%s1 + $0x438] sm:$0xf]
  %v162 = vld [vmem:[%s1 + $0x440] sm:$0xf]
  %v163 = vld [vmem:[%s1 + $0x448] sm:$0xf]
  %v164 = vld [vmem:[%s1 + $0x450] sm:$0xf]
  %v165 = vld [vmem:[%s1 + $0x458] sm:$0xf]
  %v166 = vld [vmem:[%s1 + $0x460] sm:$0xf]
  %v167 = vld [vmem:[%s1 + $0x468] sm:$0xf]
  %v168 = vld [vmem:[%s1 + $0x470] sm:$0xf]
  %v169 = vld [vmem:[%s1 + $0x478] sm:$0xf]
  %v170 = vld [vmem:[%s1 + $0x480] sm:$0xf]
  %v171 = vld [vmem:[%s1 + $0x488] sm:$0xf]
  %v172 = vld [vmem:[%s1 + $0x490] sm:$0xf]
  %v173 = vld [vmem:[%s1 + $0x498] sm:$0xf]
  %v174 = vld [vmem:[%s1 + $0x4a0] sm:$0xf]
  %v175 = vld [vmem:[%s1 + $0x4a8] sm:$0xf]
  %v176 = vld [vmem:[%s1 + $0x4b0] sm:$0xf]
  %v177 = vld [vmem:[%s1 + $0x4b8] sm:$0xf]
  %v178 = vld [vmem:[%s1 + $0x4c0] sm:$0xf]
  %v179 = vld [vmem:[%s1 + $0x4c8] sm:$0xf]
  %v180 = vld [vmem:[%s1 + $0x4d0] sm:$0xf]
  %v181 = vld [vmem:[%s1 + $0x4d8] sm:$0xf]
  %v182 = vld [vmem:[%s1 + $0x4e0] sm:$0xf]
  %v183 = vld [vmem:[%s1 + $0x4e8] sm:$0xf]
  %v184 = vld [vmem:[%s1 + $0x4f0] sm:$0xf]
  %v185 = vld [vmem:[%s1 + $0x4f8] sm:$0xf]
  %v186 = vld [vmem:[%s1 + $0x500] sm:$0xf]
  %v187 = vld [vmem:[%s1 + $0x508] sm:$0xf]
  %v188 = vld [vmem:[%s1 + $0x510] sm:$0xf]
  %v189 = vld [vmem:[%s1 + $0x518] sm:$0xf]
  %v190 = vld [vmem:[%s1 + $0x520] sm:$0xf]
  %v191 = vld [vmem:[%s1 + $0x528] sm:$0xf]
  %v192 = vld [vmem:[%s1 + $0x530] sm:$0xf]
  %v193 = vld [vmem:[%s1 + $0x538] sm:$0xf]
  %v194 = vld [vmem:[%s1 + $0x540] sm:$0xf]
  %v195 = vld [vmem:[%s1 + $0x548] sm:$0xf]
  %v196 = vld [vmem:[%s1 + $0x550] sm:$0xf]
  %v197 = vld [vmem:[%s1 + $0x558] sm:$0xf]
  %v198 = vld [vmem:[%s1 + $0x560] sm:$0xf]
  %v199 = vld [vmem:[%s1 + $0x568] sm:$0xf]
  %v200 = vld [vmem:[%s1 + $0x570] sm:$0xf]
  %v201 = vld [vmem:[%s1 + $0x578] sm:$0xf]
  %v202 = vld [vmem:[%s1 + $0x580] sm:$0xf]
  %v203 = vld [vmem:[%s1 + $0x588] sm:$0xf]
  %v204 = vld [vmem:[%s1 + $0x590] sm:$0xf]
  %v205 = vld [vmem:[%s1 + $0x598] sm:$0xf]
  %v206 = vld [vmem:[%s1 + $0x5a0] sm:$0xf]
  %v207 = vld [vmem:[%s1 + $0x5a8] sm:$0xf]
  %v208 = vld [vmem:[%s1 + $0x5b0] sm:$0xf]
  %v209 = vld [vmem:[%s1 + $0x5b8] sm:$0xf]
  %v210 = vld [vmem:[%s1 + $0x5c0] sm:$0xf]
  %v211 = vld [vmem:[%s1 + $0x5c8] sm:$0xf]
  %v212 = vld [vmem:[%s1 + $0x5d0] sm:$0xf]
  %v213 = vld [vmem:[%s1 + $0x5d8] sm:$0xf]
  %v214 = vld [vmem:[%s1 + $0x5e0] sm:$0xf]
  %v215 = vld [vmem:[%s1 + $0x5e8] sm:$0xf]
  %v216 = vld [vmem:[%s1 + $0x5f0] sm:$0xf]
  %v217 = vld [vmem:[%s1 + $0x5f8] sm:$0xf]
  %v218 = vld [vmem:[%s1 + $0x600] sm:$0xf]
  %v219 = vld [vmem:[%s1 + $0x608] sm:$0xf]
  %v220 = vld [vmem:[%s1 + $0x610] sm:$0xf]
  %v221 = vld [vmem:[%s1 + $0x618] sm:$0xf]
  %v222 = vld [vmem:[%s1 + $0x620] sm:$0xf]
  %v223 = vld [vmem:[%s1 + $0x628] sm:$0xf]
  %v224 = vld [vmem:[%s1 + $0x630] sm:$0xf]
  %v225 = vld [vmem:[%s1 + $0x638] sm:$0xf]
  %v226 = vld [vmem:[%s1 + $0x640] sm:$0xf]
  %v227 = vld [vmem:[%s1 + $0x648] sm:$0xf]
  %v228 = vld [vmem:[%s1 + $0x650] sm:$0xf]
  %v229 = vld [vmem:[%s1 + $0x658] sm:$0xf]
  %v230 = vld [vmem:[%s1 + $0x660] sm:$0xf]
  %v231 = vld [vmem:[%s1 + $0x668] sm:$0xf]
  %v232 = vld [vmem:[%s1 + $0x670] sm:$0xf]
  %v233 = vld [vmem:[%s1 + $0x678] sm:$0xf]
  %v234 = vld [vmem:[%s1 + $0x680] sm:$0xf]
  %v235 = vld [vmem:[%s1 + $0x688] sm:$0xf]
  %v236 = vld [vmem:[%s1 + $0x690] sm:$0xf]
  %v237 = vld [vmem:[%s1 + $0x698] sm:$0xf]
  %v238 = vld [vmem:[%s1 + $0x6a0] sm:$0xf]
  %v239 = vld [vmem:[%s1 + $0x6a8] sm:$0xf]
  %v240 = vld [vmem:[%s1 + $0x6b0] sm:$0xf]
  %v241 = vld [vmem:[%s1 + $0x6b8] sm:$0xf]
  %v242 = vld [vmem:[%s1 + $0x6c0] sm:$0xf]
  %v243 = vld [vmem:[%s1 + $0x6c8] sm:$0xf]
  %v244 = vld [vmem:[%s1 + $0x6d0] sm:$0xf]
  %v245 = vld [vmem:[%s1 + $0x6d8] sm:$0xf]
  %v246 = vld [vmem:[%s1 + $0x6e0] sm:$0xf]
  %v247 = vld [vmem:[%s1 + $0x6e8] sm:$0xf]
  %v248 = vld [vmem:[%s1 + $0x6f0] sm:$0xf]
  %v249 = vld [vmem:[%s1 + $0x6f8] sm:$0xf]
  %v250 = vld [vmem:[%s1 + $0x700] sm:$0xf]
  %v251 = vld [vmem:[%s1 + $0x708] sm:$0xf]
  %v252 = vld [vmem:[%s1 + $0x710] sm:$0xf]
  %v253 = vld [vmem:[%s1 + $0x718] sm:$0xf]
  %v254 = vld [vmem:[%s1 + $0x720] sm:$0xf]
  %v255 = vld [vmem:[%s1 + $0x728] sm:$0xf]
  %v256 = vld [vmem:[%s1 + $0x730] sm:$0xf]
  %v257 = vld [vmem:[%s1 + $0x738] sm:$0xf]
  %v258 = vld [vmem:[%s1 + $0x740] sm:$0xf]
  %v259 = vld [vmem:[%s1 + $0x748] sm:$0xf]
  %v260 = vld [vmem:[%s1 + $0x750] sm:$0xf]
  %v261 = vld [vmem:[%s1 + $0x758] sm:$0xf]
  %v262 = vld [vmem:[%s1 + $0x760] sm:$0xf]
  %v263 = vld [vmem:[%s1 + $0x768] sm:$0xf]
  %v264 = vld [vmem:[%s1 + $0x770] sm:$0xf]
  %v265 = vld [vmem:[%s1 + $0x778] sm:$0xf]
  %v266 = vld [vmem:[%s1 + $0x780] sm:$0xf]
  %v267 = vld [vmem:[%s1 + $0x788] sm:$0xf]
  %v268 = vld [vmem:[%s1 + $0x790] sm:$0xf]
  %v269 = vld [vmem:[%s1 + $0x798] sm:$0xf]
  %v270 = vld [vmem:[%s1 + $0x7a0] sm:$0xf]
  %v271 = vld [vmem:[%s1 + $0x7a8] sm:$0xf]
  %v272 = vld [vmem:[%s1 + $0x7b0] sm:$0xf]
  %v273 = vld [vmem:[%s1 + $0x7b8] sm:$0xf]
  %v274 = vld [vmem:[%s1 + $0x7c0] sm:$0xf]
  %v275 = vld [vmem:[%s1 + $0x7c8] sm:$0xf]
  %v276 = vld [vmem:[%s1 + $0x7d0] sm:$0xf]
  %v277 = vld [vmem:[%s1 + $0x7d8] sm:$0xf]
  %v278 = vld [vmem:[%s1 + $0x7e0] sm:$0xf]
  %v279 = vld [vmem:[%s1 + $0x7e8] sm:$0xf]
  %v280 = vld [vmem:[%s1 + $0x7f0] sm:$0xf]
  %v281 = vld [vmem:[%s1 + $0x7f8] sm:$0xf]
  %v282 = vld [vmem:[%s1 + $0x800] sm:$0xf]
  %v283 = vld [vmem:[%s1 + $0x808] sm:$0xf]
  %v284 = vld [vmem:[%s1 + $0x810] sm:$0xf]
  %v285 = vld [vmem:[%s1 + $0x818] sm:$0xf]
  %v286 = vld [vmem:[%s1 + $0x820] sm:$0xf]
  %v287 = vld [vmem:[%s1 + $0x828] sm:$0xf]
  %v288 = vld [vmem:[%s1 + $0x830] sm:$0xf]
  %v289 = vld [vmem:[%s1 + $0x838] sm:$0xf]
  %v290 = vld [vmem:[%s1 + $0x840] sm:$0xf]
  %v291 = vld [vmem:[%s1 + $0x848] sm:$0xf]
  %v292 = vld [vmem:[%s1 + $0x850] sm:$0xf]
  %v293 = vld [vmem:[%s1 + $0x858] sm:$0xf]
  %v294 = vld [vmem:[%s1 + $0x860] sm:$0xf]
  %v295 = vld [vmem:[%s1 + $0x868] sm:$0xf]
  %v296 = vld [vmem:[%s1 + $0x870] sm:$0xf]
  %v297 = vld [vmem:[%s1 + $0x878] sm:$0xf]
  %v298 = vld [vmem:[%s1 + $0x880] sm:$0xf]
  %v299 = vld [vmem:[%s1 + $0x888] sm:$0xf]
  %v300 = vld [vmem:[%s1 + $0x890] sm:$0xf]
  %v301 = vld [vmem:[%s1 + $0x898] sm:$0xf]
  %v302 = vld [vmem:[%s1 + $0x8a0] sm:$0xf]
  %v303 = vld [vmem:[%s1 + $0x8a8] sm:$0xf]
  %v304 = vld [vmem:[%s1 + $0x8b0] sm:$0xf]
  %v305 = vld [vmem:[%s1 + $0x8b8] sm:$0xf]
  %v306 = vld [vmem:[%s1 + $0x8c0] sm:$0xf]
  %v307 = vld [vmem:[%s1 + $0x8c8] sm:$0xf]
  %v308 = vld [vmem:[%s1 + $0x8d0] sm:$0xf]
  %v309 = vld [vmem:[%s1 + $0x8d8] sm:$0xf]
  %v310 = vld [vmem:[%s1 + $0x8e0] sm:$0xf]
  %v311 = vld [vmem:[%s1 + $0x8e8] sm:$0xf]
  %v312 = vld [vmem:[%s1 + $0x8f0] sm:$0xf]
  %v313 = vld [vmem:[%s1 + $0x8f8] sm:$0xf]
  %v314 = vld [vmem:[%s1 + $0x900] sm:$0xf]
  %v315 = vld [vmem:[%s1 + $0x908] sm:$0xf]
  %v316 = vld [vmem:[%s1 + $0x910] sm:$0xf]
  %v317 = vld [vmem:[%s1 + $0x918] sm:$0xf]
  %v318 = vld [vmem:[%s1 + $0x920] sm:$0xf]
  %v319 = vld [vmem:[%s1 + $0x928] sm:$0xf]
  %v320 = vld [vmem:[%s1 + $0x930] sm:$0xf]
  %v321 = vld [vmem:[%s1 + $0x938] sm:$0xf]
  %v322 = vld [vmem:[%s1 + $0x940] sm:$0xf]
  %v323 = vld [vmem:[%s1 + $0x948] sm:$0xf]
  %v324 = vld [vmem:[%s1 + $0x950] sm:$0xf]
  %v325 = vld [vmem:[%s1 + $0x958] sm:$0xf]
  %v326 = vld [vmem:[%s1 + $0x960] sm:$0xf]
  %v327 = vld [vmem:[%s1 + $0x968] sm:$0xf]
  %v328 = vld [vmem:[%s1 + $0x970] sm:$0xf]
  %v329 = vld [vmem:[%s1 + $0x978] sm:$0xf]
  %v330 = vld [vmem:[%s1 + $0x980] sm:$0xf]
  %v331 = vld [vmem:[%s1 + $0x988] sm:$0xf]
  %v332 = vld [vmem:[%s1 + $0x990] sm:$0xf]
  %v333 = vld [vmem:[%s1 + $0x998] sm:$0xf]
  %v334 = vld [vmem:[%s1 + $0x9a0] sm:$0xf]
  %v335 = vld [vmem:[%s1 + $0x9a8] sm:$0xf]
  %v336 = vld [vmem:[%s1 + $0x9b0] sm:$0xf]
  %v337 = vld [vmem:[%s1 + $0x9b8] sm:$0xf]
  %v338 = vld [vmem:[%s1 + $0x9c0] sm:$0xf]
  %v339 = vld [vmem:[%s1 + $0x9c8] sm:$0xf]
  %v340 = vld [vmem:[%s1 + $0x9d0] sm:$0xf]
  %v341 = vld [vmem:[%s1 + $0x9d8] sm:$0xf]
  %v342 = vld [vmem:[%s1 + $0x9e0] sm:$0xf]
  %v343 = vld [vmem:[%s1 + $0x9e8] sm:$0xf]
  %v344 = vld [vmem:[%s1 + $0x9f0] sm:$0xf]
  %v345 = vld [vmem:[%s1 + $0x9f8] sm:$0xf]
  %v346 = vld [vmem:[%s1 + $0xa00] sm:$0xf]
  %v347 = vld [vmem:[%s1 + $0xa08] sm:$0xf]
  %v348 = vld [vmem:[%s1 + $0xa10] sm:$0xf]
  %v349 = vld [vmem:[%s1 + $0xa18] sm:$0xf]
  %v350 = vld [vmem:[%s1 + $0xa20] sm:$0xf]
  %v351 = vld [vmem:[%s1 + $0xa28] sm:$0xf]
  %v352 = vld [vmem:[%s1 + $0xa30] sm:$0xf]
  %v353 = vld [vmem:[%s1 + $0xa38] sm:$0xf]
  %v354 = vld [vmem:[%s1 + $0xa40] sm:$0xf]
  %v355 = vld [vmem:[%s1 + $0xa48] sm:$0xf]
  %v356 = vld [vmem:[%s1 + $0xa50] sm:$0xf]
  %v357 = vld [vmem:[%s1 + $0xa58] sm:$0xf]
  %v358 = vld [vmem:[%s1 + $0xa60] sm:$0xf]
  %v359 = vld [vmem:[%s1 + $0xa68] sm:$0xf]
  %v360 = vld [vmem:[%s1 + $0xa70] sm:$0xf]
  %v361 = vld [vmem:[%s1 + $0xa78] sm:$0xf]
  %v373 = vunpack.c.l.b16 %v15
  %v374 = vunpack.c.h.b16 %v15
  %v375 = vunpack.c.l.b16 %v16
  %v376 = vunpack.c.h.b16 %v16
  %v377 = vunpack.c.l.b16 %v17
  %v378 = vunpack.c.h.b16 %v17
  %v379 = vunpack.c.l.b16 %v18
  %v380 = vunpack.c.h.b16 %v18
  %v381 = vunpack.c.l.b16 %v19
  %v382 = vunpack.c.h.b16 %v19
  %v383 = vunpack.c.l.b16 %v20
  %v384 = vunpack.c.h.b16 %v20
  %v385 = vunpack.c.l.b16 %v21
  %v386 = vunpack.c.h.b16 %v21
  %v387 = vunpack.c.l.b16 %v22
  %v388 = vunpack.c.h.b16 %v22
  %v389 = vunpack.c.l.b16 %v23
  %v390 = vunpack.c.h.b16 %v23
  %v391 = vunpack.c.l.b16 %v24
  %v392 = vunpack.c.h.b16 %v24
  %v393 = vunpack.c.l.b16 %v25
  %v394 = vpack.c.b16 %v373, %v373
  %v395 = vpack.c.b16 %v374, %v374
  %v396 = vpack.c.b16 %v375, %v375
  %v397 = vpack.c.b16 %v376, %v376
  %v398 = vpack.c.b16 %v377, %v377
  %v399 = vpack.c.b16 %v378, %v378
  %v400 = vpack.c.b16 %v379, %v379
  %v401 = vpack.c.b16 %v380, %v380
  %v402 = vpack.c.b16 %v381, %v381
  %v403 = vpack.c.b16 %v382, %v382
  %v404 = vpack.c.b16 %v383, %v383
  %v405 = vpack.c.b16 %v384, %v384
  %v406 = vpack.c.b16 %v385, %v385
  %v407 = vpack.c.b16 %v386, %v386
  %v408 = vpack.c.b16 %v387, %v387
  %v409 = vpack.c.b16 %v388, %v388
  %v410 = vpack.c.b16 %v389, %v389
  %v411 = vpack.c.b16 %v390, %v390
  %v412 = vpack.c.b16 %v391, %v391
  %v413 = vpack.c.b16 %v392, %v392
  %v414 = vpack.c.b16 %v393, %v393
  %v772 = vunpack.c.l.b16 %v26
  %v773 = vunpack.c.l.b16 %v27
  %v774 = vunpack.c.l.b16 %v28
  %v775 = vunpack.c.l.b16 %v29
  %v776 = vunpack.c.l.b16 %v30
  %v777 = vunpack.c.l.b16 %v31
  %v778 = vunpack.c.l.b16 %v32
  %v779 = vunpack.c.l.b16 %v33
  %v780 = vunpack.c.l.b16 %v34
  %v781 = vunpack.c.l.b16 %v35
  %v782 = vunpack.c.l.b16 %v36
  %v783 = vunpack.c.l.b16 %v37
  %v784 = vunpack.c.l.b16 %v38
  %v785 = vunpack.c.l.b16 %v39
  %v786 = vunpack.c.l.b16 %v40
  %v787 = vunpack.c.l.b16 %v41
  %v788 = vunpack.c.l.b16 %v42
  %v789 = vunpack.c.l.b16 %v43
  %v790 = vunpack.c.l.b16 %v44
  %v791 = vunpack.c.l.b16 %v45
  %v792 = vunpack.c.l.b16 %v46
  %v793 = vunpack.c.l.b16 %v47
  %v794 = vunpack.c.l.b16 %v48
  %v795 = vunpack.c.l.b16 %v49
  %v796 = vunpack.c.l.b16 %v50
  %v797 = vunpack.c.l.b16 %v51
  %v798 = vunpack.c.l.b16 %v52
  %v799 = vunpack.c.l.b16 %v53
  %v800 = vunpack.c.l.b16 %v54
  %v801 = vunpack.c.l.b16 %v55
  %v802 = vunpack.c.l.b16 %v56
  %v803 = vunpack.c.l.b16 %v57
  %v804 = vunpack.c.l.b16 %v58
  %v805 = vunpack.c.l.b16 %v59
  %v806 = vunpack.c.l.b16 %v60
  %v807 = vunpack.c.l.b16 %v61
  %v808 = vunpack.c.l.b16 %v62
  %v809 = vunpack.c.l.b16 %v63
  %v810 = vunpack.c.l.b16 %v64
  %v811 = vunpack.c.l.b16 %v65
  %v812 = vunpack.c.l.b16 %v66
  %v813 = vunpack.c.l.b16 %v67
  %v814 = vunpack.c.l.b16 %v68
  %v815 = vunpack.c.l.b16 %v69
  %v816 = vunpack.c.l.b16 %v70
  %v817 = vunpack.c.l.b16 %v71
  %v818 = vunpack.c.l.b16 %v72
  %v819 = vunpack.c.l.b16 %v73
  %v820 = vunpack.c.l.b16 %v74
  %v821 = vunpack.c.l.b16 %v75
  %v822 = vunpack.c.l.b16 %v76
  %v823 = vunpack.c.l.b16 %v77
  %v824 = vunpack.c.l.b16 %v78
  %v825 = vunpack.c.l.b16 %v79
  %v826 = vunpack.c.l.b16 %v80
  %v827 = vunpack.c.l.b16 %v81
  %v828 = vunpack.c.l.b16 %v82
  %v829 = vunpack.c.l.b16 %v83
  %v830 = vunpack.c.l.b16 %v84
  %v831 = vunpack.c.l.b16 %v85
  %v832 = vunpack.c.l.b16 %v86
  %v833 = vunpack.c.l.b16 %v87
  %v834 = vunpack.c.l.b16 %v88
  %v835 = vunpack.c.l.b16 %v89
  %v836 = vunpack.c.l.b16 %v90
  %v837 = vunpack.c.l.b16 %v91
  %v838 = vunpack.c.l.b16 %v92
  %v839 = vunpack.c.l.b16 %v93
  %v840 = vunpack.c.l.b16 %v94
  %v841 = vunpack.c.l.b16 %v95
  %v842 = vunpack.c.l.b16 %v96
  %v843 = vunpack.c.l.b16 %v97
  %v844 = vunpack.c.l.b16 %v98
  %v845 = vunpack.c.l.b16 %v99
  %v846 = vunpack.c.l.b16 %v100
  %v847 = vunpack.c.l.b16 %v101
  %v848 = vunpack.c.l.b16 %v102
  %v849 = vunpack.c.l.b16 %v103
  %v850 = vunpack.c.l.b16 %v104
  %v851 = vunpack.c.l.b16 %v105
  %v852 = vunpack.c.l.b16 %v106
  %v853 = vunpack.c.l.b16 %v107
  %v854 = vunpack.c.l.b16 %v108
  %v855 = vunpack.c.l.b16 %v109
  %v856 = vunpack.c.l.b16 %v110
  %v857 = vunpack.c.l.b16 %v111
  %v858 = vunpack.c.l.b16 %v112
  %v859 = vunpack.c.l.b16 %v113
  %v860 = vunpack.c.l.b16 %v114
  %v861 = vunpack.c.l.b16 %v115
  %v862 = vunpack.c.l.b16 %v116
  %v863 = vunpack.c.l.b16 %v117
  %v864 = vunpack.c.l.b16 %v118
  %v865 = vunpack.c.l.b16 %v119
  %v866 = vunpack.c.l.b16 %v120
  %v867 = vunpack.c.l.b16 %v121
  %v868 = vunpack.c.l.b16 %v122
  %v869 = vunpack.c.l.b16 %v123
  %v870 = vunpack.c.l.b16 %v124
  %v871 = vunpack.c.l.b16 %v125
  %v872 = vunpack.c.l.b16 %v126
  %v873 = vunpack.c.l.b16 %v127
  %v874 = vunpack.c.l.b16 %v128
  %v875 = vunpack.c.l.b16 %v129
  %v876 = vunpack.c.l.b16 %v130
  %v877 = vunpack.c.l.b16 %v131
  %v878 = vunpack.c.l.b16 %v132
  %v879 = vunpack.c.l.b16 %v133
  %v880 = vunpack.c.l.b16 %v134
  %v881 = vunpack.c.l.b16 %v135
  %v882 = vunpack.c.l.b16 %v136
  %v883 = vunpack.c.l.b16 %v137
  %v884 = vunpack.c.l.b16 %v138
  %v885 = vunpack.c.l.b16 %v139
  %v886 = vunpack.c.l.b16 %v140
  %v887 = vunpack.c.l.b16 %v141
  %v888 = vunpack.c.l.b16 %v142
  %v889 = vunpack.c.l.b16 %v143
  %v890 = vunpack.c.l.b16 %v144
  %v891 = vunpack.c.l.b16 %v145
  %v892 = vunpack.c.l.b16 %v146
  %v893 = vunpack.c.l.b16 %v147
  %v894 = vunpack.c.l.b16 %v148
  %v895 = vunpack.c.l.b16 %v149
  %v896 = vunpack.c.l.b16 %v150
  %v897 = vunpack.c.l.b16 %v151
  %v898 = vunpack.c.l.b16 %v152
  %v899 = vunpack.c.l.b16 %v153
  %v900 = vunpack.c.l.b16 %v154
  %v901 = vunpack.c.l.b16 %v155
  %v902 = vunpack.c.l.b16 %v156
  %v903 = vunpack.c.l.b16 %v157
  %v904 = vunpack.c.l.b16 %v158
  %v905 = vunpack.c.l.b16 %v159
  %v906 = vunpack.c.l.b16 %v160
  %v907 = vunpack.c.l.b16 %v161
  %v908 = vunpack.c.l.b16 %v162
  %v909 = vunpack.c.l.b16 %v163
  %v910 = vunpack.c.l.b16 %v164
  %v911 = vunpack.c.l.b16 %v165
  %v912 = vunpack.c.l.b16 %v166
  %v913 = vunpack.c.l.b16 %v167
  %v914 = vunpack.c.l.b16 %v168
  %v915 = vunpack.c.l.b16 %v169
  %v916 = vunpack.c.l.b16 %v170
  %v917 = vunpack.c.l.b16 %v171
  %v918 = vunpack.c.l.b16 %v172
  %v919 = vunpack.c.l.b16 %v173
  %v920 = vunpack.c.l.b16 %v174
  %v921 = vunpack.c.l.b16 %v175
  %v922 = vunpack.c.l.b16 %v176
  %v923 = vunpack.c.l.b16 %v177
  %v924 = vunpack.c.l.b16 %v178
  %v925 = vunpack.c.l.b16 %v179
  %v926 = vunpack.c.l.b16 %v180
  %v927 = vunpack.c.l.b16 %v181
  %v928 = vunpack.c.l.b16 %v182
  %v929 = vunpack.c.l.b16 %v183
  %v930 = vunpack.c.l.b16 %v184
  %v931 = vunpack.c.l.b16 %v185
  %v932 = vunpack.c.l.b16 %v186
  %v933 = vunpack.c.l.b16 %v187
  %v934 = vunpack.c.l.b16 %v188
  %v935 = vunpack.c.l.b16 %v189
  %v936 = vunpack.c.l.b16 %v190
  %v937 = vunpack.c.l.b16 %v191
  %v938 = vunpack.c.l.b16 %v192
  %v939 = vunpack.c.l.b16 %v193
  %v940 = vunpack.c.l.b16 %v194
  %v941 = vunpack.c.l.b16 %v195
  %v942 = vunpack.c.l.b16 %v196
  %v943 = vunpack.c.l.b16 %v197
  %v944 = vunpack.c.l.b16 %v198
  %v945 = vunpack.c.l.b16 %v199
  %v946 = vunpack.c.l.b16 %v200
  %v947 = vunpack.c.l.b16 %v201
  %v948 = vunpack.c.l.b16 %v202
  %v949 = vunpack.c.l.b16 %v203
  %v950 = vunpack.c.l.b16 %v204
  %v951 = vunpack.c.l.b16 %v205
  %v952 = vunpack.c.l.b16 %v206
  %v953 = vunpack.c.l.b16 %v207
  %v954 = vunpack.c.l.b16 %v208
  %v955 = vunpack.c.l.b16 %v209
  %v956 = vunpack.c.l.b16 %v210
  %v957 = vunpack.c.l.b16 %v211
  %v958 = vunpack.c.l.b16 %v212
  %v959 = vunpack.c.l.b16 %v213
  %v960 = vunpack.c.l.b16 %v214
  %v961 = vunpack.c.l.b16 %v215
  %v962 = vunpack.c.l.b16 %v216
  %v963 = vunpack.c.l.b16 %v217
  %v964 = vunpack.c.l.b16 %v218
  %v965 = vunpack.c.l.b16 %v219
  %v966 = vunpack.c.l.b16 %v220
  %v967 = vunpack.c.l.b16 %v221
  %v968 = vunpack.c.l.b16 %v222
  %v969 = vunpack.c.l.b16 %v223
  %v970 = vunpack.c.l.b16 %v224
  %v971 = vunpack.c.l.b16 %v225
  %v972 = vunpack.c.l.b16 %v226
  %v973 = vunpack.c.l.b16 %v227
  %v974 = vunpack.c.l.b16 %v228
  %v975 = vunpack.c.l.b16 %v229
  %v976 = vunpack.c.l.b16 %v230
  %v977 = vunpack.c.l.b16 %v231
  %v978 = vunpack.c.l.b16 %v232
  %v979 = vunpack.c.l.b16 %v233
  %v980 = vunpack.c.l.b16 %v234
  %v981 = vunpack.c.l.b16 %v235
  %v982 = vunpack.c.l.b16 %v236
  %v983 = vunpack.c.l.b16 %v237
  %v984 = vunpack.c.l.b16 %v238
  %v985 = vunpack.c.l.b16 %v239
  %v986 = vunpack.c.l.b16 %v240
  %v987 = vunpack.c.l.b16 %v241
  %v988 = vunpack.c.l.b16 %v242
  %v989 = vunpack.c.l.b16 %v243
  %v990 = vunpack.c.l.b16 %v244
  %v991 = vunpack.c.l.b16 %v245
  %v992 = vunpack.c.l.b16 %v246
  %v993 = vunpack.c.l.b16 %v247
  %v994 = vunpack.c.l.b16 %v248
  %v995 = vunpack.c.l.b16 %v249
  %v996 = vunpack.c.l.b16 %v250
  %v997 = vunpack.c.l.b16 %v251
  %v998 = vunpack.c.l.b16 %v252
  %v999 = vunpack.c.l.b16 %v253
  %v1000 = vunpack.c.l.b16 %v254
  %v1001 = vunpack.c.l.b16 %v255
  %v1002 = vunpack.c.l.b16 %v256
  %v1003 = vunpack.c.l.b16 %v257
  %v1004 = vunpack.c.l.b16 %v258
  %v1005 = vunpack.c.l.b16 %v259
  %v1006 = vunpack.c.l.b16 %v260
  %v1007 = vunpack.c.l.b16 %v261
  %v1008 = vunpack.c.l.b16 %v262
  %v1009 = vunpack.c.l.b16 %v263
  %v1010 = vunpack.c.l.b16 %v264
  %v1011 = vunpack.c.l.b16 %v265
  %v1012 = vunpack.c.l.b16 %v266
  %v1013 = vunpack.c.l.b16 %v267
  %v1014 = vunpack.c.l.b16 %v268
  %v1015 = vunpack.c.l.b16 %v269
  %v1016 = vunpack.c.l.b16 %v270
  %v1017 = vunpack.c.l.b16 %v271
  %v1018 = vunpack.c.l.b16 %v272
  %v1019 = vunpack.c.l.b16 %v273
  %v1020 = vunpack.c.l.b16 %v274
  %v1021 = vunpack.c.l.b16 %v275
  %v1022 = vunpack.c.l.b16 %v276
  %v1023 = vunpack.c.l.b16 %v277
  %v1024 = vunpack.c.l.b16 %v278
  %v1025 = vunpack.c.l.b16 %v279
  %v1026 = vunpack.c.l.b16 %v280
  %v1027 = vunpack.c.l.b16 %v281
  %v1028 = vunpack.c.l.b16 %v282
  %v1029 = vunpack.c.l.b16 %v283
  %v1030 = vunpack.c.l.b16 %v284
  %v1031 = vunpack.c.l.b16 %v285
  %v1032 = vunpack.c.l.b16 %v286
  %v1033 = vunpack.c.l.b16 %v287
  %v1034 = vunpack.c.l.b16 %v288
  %v1035 = vunpack.c.l.b16 %v289
  %v1036 = vunpack.c.l.b16 %v290
  %v1037 = vunpack.c.l.b16 %v291
  %v1038 = vunpack.c.l.b16 %v292
  %v1039 = vunpack.c.l.b16 %v293
  %v1040 = vunpack.c.l.b16 %v294
  %v1041 = vunpack.c.l.b16 %v295
  %v1042 = vunpack.c.l.b16 %v296
  %v1043 = vunpack.c.l.b16 %v297
  %v1044 = vunpack.c.l.b16 %v298
  %v1045 = vunpack.c.l.b16 %v299
  %v1046 = vunpack.c.l.b16 %v300
  %v1047 = vunpack.c.l.b16 %v301
  %v1048 = vunpack.c.l.b16 %v302
  %v1049 = vunpack.c.l.b16 %v303
  %v1050 = vunpack.c.l.b16 %v304
  %v1051 = vunpack.c.l.b16 %v305
  %v1052 = vunpack.c.l.b16 %v306
  %v1053 = vunpack.c.l.b16 %v307
  %v1054 = vunpack.c.l.b16 %v308
  %v1055 = vunpack.c.l.b16 %v309
  %v1056 = vunpack.c.l.b16 %v310
  %v1057 = vunpack.c.l.b16 %v311
  %v1058 = vunpack.c.l.b16 %v312
  %v1059 = vunpack.c.l.b16 %v313
  %v1060 = vunpack.c.l.b16 %v314
  %v1061 = vunpack.c.l.b16 %v315
  %v1062 = vunpack.c.l.b16 %v316
  %v1063 = vunpack.c.l.b16 %v317
  %v1064 = vunpack.c.l.b16 %v318
  %v1065 = vunpack.c.l.b16 %v319
  %v1066 = vunpack.c.l.b16 %v320
  %v1067 = vunpack.c.l.b16 %v321
  %v1068 = vunpack.c.l.b16 %v322
  %v1069 = vunpack.c.l.b16 %v323
  %v1070 = vunpack.c.l.b16 %v324
  %v1071 = vunpack.c.l.b16 %v325
  %v1072 = vunpack.c.l.b16 %v326
  %v1073 = vunpack.c.l.b16 %v327
  %v1074 = vunpack.c.l.b16 %v328
  %v1075 = vunpack.c.l.b16 %v329
  %v1076 = vunpack.c.l.b16 %v330
  %v1077 = vunpack.c.l.b16 %v331
  %v1078 = vunpack.c.l.b16 %v332
  %v1079 = vunpack.c.l.b16 %v333
  %v1080 = vunpack.c.l.b16 %v334
  %v1081 = vunpack.c.l.b16 %v335
  %v1082 = vunpack.c.l.b16 %v336
  %v1083 = vunpack.c.l.b16 %v337
  %v1084 = vunpack.c.l.b16 %v338
  %v1085 = vunpack.c.l.b16 %v339
  %v1086 = vunpack.c.l.b16 %v340
  %v1087 = vunpack.c.l.b16 %v341
  %v1088 = vunpack.c.l.b16 %v342
  %v1089 = vunpack.c.l.b16 %v343
  %v1090 = vunpack.c.l.b16 %v344
  %v1091 = vunpack.c.l.b16 %v345
  %v1092 = vunpack.c.l.b16 %v346
  %v1093 = vunpack.c.l.b16 %v347
  %v1094 = vunpack.c.l.b16 %v348
  %v1095 = vunpack.c.l.b16 %v349
  %v1096 = vunpack.c.l.b16 %v350
  %v1097 = vunpack.c.l.b16 %v351
  %v1098 = vunpack.c.l.b16 %v352
  %v1099 = vunpack.c.l.b16 %v353
  %v1100 = vunpack.c.l.b16 %v354
  %v1101 = vunpack.c.l.b16 %v355
  %v1102 = vunpack.c.l.b16 %v356
  %v1103 = vunpack.c.l.b16 %v357
  %v1104 = vunpack.c.l.b16 %v358
  %v1105 = vunpack.c.l.b16 %v359
  %v1106 = vunpack.c.l.b16 %v360
  %v1107 = vunpack.c.l.b16 %v361
  %v1108 = vpack.c.b16 %v773, %v772
  %v1109 = vpack.c.b16 %v775, %v774
  %v1110 = vpack.c.b16 %v777, %v776
  %v1111 = vpack.c.b16 %v779, %v778
  %v1112 = vpack.c.b16 %v781, %v780
  %v1113 = vpack.c.b16 %v783, %v782
  %v1114 = vpack.c.b16 %v785, %v784
  %v1115 = vpack.c.b16 %v787, %v786
  %v1116 = vpack.c.b16 %v789, %v788
  %v1117 = vpack.c.b16 %v791, %v790
  %v1118 = vpack.c.b16 %v793, %v792
  %v1119 = vpack.c.b16 %v795, %v794
  %v1120 = vpack.c.b16 %v797, %v796
  %v1121 = vpack.c.b16 %v799, %v798
  %v1122 = vpack.c.b16 %v801, %v800
  %v1123 = vpack.c.b16 %v803, %v802
  %v1124 = vpack.c.b16 %v805, %v804
  %v1125 = vpack.c.b16 %v807, %v806
  %v1126 = vpack.c.b16 %v809, %v808
  %v1127 = vpack.c.b16 %v811, %v810
  %v1128 = vpack.c.b16 %v813, %v812
  %v1129 = vpack.c.b16 %v815, %v814
  %v1130 = vpack.c.b16 %v817, %v816
  %v1131 = vpack.c.b16 %v819, %v818
  %v1132 = vpack.c.b16 %v821, %v820
  %v1133 = vpack.c.b16 %v823, %v822
  %v1134 = vpack.c.b16 %v825, %v824
  %v1135 = vpack.c.b16 %v827, %v826
  %v1136 = vpack.c.b16 %v829, %v828
  %v1137 = vpack.c.b16 %v831, %v830
  %v1138 = vpack.c.b16 %v833, %v832
  %v1139 = vpack.c.b16 %v835, %v834
  %v1140 = vpack.c.b16 %v837, %v836
  %v1141 = vpack.c.b16 %v839, %v838
  %v1142 = vpack.c.b16 %v841, %v840
  %v1143 = vpack.c.b16 %v843, %v842
  %v1144 = vpack.c.b16 %v845, %v844
  %v1145 = vpack.c.b16 %v847, %v846
  %v1146 = vpack.c.b16 %v849, %v848
  %v1147 = vpack.c.b16 %v851, %v850
  %v1148 = vpack.c.b16 %v853, %v852
  %v1149 = vpack.c.b16 %v855, %v854
  %v1150 = vpack.c.b16 %v857, %v856
  %v1151 = vpack.c.b16 %v859, %v858
  %v1152 = vpack.c.b16 %v861, %v860
  %v1153 = vpack.c.b16 %v863, %v862
  %v1154 = vpack.c.b16 %v865, %v864
  %v1155 = vpack.c.b16 %v867, %v866
  %v1156 = vpack.c.b16 %v869, %v868
  %v1157 = vpack.c.b16 %v871, %v870
  %v1158 = vpack.c.b16 %v873, %v872
  %v1159 = vpack.c.b16 %v875, %v874
  %v1160 = vpack.c.b16 %v877, %v876
  %v1161 = vpack.c.b16 %v879, %v878
  %v1162 = vpack.c.b16 %v881, %v880
  %v1163 = vpack.c.b16 %v883, %v882
  %v1164 = vpack.c.b16 %v885, %v884
  %v1165 = vpack.c.b16 %v887, %v886
  %v1166 = vpack.c.b16 %v889, %v888
  %v1167 = vpack.c.b16 %v891, %v890
  %v1168 = vpack.c.b16 %v893, %v892
  %v1169 = vpack.c.b16 %v895, %v894
  %v1170 = vpack.c.b16 %v897, %v896
  %v1171 = vpack.c.b16 %v899, %v898
  %v1172 = vpack.c.b16 %v901, %v900
  %v1173 = vpack.c.b16 %v903, %v902
  %v1174 = vpack.c.b16 %v905, %v904
  %v1175 = vpack.c.b16 %v907, %v906
  %v1176 = vpack.c.b16 %v909, %v908
  %v1177 = vpack.c.b16 %v911, %v910
  %v1178 = vpack.c.b16 %v913, %v912
  %v1179 = vpack.c.b16 %v915, %v914
  %v1180 = vpack.c.b16 %v917, %v916
  %v1181 = vpack.c.b16 %v919, %v918
  %v1182 = vpack.c.b16 %v921, %v920
  %v1183 = vpack.c.b16 %v923, %v922
  %v1184 = vpack.c.b16 %v925, %v924
  %v1185 = vpack.c.b16 %v927, %v926
  %v1186 = vpack.c.b16 %v929, %v928
  %v1187 = vpack.c.b16 %v931, %v930
  %v1188 = vpack.c.b16 %v933, %v932
  %v1189 = vpack.c.b16 %v935, %v934
  %v1190 = vpack.c.b16 %v937, %v936
  %v1191 = vpack.c.b16 %v939, %v938
  %v1192 = vpack.c.b16 %v941, %v940
  %v1193 = vpack.c.b16 %v943, %v942
  %v1194 = vpack.c.b16 %v945, %v944
  %v1195 = vpack.c.b16 %v947, %v946
  %v1196 = vpack.c.b16 %v949, %v948
  %v1197 = vpack.c.b16 %v951, %v950
  %v1198 = vpack.c.b16 %v953, %v952
  %v1199 = vpack.c.b16 %v955, %v954
  %v1200 = vpack.c.b16 %v957, %v956
  %v1201 = vpack.c.b16 %v959, %v958
  %v1202 = vpack.c.b16 %v961, %v960
  %v1203 = vpack.c.b16 %v963, %v962
  %v1204 = vpack.c.b16 %v965, %v964
  %v1205 = vpack.c.b16 %v967, %v966
  %v1206 = vpack.c.b16 %v969, %v968
  %v1207 = vpack.c.b16 %v971, %v970
  %v1208 = vpack.c.b16 %v973, %v972
  %v1209 = vpack.c.b16 %v975, %v974
  %v1210 = vpack.c.b16 %v977, %v976
  %v1211 = vpack.c.b16 %v979, %v978
  %v1212 = vpack.c.b16 %v981, %v980
  %v1213 = vpack.c.b16 %v983, %v982
  %v1214 = vpack.c.b16 %v985, %v984
  %v1215 = vpack.c.b16 %v987, %v986
  %v1216 = vpack.c.b16 %v989, %v988
  %v1217 = vpack.c.b16 %v991, %v990
  %v1218 = vpack.c.b16 %v993, %v992
  %v1219 = vpack.c.b16 %v995, %v994
  %v1220 = vpack.c.b16 %v997, %v996
  %v1221 = vpack.c.b16 %v999, %v998
  %v1222 = vpack.c.b16 %v1001, %v1000
  %v1223 = vpack.c.b16 %v1003, %v1002
  %v1224 = vpack.c.b16 %v1005, %v1004
  %v1225 = vpack.c.b16 %v1007, %v1006
  %v1226 = vpack.c.b16 %v1009, %v1008
  %v1227 = vpack.c.b16 %v1011, %v1010
  %v1228 = vpack.c.b16 %v1013, %v1012
  %v1229 = vpack.c.b16 %v1015, %v1014
  %v1230 = vpack.c.b16 %v1017, %v1016
  %v1231 = vpack.c.b16 %v1019, %v1018
  %v1232 = vpack.c.b16 %v1021, %v1020
  %v1233 = vpack.c.b16 %v1023, %v1022
  %v1234 = vpack.c.b16 %v1025, %v1024
  %v1235 = vpack.c.b16 %v1027, %v1026
  %v1236 = vpack.c.b16 %v1029, %v1028
  %v1237 = vpack.c.b16 %v1031, %v1030
  %v1238 = vpack.c.b16 %v1033, %v1032
  %v1239 = vpack.c.b16 %v1035, %v1034
  %v1240 = vpack.c.b16 %v1037, %v1036
  %v1241 = vpack.c.b16 %v1039, %v1038
  %v1242 = vpack.c.b16 %v1041, %v1040
  %v1243 = vpack.c.b16 %v1043, %v1042
  %v1244 = vpack.c.b16 %v1045, %v1044
  %v1245 = vpack.c.b16 %v1047, %v1046
  %v1246 = vpack.c.b16 %v1049, %v1048
  %v1247 = vpack.c.b16 %v1051, %v1050
  %v1248 = vpack.c.b16 %v1053, %v1052
  %v1249 = vpack.c.b16 %v1055, %v1054
  %v1250 = vpack.c.b16 %v1057, %v1056
  %v1251 = vpack.c.b16 %v1059, %v1058
  %v1252 = vpack.c.b16 %v1061, %v1060
  %v1253 = vpack.c.b16 %v1063, %v1062
  %v1254 = vpack.c.b16 %v1065, %v1064
  %v1255 = vpack.c.b16 %v1067, %v1066
  %v1256 = vpack.c.b16 %v1069, %v1068
  %v1257 = vpack.c.b16 %v1071, %v1070
  %v1258 = vpack.c.b16 %v1073, %v1072
  %v1259 = vpack.c.b16 %v1075, %v1074
  %v1260 = vpack.c.b16 %v1077, %v1076
  %v1261 = vpack.c.b16 %v1079, %v1078
  %v1262 = vpack.c.b16 %v1081, %v1080
  %v1263 = vpack.c.b16 %v1083, %v1082
  %v1264 = vpack.c.b16 %v1085, %v1084
  %v1265 = vpack.c.b16 %v1087, %v1086
  %v1266 = vpack.c.b16 %v1089, %v1088
  %v1267 = vpack.c.b16 %v1091, %v1090
  %v1268 = vpack.c.b16 %v1093, %v1092
  %v1269 = vpack.c.b16 %v1095, %v1094
  %v1270 = vpack.c.b16 %v1097, %v1096
  %v1271 = vpack.c.b16 %v1099, %v1098
  %v1272 = vpack.c.b16 %v1101, %v1100
  %v1273 = vpack.c.b16 %v1103, %v1102
  %v1274 = vpack.c.b16 %v1105, %v1104
  %v1275 = vpack.c.b16 %v1107, %v1106
  %1444 = vmatprep.subr.bf16.mxu0 0
  %1445 = vmatpush1.bf16.msra.mxu0 %v1115
  %1446 = vmatprep.subr.bf16.mxu0 0
  %1447 = vmatpush1.bf16.msra.mxu0 %v1114
  %1448 = vmatprep.subr.bf16.mxu0 0
  %1449 = vmatpush1.bf16.msra.mxu0 %v1113
  %1450 = vmatprep.subr.bf16.mxu0 0
  %1451 = vmatpush1.bf16.msra.mxu0 %v1112
  %1452 = vmatprep.subr.bf16.mxu0 0
  %1453 = vmatpush1.bf16.msra.mxu0 %v1111
  %1454 = vmatprep.subr.bf16.mxu0 0
  %1455 = vmatpush1.bf16.msra.mxu0 %v1110
  %1456 = vmatprep.subr.bf16.mxu0 0
  %1457 = vmatpush1.bf16.msra.mxu0 %v1109
  %1458 = vmatprep.subr.bf16.mxu0 0
  %1459 = vmatpush1.bf16.msra.mxu0 %v1108
  %1460 = vmatprep.subr.bf16.mxu0 0
  %1461 = vmatpush2.bf16.msra.mxu0 %v1123
  %1462 = vmatprep.subr.bf16.mxu0 0
  %1463 = vmatpush2.bf16.msra.mxu0 %v1122
  %1464 = vmatprep.subr.bf16.mxu0 0
  %1465 = vmatpush2.bf16.msra.mxu0 %v1121
  %1466 = vmatprep.subr.bf16.mxu0 0
  %1467 = vmatpush2.bf16.msra.mxu0 %v1120
  %1468 = vmatprep.subr.bf16.mxu0 0
  %1469 = vmatpush2.bf16.msra.mxu0 %v1119
  %1470 = vmatprep.subr.bf16.mxu0 0
  %1471 = vmatpush2.bf16.msra.mxu0 %v1118
  %1472 = vmatprep.subr.bf16.mxu0 0
  %1473 = vmatpush2.bf16.msra.mxu0 %v1117
  %1474 = vmatprep.subr.bf16.mxu0 0
  %1475 = vmatpush2.bf16.msra.mxu0 %v1116
  %1476 = vmatprep.mubr.bf16.mxu0 %v395
  %1477 = vmatmul.mubr.bf16.gmra.mxu0 %v394
  %v1478 = vpop.f32.mrf.mxu0
  %v1479 = vadd.f32 0.0, %v1478
  %v1480 = vpop.f32.mrf.mxu0
  %v1481 = vpop.f32.mrf.mxu0
  %v1482 = vpop.f32.mrf.mxu0
  %1483 = vdwg.mxu0
  %1484 = vmatprep.subr.bf16.mxu0 0
  %1485 = vmatpush1.bf16.msra.mxu0 %v1131
  %1486 = vmatprep.subr.bf16.mxu0 0
  %1487 = vmatpush1.bf16.msra.mxu0 %v1130
  %1488 = vmatprep.subr.bf16.mxu0 0
  %1489 = vmatpush1.bf16.msra.mxu0 %v1129
  %1490 = vmatprep.subr.bf16.mxu0 0
  %1491 = vmatpush1.bf16.msra.mxu0 %v1128
  %1492 = vmatprep.subr.bf16.mxu0 0
  %1493 = vmatpush1.bf16.msra.mxu0 %v1127
  %1494 = vmatprep.subr.bf16.mxu0 0
  %1495 = vmatpush1.bf16.msra.mxu0 %v1126
  %1496 = vmatprep.subr.bf16.mxu0 0
  %1497 = vmatpush1.bf16.msra.mxu0 %v1125
  %1498 = vmatprep.subr.bf16.mxu0 0
  %1499 = vmatpush1.bf16.msra.mxu0 %v1124
  %1500 = vmatprep.subr.bf16.mxu0 0
  %1501 = vmatpush2.bf16.msra.mxu0 %v1139
  %1502 = vmatprep.subr.bf16.mxu0 0
  %1503 = vmatpush2.bf16.msra.mxu0 %v1138
  %1504 = vmatprep.subr.bf16.mxu0 0
  %1505 = vmatpush2.bf16.msra.mxu0 %v1137
  %1506 = vmatprep.subr.bf16.mxu0 0
  %1507 = vmatpush2.bf16.msra.mxu0 %v1136
  %1508 = vmatprep.subr.bf16.mxu0 0
  %1509 = vmatpush2.bf16.msra.mxu0 %v1135
  %1510 = vmatprep.subr.bf16.mxu0 0
  %1511 = vmatpush2.bf16.msra.mxu0 %v1134
  %1512 = vmatprep.subr.bf16.mxu0 0
  %1513 = vmatpush2.bf16.msra.mxu0 %v1133
  %1514 = vmatprep.subr.bf16.mxu0 0
  %1515 = vmatpush2.bf16.msra.mxu0 %v1132
  %1516 = vmatprep.mubr.bf16.mxu0 %v397
  %1517 = vmatmul.mubr.bf16.gmra.mxu0 %v396
  %v1518 = vpop.f32.mrf.mxu0
  %v1519 = vadd.f32 %v1479, %v1518
  %v1520 = vpop.f32.mrf.mxu0
  %v1521 = vpop.f32.mrf.mxu0
  %v1522 = vpop.f32.mrf.mxu0
  %1523 = vdwg.mxu0
  %1524 = vmatprep.subr.bf16.mxu0 0
  %1525 = vmatpush1.bf16.msra.mxu0 %v1147
  %1526 = vmatprep.subr.bf16.mxu0 0
  %1527 = vmatpush1.bf16.msra.mxu0 %v1146
  %1528 = vmatprep.subr.bf16.mxu0 0
  %1529 = vmatpush1.bf16.msra.mxu0 %v1145
  %1530 = vmatprep.subr.bf16.mxu0 0
  %1531 = vmatpush1.bf16.msra.mxu0 %v1144
  %1532 = vmatprep.subr.bf16.mxu0 0
  %1533 = vmatpush1.bf16.msra.mxu0 %v1143
  %1534 = vmatprep.subr.bf16.mxu0 0
  %1535 = vmatpush1.bf16.msra.mxu0 %v1142
  %1536 = vmatprep.subr.bf16.mxu0 0
  %1537 = vmatpush1.bf16.msra.mxu0 %v1141
  %1538 = vmatprep.subr.bf16.mxu0 0
  %1539 = vmatpush1.bf16.msra.mxu0 %v1140
  %1540 = vmatprep.subr.bf16.mxu0 0
  %1541 = vmatpush2.bf16.msra.mxu0 %v1155
  %1542 = vmatprep.subr.bf16.mxu0 0
  %1543 = vmatpush2.bf16.msra.mxu0 %v1154
  %1544 = vmatprep.subr.bf16.mxu0 0
  %1545 = vmatpush2.bf16.msra.mxu0 %v1153
  %1546 = vmatprep.subr.bf16.mxu0 0
  %1547 = vmatpush2.bf16.msra.mxu0 %v1152
  %1548 = vmatprep.subr.bf16.mxu0 0
  %1549 = vmatpush2.bf16.msra.mxu0 %v1151
  %1550 = vmatprep.subr.bf16.mxu0 0
  %1551 = vmatpush2.bf16.msra.mxu0 %v1150
  %1552 = vmatprep.subr.bf16.mxu0 0
  %1553 = vmatpush2.bf16.msra.mxu0 %v1149
  %1554 = vmatprep.subr.bf16.mxu0 0
  %1555 = vmatpush2.bf16.msra.mxu0 %v1148
  %1556 = vmatprep.mubr.bf16.mxu0 %v399
  %1557 = vmatmul.mubr.bf16.gmra.mxu0 %v398
  %v1558 = vpop.f32.mrf.mxu0
  %v1559 = vadd.f32 %v1519, %v1558
  %v1560 = vpop.f32.mrf.mxu0
  %v1561 = vpop.f32.mrf.mxu0
  %v1562 = vpop.f32.mrf.mxu0
  %1563 = vdwg.mxu0
  %1564 = vmatprep.subr.bf16.mxu0 0
  %1565 = vmatpush1.bf16.msra.mxu0 %v1163
  %1566 = vmatprep.subr.bf16.mxu0 0
  %1567 = vmatpush1.bf16.msra.mxu0 %v1162
  %1568 = vmatprep.subr.bf16.mxu0 0
  %1569 = vmatpush1.bf16.msra.mxu0 %v1161
  %1570 = vmatprep.subr.bf16.mxu0 0
  %1571 = vmatpush1.bf16.msra.mxu0 %v1160
  %1572 = vmatprep.subr.bf16.mxu0 0
  %1573 = vmatpush1.bf16.msra.mxu0 %v1159
  %1574 = vmatprep.subr.bf16.mxu0 0
  %1575 = vmatpush1.bf16.msra.mxu0 %v1158
  %1576 = vmatprep.subr.bf16.mxu0 0
  %1577 = vmatpush1.bf16.msra.mxu0 %v1157
  %1578 = vmatprep.subr.bf16.mxu0 0
  %1579 = vmatpush1.bf16.msra.mxu0 %v1156
  %1580 = vmatprep.subr.bf16.mxu0 0
  %1581 = vmatpush2.bf16.msra.mxu0 %v1171
  %1582 = vmatprep.subr.bf16.mxu0 0
  %1583 = vmatpush2.bf16.msra.mxu0 %v1170
  %1584 = vmatprep.subr.bf16.mxu0 0
  %1585 = vmatpush2.bf16.msra.mxu0 %v1169
  %1586 = vmatprep.subr.bf16.mxu0 0
  %1587 = vmatpush2.bf16.msra.mxu0 %v1168
  %1588 = vmatprep.subr.bf16.mxu0 0
  %1589 = vmatpush2.bf16.msra.mxu0 %v1167
  %1590 = vmatprep.subr.bf16.mxu0 0
  %1591 = vmatpush2.bf16.msra.mxu0 %v1166
  %1592 = vmatprep.subr.bf16.mxu0 0
  %1593 = vmatpush2.bf16.msra.mxu0 %v1165
  %1594 = vmatprep.subr.bf16.mxu0 0
  %1595 = vmatpush2.bf16.msra.mxu0 %v1164
  %1596 = vmatprep.mubr.bf16.mxu0 %v401
  %1597 = vmatmul.mubr.bf16.gmra.mxu0 %v400
  %v1598 = vpop.f32.mrf.mxu0
  %v1599 = vadd.f32 %v1559, %v1598
  %v1600 = vpop.f32.mrf.mxu0
  %v1601 = vpop.f32.mrf.mxu0
  %v1602 = vpop.f32.mrf.mxu0
  %1603 = vdwg.mxu0
  %1604 = vmatprep.subr.bf16.mxu0 0
  %1605 = vmatpush1.bf16.msra.mxu0 %v1179
  %1606 = vmatprep.subr.bf16.mxu0 0
  %1607 = vmatpush1.bf16.msra.mxu0 %v1178
  %1608 = vmatprep.subr.bf16.mxu0 0
  %1609 = vmatpush1.bf16.msra.mxu0 %v1177
  %1610 = vmatprep.subr.bf16.mxu0 0
  %1611 = vmatpush1.bf16.msra.mxu0 %v1176
  %1612 = vmatprep.subr.bf16.mxu0 0
  %1613 = vmatpush1.bf16.msra.mxu0 %v1175
  %1614 = vmatprep.subr.bf16.mxu0 0
  %1615 = vmatpush1.bf16.msra.mxu0 %v1174
  %1616 = vmatprep.subr.bf16.mxu0 0
  %1617 = vmatpush1.bf16.msra.mxu0 %v1173
  %1618 = vmatprep.subr.bf16.mxu0 0
  %1619 = vmatpush1.bf16.msra.mxu0 %v1172
  %1620 = vmatprep.subr.bf16.mxu0 0
  %1621 = vmatpush2.bf16.msra.mxu0 %v1187
  %1622 = vmatprep.subr.bf16.mxu0 0
  %1623 = vmatpush2.bf16.msra.mxu0 %v1186
  %1624 = vmatprep.subr.bf16.mxu0 0
  %1625 = vmatpush2.bf16.msra.mxu0 %v1185
  %1626 = vmatprep.subr.bf16.mxu0 0
  %1627 = vmatpush2.bf16.msra.mxu0 %v1184
  %1628 = vmatprep.subr.bf16.mxu0 0
  %1629 = vmatpush2.bf16.msra.mxu0 %v1183
  %1630 = vmatprep.subr.bf16.mxu0 0
  %1631 = vmatpush2.bf16.msra.mxu0 %v1182
  %1632 = vmatprep.subr.bf16.mxu0 0
  %1633 = vmatpush2.bf16.msra.mxu0 %v1181
  %1634 = vmatprep.subr.bf16.mxu0 0
  %1635 = vmatpush2.bf16.msra.mxu0 %v1180
  %1636 = vmatprep.mubr.bf16.mxu0 %v403
  %1637 = vmatmul.mubr.bf16.gmra.mxu0 %v402
  %v1638 = vpop.f32.mrf.mxu0
  %v1639 = vadd.f32 %v1599, %v1638
  %v1640 = vpop.f32.mrf.mxu0
  %v1641 = vpop.f32.mrf.mxu0
  %v1642 = vpop.f32.mrf.mxu0
  %1643 = vdwg.mxu0
  %1644 = vmatprep.subr.bf16.mxu0 0
  %1645 = vmatpush1.bf16.msra.mxu0 %v1195
  %1646 = vmatprep.subr.bf16.mxu0 0
  %1647 = vmatpush1.bf16.msra.mxu0 %v1194
  %1648 = vmatprep.subr.bf16.mxu0 0
  %1649 = vmatpush1.bf16.msra.mxu0 %v1193
  %1650 = vmatprep.subr.bf16.mxu0 0
  %1651 = vmatpush1.bf16.msra.mxu0 %v1192
  %1652 = vmatprep.subr.bf16.mxu0 0
  %1653 = vmatpush1.bf16.msra.mxu0 %v1191
  %1654 = vmatprep.subr.bf16.mxu0 0
  %1655 = vmatpush1.bf16.msra.mxu0 %v1190
  %1656 = vmatprep.subr.bf16.mxu0 0
  %1657 = vmatpush1.bf16.msra.mxu0 %v1189
  %1658 = vmatprep.subr.bf16.mxu0 0
  %1659 = vmatpush1.bf16.msra.mxu0 %v1188
  %1660 = vmatprep.subr.bf16.mxu0 0
  %1661 = vmatpush2.bf16.msra.mxu0 %v1203
  %1662 = vmatprep.subr.bf16.mxu0 0
  %1663 = vmatpush2.bf16.msra.mxu0 %v1202
  %1664 = vmatprep.subr.bf16.mxu0 0
  %1665 = vmatpush2.bf16.msra.mxu0 %v1201
  %1666 = vmatprep.subr.bf16.mxu0 0
  %1667 = vmatpush2.bf16.msra.mxu0 %v1200
  %1668 = vmatprep.subr.bf16.mxu0 0
  %1669 = vmatpush2.bf16.msra.mxu0 %v1199
  %1670 = vmatprep.subr.bf16.mxu0 0
  %1671 = vmatpush2.bf16.msra.mxu0 %v1198
  %1672 = vmatprep.subr.bf16.mxu0 0
  %1673 = vmatpush2.bf16.msra.mxu0 %v1197
  %1674 = vmatprep.subr.bf16.mxu0 0
  %1675 = vmatpush2.bf16.msra.mxu0 %v1196
  %1676 = vmatprep.mubr.bf16.mxu0 %v405
  %1677 = vmatmul.mubr.bf16.gmra.mxu0 %v404
  %v1678 = vpop.f32.mrf.mxu0
  %v1679 = vadd.f32 %v1639, %v1678
  %v1680 = vpop.f32.mrf.mxu0
  %v1681 = vpop.f32.mrf.mxu0
  %v1682 = vpop.f32.mrf.mxu0
  %1683 = vdwg.mxu0
  %1684 = vmatprep.subr.bf16.mxu0 0
  %1685 = vmatpush1.bf16.msra.mxu0 %v1211
  %1686 = vmatprep.subr.bf16.mxu0 0
  %1687 = vmatpush1.bf16.msra.mxu0 %v1210
  %1688 = vmatprep.subr.bf16.mxu0 0
  %1689 = vmatpush1.bf16.msra.mxu0 %v1209
  %1690 = vmatprep.subr.bf16.mxu0 0
  %1691 = vmatpush1.bf16.msra.mxu0 %v1208
  %1692 = vmatprep.subr.bf16.mxu0 0
  %1693 = vmatpush1.bf16.msra.mxu0 %v1207
  %1694 = vmatprep.subr.bf16.mxu0 0
  %1695 = vmatpush1.bf16.msra.mxu0 %v1206
  %1696 = vmatprep.subr.bf16.mxu0 0
  %1697 = vmatpush1.bf16.msra.mxu0 %v1205
  %1698 = vmatprep.subr.bf16.mxu0 0
  %1699 = vmatpush1.bf16.msra.mxu0 %v1204
  %1700 = vmatprep.subr.bf16.mxu0 0
  %1701 = vmatpush2.bf16.msra.mxu0 %v1219
  %1702 = vmatprep.subr.bf16.mxu0 0
  %1703 = vmatpush2.bf16.msra.mxu0 %v1218
  %1704 = vmatprep.subr.bf16.mxu0 0
  %1705 = vmatpush2.bf16.msra.mxu0 %v1217
  %1706 = vmatprep.subr.bf16.mxu0 0
  %1707 = vmatpush2.bf16.msra.mxu0 %v1216
  %1708 = vmatprep.subr.bf16.mxu0 0
  %1709 = vmatpush2.bf16.msra.mxu0 %v1215
  %1710 = vmatprep.subr.bf16.mxu0 0
  %1711 = vmatpush2.bf16.msra.mxu0 %v1214
  %1712 = vmatprep.subr.bf16.mxu0 0
  %1713 = vmatpush2.bf16.msra.mxu0 %v1213
  %1714 = vmatprep.subr.bf16.mxu0 0
  %1715 = vmatpush2.bf16.msra.mxu0 %v1212
  %1716 = vmatprep.mubr.bf16.mxu0 %v407
  %1717 = vmatmul.mubr.bf16.gmra.mxu0 %v406
  %v1718 = vpop.f32.mrf.mxu0
  %v1719 = vadd.f32 %v1679, %v1718
  %v1720 = vpop.f32.mrf.mxu0
  %v1721 = vpop.f32.mrf.mxu0
  %v1722 = vpop.f32.mrf.mxu0
  %1723 = vdwg.mxu0
  %1724 = vmatprep.subr.bf16.mxu0 0
  %1725 = vmatpush1.bf16.msra.mxu0 %v1227
  %1726 = vmatprep.subr.bf16.mxu0 0
  %1727 = vmatpush1.bf16.msra.mxu0 %v1226
  %1728 = vmatprep.subr.bf16.mxu0 0
  %1729 = vmatpush1.bf16.msra.mxu0 %v1225
  %1730 = vmatprep.subr.bf16.mxu0 0
  %1731 = vmatpush1.bf16.msra.mxu0 %v1224
  %1732 = vmatprep.subr.bf16.mxu0 0
  %1733 = vmatpush1.bf16.msra.mxu0 %v1223
  %1734 = vmatprep.subr.bf16.mxu0 0
  %1735 = vmatpush1.bf16.msra.mxu0 %v1222
  %1736 = vmatprep.subr.bf16.mxu0 0
  %1737 = vmatpush1.bf16.msra.mxu0 %v1221
  %1738 = vmatprep.subr.bf16.mxu0 0
  %1739 = vmatpush1.bf16.msra.mxu0 %v1220
  %1740 = vmatprep.subr.bf16.mxu0 0
  %1741 = vmatpush2.bf16.msra.mxu0 %v1235
  %1742 = vmatprep.subr.bf16.mxu0 0
  %1743 = vmatpush2.bf16.msra.mxu0 %v1234
  %1744 = vmatprep.subr.bf16.mxu0 0
  %1745 = vmatpush2.bf16.msra.mxu0 %v1233
  %1746 = vmatprep.subr.bf16.mxu0 0
  %1747 = vmatpush2.bf16.msra.mxu0 %v1232
  %1748 = vmatprep.subr.bf16.mxu0 0
  %1749 = vmatpush2.bf16.msra.mxu0 %v1231
  %1750 = vmatprep.subr.bf16.mxu0 0
  %1751 = vmatpush2.bf16.msra.mxu0 %v1230
  %1752 = vmatprep.subr.bf16.mxu0 0
  %1753 = vmatpush2.bf16.msra.mxu0 %v1229
  %1754 = vmatprep.subr.bf16.mxu0 0
  %1755 = vmatpush2.bf16.msra.mxu0 %v1228
  %1756 = vmatprep.mubr.bf16.mxu0 %v409
  %1757 = vmatmul.mubr.bf16.gmra.mxu0 %v408
  %v1758 = vpop.f32.mrf.mxu0
  %v1759 = vadd.f32 %v1719, %v1758
  %v1760 = vpop.f32.mrf.mxu0
  %v1761 = vpop.f32.mrf.mxu0
  %v1762 = vpop.f32.mrf.mxu0
  %1763 = vdwg.mxu0
  %1764 = vmatprep.subr.bf16.mxu0 0
  %1765 = vmatpush1.bf16.msra.mxu0 %v1243
  %1766 = vmatprep.subr.bf16.mxu0 0
  %1767 = vmatpush1.bf16.msra.mxu0 %v1242
  %1768 = vmatprep.subr.bf16.mxu0 0
  %1769 = vmatpush1.bf16.msra.mxu0 %v1241
  %1770 = vmatprep.subr.bf16.mxu0 0
  %1771 = vmatpush1.bf16.msra.mxu0 %v1240
  %1772 = vmatprep.subr.bf16.mxu0 0
  %1773 = vmatpush1.bf16.msra.mxu0 %v1239
  %1774 = vmatprep.subr.bf16.mxu0 0
  %1775 = vmatpush1.bf16.msra.mxu0 %v1238
  %1776 = vmatprep.subr.bf16.mxu0 0
  %1777 = vmatpush1.bf16.msra.mxu0 %v1237
  %1778 = vmatprep.subr.bf16.mxu0 0
  %1779 = vmatpush1.bf16.msra.mxu0 %v1236
  %1780 = vmatprep.subr.bf16.mxu0 0
  %1781 = vmatpush2.bf16.msra.mxu0 %v1251
  %1782 = vmatprep.subr.bf16.mxu0 0
  %1783 = vmatpush2.bf16.msra.mxu0 %v1250
  %1784 = vmatprep.subr.bf16.mxu0 0
  %1785 = vmatpush2.bf16.msra.mxu0 %v1249
  %1786 = vmatprep.subr.bf16.mxu0 0
  %1787 = vmatpush2.bf16.msra.mxu0 %v1248
  %1788 = vmatprep.subr.bf16.mxu0 0
  %1789 = vmatpush2.bf16.msra.mxu0 %v1247
  %1790 = vmatprep.subr.bf16.mxu0 0
  %1791 = vmatpush2.bf16.msra.mxu0 %v1246
  %1792 = vmatprep.subr.bf16.mxu0 0
  %1793 = vmatpush2.bf16.msra.mxu0 %v1245
  %1794 = vmatprep.subr.bf16.mxu0 0
  %1795 = vmatpush2.bf16.msra.mxu0 %v1244
  %1796 = vmatprep.mubr.bf16.mxu0 %v411
  %1797 = vmatmul.mubr.bf16.gmra.mxu0 %v410
  %v1798 = vpop.f32.mrf.mxu0
  %v1799 = vadd.f32 %v1759, %v1798
  %v1800 = vpop.f32.mrf.mxu0
  %v1801 = vpop.f32.mrf.mxu0
  %v1802 = vpop.f32.mrf.mxu0
  %1803 = vdwg.mxu0
  %1804 = vmatprep.subr.bf16.mxu0 0
  %1805 = vmatpush1.bf16.msra.mxu0 %v1259
  %1806 = vmatprep.subr.bf16.mxu0 0
  %1807 = vmatpush1.bf16.msra.mxu0 %v1258
  %1808 = vmatprep.subr.bf16.mxu0 0
  %1809 = vmatpush1.bf16.msra.mxu0 %v1257
  %1810 = vmatprep.subr.bf16.mxu0 0
  %1811 = vmatpush1.bf16.msra.mxu0 %v1256
  %1812 = vmatprep.subr.bf16.mxu0 0
  %1813 = vmatpush1.bf16.msra.mxu0 %v1255
  %1814 = vmatprep.subr.bf16.mxu0 0
  %1815 = vmatpush1.bf16.msra.mxu0 %v1254
  %1816 = vmatprep.subr.bf16.mxu0 0
  %1817 = vmatpush1.bf16.msra.mxu0 %v1253
  %1818 = vmatprep.subr.bf16.mxu0 0
  %1819 = vmatpush1.bf16.msra.mxu0 %v1252
  %1820 = vmatprep.subr.bf16.mxu0 0
  %1821 = vmatpush2.bf16.msra.mxu0 %v1267
  %1822 = vmatprep.subr.bf16.mxu0 0
  %1823 = vmatpush2.bf16.msra.mxu0 %v1266
  %1824 = vmatprep.subr.bf16.mxu0 0
  %1825 = vmatpush2.bf16.msra.mxu0 %v1265
  %1826 = vmatprep.subr.bf16.mxu0 0
  %1827 = vmatpush2.bf16.msra.mxu0 %v1264
  %1828 = vmatprep.subr.bf16.mxu0 0
  %1829 = vmatpush2.bf16.msra.mxu0 %v1263
  %1830 = vmatprep.subr.bf16.mxu0 0
  %1831 = vmatpush2.bf16.msra.mxu0 %v1262
  %1832 = vmatprep.subr.bf16.mxu0 0
  %1833 = vmatpush2.bf16.msra.mxu0 %v1261
  %1834 = vmatprep.subr.bf16.mxu0 0
  %1835 = vmatpush2.bf16.msra.mxu0 %v1260
  %1836 = vmatprep.mubr.bf16.mxu0 %v413
  %1837 = vmatmul.mubr.bf16.gmra.mxu0 %v412
  %v1838 = vpop.f32.mrf.mxu0
  %v1839 = vadd.f32 %v1799, %v1838
  %v1840 = vpop.f32.mrf.mxu0
  %v1841 = vpop.f32.mrf.mxu0
  %v1842 = vpop.f32.mrf.mxu0
  %1843 = vdwg.mxu0
  %1844 = vmatprep.subr.bf16.mxu0 0
  %1845 = vmatpush1.bf16.msra.mxu0 %v1275
  %1846 = vmatprep.subr.bf16.mxu0 0
  %1847 = vmatpush1.bf16.msra.mxu0 %v1274
  %1848 = vmatprep.subr.bf16.mxu0 0
  %1849 = vmatpush1.bf16.msra.mxu0 %v1273
  %1850 = vmatprep.subr.bf16.mxu0 0
  %1851 = vmatpush1.bf16.msra.mxu0 %v1272
  %1852 = vmatprep.subr.bf16.mxu0 0
  %1853 = vmatpush1.bf16.msra.mxu0 %v1271
  %1854 = vmatprep.subr.bf16.mxu0 0
  %1855 = vmatpush1.bf16.msra.mxu0 %v1270
  %1856 = vmatprep.subr.bf16.mxu0 0
  %1857 = vmatpush1.bf16.msra.mxu0 %v1269
  %1858 = vmatprep.subr.bf16.mxu0 0
  %1859 = vmatpush1.bf16.msra.mxu0 %v1268
  %1860 = vmatprep.subr.bf16.mxu0 0
  %1861 = vmatpush2.bf16.msra.mxu0 0
  %1862 = vmatprep.subr.bf16.mxu0 0
  %1863 = vmatpush2.bf16.msra.mxu0 0
  %1864 = vmatprep.subr.bf16.mxu0 0
  %1865 = vmatpush2.bf16.msra.mxu0 0
  %1866 = vmatprep.subr.bf16.mxu0 0
  %1867 = vmatpush2.bf16.msra.mxu0 0
  %1868 = vmatprep.subr.bf16.mxu0 0
  %1869 = vmatpush2.bf16.msra.mxu0 0
  %1870 = vmatprep.subr.bf16.mxu0 0
  %1871 = vmatpush2.bf16.msra.mxu0 0
  %1872 = vmatprep.subr.bf16.mxu0 0
  %1873 = vmatpush2.bf16.msra.mxu0 0
  %1874 = vmatprep.subr.bf16.mxu0 0
  %1875 = vmatpush2.bf16.msra.mxu0 0
  %1876 = vmatprep.mubr.bf16.mxu0 0
  %1877 = vmatmul.mubr.bf16.gmra.mxu0 %v414
  %v1878 = vpop.f32.mrf.mxu0
  %v1879 = vadd.f32 %v1839, %v1878
  %v1880 = vpop.f32.mrf.mxu0
  %v1881 = vpop.f32.mrf.mxu0
  %v1882 = vpop.f32.mrf.mxu0
  %1883 = vdwg.mxu0
  %s1884 = scalar_lea.vmem %s0, 84
  %v1885 = vld [vmem:[%s1884] sm:$0xff]
  %v1886 = vld [vmem:[%s1884 + $0x8] sm:$0xff]
  %v1887 = vld [vmem:[%s1884 + $0x10] sm:$0xff]
  %v1888 = vld [vmem:[%s1884 + $0x18] sm:$0xff]
  %v1889 = vld [vmem:[%s1884 + $0x20] sm:$0xff]
  %v1890 = vld [vmem:[%s1884 + $0x28] sm:$0xff]
  %v1891 = vld [vmem:[%s1884 + $0x30] sm:$0xff]
  %v1892 = vld [vmem:[%s1884 + $0x38] sm:$0xff]
  %v1893 = vld [vmem:[%s1884 + $0x40] sm:$0xff]
  %v1894 = vld [vmem:[%s1884 + $0x48] sm:$0xff]
  %v1895 = vld [vmem:[%s1884 + $0x50] sm:$0xf]
  %v1907 = vunpack.c.l.b16 %v1885
  %v1908 = vunpack.c.h.b16 %v1885
  %v1909 = vunpack.c.l.b16 %v1886
  %v1910 = vunpack.c.h.b16 %v1886
  %v1911 = vunpack.c.l.b16 %v1887
  %v1912 = vunpack.c.h.b16 %v1887
  %v1913 = vunpack.c.l.b16 %v1888
  %v1914 = vunpack.c.h.b16 %v1888
  %v1915 = vunpack.c.l.b16 %v1889
  %v1916 = vunpack.c.h.b16 %v1889
  %v1917 = vunpack.c.l.b16 %v1890
  %v1918 = vunpack.c.h.b16 %v1890
  %v1919 = vunpack.c.l.b16 %v1891
  %v1920 = vunpack.c.h.b16 %v1891
  %v1921 = vunpack.c.l.b16 %v1892
  %v1922 = vunpack.c.h.b16 %v1892
  %v1923 = vunpack.c.l.b16 %v1893
  %v1924 = vunpack.c.h.b16 %v1893
  %v1925 = vunpack.c.l.b16 %v1894
  %v1926 = vunpack.c.h.b16 %v1894
  %v1927 = vunpack.c.l.b16 %v1895
  %v1928 = vpack.c.b16 %v1907, %v1907
  %v1929 = vpack.c.b16 %v1908, %v1908
  %v1930 = vpack.c.b16 %v1909, %v1909
  %v1931 = vpack.c.b16 %v1910, %v1910
  %v1932 = vpack.c.b16 %v1911, %v1911
  %v1933 = vpack.c.b16 %v1912, %v1912
  %v1934 = vpack.c.b16 %v1913, %v1913
  %v1935 = vpack.c.b16 %v1914, %v1914
  %v1936 = vpack.c.b16 %v1915, %v1915
  %v1937 = vpack.c.b16 %v1916, %v1916
  %v1938 = vpack.c.b16 %v1917, %v1917
  %v1939 = vpack.c.b16 %v1918, %v1918
  %v1940 = vpack.c.b16 %v1919, %v1919
  %v1941 = vpack.c.b16 %v1920, %v1920
  %v1942 = vpack.c.b16 %v1921, %v1921
  %v1943 = vpack.c.b16 %v1922, %v1922
  %v1944 = vpack.c.b16 %v1923, %v1923
  %v1945 = vpack.c.b16 %v1924, %v1924
  %v1946 = vpack.c.b16 %v1925, %v1925
  %v1947 = vpack.c.b16 %v1926, %v1926
  %v1948 = vpack.c.b16 %v1927, %v1927
  %1970 = vrot.lane.b32.xlu0 %v1108, 96
  %v1971 = vpop.permute.xlu0 %1970
  %1972 = vrot.lane.b32.xlu0 %v1109, 96
  %v1973 = vpop.permute.xlu0 %1972
  %1974 = vrot.lane.b32.xlu0 %v1110, 96
  %v1975 = vpop.permute.xlu0 %1974
  %1976 = vrot.lane.b32.xlu0 %v1111, 96
  %v1977 = vpop.permute.xlu0 %1976
  %1978 = vrot.lane.b32.xlu0 %v1112, 96
  %v1979 = vpop.permute.xlu0 %1978
  %1980 = vrot.lane.b32.xlu0 %v1113, 96
  %v1981 = vpop.permute.xlu0 %1980
  %1982 = vrot.lane.b32.xlu0 %v1114, 96
  %v1983 = vpop.permute.xlu0 %1982
  %1984 = vrot.lane.b32.xlu0 %v1115, 96
  %v1985 = vpop.permute.xlu0 %1984
  %1986 = vrot.lane.b32.xlu0 %v1116, 96
  %v1987 = vpop.permute.xlu0 %1986
  %1988 = vrot.lane.b32.xlu0 %v1117, 96
  %v1989 = vpop.permute.xlu0 %1988
  %1990 = vrot.lane.b32.xlu0 %v1118, 96
  %v1991 = vpop.permute.xlu0 %1990
  %1992 = vrot.lane.b32.xlu0 %v1119, 96
  %v1993 = vpop.permute.xlu0 %1992
  %1994 = vrot.lane.b32.xlu0 %v1120, 96
  %v1995 = vpop.permute.xlu0 %1994
  %1996 = vrot.lane.b32.xlu0 %v1121, 96
  %v1997 = vpop.permute.xlu0 %1996
  %1998 = vrot.lane.b32.xlu0 %v1122, 96
  %v1999 = vpop.permute.xlu0 %1998
  %2000 = vrot.lane.b32.xlu0 %v1123, 96
  %v2001 = vpop.permute.xlu0 %2000
  %2002 = vrot.lane.b32.xlu0 %v1124, 96
  %v2003 = vpop.permute.xlu0 %2002
  %2004 = vrot.lane.b32.xlu0 %v1125, 96
  %v2005 = vpop.permute.xlu0 %2004
  %2006 = vrot.lane.b32.xlu0 %v1126, 96
  %v2007 = vpop.permute.xlu0 %2006
  %2008 = vrot.lane.b32.xlu0 %v1127, 96
  %v2009 = vpop.permute.xlu0 %2008
  %2010 = vrot.lane.b32.xlu0 %v1128, 96
  %v2011 = vpop.permute.xlu0 %2010
  %2012 = vrot.lane.b32.xlu0 %v1129, 96
  %v2013 = vpop.permute.xlu0 %2012
  %2014 = vrot.lane.b32.xlu0 %v1130, 96
  %v2015 = vpop.permute.xlu0 %2014
  %2016 = vrot.lane.b32.xlu0 %v1131, 96
  %v2017 = vpop.permute.xlu0 %2016
  %2018 = vrot.lane.b32.xlu0 %v1132, 96
  %v2019 = vpop.permute.xlu0 %2018
  %2020 = vrot.lane.b32.xlu0 %v1133, 96
  %v2021 = vpop.permute.xlu0 %2020
  %2022 = vrot.lane.b32.xlu0 %v1134, 96
  %v2023 = vpop.permute.xlu0 %2022
  %2024 = vrot.lane.b32.xlu0 %v1135, 96
  %v2025 = vpop.permute.xlu0 %2024
  %2026 = vrot.lane.b32.xlu0 %v1136, 96
  %v2027 = vpop.permute.xlu0 %2026
  %2028 = vrot.lane.b32.xlu0 %v1137, 96
  %v2029 = vpop.permute.xlu0 %2028
  %2030 = vrot.lane.b32.xlu0 %v1138, 96
  %v2031 = vpop.permute.xlu0 %2030
  %2032 = vrot.lane.b32.xlu0 %v1139, 96
  %v2033 = vpop.permute.xlu0 %2032
  %2034 = vrot.lane.b32.xlu0 %v1140, 96
  %v2035 = vpop.permute.xlu0 %2034
  %2036 = vrot.lane.b32.xlu0 %v1141, 96
  %v2037 = vpop.permute.xlu0 %2036
  %2038 = vrot.lane.b32.xlu0 %v1142, 96
  %v2039 = vpop.permute.xlu0 %2038
  %2040 = vrot.lane.b32.xlu0 %v1143, 96
  %v2041 = vpop.permute.xlu0 %2040
  %2042 = vrot.lane.b32.xlu0 %v1144, 96
  %v2043 = vpop.permute.xlu0 %2042
  %2044 = vrot.lane.b32.xlu0 %v1145, 96
  %v2045 = vpop.permute.xlu0 %2044
  %2046 = vrot.lane.b32.xlu0 %v1146, 96
  %v2047 = vpop.permute.xlu0 %2046
  %2048 = vrot.lane.b32.xlu0 %v1147, 96
  %v2049 = vpop.permute.xlu0 %2048
  %2050 = vrot.lane.b32.xlu0 %v1148, 96
  %v2051 = vpop.permute.xlu0 %2050
  %2052 = vrot.lane.b32.xlu0 %v1149, 96
  %v2053 = vpop.permute.xlu0 %2052
  %2054 = vrot.lane.b32.xlu0 %v1150, 96
  %v2055 = vpop.permute.xlu0 %2054
  %2056 = vrot.lane.b32.xlu0 %v1151, 96
  %v2057 = vpop.permute.xlu0 %2056
  %2058 = vrot.lane.b32.xlu0 %v1152, 96
  %v2059 = vpop.permute.xlu0 %2058
  %2060 = vrot.lane.b32.xlu0 %v1153, 96
  %v2061 = vpop.permute.xlu0 %2060
  %2062 = vrot.lane.b32.xlu0 %v1154, 96
  %v2063 = vpop.permute.xlu0 %2062
  %2064 = vrot.lane.b32.xlu0 %v1155, 96
  %v2065 = vpop.permute.xlu0 %2064
  %2066 = vrot.lane.b32.xlu0 %v1156, 96
  %v2067 = vpop.permute.xlu0 %2066
  %2068 = vrot.lane.b32.xlu0 %v1157, 96
  %v2069 = vpop.permute.xlu0 %2068
  %2070 = vrot.lane.b32.xlu0 %v1158, 96
  %v2071 = vpop.permute.xlu0 %2070
  %2072 = vrot.lane.b32.xlu0 %v1159, 96
  %v2073 = vpop.permute.xlu0 %2072
  %2074 = vrot.lane.b32.xlu0 %v1160, 96
  %v2075 = vpop.permute.xlu0 %2074
  %2076 = vrot.lane.b32.xlu0 %v1161, 96
  %v2077 = vpop.permute.xlu0 %2076
  %2078 = vrot.lane.b32.xlu0 %v1162, 96
  %v2079 = vpop.permute.xlu0 %2078
  %2080 = vrot.lane.b32.xlu0 %v1163, 96
  %v2081 = vpop.permute.xlu0 %2080
  %2082 = vrot.lane.b32.xlu0 %v1164, 96
  %v2083 = vpop.permute.xlu0 %2082
  %2084 = vrot.lane.b32.xlu0 %v1165, 96
  %v2085 = vpop.permute.xlu0 %2084
  %2086 = vrot.lane.b32.xlu0 %v1166, 96
  %v2087 = vpop.permute.xlu0 %2086
  %2088 = vrot.lane.b32.xlu0 %v1167, 96
  %v2089 = vpop.permute.xlu0 %2088
  %2090 = vrot.lane.b32.xlu0 %v1168, 96
  %v2091 = vpop.permute.xlu0 %2090
  %2092 = vrot.lane.b32.xlu0 %v1169, 96
  %v2093 = vpop.permute.xlu0 %2092
  %2094 = vrot.lane.b32.xlu0 %v1170, 96
  %v2095 = vpop.permute.xlu0 %2094
  %2096 = vrot.lane.b32.xlu0 %v1171, 96
  %v2097 = vpop.permute.xlu0 %2096
  %2098 = vrot.lane.b32.xlu0 %v1172, 96
  %v2099 = vpop.permute.xlu0 %2098
  %2100 = vrot.lane.b32.xlu0 %v1173, 96
  %v2101 = vpop.permute.xlu0 %2100
  %2102 = vrot.lane.b32.xlu0 %v1174, 96
  %v2103 = vpop.permute.xlu0 %2102
  %2104 = vrot.lane.b32.xlu0 %v1175, 96
  %v2105 = vpop.permute.xlu0 %2104
  %2106 = vrot.lane.b32.xlu0 %v1176, 96
  %v2107 = vpop.permute.xlu0 %2106
  %2108 = vrot.lane.b32.xlu0 %v1177, 96
  %v2109 = vpop.permute.xlu0 %2108
  %2110 = vrot.lane.b32.xlu0 %v1178, 96
  %v2111 = vpop.permute.xlu0 %2110
  %2112 = vrot.lane.b32.xlu0 %v1179, 96
  %v2113 = vpop.permute.xlu0 %2112
  %2114 = vrot.lane.b32.xlu0 %v1180, 96
  %v2115 = vpop.permute.xlu0 %2114
  %2116 = vrot.lane.b32.xlu0 %v1181, 96
  %v2117 = vpop.permute.xlu0 %2116
  %2118 = vrot.lane.b32.xlu0 %v1182, 96
  %v2119 = vpop.permute.xlu0 %2118
  %2120 = vrot.lane.b32.xlu0 %v1183, 96
  %v2121 = vpop.permute.xlu0 %2120
  %2122 = vrot.lane.b32.xlu0 %v1184, 96
  %v2123 = vpop.permute.xlu0 %2122
  %2124 = vrot.lane.b32.xlu0 %v1185, 96
  %v2125 = vpop.permute.xlu0 %2124
  %2126 = vrot.lane.b32.xlu0 %v1186, 96
  %v2127 = vpop.permute.xlu0 %2126
  %2128 = vrot.lane.b32.xlu0 %v1187, 96
  %v2129 = vpop.permute.xlu0 %2128
  %2130 = vrot.lane.b32.xlu0 %v1188, 96
  %v2131 = vpop.permute.xlu0 %2130
  %2132 = vrot.lane.b32.xlu0 %v1189, 96
  %v2133 = vpop.permute.xlu0 %2132
  %2134 = vrot.lane.b32.xlu0 %v1190, 96
  %v2135 = vpop.permute.xlu0 %2134
  %2136 = vrot.lane.b32.xlu0 %v1191, 96
  %v2137 = vpop.permute.xlu0 %2136
  %2138 = vrot.lane.b32.xlu0 %v1192, 96
  %v2139 = vpop.permute.xlu0 %2138
  %2140 = vrot.lane.b32.xlu0 %v1193, 96
  %v2141 = vpop.permute.xlu0 %2140
  %2142 = vrot.lane.b32.xlu0 %v1194, 96
  %v2143 = vpop.permute.xlu0 %2142
  %2144 = vrot.lane.b32.xlu0 %v1195, 96
  %v2145 = vpop.permute.xlu0 %2144
  %2146 = vrot.lane.b32.xlu0 %v1196, 96
  %v2147 = vpop.permute.xlu0 %2146
  %2148 = vrot.lane.b32.xlu0 %v1197, 96
  %v2149 = vpop.permute.xlu0 %2148
  %2150 = vrot.lane.b32.xlu0 %v1198, 96
  %v2151 = vpop.permute.xlu0 %2150
  %2152 = vrot.lane.b32.xlu0 %v1199, 96
  %v2153 = vpop.permute.xlu0 %2152
  %2154 = vrot.lane.b32.xlu0 %v1200, 96
  %v2155 = vpop.permute.xlu0 %2154
  %2156 = vrot.lane.b32.xlu0 %v1201, 96
  %v2157 = vpop.permute.xlu0 %2156
  %2158 = vrot.lane.b32.xlu0 %v1202, 96
  %v2159 = vpop.permute.xlu0 %2158
  %2160 = vrot.lane.b32.xlu0 %v1203, 96
  %v2161 = vpop.permute.xlu0 %2160
  %2162 = vrot.lane.b32.xlu0 %v1204, 96
  %v2163 = vpop.permute.xlu0 %2162
  %2164 = vrot.lane.b32.xlu0 %v1205, 96
  %v2165 = vpop.permute.xlu0 %2164
  %2166 = vrot.lane.b32.xlu0 %v1206, 96
  %v2167 = vpop.permute.xlu0 %2166
  %2168 = vrot.lane.b32.xlu0 %v1207, 96
  %v2169 = vpop.permute.xlu0 %2168
  %2170 = vrot.lane.b32.xlu0 %v1208, 96
  %v2171 = vpop.permute.xlu0 %2170
  %2172 = vrot.lane.b32.xlu0 %v1209, 96
  %v2173 = vpop.permute.xlu0 %2172
  %2174 = vrot.lane.b32.xlu0 %v1210, 96
  %v2175 = vpop.permute.xlu0 %2174
  %2176 = vrot.lane.b32.xlu0 %v1211, 96
  %v2177 = vpop.permute.xlu0 %2176
  %2178 = vrot.lane.b32.xlu0 %v1212, 96
  %v2179 = vpop.permute.xlu0 %2178
  %2180 = vrot.lane.b32.xlu0 %v1213, 96
  %v2181 = vpop.permute.xlu0 %2180
  %2182 = vrot.lane.b32.xlu0 %v1214, 96
  %v2183 = vpop.permute.xlu0 %2182
  %2184 = vrot.lane.b32.xlu0 %v1215, 96
  %v2185 = vpop.permute.xlu0 %2184
  %2186 = vrot.lane.b32.xlu0 %v1216, 96
  %v2187 = vpop.permute.xlu0 %2186
  %2188 = vrot.lane.b32.xlu0 %v1217, 96
  %v2189 = vpop.permute.xlu0 %2188
  %2190 = vrot.lane.b32.xlu0 %v1218, 96
  %v2191 = vpop.permute.xlu0 %2190
  %2192 = vrot.lane.b32.xlu0 %v1219, 96
  %v2193 = vpop.permute.xlu0 %2192
  %2194 = vrot.lane.b32.xlu0 %v1220, 96
  %v2195 = vpop.permute.xlu0 %2194
  %2196 = vrot.lane.b32.xlu0 %v1221, 96
  %v2197 = vpop.permute.xlu0 %2196
  %2198 = vrot.lane.b32.xlu0 %v1222, 96
  %v2199 = vpop.permute.xlu0 %2198
  %2200 = vrot.lane.b32.xlu0 %v1223, 96
  %v2201 = vpop.permute.xlu0 %2200
  %2202 = vrot.lane.b32.xlu0 %v1224, 96
  %v2203 = vpop.permute.xlu0 %2202
  %2204 = vrot.lane.b32.xlu0 %v1225, 96
  %v2205 = vpop.permute.xlu0 %2204
  %2206 = vrot.lane.b32.xlu0 %v1226, 96
  %v2207 = vpop.permute.xlu0 %2206
  %2208 = vrot.lane.b32.xlu0 %v1227, 96
  %v2209 = vpop.permute.xlu0 %2208
  %2210 = vrot.lane.b32.xlu0 %v1228, 96
  %v2211 = vpop.permute.xlu0 %2210
  %2212 = vrot.lane.b32.xlu0 %v1229, 96
  %v2213 = vpop.permute.xlu0 %2212
  %2214 = vrot.lane.b32.xlu0 %v1230, 96
  %v2215 = vpop.permute.xlu0 %2214
  %2216 = vrot.lane.b32.xlu0 %v1231, 96
  %v2217 = vpop.permute.xlu0 %2216
  %2218 = vrot.lane.b32.xlu0 %v1232, 96
  %v2219 = vpop.permute.xlu0 %2218
  %2220 = vrot.lane.b32.xlu0 %v1233, 96
  %v2221 = vpop.permute.xlu0 %2220
  %2222 = vrot.lane.b32.xlu0 %v1234, 96
  %v2223 = vpop.permute.xlu0 %2222
  %2224 = vrot.lane.b32.xlu0 %v1235, 96
  %v2225 = vpop.permute.xlu0 %2224
  %2226 = vrot.lane.b32.xlu0 %v1236, 96
  %v2227 = vpop.permute.xlu0 %2226
  %2228 = vrot.lane.b32.xlu0 %v1237, 96
  %v2229 = vpop.permute.xlu0 %2228
  %2230 = vrot.lane.b32.xlu0 %v1238, 96
  %v2231 = vpop.permute.xlu0 %2230
  %2232 = vrot.lane.b32.xlu0 %v1239, 96
  %v2233 = vpop.permute.xlu0 %2232
  %2234 = vrot.lane.b32.xlu0 %v1240, 96
  %v2235 = vpop.permute.xlu0 %2234
  %2236 = vrot.lane.b32.xlu0 %v1241, 96
  %v2237 = vpop.permute.xlu0 %2236
  %2238 = vrot.lane.b32.xlu0 %v1242, 96
  %v2239 = vpop.permute.xlu0 %2238
  %2240 = vrot.lane.b32.xlu0 %v1243, 96
  %v2241 = vpop.permute.xlu0 %2240
  %2242 = vrot.lane.b32.xlu0 %v1244, 96
  %v2243 = vpop.permute.xlu0 %2242
  %2244 = vrot.lane.b32.xlu0 %v1245, 96
  %v2245 = vpop.permute.xlu0 %2244
  %2246 = vrot.lane.b32.xlu0 %v1246, 96
  %v2247 = vpop.permute.xlu0 %2246
  %2248 = vrot.lane.b32.xlu0 %v1247, 96
  %v2249 = vpop.permute.xlu0 %2248
  %2250 = vrot.lane.b32.xlu0 %v1248, 96
  %v2251 = vpop.permute.xlu0 %2250
  %2252 = vrot.lane.b32.xlu0 %v1249, 96
  %v2253 = vpop.permute.xlu0 %2252
  %2254 = vrot.lane.b32.xlu0 %v1250, 96
  %v2255 = vpop.permute.xlu0 %2254
  %2256 = vrot.lane.b32.xlu0 %v1251, 96
  %v2257 = vpop.permute.xlu0 %2256
  %2258 = vrot.lane.b32.xlu0 %v1252, 96
  %v2259 = vpop.permute.xlu0 %2258
  %2260 = vrot.lane.b32.xlu0 %v1253, 96
  %v2261 = vpop.permute.xlu0 %2260
  %2262 = vrot.lane.b32.xlu0 %v1254, 96
  %v2263 = vpop.permute.xlu0 %2262
  %2264 = vrot.lane.b32.xlu0 %v1255, 96
  %v2265 = vpop.permute.xlu0 %2264
  %2266 = vrot.lane.b32.xlu0 %v1256, 96
  %v2267 = vpop.permute.xlu0 %2266
  %2268 = vrot.lane.b32.xlu0 %v1257, 96
  %v2269 = vpop.permute.xlu0 %2268
  %2270 = vrot.lane.b32.xlu0 %v1258, 96
  %v2271 = vpop.permute.xlu0 %2270
  %2272 = vrot.lane.b32.xlu0 %v1259, 96
  %v2273 = vpop.permute.xlu0 %2272
  %2274 = vrot.lane.b32.xlu0 %v1260, 96
  %v2275 = vpop.permute.xlu0 %2274
  %2276 = vrot.lane.b32.xlu0 %v1261, 96
  %v2277 = vpop.permute.xlu0 %2276
  %2278 = vrot.lane.b32.xlu0 %v1262, 96
  %v2279 = vpop.permute.xlu0 %2278
  %2280 = vrot.lane.b32.xlu0 %v1263, 96
  %v2281 = vpop.permute.xlu0 %2280
  %2282 = vrot.lane.b32.xlu0 %v1264, 96
  %v2283 = vpop.permute.xlu0 %2282
  %2284 = vrot.lane.b32.xlu0 %v1265, 96
  %v2285 = vpop.permute.xlu0 %2284
  %2286 = vrot.lane.b32.xlu0 %v1266, 96
  %v2287 = vpop.permute.xlu0 %2286
  %2288 = vrot.lane.b32.xlu0 %v1267, 96
  %v2289 = vpop.permute.xlu0 %2288
  %2290 = vrot.lane.b32.xlu0 %v1268, 96
  %v2291 = vpop.permute.xlu0 %2290
  %2292 = vrot.lane.b32.xlu0 %v1269, 96
  %v2293 = vpop.permute.xlu0 %2292
  %2294 = vrot.lane.b32.xlu0 %v1270, 96
  %v2295 = vpop.permute.xlu0 %2294
  %2296 = vrot.lane.b32.xlu0 %v1271, 96
  %v2297 = vpop.permute.xlu0 %2296
  %2298 = vrot.lane.b32.xlu0 %v1272, 96
  %v2299 = vpop.permute.xlu0 %2298
  %2300 = vrot.lane.b32.xlu0 %v1273, 96
  %v2301 = vpop.permute.xlu0 %2300
  %2302 = vrot.lane.b32.xlu0 %v1274, 96
  %v2303 = vpop.permute.xlu0 %2302
  %2304 = vrot.lane.b32.xlu0 %v1275, 96
  %v2305 = vpop.permute.xlu0 %2304
  %2474 = vmatprep.subr.bf16.mxu0 0
  %2475 = vmatpush1.bf16.msra.mxu0 %v1985
  %2476 = vmatprep.subr.bf16.mxu0 0
  %2477 = vmatpush1.bf16.msra.mxu0 %v1983
  %2478 = vmatprep.subr.bf16.mxu0 0
  %2479 = vmatpush1.bf16.msra.mxu0 %v1981
  %2480 = vmatprep.subr.bf16.mxu0 0
  %2481 = vmatpush1.bf16.msra.mxu0 %v1979
  %2482 = vmatprep.subr.bf16.mxu0 0
  %2483 = vmatpush1.bf16.msra.mxu0 %v1977
  %2484 = vmatprep.subr.bf16.mxu0 0
  %2485 = vmatpush1.bf16.msra.mxu0 %v1975
  %2486 = vmatprep.subr.bf16.mxu0 0
  %2487 = vmatpush1.bf16.msra.mxu0 %v1973
  %2488 = vmatprep.subr.bf16.mxu0 0
  %2489 = vmatpush1.bf16.msra.mxu0 %v1971
  %2490 = vmatprep.subr.bf16.mxu0 0
  %2491 = vmatpush2.bf16.msra.mxu0 %v2001
  %2492 = vmatprep.subr.bf16.mxu0 0
  %2493 = vmatpush2.bf16.msra.mxu0 %v1999
  %2494 = vmatprep.subr.bf16.mxu0 0
  %2495 = vmatpush2.bf16.msra.mxu0 %v1997
  %2496 = vmatprep.subr.bf16.mxu0 0
  %2497 = vmatpush2.bf16.msra.mxu0 %v1995
  %2498 = vmatprep.subr.bf16.mxu0 0
  %2499 = vmatpush2.bf16.msra.mxu0 %v1993
  %2500 = vmatprep.subr.bf16.mxu0 0
  %2501 = vmatpush2.bf16.msra.mxu0 %v1991
  %2502 = vmatprep.subr.bf16.mxu0 0
  %2503 = vmatpush2.bf16.msra.mxu0 %v1989
  %2504 = vmatprep.subr.bf16.mxu0 0
  %2505 = vmatpush2.bf16.msra.mxu0 %v1987
  %2506 = vmatprep.mubr.bf16.mxu0 %v1929
  %2507 = vmatmul.mubr.bf16.gmra.mxu0 %v1928
  %v2508 = vpop.f32.mrf.mxu0
  %v2509 = vadd.f32 0.0, %v2508
  %v2510 = vpop.f32.mrf.mxu0
  %v2511 = vpop.f32.mrf.mxu0
  %v2512 = vpop.f32.mrf.mxu0
  %2513 = vdwg.mxu0
  %2514 = vmatprep.subr.bf16.mxu0 0
  %2515 = vmatpush1.bf16.msra.mxu0 %v2017
  %2516 = vmatprep.subr.bf16.mxu0 0
  %2517 = vmatpush1.bf16.msra.mxu0 %v2015
  %2518 = vmatprep.subr.bf16.mxu0 0
  %2519 = vmatpush1.bf16.msra.mxu0 %v2013
  %2520 = vmatprep.subr.bf16.mxu0 0
  %2521 = vmatpush1.bf16.msra.mxu0 %v2011
  %2522 = vmatprep.subr.bf16.mxu0 0
  %2523 = vmatpush1.bf16.msra.mxu0 %v2009
  %2524 = vmatprep.subr.bf16.mxu0 0
  %2525 = vmatpush1.bf16.msra.mxu0 %v2007
  %2526 = vmatprep.subr.bf16.mxu0 0
  %2527 = vmatpush1.bf16.msra.mxu0 %v2005
  %2528 = vmatprep.subr.bf16.mxu0 0
  %2529 = vmatpush1.bf16.msra.mxu0 %v2003
  %2530 = vmatprep.subr.bf16.mxu0 0
  %2531 = vmatpush2.bf16.msra.mxu0 %v2033
  %2532 = vmatprep.subr.bf16.mxu0 0
  %2533 = vmatpush2.bf16.msra.mxu0 %v2031
  %2534 = vmatprep.subr.bf16.mxu0 0
  %2535 = vmatpush2.bf16.msra.mxu0 %v2029
  %2536 = vmatprep.subr.bf16.mxu0 0
  %2537 = vmatpush2.bf16.msra.mxu0 %v2027
  %2538 = vmatprep.subr.bf16.mxu0 0
  %2539 = vmatpush2.bf16.msra.mxu0 %v2025
  %2540 = vmatprep.subr.bf16.mxu0 0
  %2541 = vmatpush2.bf16.msra.mxu0 %v2023
  %2542 = vmatprep.subr.bf16.mxu0 0
  %2543 = vmatpush2.bf16.msra.mxu0 %v2021
  %2544 = vmatprep.subr.bf16.mxu0 0
  %2545 = vmatpush2.bf16.msra.mxu0 %v2019
  %2546 = vmatprep.mubr.bf16.mxu0 %v1931
  %2547 = vmatmul.mubr.bf16.gmra.mxu0 %v1930
  %v2548 = vpop.f32.mrf.mxu0
  %v2549 = vadd.f32 %v2509, %v2548
  %v2550 = vpop.f32.mrf.mxu0
  %v2551 = vpop.f32.mrf.mxu0
  %v2552 = vpop.f32.mrf.mxu0
  %2553 = vdwg.mxu0
  %2554 = vmatprep.subr.bf16.mxu0 0
  %2555 = vmatpush1.bf16.msra.mxu0 %v2049
  %2556 = vmatprep.subr.bf16.mxu0 0
  %2557 = vmatpush1.bf16.msra.mxu0 %v2047
  %2558 = vmatprep.subr.bf16.mxu0 0
  %2559 = vmatpush1.bf16.msra.mxu0 %v2045
  %2560 = vmatprep.subr.bf16.mxu0 0
  %2561 = vmatpush1.bf16.msra.mxu0 %v2043
  %2562 = vmatprep.subr.bf16.mxu0 0
  %2563 = vmatpush1.bf16.msra.mxu0 %v2041
  %2564 = vmatprep.subr.bf16.mxu0 0
  %2565 = vmatpush1.bf16.msra.mxu0 %v2039
  %2566 = vmatprep.subr.bf16.mxu0 0
  %2567 = vmatpush1.bf16.msra.mxu0 %v2037
  %2568 = vmatprep.subr.bf16.mxu0 0
  %2569 = vmatpush1.bf16.msra.mxu0 %v2035
  %2570 = vmatprep.subr.bf16.mxu0 0
  %2571 = vmatpush2.bf16.msra.mxu0 %v2065
  %2572 = vmatprep.subr.bf16.mxu0 0
  %2573 = vmatpush2.bf16.msra.mxu0 %v2063
  %2574 = vmatprep.subr.bf16.mxu0 0
  %2575 = vmatpush2.bf16.msra.mxu0 %v2061
  %2576 = vmatprep.subr.bf16.mxu0 0
  %2577 = vmatpush2.bf16.msra.mxu0 %v2059
  %2578 = vmatprep.subr.bf16.mxu0 0
  %2579 = vmatpush2.bf16.msra.mxu0 %v2057
  %2580 = vmatprep.subr.bf16.mxu0 0
  %2581 = vmatpush2.bf16.msra.mxu0 %v2055
  %2582 = vmatprep.subr.bf16.mxu0 0
  %2583 = vmatpush2.bf16.msra.mxu0 %v2053
  %2584 = vmatprep.subr.bf16.mxu0 0
  %2585 = vmatpush2.bf16.msra.mxu0 %v2051
  %2586 = vmatprep.mubr.bf16.mxu0 %v1933
  %2587 = vmatmul.mubr.bf16.gmra.mxu0 %v1932
  %v2588 = vpop.f32.mrf.mxu0
  %v2589 = vadd.f32 %v2549, %v2588
  %v2590 = vpop.f32.mrf.mxu0
  %v2591 = vpop.f32.mrf.mxu0
  %v2592 = vpop.f32.mrf.mxu0
  %2593 = vdwg.mxu0
  %2594 = vmatprep.subr.bf16.mxu0 0
  %2595 = vmatpush1.bf16.msra.mxu0 %v2081
  %2596 = vmatprep.subr.bf16.mxu0 0
  %2597 = vmatpush1.bf16.msra.mxu0 %v2079
  %2598 = vmatprep.subr.bf16.mxu0 0
  %2599 = vmatpush1.bf16.msra.mxu0 %v2077
  %2600 = vmatprep.subr.bf16.mxu0 0
  %2601 = vmatpush1.bf16.msra.mxu0 %v2075
  %2602 = vmatprep.subr.bf16.mxu0 0
  %2603 = vmatpush1.bf16.msra.mxu0 %v2073
  %2604 = vmatprep.subr.bf16.mxu0 0
  %2605 = vmatpush1.bf16.msra.mxu0 %v2071
  %2606 = vmatprep.subr.bf16.mxu0 0
  %2607 = vmatpush1.bf16.msra.mxu0 %v2069
  %2608 = vmatprep.subr.bf16.mxu0 0
  %2609 = vmatpush1.bf16.msra.mxu0 %v2067
  %2610 = vmatprep.subr.bf16.mxu0 0
  %2611 = vmatpush2.bf16.msra.mxu0 %v2097
  %2612 = vmatprep.subr.bf16.mxu0 0
  %2613 = vmatpush2.bf16.msra.mxu0 %v2095
  %2614 = vmatprep.subr.bf16.mxu0 0
  %2615 = vmatpush2.bf16.msra.mxu0 %v2093
  %2616 = vmatprep.subr.bf16.mxu0 0
  %2617 = vmatpush2.bf16.msra.mxu0 %v2091
  %2618 = vmatprep.subr.bf16.mxu0 0
  %2619 = vmatpush2.bf16.msra.mxu0 %v2089
  %2620 = vmatprep.subr.bf16.mxu0 0
  %2621 = vmatpush2.bf16.msra.mxu0 %v2087
  %2622 = vmatprep.subr.bf16.mxu0 0
  %2623 = vmatpush2.bf16.msra.mxu0 %v2085
  %2624 = vmatprep.subr.bf16.mxu0 0
  %2625 = vmatpush2.bf16.msra.mxu0 %v2083
  %2626 = vmatprep.mubr.bf16.mxu0 %v1935
  %2627 = vmatmul.mubr.bf16.gmra.mxu0 %v1934
  %v2628 = vpop.f32.mrf.mxu0
  %v2629 = vadd.f32 %v2589, %v2628
  %v2630 = vpop.f32.mrf.mxu0
  %v2631 = vpop.f32.mrf.mxu0
  %v2632 = vpop.f32.mrf.mxu0
  %2633 = vdwg.mxu0
  %2634 = vmatprep.subr.bf16.mxu0 0
  %2635 = vmatpush1.bf16.msra.mxu0 %v2113
  %2636 = vmatprep.subr.bf16.mxu0 0
  %2637 = vmatpush1.bf16.msra.mxu0 %v2111
  %2638 = vmatprep.subr.bf16.mxu0 0
  %2639 = vmatpush1.bf16.msra.mxu0 %v2109
  %2640 = vmatprep.subr.bf16.mxu0 0
  %2641 = vmatpush1.bf16.msra.mxu0 %v2107
  %2642 = vmatprep.subr.bf16.mxu0 0
  %2643 = vmatpush1.bf16.msra.mxu0 %v2105
  %2644 = vmatprep.subr.bf16.mxu0 0
  %2645 = vmatpush1.bf16.msra.mxu0 %v2103
  %2646 = vmatprep.subr.bf16.mxu0 0
  %2647 = vmatpush1.bf16.msra.mxu0 %v2101
  %2648 = vmatprep.subr.bf16.mxu0 0
  %2649 = vmatpush1.bf16.msra.mxu0 %v2099
  %2650 = vmatprep.subr.bf16.mxu0 0
  %2651 = vmatpush2.bf16.msra.mxu0 %v2129
  %2652 = vmatprep.subr.bf16.mxu0 0
  %2653 = vmatpush2.bf16.msra.mxu0 %v2127
  %2654 = vmatprep.subr.bf16.mxu0 0
  %2655 = vmatpush2.bf16.msra.mxu0 %v2125
  %2656 = vmatprep.subr.bf16.mxu0 0
  %2657 = vmatpush2.bf16.msra.mxu0 %v2123
  %2658 = vmatprep.subr.bf16.mxu0 0
  %2659 = vmatpush2.bf16.msra.mxu0 %v2121
  %2660 = vmatprep.subr.bf16.mxu0 0
  %2661 = vmatpush2.bf16.msra.mxu0 %v2119
  %2662 = vmatprep.subr.bf16.mxu0 0
  %2663 = vmatpush2.bf16.msra.mxu0 %v2117
  %2664 = vmatprep.subr.bf16.mxu0 0
  %2665 = vmatpush2.bf16.msra.mxu0 %v2115
  %2666 = vmatprep.mubr.bf16.mxu0 %v1937
  %2667 = vmatmul.mubr.bf16.gmra.mxu0 %v1936
  %v2668 = vpop.f32.mrf.mxu0
  %v2669 = vadd.f32 %v2629, %v2668
  %v2670 = vpop.f32.mrf.mxu0
  %v2671 = vpop.f32.mrf.mxu0
  %v2672 = vpop.f32.mrf.mxu0
  %2673 = vdwg.mxu0
  %2674 = vmatprep.subr.bf16.mxu0 0
  %2675 = vmatpush1.bf16.msra.mxu0 %v2145
  %2676 = vmatprep.subr.bf16.mxu0 0
  %2677 = vmatpush1.bf16.msra.mxu0 %v2143
  %2678 = vmatprep.subr.bf16.mxu0 0
  %2679 = vmatpush1.bf16.msra.mxu0 %v2141
  %2680 = vmatprep.subr.bf16.mxu0 0
  %2681 = vmatpush1.bf16.msra.mxu0 %v2139
  %2682 = vmatprep.subr.bf16.mxu0 0
  %2683 = vmatpush1.bf16.msra.mxu0 %v2137
  %2684 = vmatprep.subr.bf16.mxu0 0
  %2685 = vmatpush1.bf16.msra.mxu0 %v2135
  %2686 = vmatprep.subr.bf16.mxu0 0
  %2687 = vmatpush1.bf16.msra.mxu0 %v2133
  %2688 = vmatprep.subr.bf16.mxu0 0
  %2689 = vmatpush1.bf16.msra.mxu0 %v2131
  %2690 = vmatprep.subr.bf16.mxu0 0
  %2691 = vmatpush2.bf16.msra.mxu0 %v2161
  %2692 = vmatprep.subr.bf16.mxu0 0
  %2693 = vmatpush2.bf16.msra.mxu0 %v2159
  %2694 = vmatprep.subr.bf16.mxu0 0
  %2695 = vmatpush2.bf16.msra.mxu0 %v2157
  %2696 = vmatprep.subr.bf16.mxu0 0
  %2697 = vmatpush2.bf16.msra.mxu0 %v2155
  %2698 = vmatprep.subr.bf16.mxu0 0
  %2699 = vmatpush2.bf16.msra.mxu0 %v2153
  %2700 = vmatprep.subr.bf16.mxu0 0
  %2701 = vmatpush2.bf16.msra.mxu0 %v2151
  %2702 = vmatprep.subr.bf16.mxu0 0
  %2703 = vmatpush2.bf16.msra.mxu0 %v2149
  %2704 = vmatprep.subr.bf16.mxu0 0
  %2705 = vmatpush2.bf16.msra.mxu0 %v2147
  %2706 = vmatprep.mubr.bf16.mxu0 %v1939
  %2707 = vmatmul.mubr.bf16.gmra.mxu0 %v1938
  %v2708 = vpop.f32.mrf.mxu0
  %v2709 = vadd.f32 %v2669, %v2708
  %v2710 = vpop.f32.mrf.mxu0
  %v2711 = vpop.f32.mrf.mxu0
  %v2712 = vpop.f32.mrf.mxu0
  %2713 = vdwg.mxu0
  %2714 = vmatprep.subr.bf16.mxu0 0
  %2715 = vmatpush1.bf16.msra.mxu0 %v2177
  %2716 = vmatprep.subr.bf16.mxu0 0
  %2717 = vmatpush1.bf16.msra.mxu0 %v2175
  %2718 = vmatprep.subr.bf16.mxu0 0
  %2719 = vmatpush1.bf16.msra.mxu0 %v2173
  %2720 = vmatprep.subr.bf16.mxu0 0
  %2721 = vmatpush1.bf16.msra.mxu0 %v2171
  %2722 = vmatprep.subr.bf16.mxu0 0
  %2723 = vmatpush1.bf16.msra.mxu0 %v2169
  %2724 = vmatprep.subr.bf16.mxu0 0
  %2725 = vmatpush1.bf16.msra.mxu0 %v2167
  %2726 = vmatprep.subr.bf16.mxu0 0
  %2727 = vmatpush1.bf16.msra.mxu0 %v2165
  %2728 = vmatprep.subr.bf16.mxu0 0
  %2729 = vmatpush1.bf16.msra.mxu0 %v2163
  %2730 = vmatprep.subr.bf16.mxu0 0
  %2731 = vmatpush2.bf16.msra.mxu0 %v2193
  %2732 = vmatprep.subr.bf16.mxu0 0
  %2733 = vmatpush2.bf16.msra.mxu0 %v2191
  %2734 = vmatprep.subr.bf16.mxu0 0
  %2735 = vmatpush2.bf16.msra.mxu0 %v2189
  %2736 = vmatprep.subr.bf16.mxu0 0
  %2737 = vmatpush2.bf16.msra.mxu0 %v2187
  %2738 = vmatprep.subr.bf16.mxu0 0
  %2739 = vmatpush2.bf16.msra.mxu0 %v2185
  %2740 = vmatprep.subr.bf16.mxu0 0
  %2741 = vmatpush2.bf16.msra.mxu0 %v2183
  %2742 = vmatprep.subr.bf16.mxu0 0
  %2743 = vmatpush2.bf16.msra.mxu0 %v2181
  %2744 = vmatprep.subr.bf16.mxu0 0
  %2745 = vmatpush2.bf16.msra.mxu0 %v2179
  %2746 = vmatprep.mubr.bf16.mxu0 %v1941
  %2747 = vmatmul.mubr.bf16.gmra.mxu0 %v1940
  %v2748 = vpop.f32.mrf.mxu0
  %v2749 = vadd.f32 %v2709, %v2748
  %v2750 = vpop.f32.mrf.mxu0
  %v2751 = vpop.f32.mrf.mxu0
  %v2752 = vpop.f32.mrf.mxu0
  %2753 = vdwg.mxu0
  %2754 = vmatprep.subr.bf16.mxu0 0
  %2755 = vmatpush1.bf16.msra.mxu0 %v2209
  %2756 = vmatprep.subr.bf16.mxu0 0
  %2757 = vmatpush1.bf16.msra.mxu0 %v2207
  %2758 = vmatprep.subr.bf16.mxu0 0
  %2759 = vmatpush1.bf16.msra.mxu0 %v2205
  %2760 = vmatprep.subr.bf16.mxu0 0
  %2761 = vmatpush1.bf16.msra.mxu0 %v2203
  %2762 = vmatprep.subr.bf16.mxu0 0
  %2763 = vmatpush1.bf16.msra.mxu0 %v2201
  %2764 = vmatprep.subr.bf16.mxu0 0
  %2765 = vmatpush1.bf16.msra.mxu0 %v2199
  %2766 = vmatprep.subr.bf16.mxu0 0
  %2767 = vmatpush1.bf16.msra.mxu0 %v2197
  %2768 = vmatprep.subr.bf16.mxu0 0
  %2769 = vmatpush1.bf16.msra.mxu0 %v2195
  %2770 = vmatprep.subr.bf16.mxu0 0
  %2771 = vmatpush2.bf16.msra.mxu0 %v2225
  %2772 = vmatprep.subr.bf16.mxu0 0
  %2773 = vmatpush2.bf16.msra.mxu0 %v2223
  %2774 = vmatprep.subr.bf16.mxu0 0
  %2775 = vmatpush2.bf16.msra.mxu0 %v2221
  %2776 = vmatprep.subr.bf16.mxu0 0
  %2777 = vmatpush2.bf16.msra.mxu0 %v2219
  %2778 = vmatprep.subr.bf16.mxu0 0
  %2779 = vmatpush2.bf16.msra.mxu0 %v2217
  %2780 = vmatprep.subr.bf16.mxu0 0
  %2781 = vmatpush2.bf16.msra.mxu0 %v2215
  %2782 = vmatprep.subr.bf16.mxu0 0
  %2783 = vmatpush2.bf16.msra.mxu0 %v2213
  %2784 = vmatprep.subr.bf16.mxu0 0
  %2785 = vmatpush2.bf16.msra.mxu0 %v2211
  %2786 = vmatprep.mubr.bf16.mxu0 %v1943
  %2787 = vmatmul.mubr.bf16.gmra.mxu0 %v1942
  %v2788 = vpop.f32.mrf.mxu0
  %v2789 = vadd.f32 %v2749, %v2788
  %v2790 = vpop.f32.mrf.mxu0
  %v2791 = vpop.f32.mrf.mxu0
  %v2792 = vpop.f32.mrf.mxu0
  %2793 = vdwg.mxu0
  %2794 = vmatprep.subr.bf16.mxu0 0
  %2795 = vmatpush1.bf16.msra.mxu0 %v2241
  %2796 = vmatprep.subr.bf16.mxu0 0
  %2797 = vmatpush1.bf16.msra.mxu0 %v2239
  %2798 = vmatprep.subr.bf16.mxu0 0
  %2799 = vmatpush1.bf16.msra.mxu0 %v2237
  %2800 = vmatprep.subr.bf16.mxu0 0
  %2801 = vmatpush1.bf16.msra.mxu0 %v2235
  %2802 = vmatprep.subr.bf16.mxu0 0
  %2803 = vmatpush1.bf16.msra.mxu0 %v2233
  %2804 = vmatprep.subr.bf16.mxu0 0
  %2805 = vmatpush1.bf16.msra.mxu0 %v2231
  %2806 = vmatprep.subr.bf16.mxu0 0
  %2807 = vmatpush1.bf16.msra.mxu0 %v2229
  %2808 = vmatprep.subr.bf16.mxu0 0
  %2809 = vmatpush1.bf16.msra.mxu0 %v2227
  %2810 = vmatprep.subr.bf16.mxu0 0
  %2811 = vmatpush2.bf16.msra.mxu0 %v2257
  %2812 = vmatprep.subr.bf16.mxu0 0
  %2813 = vmatpush2.bf16.msra.mxu0 %v2255
  %2814 = vmatprep.subr.bf16.mxu0 0
  %2815 = vmatpush2.bf16.msra.mxu0 %v2253
  %2816 = vmatprep.subr.bf16.mxu0 0
  %2817 = vmatpush2.bf16.msra.mxu0 %v2251
  %2818 = vmatprep.subr.bf16.mxu0 0
  %2819 = vmatpush2.bf16.msra.mxu0 %v2249
  %2820 = vmatprep.subr.bf16.mxu0 0
  %2821 = vmatpush2.bf16.msra.mxu0 %v2247
  %2822 = vmatprep.subr.bf16.mxu0 0
  %2823 = vmatpush2.bf16.msra.mxu0 %v2245
  %2824 = vmatprep.subr.bf16.mxu0 0
  %2825 = vmatpush2.bf16.msra.mxu0 %v2243
  %2826 = vmatprep.mubr.bf16.mxu0 %v1945
  %2827 = vmatmul.mubr.bf16.gmra.mxu0 %v1944
  %v2828 = vpop.f32.mrf.mxu0
  %v2829 = vadd.f32 %v2789, %v2828
  %v2830 = vpop.f32.mrf.mxu0
  %v2831 = vpop.f32.mrf.mxu0
  %v2832 = vpop.f32.mrf.mxu0
  %2833 = vdwg.mxu0
  %2834 = vmatprep.subr.bf16.mxu0 0
  %2835 = vmatpush1.bf16.msra.mxu0 %v2273
  %2836 = vmatprep.subr.bf16.mxu0 0
  %2837 = vmatpush1.bf16.msra.mxu0 %v2271
  %2838 = vmatprep.subr.bf16.mxu0 0
  %2839 = vmatpush1.bf16.msra.mxu0 %v2269
  %2840 = vmatprep.subr.bf16.mxu0 0
  %2841 = vmatpush1.bf16.msra.mxu0 %v2267
  %2842 = vmatprep.subr.bf16.mxu0 0
  %2843 = vmatpush1.bf16.msra.mxu0 %v2265
  %2844 = vmatprep.subr.bf16.mxu0 0
  %2845 = vmatpush1.bf16.msra.mxu0 %v2263
  %2846 = vmatprep.subr.bf16.mxu0 0
  %2847 = vmatpush1.bf16.msra.mxu0 %v2261
  %2848 = vmatprep.subr.bf16.mxu0 0
  %2849 = vmatpush1.bf16.msra.mxu0 %v2259
  %2850 = vmatprep.subr.bf16.mxu0 0
  %2851 = vmatpush2.bf16.msra.mxu0 %v2289
  %2852 = vmatprep.subr.bf16.mxu0 0
  %2853 = vmatpush2.bf16.msra.mxu0 %v2287
  %2854 = vmatprep.subr.bf16.mxu0 0
  %2855 = vmatpush2.bf16.msra.mxu0 %v2285
  %2856 = vmatprep.subr.bf16.mxu0 0
  %2857 = vmatpush2.bf16.msra.mxu0 %v2283
  %2858 = vmatprep.subr.bf16.mxu0 0
  %2859 = vmatpush2.bf16.msra.mxu0 %v2281
  %2860 = vmatprep.subr.bf16.mxu0 0
  %2861 = vmatpush2.bf16.msra.mxu0 %v2279
  %2862 = vmatprep.subr.bf16.mxu0 0
  %2863 = vmatpush2.bf16.msra.mxu0 %v2277
  %2864 = vmatprep.subr.bf16.mxu0 0
  %2865 = vmatpush2.bf16.msra.mxu0 %v2275
  %2866 = vmatprep.mubr.bf16.mxu0 %v1947
  %2867 = vmatmul.mubr.bf16.gmra.mxu0 %v1946
  %v2868 = vpop.f32.mrf.mxu0
  %v2869 = vadd.f32 %v2829, %v2868
  %v2870 = vpop.f32.mrf.mxu0
  %v2871 = vpop.f32.mrf.mxu0
  %v2872 = vpop.f32.mrf.mxu0
  %2873 = vdwg.mxu0
  %2874 = vmatprep.subr.bf16.mxu0 0
  %2875 = vmatpush1.bf16.msra.mxu0 %v2305
  %2876 = vmatprep.subr.bf16.mxu0 0
  %2877 = vmatpush1.bf16.msra.mxu0 %v2303
  %2878 = vmatprep.subr.bf16.mxu0 0
  %2879 = vmatpush1.bf16.msra.mxu0 %v2301
  %2880 = vmatprep.subr.bf16.mxu0 0
  %2881 = vmatpush1.bf16.msra.mxu0 %v2299
  %2882 = vmatprep.subr.bf16.mxu0 0
  %2883 = vmatpush1.bf16.msra.mxu0 %v2297
  %2884 = vmatprep.subr.bf16.mxu0 0
  %2885 = vmatpush1.bf16.msra.mxu0 %v2295
  %2886 = vmatprep.subr.bf16.mxu0 0
  %2887 = vmatpush1.bf16.msra.mxu0 %v2293
  %2888 = vmatprep.subr.bf16.mxu0 0
  %2889 = vmatpush1.bf16.msra.mxu0 %v2291
  %2890 = vmatprep.subr.bf16.mxu0 0
  %2891 = vmatpush2.bf16.msra.mxu0 0
  %2892 = vmatprep.subr.bf16.mxu0 0
  %2893 = vmatpush2.bf16.msra.mxu0 0
  %2894 = vmatprep.subr.bf16.mxu0 0
  %2895 = vmatpush2.bf16.msra.mxu0 0
  %2896 = vmatprep.subr.bf16.mxu0 0
  %2897 = vmatpush2.bf16.msra.mxu0 0
  %2898 = vmatprep.subr.bf16.mxu0 0
  %2899 = vmatpush2.bf16.msra.mxu0 0
  %2900 = vmatprep.subr.bf16.mxu0 0
  %2901 = vmatpush2.bf16.msra.mxu0 0
  %2902 = vmatprep.subr.bf16.mxu0 0
  %2903 = vmatpush2.bf16.msra.mxu0 0
  %2904 = vmatprep.subr.bf16.mxu0 0
  %2905 = vmatpush2.bf16.msra.mxu0 0
  %2906 = vmatprep.mubr.bf16.mxu0 0
  %2907 = vmatmul.mubr.bf16.gmra.mxu0 %v1948
  %v2908 = vpop.f32.mrf.mxu0
  %v2909 = vadd.f32 %v2869, %v2908
  %v2910 = vpop.f32.mrf.mxu0
  %v2911 = vpop.f32.mrf.mxu0
  %v2912 = vpop.f32.mrf.mxu0
  %2913 = vdwg.mxu0
  %s2914 = scalar_lea.vmem %s0, 168
  %v2915 = vld [vmem:[%s2914] sm:$0xff]
  %v2916 = vld [vmem:[%s2914 + $0x8] sm:$0xff]
  %v2917 = vld [vmem:[%s2914 + $0x10] sm:$0xff]
  %v2918 = vld [vmem:[%s2914 + $0x18] sm:$0xff]
  %v2919 = vld [vmem:[%s2914 + $0x20] sm:$0xff]
  %v2920 = vld [vmem:[%s2914 + $0x28] sm:$0xff]
  %v2921 = vld [vmem:[%s2914 + $0x30] sm:$0xff]
  %v2922 = vld [vmem:[%s2914 + $0x38] sm:$0xff]
  %v2923 = vld [vmem:[%s2914 + $0x40] sm:$0xff]
  %v2924 = vld [vmem:[%s2914 + $0x48] sm:$0xff]
  %v2925 = vld [vmem:[%s2914 + $0x50] sm:$0xf]
  %v2937 = vunpack.c.l.b16 %v2915
  %v2938 = vunpack.c.h.b16 %v2915
  %v2939 = vunpack.c.l.b16 %v2916
  %v2940 = vunpack.c.h.b16 %v2916
  %v2941 = vunpack.c.l.b16 %v2917
  %v2942 = vunpack.c.h.b16 %v2917
  %v2943 = vunpack.c.l.b16 %v2918
  %v2944 = vunpack.c.h.b16 %v2918
  %v2945 = vunpack.c.l.b16 %v2919
  %v2946 = vunpack.c.h.b16 %v2919
  %v2947 = vunpack.c.l.b16 %v2920
  %v2948 = vunpack.c.h.b16 %v2920
  %v2949 = vunpack.c.l.b16 %v2921
  %v2950 = vunpack.c.h.b16 %v2921
  %v2951 = vunpack.c.l.b16 %v2922
  %v2952 = vunpack.c.h.b16 %v2922
  %v2953 = vunpack.c.l.b16 %v2923
  %v2954 = vunpack.c.h.b16 %v2923
  %v2955 = vunpack.c.l.b16 %v2924
  %v2956 = vunpack.c.h.b16 %v2924
  %v2957 = vunpack.c.l.b16 %v2925
  %v2958 = vpack.c.b16 %v2937, %v2937
  %v2959 = vpack.c.b16 %v2938, %v2938
  %v2960 = vpack.c.b16 %v2939, %v2939
  %v2961 = vpack.c.b16 %v2940, %v2940
  %v2962 = vpack.c.b16 %v2941, %v2941
  %v2963 = vpack.c.b16 %v2942, %v2942
  %v2964 = vpack.c.b16 %v2943, %v2943
  %v2965 = vpack.c.b16 %v2944, %v2944
  %v2966 = vpack.c.b16 %v2945, %v2945
  %v2967 = vpack.c.b16 %v2946, %v2946
  %v2968 = vpack.c.b16 %v2947, %v2947
  %v2969 = vpack.c.b16 %v2948, %v2948
  %v2970 = vpack.c.b16 %v2949, %v2949
  %v2971 = vpack.c.b16 %v2950, %v2950
  %v2972 = vpack.c.b16 %v2951, %v2951
  %v2973 = vpack.c.b16 %v2952, %v2952
  %v2974 = vpack.c.b16 %v2953, %v2953
  %v2975 = vpack.c.b16 %v2954, %v2954
  %v2976 = vpack.c.b16 %v2955, %v2955
  %v2977 = vpack.c.b16 %v2956, %v2956
  %v2978 = vpack.c.b16 %v2957, %v2957
  %3000 = vrot.lane.b32.xlu0 %v1108, 64
  %v3001 = vpop.permute.xlu0 %3000
  %3002 = vrot.lane.b32.xlu0 %v1109, 64
  %v3003 = vpop.permute.xlu0 %3002
  %3004 = vrot.lane.b32.xlu0 %v1110, 64
  %v3005 = vpop.permute.xlu0 %3004
  %3006 = vrot.lane.b32.xlu0 %v1111, 64
  %v3007 = vpop.permute.xlu0 %3006
  %3008 = vrot.lane.b32.xlu0 %v1112, 64
  %v3009 = vpop.permute.xlu0 %3008
  %3010 = vrot.lane.b32.xlu0 %v1113, 64
  %v3011 = vpop.permute.xlu0 %3010
  %3012 = vrot.lane.b32.xlu0 %v1114, 64
  %v3013 = vpop.permute.xlu0 %3012
  %3014 = vrot.lane.b32.xlu0 %v1115, 64
  %v3015 = vpop.permute.xlu0 %3014
  %3016 = vrot.lane.b32.xlu0 %v1116, 64
  %v3017 = vpop.permute.xlu0 %3016
  %3018 = vrot.lane.b32.xlu0 %v1117, 64
  %v3019 = vpop.permute.xlu0 %3018
  %3020 = vrot.lane.b32.xlu0 %v1118, 64
  %v3021 = vpop.permute.xlu0 %3020
  %3022 = vrot.lane.b32.xlu0 %v1119, 64
  %v3023 = vpop.permute.xlu0 %3022
  %3024 = vrot.lane.b32.xlu0 %v1120, 64
  %v3025 = vpop.permute.xlu0 %3024
  %3026 = vrot.lane.b32.xlu0 %v1121, 64
  %v3027 = vpop.permute.xlu0 %3026
  %3028 = vrot.lane.b32.xlu0 %v1122, 64
  %v3029 = vpop.permute.xlu0 %3028
  %3030 = vrot.lane.b32.xlu0 %v1123, 64
  %v3031 = vpop.permute.xlu0 %3030
  %3032 = vrot.lane.b32.xlu0 %v1124, 64
  %v3033 = vpop.permute.xlu0 %3032
  %3034 = vrot.lane.b32.xlu0 %v1125, 64
  %v3035 = vpop.permute.xlu0 %3034
  %3036 = vrot.lane.b32.xlu0 %v1126, 64
  %v3037 = vpop.permute.xlu0 %3036
  %3038 = vrot.lane.b32.xlu0 %v1127, 64
  %v3039 = vpop.permute.xlu0 %3038
  %3040 = vrot.lane.b32.xlu0 %v1128, 64
  %v3041 = vpop.permute.xlu0 %3040
  %3042 = vrot.lane.b32.xlu0 %v1129, 64
  %v3043 = vpop.permute.xlu0 %3042
  %3044 = vrot.lane.b32.xlu0 %v1130, 64
  %v3045 = vpop.permute.xlu0 %3044
  %3046 = vrot.lane.b32.xlu0 %v1131, 64
  %v3047 = vpop.permute.xlu0 %3046
  %3048 = vrot.lane.b32.xlu0 %v1132, 64
  %v3049 = vpop.permute.xlu0 %3048
  %3050 = vrot.lane.b32.xlu0 %v1133, 64
  %v3051 = vpop.permute.xlu0 %3050
  %3052 = vrot.lane.b32.xlu0 %v1134, 64
  %v3053 = vpop.permute.xlu0 %3052
  %3054 = vrot.lane.b32.xlu0 %v1135, 64
  %v3055 = vpop.permute.xlu0 %3054
  %3056 = vrot.lane.b32.xlu0 %v1136, 64
  %v3057 = vpop.permute.xlu0 %3056
  %3058 = vrot.lane.b32.xlu0 %v1137, 64
  %v3059 = vpop.permute.xlu0 %3058
  %3060 = vrot.lane.b32.xlu0 %v1138, 64
  %v3061 = vpop.permute.xlu0 %3060
  %3062 = vrot.lane.b32.xlu0 %v1139, 64
  %v3063 = vpop.permute.xlu0 %3062
  %3064 = vrot.lane.b32.xlu0 %v1140, 64
  %v3065 = vpop.permute.xlu0 %3064
  %3066 = vrot.lane.b32.xlu0 %v1141, 64
  %v3067 = vpop.permute.xlu0 %3066
  %3068 = vrot.lane.b32.xlu0 %v1142, 64
  %v3069 = vpop.permute.xlu0 %3068
  %3070 = vrot.lane.b32.xlu0 %v1143, 64
  %v3071 = vpop.permute.xlu0 %3070
  %3072 = vrot.lane.b32.xlu0 %v1144, 64
  %v3073 = vpop.permute.xlu0 %3072
  %3074 = vrot.lane.b32.xlu0 %v1145, 64
  %v3075 = vpop.permute.xlu0 %3074
  %3076 = vrot.lane.b32.xlu0 %v1146, 64
  %v3077 = vpop.permute.xlu0 %3076
  %3078 = vrot.lane.b32.xlu0 %v1147, 64
  %v3079 = vpop.permute.xlu0 %3078
  %3080 = vrot.lane.b32.xlu0 %v1148, 64
  %v3081 = vpop.permute.xlu0 %3080
  %3082 = vrot.lane.b32.xlu0 %v1149, 64
  %v3083 = vpop.permute.xlu0 %3082
  %3084 = vrot.lane.b32.xlu0 %v1150, 64
  %v3085 = vpop.permute.xlu0 %3084
  %3086 = vrot.lane.b32.xlu0 %v1151, 64
  %v3087 = vpop.permute.xlu0 %3086
  %3088 = vrot.lane.b32.xlu0 %v1152, 64
  %v3089 = vpop.permute.xlu0 %3088
  %3090 = vrot.lane.b32.xlu0 %v1153, 64
  %v3091 = vpop.permute.xlu0 %3090
  %3092 = vrot.lane.b32.xlu0 %v1154, 64
  %v3093 = vpop.permute.xlu0 %3092
  %3094 = vrot.lane.b32.xlu0 %v1155, 64
  %v3095 = vpop.permute.xlu0 %3094
  %3096 = vrot.lane.b32.xlu0 %v1156, 64
  %v3097 = vpop.permute.xlu0 %3096
  %3098 = vrot.lane.b32.xlu0 %v1157, 64
  %v3099 = vpop.permute.xlu0 %3098
  %3100 = vrot.lane.b32.xlu0 %v1158, 64
  %v3101 = vpop.permute.xlu0 %3100
  %3102 = vrot.lane.b32.xlu0 %v1159, 64
  %v3103 = vpop.permute.xlu0 %3102
  %3104 = vrot.lane.b32.xlu0 %v1160, 64
  %v3105 = vpop.permute.xlu0 %3104
  %3106 = vrot.lane.b32.xlu0 %v1161, 64
  %v3107 = vpop.permute.xlu0 %3106
  %3108 = vrot.lane.b32.xlu0 %v1162, 64
  %v3109 = vpop.permute.xlu0 %3108
  %3110 = vrot.lane.b32.xlu0 %v1163, 64
  %v3111 = vpop.permute.xlu0 %3110
  %3112 = vrot.lane.b32.xlu0 %v1164, 64
  %v3113 = vpop.permute.xlu0 %3112
  %3114 = vrot.lane.b32.xlu0 %v1165, 64
  %v3115 = vpop.permute.xlu0 %3114
  %3116 = vrot.lane.b32.xlu0 %v1166, 64
  %v3117 = vpop.permute.xlu0 %3116
  %3118 = vrot.lane.b32.xlu0 %v1167, 64
  %v3119 = vpop.permute.xlu0 %3118
  %3120 = vrot.lane.b32.xlu0 %v1168, 64
  %v3121 = vpop.permute.xlu0 %3120
  %3122 = vrot.lane.b32.xlu0 %v1169, 64
  %v3123 = vpop.permute.xlu0 %3122
  %3124 = vrot.lane.b32.xlu0 %v1170, 64
  %v3125 = vpop.permute.xlu0 %3124
  %3126 = vrot.lane.b32.xlu0 %v1171, 64
  %v3127 = vpop.permute.xlu0 %3126
  %3128 = vrot.lane.b32.xlu0 %v1172, 64
  %v3129 = vpop.permute.xlu0 %3128
  %3130 = vrot.lane.b32.xlu0 %v1173, 64
  %v3131 = vpop.permute.xlu0 %3130
  %3132 = vrot.lane.b32.xlu0 %v1174, 64
  %v3133 = vpop.permute.xlu0 %3132
  %3134 = vrot.lane.b32.xlu0 %v1175, 64
  %v3135 = vpop.permute.xlu0 %3134
  %3136 = vrot.lane.b32.xlu0 %v1176, 64
  %v3137 = vpop.permute.xlu0 %3136
  %3138 = vrot.lane.b32.xlu0 %v1177, 64
  %v3139 = vpop.permute.xlu0 %3138
  %3140 = vrot.lane.b32.xlu0 %v1178, 64
  %v3141 = vpop.permute.xlu0 %3140
  %3142 = vrot.lane.b32.xlu0 %v1179, 64
  %v3143 = vpop.permute.xlu0 %3142
  %3144 = vrot.lane.b32.xlu0 %v1180, 64
  %v3145 = vpop.permute.xlu0 %3144
  %3146 = vrot.lane.b32.xlu0 %v1181, 64
  %v3147 = vpop.permute.xlu0 %3146
  %3148 = vrot.lane.b32.xlu0 %v1182, 64
  %v3149 = vpop.permute.xlu0 %3148
  %3150 = vrot.lane.b32.xlu0 %v1183, 64
  %v3151 = vpop.permute.xlu0 %3150
  %3152 = vrot.lane.b32.xlu0 %v1184, 64
  %v3153 = vpop.permute.xlu0 %3152
  %3154 = vrot.lane.b32.xlu0 %v1185, 64
  %v3155 = vpop.permute.xlu0 %3154
  %3156 = vrot.lane.b32.xlu0 %v1186, 64
  %v3157 = vpop.permute.xlu0 %3156
  %3158 = vrot.lane.b32.xlu0 %v1187, 64
  %v3159 = vpop.permute.xlu0 %3158
  %3160 = vrot.lane.b32.xlu0 %v1188, 64
  %v3161 = vpop.permute.xlu0 %3160
  %3162 = vrot.lane.b32.xlu0 %v1189, 64
  %v3163 = vpop.permute.xlu0 %3162
  %3164 = vrot.lane.b32.xlu0 %v1190, 64
  %v3165 = vpop.permute.xlu0 %3164
  %3166 = vrot.lane.b32.xlu0 %v1191, 64
  %v3167 = vpop.permute.xlu0 %3166
  %3168 = vrot.lane.b32.xlu0 %v1192, 64
  %v3169 = vpop.permute.xlu0 %3168
  %3170 = vrot.lane.b32.xlu0 %v1193, 64
  %v3171 = vpop.permute.xlu0 %3170
  %3172 = vrot.lane.b32.xlu0 %v1194, 64
  %v3173 = vpop.permute.xlu0 %3172
  %3174 = vrot.lane.b32.xlu0 %v1195, 64
  %v3175 = vpop.permute.xlu0 %3174
  %3176 = vrot.lane.b32.xlu0 %v1196, 64
  %v3177 = vpop.permute.xlu0 %3176
  %3178 = vrot.lane.b32.xlu0 %v1197, 64
  %v3179 = vpop.permute.xlu0 %3178
  %3180 = vrot.lane.b32.xlu0 %v1198, 64
  %v3181 = vpop.permute.xlu0 %3180
  %3182 = vrot.lane.b32.xlu0 %v1199, 64
  %v3183 = vpop.permute.xlu0 %3182
  %3184 = vrot.lane.b32.xlu0 %v1200, 64
  %v3185 = vpop.permute.xlu0 %3184
  %3186 = vrot.lane.b32.xlu0 %v1201, 64
  %v3187 = vpop.permute.xlu0 %3186
  %3188 = vrot.lane.b32.xlu0 %v1202, 64
  %v3189 = vpop.permute.xlu0 %3188
  %3190 = vrot.lane.b32.xlu0 %v1203, 64
  %v3191 = vpop.permute.xlu0 %3190
  %3192 = vrot.lane.b32.xlu0 %v1204, 64
  %v3193 = vpop.permute.xlu0 %3192
  %3194 = vrot.lane.b32.xlu0 %v1205, 64
  %v3195 = vpop.permute.xlu0 %3194
  %3196 = vrot.lane.b32.xlu0 %v1206, 64
  %v3197 = vpop.permute.xlu0 %3196
  %3198 = vrot.lane.b32.xlu0 %v1207, 64
  %v3199 = vpop.permute.xlu0 %3198
  %3200 = vrot.lane.b32.xlu0 %v1208, 64
  %v3201 = vpop.permute.xlu0 %3200
  %3202 = vrot.lane.b32.xlu0 %v1209, 64
  %v3203 = vpop.permute.xlu0 %3202
  %3204 = vrot.lane.b32.xlu0 %v1210, 64
  %v3205 = vpop.permute.xlu0 %3204
  %3206 = vrot.lane.b32.xlu0 %v1211, 64
  %v3207 = vpop.permute.xlu0 %3206
  %3208 = vrot.lane.b32.xlu0 %v1212, 64
  %v3209 = vpop.permute.xlu0 %3208
  %3210 = vrot.lane.b32.xlu0 %v1213, 64
  %v3211 = vpop.permute.xlu0 %3210
  %3212 = vrot.lane.b32.xlu0 %v1214, 64
  %v3213 = vpop.permute.xlu0 %3212
  %3214 = vrot.lane.b32.xlu0 %v1215, 64
  %v3215 = vpop.permute.xlu0 %3214
  %3216 = vrot.lane.b32.xlu0 %v1216, 64
  %v3217 = vpop.permute.xlu0 %3216
  %3218 = vrot.lane.b32.xlu0 %v1217, 64
  %v3219 = vpop.permute.xlu0 %3218
  %3220 = vrot.lane.b32.xlu0 %v1218, 64
  %v3221 = vpop.permute.xlu0 %3220
  %3222 = vrot.lane.b32.xlu0 %v1219, 64
  %v3223 = vpop.permute.xlu0 %3222
  %3224 = vrot.lane.b32.xlu0 %v1220, 64
  %v3225 = vpop.permute.xlu0 %3224
  %3226 = vrot.lane.b32.xlu0 %v1221, 64
  %v3227 = vpop.permute.xlu0 %3226
  %3228 = vrot.lane.b32.xlu0 %v1222, 64
  %v3229 = vpop.permute.xlu0 %3228
  %3230 = vrot.lane.b32.xlu0 %v1223, 64
  %v3231 = vpop.permute.xlu0 %3230
  %3232 = vrot.lane.b32.xlu0 %v1224, 64
  %v3233 = vpop.permute.xlu0 %3232
  %3234 = vrot.lane.b32.xlu0 %v1225, 64
  %v3235 = vpop.permute.xlu0 %3234
  %3236 = vrot.lane.b32.xlu0 %v1226, 64
  %v3237 = vpop.permute.xlu0 %3236
  %3238 = vrot.lane.b32.xlu0 %v1227, 64
  %v3239 = vpop.permute.xlu0 %3238
  %3240 = vrot.lane.b32.xlu0 %v1228, 64
  %v3241 = vpop.permute.xlu0 %3240
  %3242 = vrot.lane.b32.xlu0 %v1229, 64
  %v3243 = vpop.permute.xlu0 %3242
  %3244 = vrot.lane.b32.xlu0 %v1230, 64
  %v3245 = vpop.permute.xlu0 %3244
  %3246 = vrot.lane.b32.xlu0 %v1231, 64
  %v3247 = vpop.permute.xlu0 %3246
  %3248 = vrot.lane.b32.xlu0 %v1232, 64
  %v3249 = vpop.permute.xlu0 %3248
  %3250 = vrot.lane.b32.xlu0 %v1233, 64
  %v3251 = vpop.permute.xlu0 %3250
  %3252 = vrot.lane.b32.xlu0 %v1234, 64
  %v3253 = vpop.permute.xlu0 %3252
  %3254 = vrot.lane.b32.xlu0 %v1235, 64
  %v3255 = vpop.permute.xlu0 %3254
  %3256 = vrot.lane.b32.xlu0 %v1236, 64
  %v3257 = vpop.permute.xlu0 %3256
  %3258 = vrot.lane.b32.xlu0 %v1237, 64
  %v3259 = vpop.permute.xlu0 %3258
  %3260 = vrot.lane.b32.xlu0 %v1238, 64
  %v3261 = vpop.permute.xlu0 %3260
  %3262 = vrot.lane.b32.xlu0 %v1239, 64
  %v3263 = vpop.permute.xlu0 %3262
  %3264 = vrot.lane.b32.xlu0 %v1240, 64
  %v3265 = vpop.permute.xlu0 %3264
  %3266 = vrot.lane.b32.xlu0 %v1241, 64
  %v3267 = vpop.permute.xlu0 %3266
  %3268 = vrot.lane.b32.xlu0 %v1242, 64
  %v3269 = vpop.permute.xlu0 %3268
  %3270 = vrot.lane.b32.xlu0 %v1243, 64
  %v3271 = vpop.permute.xlu0 %3270
  %3272 = vrot.lane.b32.xlu0 %v1244, 64
  %v3273 = vpop.permute.xlu0 %3272
  %3274 = vrot.lane.b32.xlu0 %v1245, 64
  %v3275 = vpop.permute.xlu0 %3274
  %3276 = vrot.lane.b32.xlu0 %v1246, 64
  %v3277 = vpop.permute.xlu0 %3276
  %3278 = vrot.lane.b32.xlu0 %v1247, 64
  %v3279 = vpop.permute.xlu0 %3278
  %3280 = vrot.lane.b32.xlu0 %v1248, 64
  %v3281 = vpop.permute.xlu0 %3280
  %3282 = vrot.lane.b32.xlu0 %v1249, 64
  %v3283 = vpop.permute.xlu0 %3282
  %3284 = vrot.lane.b32.xlu0 %v1250, 64
  %v3285 = vpop.permute.xlu0 %3284
  %3286 = vrot.lane.b32.xlu0 %v1251, 64
  %v3287 = vpop.permute.xlu0 %3286
  %3288 = vrot.lane.b32.xlu0 %v1252, 64
  %v3289 = vpop.permute.xlu0 %3288
  %3290 = vrot.lane.b32.xlu0 %v1253, 64
  %v3291 = vpop.permute.xlu0 %3290
  %3292 = vrot.lane.b32.xlu0 %v1254, 64
  %v3293 = vpop.permute.xlu0 %3292
  %3294 = vrot.lane.b32.xlu0 %v1255, 64
  %v3295 = vpop.permute.xlu0 %3294
  %3296 = vrot.lane.b32.xlu0 %v1256, 64
  %v3297 = vpop.permute.xlu0 %3296
  %3298 = vrot.lane.b32.xlu0 %v1257, 64
  %v3299 = vpop.permute.xlu0 %3298
  %3300 = vrot.lane.b32.xlu0 %v1258, 64
  %v3301 = vpop.permute.xlu0 %3300
  %3302 = vrot.lane.b32.xlu0 %v1259, 64
  %v3303 = vpop.permute.xlu0 %3302
  %3304 = vrot.lane.b32.xlu0 %v1260, 64
  %v3305 = vpop.permute.xlu0 %3304
  %3306 = vrot.lane.b32.xlu0 %v1261, 64
  %v3307 = vpop.permute.xlu0 %3306
  %3308 = vrot.lane.b32.xlu0 %v1262, 64
  %v3309 = vpop.permute.xlu0 %3308
  %3310 = vrot.lane.b32.xlu0 %v1263, 64
  %v3311 = vpop.permute.xlu0 %3310
  %3312 = vrot.lane.b32.xlu0 %v1264, 64
  %v3313 = vpop.permute.xlu0 %3312
  %3314 = vrot.lane.b32.xlu0 %v1265, 64
  %v3315 = vpop.permute.xlu0 %3314
  %3316 = vrot.lane.b32.xlu0 %v1266, 64
  %v3317 = vpop.permute.xlu0 %3316
  %3318 = vrot.lane.b32.xlu0 %v1267, 64
  %v3319 = vpop.permute.xlu0 %3318
  %3320 = vrot.lane.b32.xlu0 %v1268, 64
  %v3321 = vpop.permute.xlu0 %3320
  %3322 = vrot.lane.b32.xlu0 %v1269, 64
  %v3323 = vpop.permute.xlu0 %3322
  %3324 = vrot.lane.b32.xlu0 %v1270, 64
  %v3325 = vpop.permute.xlu0 %3324
  %3326 = vrot.lane.b32.xlu0 %v1271, 64
  %v3327 = vpop.permute.xlu0 %3326
  %3328 = vrot.lane.b32.xlu0 %v1272, 64
  %v3329 = vpop.permute.xlu0 %3328
  %3330 = vrot.lane.b32.xlu0 %v1273, 64
  %v3331 = vpop.permute.xlu0 %3330
  %3332 = vrot.lane.b32.xlu0 %v1274, 64
  %v3333 = vpop.permute.xlu0 %3332
  %3334 = vrot.lane.b32.xlu0 %v1275, 64
  %v3335 = vpop.permute.xlu0 %3334
  %3504 = vmatprep.subr.bf16.mxu0 0
  %3505 = vmatpush1.bf16.msra.mxu0 %v3015
  %3506 = vmatprep.subr.bf16.mxu0 0
  %3507 = vmatpush1.bf16.msra.mxu0 %v3013
  %3508 = vmatprep.subr.bf16.mxu0 0
  %3509 = vmatpush1.bf16.msra.mxu0 %v3011
  %3510 = vmatprep.subr.bf16.mxu0 0
  %3511 = vmatpush1.bf16.msra.mxu0 %v3009
  %3512 = vmatprep.subr.bf16.mxu0 0
  %3513 = vmatpush1.bf16.msra.mxu0 %v3007
  %3514 = vmatprep.subr.bf16.mxu0 0
  %3515 = vmatpush1.bf16.msra.mxu0 %v3005
  %3516 = vmatprep.subr.bf16.mxu0 0
  %3517 = vmatpush1.bf16.msra.mxu0 %v3003
  %3518 = vmatprep.subr.bf16.mxu0 0
  %3519 = vmatpush1.bf16.msra.mxu0 %v3001
  %3520 = vmatprep.subr.bf16.mxu0 0
  %3521 = vmatpush2.bf16.msra.mxu0 %v3031
  %3522 = vmatprep.subr.bf16.mxu0 0
  %3523 = vmatpush2.bf16.msra.mxu0 %v3029
  %3524 = vmatprep.subr.bf16.mxu0 0
  %3525 = vmatpush2.bf16.msra.mxu0 %v3027
  %3526 = vmatprep.subr.bf16.mxu0 0
  %3527 = vmatpush2.bf16.msra.mxu0 %v3025
  %3528 = vmatprep.subr.bf16.mxu0 0
  %3529 = vmatpush2.bf16.msra.mxu0 %v3023
  %3530 = vmatprep.subr.bf16.mxu0 0
  %3531 = vmatpush2.bf16.msra.mxu0 %v3021
  %3532 = vmatprep.subr.bf16.mxu0 0
  %3533 = vmatpush2.bf16.msra.mxu0 %v3019
  %3534 = vmatprep.subr.bf16.mxu0 0
  %3535 = vmatpush2.bf16.msra.mxu0 %v3017
  %3536 = vmatprep.mubr.bf16.mxu0 %v2959
  %3537 = vmatmul.mubr.bf16.gmra.mxu0 %v2958
  %v3538 = vpop.f32.mrf.mxu0
  %v3539 = vadd.f32 0.0, %v3538
  %v3540 = vpop.f32.mrf.mxu0
  %v3541 = vpop.f32.mrf.mxu0
  %v3542 = vpop.f32.mrf.mxu0
  %3543 = vdwg.mxu0
  %3544 = vmatprep.subr.bf16.mxu0 0
  %3545 = vmatpush1.bf16.msra.mxu0 %v3047
  %3546 = vmatprep.subr.bf16.mxu0 0
  %3547 = vmatpush1.bf16.msra.mxu0 %v3045
  %3548 = vmatprep.subr.bf16.mxu0 0
  %3549 = vmatpush1.bf16.msra.mxu0 %v3043
  %3550 = vmatprep.subr.bf16.mxu0 0
  %3551 = vmatpush1.bf16.msra.mxu0 %v3041
  %3552 = vmatprep.subr.bf16.mxu0 0
  %3553 = vmatpush1.bf16.msra.mxu0 %v3039
  %3554 = vmatprep.subr.bf16.mxu0 0
  %3555 = vmatpush1.bf16.msra.mxu0 %v3037
  %3556 = vmatprep.subr.bf16.mxu0 0
  %3557 = vmatpush1.bf16.msra.mxu0 %v3035
  %3558 = vmatprep.subr.bf16.mxu0 0
  %3559 = vmatpush1.bf16.msra.mxu0 %v3033
  %3560 = vmatprep.subr.bf16.mxu0 0
  %3561 = vmatpush2.bf16.msra.mxu0 %v3063
  %3562 = vmatprep.subr.bf16.mxu0 0
  %3563 = vmatpush2.bf16.msra.mxu0 %v3061
  %3564 = vmatprep.subr.bf16.mxu0 0
  %3565 = vmatpush2.bf16.msra.mxu0 %v3059
  %3566 = vmatprep.subr.bf16.mxu0 0
  %3567 = vmatpush2.bf16.msra.mxu0 %v3057
  %3568 = vmatprep.subr.bf16.mxu0 0
  %3569 = vmatpush2.bf16.msra.mxu0 %v3055
  %3570 = vmatprep.subr.bf16.mxu0 0
  %3571 = vmatpush2.bf16.msra.mxu0 %v3053
  %3572 = vmatprep.subr.bf16.mxu0 0
  %3573 = vmatpush2.bf16.msra.mxu0 %v3051
  %3574 = vmatprep.subr.bf16.mxu0 0
  %3575 = vmatpush2.bf16.msra.mxu0 %v3049
  %3576 = vmatprep.mubr.bf16.mxu0 %v2961
  %3577 = vmatmul.mubr.bf16.gmra.mxu0 %v2960
  %v3578 = vpop.f32.mrf.mxu0
  %v3579 = vadd.f32 %v3539, %v3578
  %v3580 = vpop.f32.mrf.mxu0
  %v3581 = vpop.f32.mrf.mxu0
  %v3582 = vpop.f32.mrf.mxu0
  %3583 = vdwg.mxu0
  %3584 = vmatprep.subr.bf16.mxu0 0
  %3585 = vmatpush1.bf16.msra.mxu0 %v3079
  %3586 = vmatprep.subr.bf16.mxu0 0
  %3587 = vmatpush1.bf16.msra.mxu0 %v3077
  %3588 = vmatprep.subr.bf16.mxu0 0
  %3589 = vmatpush1.bf16.msra.mxu0 %v3075
  %3590 = vmatprep.subr.bf16.mxu0 0
  %3591 = vmatpush1.bf16.msra.mxu0 %v3073
  %3592 = vmatprep.subr.bf16.mxu0 0
  %3593 = vmatpush1.bf16.msra.mxu0 %v3071
  %3594 = vmatprep.subr.bf16.mxu0 0
  %3595 = vmatpush1.bf16.msra.mxu0 %v3069
  %3596 = vmatprep.subr.bf16.mxu0 0
  %3597 = vmatpush1.bf16.msra.mxu0 %v3067
  %3598 = vmatprep.subr.bf16.mxu0 0
  %3599 = vmatpush1.bf16.msra.mxu0 %v3065
  %3600 = vmatprep.subr.bf16.mxu0 0
  %3601 = vmatpush2.bf16.msra.mxu0 %v3095
  %3602 = vmatprep.subr.bf16.mxu0 0
  %3603 = vmatpush2.bf16.msra.mxu0 %v3093
  %3604 = vmatprep.subr.bf16.mxu0 0
  %3605 = vmatpush2.bf16.msra.mxu0 %v3091
  %3606 = vmatprep.subr.bf16.mxu0 0
  %3607 = vmatpush2.bf16.msra.mxu0 %v3089
  %3608 = vmatprep.subr.bf16.mxu0 0
  %3609 = vmatpush2.bf16.msra.mxu0 %v3087
  %3610 = vmatprep.subr.bf16.mxu0 0
  %3611 = vmatpush2.bf16.msra.mxu0 %v3085
  %3612 = vmatprep.subr.bf16.mxu0 0
  %3613 = vmatpush2.bf16.msra.mxu0 %v3083
  %3614 = vmatprep.subr.bf16.mxu0 0
  %3615 = vmatpush2.bf16.msra.mxu0 %v3081
  %3616 = vmatprep.mubr.bf16.mxu0 %v2963
  %3617 = vmatmul.mubr.bf16.gmra.mxu0 %v2962
  %v3618 = vpop.f32.mrf.mxu0
  %v3619 = vadd.f32 %v3579, %v3618
  %v3620 = vpop.f32.mrf.mxu0
  %v3621 = vpop.f32.mrf.mxu0
  %v3622 = vpop.f32.mrf.mxu0
  %3623 = vdwg.mxu0
  %3624 = vmatprep.subr.bf16.mxu0 0
  %3625 = vmatpush1.bf16.msra.mxu0 %v3111
  %3626 = vmatprep.subr.bf16.mxu0 0
  %3627 = vmatpush1.bf16.msra.mxu0 %v3109
  %3628 = vmatprep.subr.bf16.mxu0 0
  %3629 = vmatpush1.bf16.msra.mxu0 %v3107
  %3630 = vmatprep.subr.bf16.mxu0 0
  %3631 = vmatpush1.bf16.msra.mxu0 %v3105
  %3632 = vmatprep.subr.bf16.mxu0 0
  %3633 = vmatpush1.bf16.msra.mxu0 %v3103
  %3634 = vmatprep.subr.bf16.mxu0 0
  %3635 = vmatpush1.bf16.msra.mxu0 %v3101
  %3636 = vmatprep.subr.bf16.mxu0 0
  %3637 = vmatpush1.bf16.msra.mxu0 %v3099
  %3638 = vmatprep.subr.bf16.mxu0 0
  %3639 = vmatpush1.bf16.msra.mxu0 %v3097
  %3640 = vmatprep.subr.bf16.mxu0 0
  %3641 = vmatpush2.bf16.msra.mxu0 %v3127
  %3642 = vmatprep.subr.bf16.mxu0 0
  %3643 = vmatpush2.bf16.msra.mxu0 %v3125
  %3644 = vmatprep.subr.bf16.mxu0 0
  %3645 = vmatpush2.bf16.msra.mxu0 %v3123
  %3646 = vmatprep.subr.bf16.mxu0 0
  %3647 = vmatpush2.bf16.msra.mxu0 %v3121
  %3648 = vmatprep.subr.bf16.mxu0 0
  %3649 = vmatpush2.bf16.msra.mxu0 %v3119
  %3650 = vmatprep.subr.bf16.mxu0 0
  %3651 = vmatpush2.bf16.msra.mxu0 %v3117
  %3652 = vmatprep.subr.bf16.mxu0 0
  %3653 = vmatpush2.bf16.msra.mxu0 %v3115
  %3654 = vmatprep.subr.bf16.mxu0 0
  %3655 = vmatpush2.bf16.msra.mxu0 %v3113
  %3656 = vmatprep.mubr.bf16.mxu0 %v2965
  %3657 = vmatmul.mubr.bf16.gmra.mxu0 %v2964
  %v3658 = vpop.f32.mrf.mxu0
  %v3659 = vadd.f32 %v3619, %v3658
  %v3660 = vpop.f32.mrf.mxu0
  %v3661 = vpop.f32.mrf.mxu0
  %v3662 = vpop.f32.mrf.mxu0
  %3663 = vdwg.mxu0
  %3664 = vmatprep.subr.bf16.mxu0 0
  %3665 = vmatpush1.bf16.msra.mxu0 %v3143
  %3666 = vmatprep.subr.bf16.mxu0 0
  %3667 = vmatpush1.bf16.msra.mxu0 %v3141
  %3668 = vmatprep.subr.bf16.mxu0 0
  %3669 = vmatpush1.bf16.msra.mxu0 %v3139
  %3670 = vmatprep.subr.bf16.mxu0 0
  %3671 = vmatpush1.bf16.msra.mxu0 %v3137
  %3672 = vmatprep.subr.bf16.mxu0 0
  %3673 = vmatpush1.bf16.msra.mxu0 %v3135
  %3674 = vmatprep.subr.bf16.mxu0 0
  %3675 = vmatpush1.bf16.msra.mxu0 %v3133
  %3676 = vmatprep.subr.bf16.mxu0 0
  %3677 = vmatpush1.bf16.msra.mxu0 %v3131
  %3678 = vmatprep.subr.bf16.mxu0 0
  %3679 = vmatpush1.bf16.msra.mxu0 %v3129
  %3680 = vmatprep.subr.bf16.mxu0 0
  %3681 = vmatpush2.bf16.msra.mxu0 %v3159
  %3682 = vmatprep.subr.bf16.mxu0 0
  %3683 = vmatpush2.bf16.msra.mxu0 %v3157
  %3684 = vmatprep.subr.bf16.mxu0 0
  %3685 = vmatpush2.bf16.msra.mxu0 %v3155
  %3686 = vmatprep.subr.bf16.mxu0 0
  %3687 = vmatpush2.bf16.msra.mxu0 %v3153
  %3688 = vmatprep.subr.bf16.mxu0 0
  %3689 = vmatpush2.bf16.msra.mxu0 %v3151
  %3690 = vmatprep.subr.bf16.mxu0 0
  %3691 = vmatpush2.bf16.msra.mxu0 %v3149
  %3692 = vmatprep.subr.bf16.mxu0 0
  %3693 = vmatpush2.bf16.msra.mxu0 %v3147
  %3694 = vmatprep.subr.bf16.mxu0 0
  %3695 = vmatpush2.bf16.msra.mxu0 %v3145
  %3696 = vmatprep.mubr.bf16.mxu0 %v2967
  %3697 = vmatmul.mubr.bf16.gmra.mxu0 %v2966
  %v3698 = vpop.f32.mrf.mxu0
  %v3699 = vadd.f32 %v3659, %v3698
  %v3700 = vpop.f32.mrf.mxu0
  %v3701 = vpop.f32.mrf.mxu0
  %v3702 = vpop.f32.mrf.mxu0
  %3703 = vdwg.mxu0
  %3704 = vmatprep.subr.bf16.mxu0 0
  %3705 = vmatpush1.bf16.msra.mxu0 %v3175
  %3706 = vmatprep.subr.bf16.mxu0 0
  %3707 = vmatpush1.bf16.msra.mxu0 %v3173
  %3708 = vmatprep.subr.bf16.mxu0 0
  %3709 = vmatpush1.bf16.msra.mxu0 %v3171
  %3710 = vmatprep.subr.bf16.mxu0 0
  %3711 = vmatpush1.bf16.msra.mxu0 %v3169
  %3712 = vmatprep.subr.bf16.mxu0 0
  %3713 = vmatpush1.bf16.msra.mxu0 %v3167
  %3714 = vmatprep.subr.bf16.mxu0 0
  %3715 = vmatpush1.bf16.msra.mxu0 %v3165
  %3716 = vmatprep.subr.bf16.mxu0 0
  %3717 = vmatpush1.bf16.msra.mxu0 %v3163
  %3718 = vmatprep.subr.bf16.mxu0 0
  %3719 = vmatpush1.bf16.msra.mxu0 %v3161
  %3720 = vmatprep.subr.bf16.mxu0 0
  %3721 = vmatpush2.bf16.msra.mxu0 %v3191
  %3722 = vmatprep.subr.bf16.mxu0 0
  %3723 = vmatpush2.bf16.msra.mxu0 %v3189
  %3724 = vmatprep.subr.bf16.mxu0 0
  %3725 = vmatpush2.bf16.msra.mxu0 %v3187
  %3726 = vmatprep.subr.bf16.mxu0 0
  %3727 = vmatpush2.bf16.msra.mxu0 %v3185
  %3728 = vmatprep.subr.bf16.mxu0 0
  %3729 = vmatpush2.bf16.msra.mxu0 %v3183
  %3730 = vmatprep.subr.bf16.mxu0 0
  %3731 = vmatpush2.bf16.msra.mxu0 %v3181
  %3732 = vmatprep.subr.bf16.mxu0 0
  %3733 = vmatpush2.bf16.msra.mxu0 %v3179
  %3734 = vmatprep.subr.bf16.mxu0 0
  %3735 = vmatpush2.bf16.msra.mxu0 %v3177
  %3736 = vmatprep.mubr.bf16.mxu0 %v2969
  %3737 = vmatmul.mubr.bf16.gmra.mxu0 %v2968
  %v3738 = vpop.f32.mrf.mxu0
  %v3739 = vadd.f32 %v3699, %v3738
  %v3740 = vpop.f32.mrf.mxu0
  %v3741 = vpop.f32.mrf.mxu0
  %v3742 = vpop.f32.mrf.mxu0
  %3743 = vdwg.mxu0
  %3744 = vmatprep.subr.bf16.mxu0 0
  %3745 = vmatpush1.bf16.msra.mxu0 %v3207
  %3746 = vmatprep.subr.bf16.mxu0 0
  %3747 = vmatpush1.bf16.msra.mxu0 %v3205
  %3748 = vmatprep.subr.bf16.mxu0 0
  %3749 = vmatpush1.bf16.msra.mxu0 %v3203
  %3750 = vmatprep.subr.bf16.mxu0 0
  %3751 = vmatpush1.bf16.msra.mxu0 %v3201
  %3752 = vmatprep.subr.bf16.mxu0 0
  %3753 = vmatpush1.bf16.msra.mxu0 %v3199
  %3754 = vmatprep.subr.bf16.mxu0 0
  %3755 = vmatpush1.bf16.msra.mxu0 %v3197
  %3756 = vmatprep.subr.bf16.mxu0 0
  %3757 = vmatpush1.bf16.msra.mxu0 %v3195
  %3758 = vmatprep.subr.bf16.mxu0 0
  %3759 = vmatpush1.bf16.msra.mxu0 %v3193
  %3760 = vmatprep.subr.bf16.mxu0 0
  %3761 = vmatpush2.bf16.msra.mxu0 %v3223
  %3762 = vmatprep.subr.bf16.mxu0 0
  %3763 = vmatpush2.bf16.msra.mxu0 %v3221
  %3764 = vmatprep.subr.bf16.mxu0 0
  %3765 = vmatpush2.bf16.msra.mxu0 %v3219
  %3766 = vmatprep.subr.bf16.mxu0 0
  %3767 = vmatpush2.bf16.msra.mxu0 %v3217
  %3768 = vmatprep.subr.bf16.mxu0 0
  %3769 = vmatpush2.bf16.msra.mxu0 %v3215
  %3770 = vmatprep.subr.bf16.mxu0 0
  %3771 = vmatpush2.bf16.msra.mxu0 %v3213
  %3772 = vmatprep.subr.bf16.mxu0 0
  %3773 = vmatpush2.bf16.msra.mxu0 %v3211
  %3774 = vmatprep.subr.bf16.mxu0 0
  %3775 = vmatpush2.bf16.msra.mxu0 %v3209
  %3776 = vmatprep.mubr.bf16.mxu0 %v2971
  %3777 = vmatmul.mubr.bf16.gmra.mxu0 %v2970
  %v3778 = vpop.f32.mrf.mxu0
  %v3779 = vadd.f32 %v3739, %v3778
  %v3780 = vpop.f32.mrf.mxu0
  %v3781 = vpop.f32.mrf.mxu0
  %v3782 = vpop.f32.mrf.mxu0
  %3783 = vdwg.mxu0
  %3784 = vmatprep.subr.bf16.mxu0 0
  %3785 = vmatpush1.bf16.msra.mxu0 %v3239
  %3786 = vmatprep.subr.bf16.mxu0 0
  %3787 = vmatpush1.bf16.msra.mxu0 %v3237
  %3788 = vmatprep.subr.bf16.mxu0 0
  %3789 = vmatpush1.bf16.msra.mxu0 %v3235
  %3790 = vmatprep.subr.bf16.mxu0 0
  %3791 = vmatpush1.bf16.msra.mxu0 %v3233
  %3792 = vmatprep.subr.bf16.mxu0 0
  %3793 = vmatpush1.bf16.msra.mxu0 %v3231
  %3794 = vmatprep.subr.bf16.mxu0 0
  %3795 = vmatpush1.bf16.msra.mxu0 %v3229
  %3796 = vmatprep.subr.bf16.mxu0 0
  %3797 = vmatpush1.bf16.msra.mxu0 %v3227
  %3798 = vmatprep.subr.bf16.mxu0 0
  %3799 = vmatpush1.bf16.msra.mxu0 %v3225
  %3800 = vmatprep.subr.bf16.mxu0 0
  %3801 = vmatpush2.bf16.msra.mxu0 %v3255
  %3802 = vmatprep.subr.bf16.mxu0 0
  %3803 = vmatpush2.bf16.msra.mxu0 %v3253
  %3804 = vmatprep.subr.bf16.mxu0 0
  %3805 = vmatpush2.bf16.msra.mxu0 %v3251
  %3806 = vmatprep.subr.bf16.mxu0 0
  %3807 = vmatpush2.bf16.msra.mxu0 %v3249
  %3808 = vmatprep.subr.bf16.mxu0 0
  %3809 = vmatpush2.bf16.msra.mxu0 %v3247
  %3810 = vmatprep.subr.bf16.mxu0 0
  %3811 = vmatpush2.bf16.msra.mxu0 %v3245
  %3812 = vmatprep.subr.bf16.mxu0 0
  %3813 = vmatpush2.bf16.msra.mxu0 %v3243
  %3814 = vmatprep.subr.bf16.mxu0 0
  %3815 = vmatpush2.bf16.msra.mxu0 %v3241
  %3816 = vmatprep.mubr.bf16.mxu0 %v2973
  %3817 = vmatmul.mubr.bf16.gmra.mxu0 %v2972
  %v3818 = vpop.f32.mrf.mxu0
  %v3819 = vadd.f32 %v3779, %v3818
  %v3820 = vpop.f32.mrf.mxu0
  %v3821 = vpop.f32.mrf.mxu0
  %v3822 = vpop.f32.mrf.mxu0
  %3823 = vdwg.mxu0
  %3824 = vmatprep.subr.bf16.mxu0 0
  %3825 = vmatpush1.bf16.msra.mxu0 %v3271
  %3826 = vmatprep.subr.bf16.mxu0 0
  %3827 = vmatpush1.bf16.msra.mxu0 %v3269
  %3828 = vmatprep.subr.bf16.mxu0 0
  %3829 = vmatpush1.bf16.msra.mxu0 %v3267
  %3830 = vmatprep.subr.bf16.mxu0 0
  %3831 = vmatpush1.bf16.msra.mxu0 %v3265
  %3832 = vmatprep.subr.bf16.mxu0 0
  %3833 = vmatpush1.bf16.msra.mxu0 %v3263
  %3834 = vmatprep.subr.bf16.mxu0 0
  %3835 = vmatpush1.bf16.msra.mxu0 %v3261
  %3836 = vmatprep.subr.bf16.mxu0 0
  %3837 = vmatpush1.bf16.msra.mxu0 %v3259
  %3838 = vmatprep.subr.bf16.mxu0 0
  %3839 = vmatpush1.bf16.msra.mxu0 %v3257
  %3840 = vmatprep.subr.bf16.mxu0 0
  %3841 = vmatpush2.bf16.msra.mxu0 %v3287
  %3842 = vmatprep.subr.bf16.mxu0 0
  %3843 = vmatpush2.bf16.msra.mxu0 %v3285
  %3844 = vmatprep.subr.bf16.mxu0 0
  %3845 = vmatpush2.bf16.msra.mxu0 %v3283
  %3846 = vmatprep.subr.bf16.mxu0 0
  %3847 = vmatpush2.bf16.msra.mxu0 %v3281
  %3848 = vmatprep.subr.bf16.mxu0 0
  %3849 = vmatpush2.bf16.msra.mxu0 %v3279
  %3850 = vmatprep.subr.bf16.mxu0 0
  %3851 = vmatpush2.bf16.msra.mxu0 %v3277
  %3852 = vmatprep.subr.bf16.mxu0 0
  %3853 = vmatpush2.bf16.msra.mxu0 %v3275
  %3854 = vmatprep.subr.bf16.mxu0 0
  %3855 = vmatpush2.bf16.msra.mxu0 %v3273
  %3856 = vmatprep.mubr.bf16.mxu0 %v2975
  %3857 = vmatmul.mubr.bf16.gmra.mxu0 %v2974
  %v3858 = vpop.f32.mrf.mxu0
  %v3859 = vadd.f32 %v3819, %v3858
  %v3860 = vpop.f32.mrf.mxu0
  %v3861 = vpop.f32.mrf.mxu0
  %v3862 = vpop.f32.mrf.mxu0
  %3863 = vdwg.mxu0
  %3864 = vmatprep.subr.bf16.mxu0 0
  %3865 = vmatpush1.bf16.msra.mxu0 %v3303
  %3866 = vmatprep.subr.bf16.mxu0 0
  %3867 = vmatpush1.bf16.msra.mxu0 %v3301
  %3868 = vmatprep.subr.bf16.mxu0 0
  %3869 = vmatpush1.bf16.msra.mxu0 %v3299
  %3870 = vmatprep.subr.bf16.mxu0 0
  %3871 = vmatpush1.bf16.msra.mxu0 %v3297
  %3872 = vmatprep.subr.bf16.mxu0 0
  %3873 = vmatpush1.bf16.msra.mxu0 %v3295
  %3874 = vmatprep.subr.bf16.mxu0 0
  %3875 = vmatpush1.bf16.msra.mxu0 %v3293
  %3876 = vmatprep.subr.bf16.mxu0 0
  %3877 = vmatpush1.bf16.msra.mxu0 %v3291
  %3878 = vmatprep.subr.bf16.mxu0 0
  %3879 = vmatpush1.bf16.msra.mxu0 %v3289
  %3880 = vmatprep.subr.bf16.mxu0 0
  %3881 = vmatpush2.bf16.msra.mxu0 %v3319
  %3882 = vmatprep.subr.bf16.mxu0 0
  %3883 = vmatpush2.bf16.msra.mxu0 %v3317
  %3884 = vmatprep.subr.bf16.mxu0 0
  %3885 = vmatpush2.bf16.msra.mxu0 %v3315
  %3886 = vmatprep.subr.bf16.mxu0 0
  %3887 = vmatpush2.bf16.msra.mxu0 %v3313
  %3888 = vmatprep.subr.bf16.mxu0 0
  %3889 = vmatpush2.bf16.msra.mxu0 %v3311
  %3890 = vmatprep.subr.bf16.mxu0 0
  %3891 = vmatpush2.bf16.msra.mxu0 %v3309
  %3892 = vmatprep.subr.bf16.mxu0 0
  %3893 = vmatpush2.bf16.msra.mxu0 %v3307
  %3894 = vmatprep.subr.bf16.mxu0 0
  %3895 = vmatpush2.bf16.msra.mxu0 %v3305
  %3896 = vmatprep.mubr.bf16.mxu0 %v2977
  %3897 = vmatmul.mubr.bf16.gmra.mxu0 %v2976
  %v3898 = vpop.f32.mrf.mxu0
  %v3899 = vadd.f32 %v3859, %v3898
  %v3900 = vpop.f32.mrf.mxu0
  %v3901 = vpop.f32.mrf.mxu0
  %v3902 = vpop.f32.mrf.mxu0
  %3903 = vdwg.mxu0
  %3904 = vmatprep.subr.bf16.mxu0 0
  %3905 = vmatpush1.bf16.msra.mxu0 %v3335
  %3906 = vmatprep.subr.bf16.mxu0 0
  %3907 = vmatpush1.bf16.msra.mxu0 %v3333
  %3908 = vmatprep.subr.bf16.mxu0 0
  %3909 = vmatpush1.bf16.msra.mxu0 %v3331
  %3910 = vmatprep.subr.bf16.mxu0 0
  %3911 = vmatpush1.bf16.msra.mxu0 %v3329
  %3912 = vmatprep.subr.bf16.mxu0 0
  %3913 = vmatpush1.bf16.msra.mxu0 %v3327
  %3914 = vmatprep.subr.bf16.mxu0 0
  %3915 = vmatpush1.bf16.msra.mxu0 %v3325
  %3916 = vmatprep.subr.bf16.mxu0 0
  %3917 = vmatpush1.bf16.msra.mxu0 %v3323
  %3918 = vmatprep.subr.bf16.mxu0 0
  %3919 = vmatpush1.bf16.msra.mxu0 %v3321
  %3920 = vmatprep.subr.bf16.mxu0 0
  %3921 = vmatpush2.bf16.msra.mxu0 0
  %3922 = vmatprep.subr.bf16.mxu0 0
  %3923 = vmatpush2.bf16.msra.mxu0 0
  %3924 = vmatprep.subr.bf16.mxu0 0
  %3925 = vmatpush2.bf16.msra.mxu0 0
  %3926 = vmatprep.subr.bf16.mxu0 0
  %3927 = vmatpush2.bf16.msra.mxu0 0
  %3928 = vmatprep.subr.bf16.mxu0 0
  %3929 = vmatpush2.bf16.msra.mxu0 0
  %3930 = vmatprep.subr.bf16.mxu0 0
  %3931 = vmatpush2.bf16.msra.mxu0 0
  %3932 = vmatprep.subr.bf16.mxu0 0
  %3933 = vmatpush2.bf16.msra.mxu0 0
  %3934 = vmatprep.subr.bf16.mxu0 0
  %3935 = vmatpush2.bf16.msra.mxu0 0
  %3936 = vmatprep.mubr.bf16.mxu0 0
  %3937 = vmatmul.mubr.bf16.gmra.mxu0 %v2978
  %v3938 = vpop.f32.mrf.mxu0
  %v3939 = vadd.f32 %v3899, %v3938
  %v3940 = vpop.f32.mrf.mxu0
  %v3941 = vpop.f32.mrf.mxu0
  %v3942 = vpop.f32.mrf.mxu0
  %3943 = vdwg.mxu0
  %s3944 = scalar_lea.vmem %s0, 252
  %v3945 = vld [vmem:[%s3944] sm:$0xff]
  %v3946 = vld [vmem:[%s3944 + $0x8] sm:$0xff]
  %v3947 = vld [vmem:[%s3944 + $0x10] sm:$0xff]
  %v3948 = vld [vmem:[%s3944 + $0x18] sm:$0xff]
  %v3949 = vld [vmem:[%s3944 + $0x20] sm:$0xff]
  %v3950 = vld [vmem:[%s3944 + $0x28] sm:$0xff]
  %v3951 = vld [vmem:[%s3944 + $0x30] sm:$0xff]
  %v3952 = vld [vmem:[%s3944 + $0x38] sm:$0xff]
  %v3953 = vld [vmem:[%s3944 + $0x40] sm:$0xff]
  %v3954 = vld [vmem:[%s3944 + $0x48] sm:$0xff]
  %v3955 = vld [vmem:[%s3944 + $0x50] sm:$0xf]
  %v3967 = vunpack.c.l.b16 %v3945
  %v3968 = vunpack.c.h.b16 %v3945
  %v3969 = vunpack.c.l.b16 %v3946
  %v3970 = vunpack.c.h.b16 %v3946
  %v3971 = vunpack.c.l.b16 %v3947
  %v3972 = vunpack.c.h.b16 %v3947
  %v3973 = vunpack.c.l.b16 %v3948
  %v3974 = vunpack.c.h.b16 %v3948
  %v3975 = vunpack.c.l.b16 %v3949
  %v3976 = vunpack.c.h.b16 %v3949
  %v3977 = vunpack.c.l.b16 %v3950
  %v3978 = vunpack.c.h.b16 %v3950
  %v3979 = vunpack.c.l.b16 %v3951
  %v3980 = vunpack.c.h.b16 %v3951
  %v3981 = vunpack.c.l.b16 %v3952
  %v3982 = vunpack.c.h.b16 %v3952
  %v3983 = vunpack.c.l.b16 %v3953
  %v3984 = vunpack.c.h.b16 %v3953
  %v3985 = vunpack.c.l.b16 %v3954
  %v3986 = vunpack.c.h.b16 %v3954
  %v3987 = vunpack.c.l.b16 %v3955
  %v3988 = vpack.c.b16 %v3967, %v3967
  %v3989 = vpack.c.b16 %v3968, %v3968
  %v3990 = vpack.c.b16 %v3969, %v3969
  %v3991 = vpack.c.b16 %v3970, %v3970
  %v3992 = vpack.c.b16 %v3971, %v3971
  %v3993 = vpack.c.b16 %v3972, %v3972
  %v3994 = vpack.c.b16 %v3973, %v3973
  %v3995 = vpack.c.b16 %v3974, %v3974
  %v3996 = vpack.c.b16 %v3975, %v3975
  %v3997 = vpack.c.b16 %v3976, %v3976
  %v3998 = vpack.c.b16 %v3977, %v3977
  %v3999 = vpack.c.b16 %v3978, %v3978
  %v4000 = vpack.c.b16 %v3979, %v3979
  %v4001 = vpack.c.b16 %v3980, %v3980
  %v4002 = vpack.c.b16 %v3981, %v3981
  %v4003 = vpack.c.b16 %v3982, %v3982
  %v4004 = vpack.c.b16 %v3983, %v3983
  %v4005 = vpack.c.b16 %v3984, %v3984
  %v4006 = vpack.c.b16 %v3985, %v3985
  %v4007 = vpack.c.b16 %v3986, %v3986
  %v4008 = vpack.c.b16 %v3987, %v3987
  %4030 = vrot.lane.b32.xlu0 %v1108, 32
  %v4031 = vpop.permute.xlu0 %4030
  %4032 = vrot.lane.b32.xlu0 %v1109, 32
  %v4033 = vpop.permute.xlu0 %4032
  %4034 = vrot.lane.b32.xlu0 %v1110, 32
  %v4035 = vpop.permute.xlu0 %4034
  %4036 = vrot.lane.b32.xlu0 %v1111, 32
  %v4037 = vpop.permute.xlu0 %4036
  %4038 = vrot.lane.b32.xlu0 %v1112, 32
  %v4039 = vpop.permute.xlu0 %4038
  %4040 = vrot.lane.b32.xlu0 %v1113, 32
  %v4041 = vpop.permute.xlu0 %4040
  %4042 = vrot.lane.b32.xlu0 %v1114, 32
  %v4043 = vpop.permute.xlu0 %4042
  %4044 = vrot.lane.b32.xlu0 %v1115, 32
  %v4045 = vpop.permute.xlu0 %4044
  %4046 = vrot.lane.b32.xlu0 %v1116, 32
  %v4047 = vpop.permute.xlu0 %4046
  %4048 = vrot.lane.b32.xlu0 %v1117, 32
  %v4049 = vpop.permute.xlu0 %4048
  %4050 = vrot.lane.b32.xlu0 %v1118, 32
  %v4051 = vpop.permute.xlu0 %4050
  %4052 = vrot.lane.b32.xlu0 %v1119, 32
  %v4053 = vpop.permute.xlu0 %4052
  %4054 = vrot.lane.b32.xlu0 %v1120, 32
  %v4055 = vpop.permute.xlu0 %4054
  %4056 = vrot.lane.b32.xlu0 %v1121, 32
  %v4057 = vpop.permute.xlu0 %4056
  %4058 = vrot.lane.b32.xlu0 %v1122, 32
  %v4059 = vpop.permute.xlu0 %4058
  %4060 = vrot.lane.b32.xlu0 %v1123, 32
  %v4061 = vpop.permute.xlu0 %4060
  %4062 = vrot.lane.b32.xlu0 %v1124, 32
  %v4063 = vpop.permute.xlu0 %4062
  %4064 = vrot.lane.b32.xlu0 %v1125, 32
  %v4065 = vpop.permute.xlu0 %4064
  %4066 = vrot.lane.b32.xlu0 %v1126, 32
  %v4067 = vpop.permute.xlu0 %4066
  %4068 = vrot.lane.b32.xlu0 %v1127, 32
  %v4069 = vpop.permute.xlu0 %4068
  %4070 = vrot.lane.b32.xlu0 %v1128, 32
  %v4071 = vpop.permute.xlu0 %4070
  %4072 = vrot.lane.b32.xlu0 %v1129, 32
  %v4073 = vpop.permute.xlu0 %4072
  %4074 = vrot.lane.b32.xlu0 %v1130, 32
  %v4075 = vpop.permute.xlu0 %4074
  %4076 = vrot.lane.b32.xlu0 %v1131, 32
  %v4077 = vpop.permute.xlu0 %4076
  %4078 = vrot.lane.b32.xlu0 %v1132, 32
  %v4079 = vpop.permute.xlu0 %4078
  %4080 = vrot.lane.b32.xlu0 %v1133, 32
  %v4081 = vpop.permute.xlu0 %4080
  %4082 = vrot.lane.b32.xlu0 %v1134, 32
  %v4083 = vpop.permute.xlu0 %4082
  %4084 = vrot.lane.b32.xlu0 %v1135, 32
  %v4085 = vpop.permute.xlu0 %4084
  %4086 = vrot.lane.b32.xlu0 %v1136, 32
  %v4087 = vpop.permute.xlu0 %4086
  %4088 = vrot.lane.b32.xlu0 %v1137, 32
  %v4089 = vpop.permute.xlu0 %4088
  %4090 = vrot.lane.b32.xlu0 %v1138, 32
  %v4091 = vpop.permute.xlu0 %4090
  %4092 = vrot.lane.b32.xlu0 %v1139, 32
  %v4093 = vpop.permute.xlu0 %4092
  %4094 = vrot.lane.b32.xlu0 %v1140, 32
  %v4095 = vpop.permute.xlu0 %4094
  %4096 = vrot.lane.b32.xlu0 %v1141, 32
  %v4097 = vpop.permute.xlu0 %4096
  %4098 = vrot.lane.b32.xlu0 %v1142, 32
  %v4099 = vpop.permute.xlu0 %4098
  %4100 = vrot.lane.b32.xlu0 %v1143, 32
  %v4101 = vpop.permute.xlu0 %4100
  %4102 = vrot.lane.b32.xlu0 %v1144, 32
  %v4103 = vpop.permute.xlu0 %4102
  %4104 = vrot.lane.b32.xlu0 %v1145, 32
  %v4105 = vpop.permute.xlu0 %4104
  %4106 = vrot.lane.b32.xlu0 %v1146, 32
  %v4107 = vpop.permute.xlu0 %4106
  %4108 = vrot.lane.b32.xlu0 %v1147, 32
  %v4109 = vpop.permute.xlu0 %4108
  %4110 = vrot.lane.b32.xlu0 %v1148, 32
  %v4111 = vpop.permute.xlu0 %4110
  %4112 = vrot.lane.b32.xlu0 %v1149, 32
  %v4113 = vpop.permute.xlu0 %4112
  %4114 = vrot.lane.b32.xlu0 %v1150, 32
  %v4115 = vpop.permute.xlu0 %4114
  %4116 = vrot.lane.b32.xlu0 %v1151, 32
  %v4117 = vpop.permute.xlu0 %4116
  %4118 = vrot.lane.b32.xlu0 %v1152, 32
  %v4119 = vpop.permute.xlu0 %4118
  %4120 = vrot.lane.b32.xlu0 %v1153, 32
  %v4121 = vpop.permute.xlu0 %4120
  %4122 = vrot.lane.b32.xlu0 %v1154, 32
  %v4123 = vpop.permute.xlu0 %4122
  %4124 = vrot.lane.b32.xlu0 %v1155, 32
  %v4125 = vpop.permute.xlu0 %4124
  %4126 = vrot.lane.b32.xlu0 %v1156, 32
  %v4127 = vpop.permute.xlu0 %4126
  %4128 = vrot.lane.b32.xlu0 %v1157, 32
  %v4129 = vpop.permute.xlu0 %4128
  %4130 = vrot.lane.b32.xlu0 %v1158, 32
  %v4131 = vpop.permute.xlu0 %4130
  %4132 = vrot.lane.b32.xlu0 %v1159, 32
  %v4133 = vpop.permute.xlu0 %4132
  %4134 = vrot.lane.b32.xlu0 %v1160, 32
  %v4135 = vpop.permute.xlu0 %4134
  %4136 = vrot.lane.b32.xlu0 %v1161, 32
  %v4137 = vpop.permute.xlu0 %4136
  %4138 = vrot.lane.b32.xlu0 %v1162, 32
  %v4139 = vpop.permute.xlu0 %4138
  %4140 = vrot.lane.b32.xlu0 %v1163, 32
  %v4141 = vpop.permute.xlu0 %4140
  %4142 = vrot.lane.b32.xlu0 %v1164, 32
  %v4143 = vpop.permute.xlu0 %4142
  %4144 = vrot.lane.b32.xlu0 %v1165, 32
  %v4145 = vpop.permute.xlu0 %4144
  %4146 = vrot.lane.b32.xlu0 %v1166, 32
  %v4147 = vpop.permute.xlu0 %4146
  %4148 = vrot.lane.b32.xlu0 %v1167, 32
  %v4149 = vpop.permute.xlu0 %4148
  %4150 = vrot.lane.b32.xlu0 %v1168, 32
  %v4151 = vpop.permute.xlu0 %4150
  %4152 = vrot.lane.b32.xlu0 %v1169, 32
  %v4153 = vpop.permute.xlu0 %4152
  %4154 = vrot.lane.b32.xlu0 %v1170, 32
  %v4155 = vpop.permute.xlu0 %4154
  %4156 = vrot.lane.b32.xlu0 %v1171, 32
  %v4157 = vpop.permute.xlu0 %4156
  %4158 = vrot.lane.b32.xlu0 %v1172, 32
  %v4159 = vpop.permute.xlu0 %4158
  %4160 = vrot.lane.b32.xlu0 %v1173, 32
  %v4161 = vpop.permute.xlu0 %4160
  %4162 = vrot.lane.b32.xlu0 %v1174, 32
  %v4163 = vpop.permute.xlu0 %4162
  %4164 = vrot.lane.b32.xlu0 %v1175, 32
  %v4165 = vpop.permute.xlu0 %4164
  %4166 = vrot.lane.b32.xlu0 %v1176, 32
  %v4167 = vpop.permute.xlu0 %4166
  %4168 = vrot.lane.b32.xlu0 %v1177, 32
  %v4169 = vpop.permute.xlu0 %4168
  %4170 = vrot.lane.b32.xlu0 %v1178, 32
  %v4171 = vpop.permute.xlu0 %4170
  %4172 = vrot.lane.b32.xlu0 %v1179, 32
  %v4173 = vpop.permute.xlu0 %4172
  %4174 = vrot.lane.b32.xlu0 %v1180, 32
  %v4175 = vpop.permute.xlu0 %4174
  %4176 = vrot.lane.b32.xlu0 %v1181, 32
  %v4177 = vpop.permute.xlu0 %4176
  %4178 = vrot.lane.b32.xlu0 %v1182, 32
  %v4179 = vpop.permute.xlu0 %4178
  %4180 = vrot.lane.b32.xlu0 %v1183, 32
  %v4181 = vpop.permute.xlu0 %4180
  %4182 = vrot.lane.b32.xlu0 %v1184, 32
  %v4183 = vpop.permute.xlu0 %4182
  %4184 = vrot.lane.b32.xlu0 %v1185, 32
  %v4185 = vpop.permute.xlu0 %4184
  %4186 = vrot.lane.b32.xlu0 %v1186, 32
  %v4187 = vpop.permute.xlu0 %4186
  %4188 = vrot.lane.b32.xlu0 %v1187, 32
  %v4189 = vpop.permute.xlu0 %4188
  %4190 = vrot.lane.b32.xlu0 %v1188, 32
  %v4191 = vpop.permute.xlu0 %4190
  %4192 = vrot.lane.b32.xlu0 %v1189, 32
  %v4193 = vpop.permute.xlu0 %4192
  %4194 = vrot.lane.b32.xlu0 %v1190, 32
  %v4195 = vpop.permute.xlu0 %4194
  %4196 = vrot.lane.b32.xlu0 %v1191, 32
  %v4197 = vpop.permute.xlu0 %4196
  %4198 = vrot.lane.b32.xlu0 %v1192, 32
  %v4199 = vpop.permute.xlu0 %4198
  %4200 = vrot.lane.b32.xlu0 %v1193, 32
  %v4201 = vpop.permute.xlu0 %4200
  %4202 = vrot.lane.b32.xlu0 %v1194, 32
  %v4203 = vpop.permute.xlu0 %4202
  %4204 = vrot.lane.b32.xlu0 %v1195, 32
  %v4205 = vpop.permute.xlu0 %4204
  %4206 = vrot.lane.b32.xlu0 %v1196, 32
  %v4207 = vpop.permute.xlu0 %4206
  %4208 = vrot.lane.b32.xlu0 %v1197, 32
  %v4209 = vpop.permute.xlu0 %4208
  %4210 = vrot.lane.b32.xlu0 %v1198, 32
  %v4211 = vpop.permute.xlu0 %4210
  %4212 = vrot.lane.b32.xlu0 %v1199, 32
  %v4213 = vpop.permute.xlu0 %4212
  %4214 = vrot.lane.b32.xlu0 %v1200, 32
  %v4215 = vpop.permute.xlu0 %4214
  %4216 = vrot.lane.b32.xlu0 %v1201, 32
  %v4217 = vpop.permute.xlu0 %4216
  %4218 = vrot.lane.b32.xlu0 %v1202, 32
  %v4219 = vpop.permute.xlu0 %4218
  %4220 = vrot.lane.b32.xlu0 %v1203, 32
  %v4221 = vpop.permute.xlu0 %4220
  %4222 = vrot.lane.b32.xlu0 %v1204, 32
  %v4223 = vpop.permute.xlu0 %4222
  %4224 = vrot.lane.b32.xlu0 %v1205, 32
  %v4225 = vpop.permute.xlu0 %4224
  %4226 = vrot.lane.b32.xlu0 %v1206, 32
  %v4227 = vpop.permute.xlu0 %4226
  %4228 = vrot.lane.b32.xlu0 %v1207, 32
  %v4229 = vpop.permute.xlu0 %4228
  %4230 = vrot.lane.b32.xlu0 %v1208, 32
  %v4231 = vpop.permute.xlu0 %4230
  %4232 = vrot.lane.b32.xlu0 %v1209, 32
  %v4233 = vpop.permute.xlu0 %4232
  %4234 = vrot.lane.b32.xlu0 %v1210, 32
  %v4235 = vpop.permute.xlu0 %4234
  %4236 = vrot.lane.b32.xlu0 %v1211, 32
  %v4237 = vpop.permute.xlu0 %4236
  %4238 = vrot.lane.b32.xlu0 %v1212, 32
  %v4239 = vpop.permute.xlu0 %4238
  %4240 = vrot.lane.b32.xlu0 %v1213, 32
  %v4241 = vpop.permute.xlu0 %4240
  %4242 = vrot.lane.b32.xlu0 %v1214, 32
  %v4243 = vpop.permute.xlu0 %4242
  %4244 = vrot.lane.b32.xlu0 %v1215, 32
  %v4245 = vpop.permute.xlu0 %4244
  %4246 = vrot.lane.b32.xlu0 %v1216, 32
  %v4247 = vpop.permute.xlu0 %4246
  %4248 = vrot.lane.b32.xlu0 %v1217, 32
  %v4249 = vpop.permute.xlu0 %4248
  %4250 = vrot.lane.b32.xlu0 %v1218, 32
  %v4251 = vpop.permute.xlu0 %4250
  %4252 = vrot.lane.b32.xlu0 %v1219, 32
  %v4253 = vpop.permute.xlu0 %4252
  %4254 = vrot.lane.b32.xlu0 %v1220, 32
  %v4255 = vpop.permute.xlu0 %4254
  %4256 = vrot.lane.b32.xlu0 %v1221, 32
  %v4257 = vpop.permute.xlu0 %4256
  %4258 = vrot.lane.b32.xlu0 %v1222, 32
  %v4259 = vpop.permute.xlu0 %4258
  %4260 = vrot.lane.b32.xlu0 %v1223, 32
  %v4261 = vpop.permute.xlu0 %4260
  %4262 = vrot.lane.b32.xlu0 %v1224, 32
  %v4263 = vpop.permute.xlu0 %4262
  %4264 = vrot.lane.b32.xlu0 %v1225, 32
  %v4265 = vpop.permute.xlu0 %4264
  %4266 = vrot.lane.b32.xlu0 %v1226, 32
  %v4267 = vpop.permute.xlu0 %4266
  %4268 = vrot.lane.b32.xlu0 %v1227, 32
  %v4269 = vpop.permute.xlu0 %4268
  %4270 = vrot.lane.b32.xlu0 %v1228, 32
  %v4271 = vpop.permute.xlu0 %4270
  %4272 = vrot.lane.b32.xlu0 %v1229, 32
  %v4273 = vpop.permute.xlu0 %4272
  %4274 = vrot.lane.b32.xlu0 %v1230, 32
  %v4275 = vpop.permute.xlu0 %4274
  %4276 = vrot.lane.b32.xlu0 %v1231, 32
  %v4277 = vpop.permute.xlu0 %4276
  %4278 = vrot.lane.b32.xlu0 %v1232, 32
  %v4279 = vpop.permute.xlu0 %4278
  %4280 = vrot.lane.b32.xlu0 %v1233, 32
  %v4281 = vpop.permute.xlu0 %4280
  %4282 = vrot.lane.b32.xlu0 %v1234, 32
  %v4283 = vpop.permute.xlu0 %4282
  %4284 = vrot.lane.b32.xlu0 %v1235, 32
  %v4285 = vpop.permute.xlu0 %4284
  %4286 = vrot.lane.b32.xlu0 %v1236, 32
  %v4287 = vpop.permute.xlu0 %4286
  %4288 = vrot.lane.b32.xlu0 %v1237, 32
  %v4289 = vpop.permute.xlu0 %4288
  %4290 = vrot.lane.b32.xlu0 %v1238, 32
  %v4291 = vpop.permute.xlu0 %4290
  %4292 = vrot.lane.b32.xlu0 %v1239, 32
  %v4293 = vpop.permute.xlu0 %4292
  %4294 = vrot.lane.b32.xlu0 %v1240, 32
  %v4295 = vpop.permute.xlu0 %4294
  %4296 = vrot.lane.b32.xlu0 %v1241, 32
  %v4297 = vpop.permute.xlu0 %4296
  %4298 = vrot.lane.b32.xlu0 %v1242, 32
  %v4299 = vpop.permute.xlu0 %4298
  %4300 = vrot.lane.b32.xlu0 %v1243, 32
  %v4301 = vpop.permute.xlu0 %4300
  %4302 = vrot.lane.b32.xlu0 %v1244, 32
  %v4303 = vpop.permute.xlu0 %4302
  %4304 = vrot.lane.b32.xlu0 %v1245, 32
  %v4305 = vpop.permute.xlu0 %4304
  %4306 = vrot.lane.b32.xlu0 %v1246, 32
  %v4307 = vpop.permute.xlu0 %4306
  %4308 = vrot.lane.b32.xlu0 %v1247, 32
  %v4309 = vpop.permute.xlu0 %4308
  %4310 = vrot.lane.b32.xlu0 %v1248, 32
  %v4311 = vpop.permute.xlu0 %4310
  %4312 = vrot.lane.b32.xlu0 %v1249, 32
  %v4313 = vpop.permute.xlu0 %4312
  %4314 = vrot.lane.b32.xlu0 %v1250, 32
  %v4315 = vpop.permute.xlu0 %4314
  %4316 = vrot.lane.b32.xlu0 %v1251, 32
  %v4317 = vpop.permute.xlu0 %4316
  %4318 = vrot.lane.b32.xlu0 %v1252, 32
  %v4319 = vpop.permute.xlu0 %4318
  %4320 = vrot.lane.b32.xlu0 %v1253, 32
  %v4321 = vpop.permute.xlu0 %4320
  %4322 = vrot.lane.b32.xlu0 %v1254, 32
  %v4323 = vpop.permute.xlu0 %4322
  %4324 = vrot.lane.b32.xlu0 %v1255, 32
  %v4325 = vpop.permute.xlu0 %4324
  %4326 = vrot.lane.b32.xlu0 %v1256, 32
  %v4327 = vpop.permute.xlu0 %4326
  %4328 = vrot.lane.b32.xlu0 %v1257, 32
  %v4329 = vpop.permute.xlu0 %4328
  %4330 = vrot.lane.b32.xlu0 %v1258, 32
  %v4331 = vpop.permute.xlu0 %4330
  %4332 = vrot.lane.b32.xlu0 %v1259, 32
  %v4333 = vpop.permute.xlu0 %4332
  %4334 = vrot.lane.b32.xlu0 %v1260, 32
  %v4335 = vpop.permute.xlu0 %4334
  %4336 = vrot.lane.b32.xlu0 %v1261, 32
  %v4337 = vpop.permute.xlu0 %4336
  %4338 = vrot.lane.b32.xlu0 %v1262, 32
  %v4339 = vpop.permute.xlu0 %4338
  %4340 = vrot.lane.b32.xlu0 %v1263, 32
  %v4341 = vpop.permute.xlu0 %4340
  %4342 = vrot.lane.b32.xlu0 %v1264, 32
  %v4343 = vpop.permute.xlu0 %4342
  %4344 = vrot.lane.b32.xlu0 %v1265, 32
  %v4345 = vpop.permute.xlu0 %4344
  %4346 = vrot.lane.b32.xlu0 %v1266, 32
  %v4347 = vpop.permute.xlu0 %4346
  %4348 = vrot.lane.b32.xlu0 %v1267, 32
  %v4349 = vpop.permute.xlu0 %4348
  %4350 = vrot.lane.b32.xlu0 %v1268, 32
  %v4351 = vpop.permute.xlu0 %4350
  %4352 = vrot.lane.b32.xlu0 %v1269, 32
  %v4353 = vpop.permute.xlu0 %4352
  %4354 = vrot.lane.b32.xlu0 %v1270, 32
  %v4355 = vpop.permute.xlu0 %4354
  %4356 = vrot.lane.b32.xlu0 %v1271, 32
  %v4357 = vpop.permute.xlu0 %4356
  %4358 = vrot.lane.b32.xlu0 %v1272, 32
  %v4359 = vpop.permute.xlu0 %4358
  %4360 = vrot.lane.b32.xlu0 %v1273, 32
  %v4361 = vpop.permute.xlu0 %4360
  %4362 = vrot.lane.b32.xlu0 %v1274, 32
  %v4363 = vpop.permute.xlu0 %4362
  %4364 = vrot.lane.b32.xlu0 %v1275, 32
  %v4365 = vpop.permute.xlu0 %4364
  %4534 = vmatprep.subr.bf16.mxu0 0
  %4535 = vmatpush1.bf16.msra.mxu0 %v4045
  %4536 = vmatprep.subr.bf16.mxu0 0
  %4537 = vmatpush1.bf16.msra.mxu0 %v4043
  %4538 = vmatprep.subr.bf16.mxu0 0
  %4539 = vmatpush1.bf16.msra.mxu0 %v4041
  %4540 = vmatprep.subr.bf16.mxu0 0
  %4541 = vmatpush1.bf16.msra.mxu0 %v4039
  %4542 = vmatprep.subr.bf16.mxu0 0
  %4543 = vmatpush1.bf16.msra.mxu0 %v4037
  %4544 = vmatprep.subr.bf16.mxu0 0
  %4545 = vmatpush1.bf16.msra.mxu0 %v4035
  %4546 = vmatprep.subr.bf16.mxu0 0
  %4547 = vmatpush1.bf16.msra.mxu0 %v4033
  %4548 = vmatprep.subr.bf16.mxu0 0
  %4549 = vmatpush1.bf16.msra.mxu0 %v4031
  %4550 = vmatprep.subr.bf16.mxu0 0
  %4551 = vmatpush2.bf16.msra.mxu0 %v4061
  %4552 = vmatprep.subr.bf16.mxu0 0
  %4553 = vmatpush2.bf16.msra.mxu0 %v4059
  %4554 = vmatprep.subr.bf16.mxu0 0
  %4555 = vmatpush2.bf16.msra.mxu0 %v4057
  %4556 = vmatprep.subr.bf16.mxu0 0
  %4557 = vmatpush2.bf16.msra.mxu0 %v4055
  %4558 = vmatprep.subr.bf16.mxu0 0
  %4559 = vmatpush2.bf16.msra.mxu0 %v4053
  %4560 = vmatprep.subr.bf16.mxu0 0
  %4561 = vmatpush2.bf16.msra.mxu0 %v4051
  %4562 = vmatprep.subr.bf16.mxu0 0
  %4563 = vmatpush2.bf16.msra.mxu0 %v4049
  %4564 = vmatprep.subr.bf16.mxu0 0
  %4565 = vmatpush2.bf16.msra.mxu0 %v4047
  %4566 = vmatprep.mubr.bf16.mxu0 %v3989
  %4567 = vmatmul.mubr.bf16.gmra.mxu0 %v3988
  %v4568 = vpop.f32.mrf.mxu0
  %v4569 = vadd.f32 0.0, %v4568
  %v4570 = vpop.f32.mrf.mxu0
  %v4571 = vpop.f32.mrf.mxu0
  %v4572 = vpop.f32.mrf.mxu0
  %4573 = vdwg.mxu0
  %4574 = vmatprep.subr.bf16.mxu0 0
  %4575 = vmatpush1.bf16.msra.mxu0 %v4077
  %4576 = vmatprep.subr.bf16.mxu0 0
  %4577 = vmatpush1.bf16.msra.mxu0 %v4075
  %4578 = vmatprep.subr.bf16.mxu0 0
  %4579 = vmatpush1.bf16.msra.mxu0 %v4073
  %4580 = vmatprep.subr.bf16.mxu0 0
  %4581 = vmatpush1.bf16.msra.mxu0 %v4071
  %4582 = vmatprep.subr.bf16.mxu0 0
  %4583 = vmatpush1.bf16.msra.mxu0 %v4069
  %4584 = vmatprep.subr.bf16.mxu0 0
  %4585 = vmatpush1.bf16.msra.mxu0 %v4067
  %4586 = vmatprep.subr.bf16.mxu0 0
  %4587 = vmatpush1.bf16.msra.mxu0 %v4065
  %4588 = vmatprep.subr.bf16.mxu0 0
  %4589 = vmatpush1.bf16.msra.mxu0 %v4063
  %4590 = vmatprep.subr.bf16.mxu0 0
  %4591 = vmatpush2.bf16.msra.mxu0 %v4093
  %4592 = vmatprep.subr.bf16.mxu0 0
  %4593 = vmatpush2.bf16.msra.mxu0 %v4091
  %4594 = vmatprep.subr.bf16.mxu0 0
  %4595 = vmatpush2.bf16.msra.mxu0 %v4089
  %4596 = vmatprep.subr.bf16.mxu0 0
  %4597 = vmatpush2.bf16.msra.mxu0 %v4087
  %4598 = vmatprep.subr.bf16.mxu0 0
  %4599 = vmatpush2.bf16.msra.mxu0 %v4085
  %4600 = vmatprep.subr.bf16.mxu0 0
  %4601 = vmatpush2.bf16.msra.mxu0 %v4083
  %4602 = vmatprep.subr.bf16.mxu0 0
  %4603 = vmatpush2.bf16.msra.mxu0 %v4081
  %4604 = vmatprep.subr.bf16.mxu0 0
  %4605 = vmatpush2.bf16.msra.mxu0 %v4079
  %4606 = vmatprep.mubr.bf16.mxu0 %v3991
  %4607 = vmatmul.mubr.bf16.gmra.mxu0 %v3990
  %v4608 = vpop.f32.mrf.mxu0
  %v4609 = vadd.f32 %v4569, %v4608
  %v4610 = vpop.f32.mrf.mxu0
  %v4611 = vpop.f32.mrf.mxu0
  %v4612 = vpop.f32.mrf.mxu0
  %4613 = vdwg.mxu0
  %4614 = vmatprep.subr.bf16.mxu0 0
  %4615 = vmatpush1.bf16.msra.mxu0 %v4109
  %4616 = vmatprep.subr.bf16.mxu0 0
  %4617 = vmatpush1.bf16.msra.mxu0 %v4107
  %4618 = vmatprep.subr.bf16.mxu0 0
  %4619 = vmatpush1.bf16.msra.mxu0 %v4105
  %4620 = vmatprep.subr.bf16.mxu0 0
  %4621 = vmatpush1.bf16.msra.mxu0 %v4103
  %4622 = vmatprep.subr.bf16.mxu0 0
  %4623 = vmatpush1.bf16.msra.mxu0 %v4101
  %4624 = vmatprep.subr.bf16.mxu0 0
  %4625 = vmatpush1.bf16.msra.mxu0 %v4099
  %4626 = vmatprep.subr.bf16.mxu0 0
  %4627 = vmatpush1.bf16.msra.mxu0 %v4097
  %4628 = vmatprep.subr.bf16.mxu0 0
  %4629 = vmatpush1.bf16.msra.mxu0 %v4095
  %4630 = vmatprep.subr.bf16.mxu0 0
  %4631 = vmatpush2.bf16.msra.mxu0 %v4125
  %4632 = vmatprep.subr.bf16.mxu0 0
  %4633 = vmatpush2.bf16.msra.mxu0 %v4123
  %4634 = vmatprep.subr.bf16.mxu0 0
  %4635 = vmatpush2.bf16.msra.mxu0 %v4121
  %4636 = vmatprep.subr.bf16.mxu0 0
  %4637 = vmatpush2.bf16.msra.mxu0 %v4119
  %4638 = vmatprep.subr.bf16.mxu0 0
  %4639 = vmatpush2.bf16.msra.mxu0 %v4117
  %4640 = vmatprep.subr.bf16.mxu0 0
  %4641 = vmatpush2.bf16.msra.mxu0 %v4115
  %4642 = vmatprep.subr.bf16.mxu0 0
  %4643 = vmatpush2.bf16.msra.mxu0 %v4113
  %4644 = vmatprep.subr.bf16.mxu0 0
  %4645 = vmatpush2.bf16.msra.mxu0 %v4111
  %4646 = vmatprep.mubr.bf16.mxu0 %v3993
  %4647 = vmatmul.mubr.bf16.gmra.mxu0 %v3992
  %v4648 = vpop.f32.mrf.mxu0
  %v4649 = vadd.f32 %v4609, %v4648
  %v4650 = vpop.f32.mrf.mxu0
  %v4651 = vpop.f32.mrf.mxu0
  %v4652 = vpop.f32.mrf.mxu0
  %4653 = vdwg.mxu0
  %4654 = vmatprep.subr.bf16.mxu0 0
  %4655 = vmatpush1.bf16.msra.mxu0 %v4141
  %4656 = vmatprep.subr.bf16.mxu0 0
  %4657 = vmatpush1.bf16.msra.mxu0 %v4139
  %4658 = vmatprep.subr.bf16.mxu0 0
  %4659 = vmatpush1.bf16.msra.mxu0 %v4137
  %4660 = vmatprep.subr.bf16.mxu0 0
  %4661 = vmatpush1.bf16.msra.mxu0 %v4135
  %4662 = vmatprep.subr.bf16.mxu0 0
  %4663 = vmatpush1.bf16.msra.mxu0 %v4133
  %4664 = vmatprep.subr.bf16.mxu0 0
  %4665 = vmatpush1.bf16.msra.mxu0 %v4131
  %4666 = vmatprep.subr.bf16.mxu0 0
  %4667 = vmatpush1.bf16.msra.mxu0 %v4129
  %4668 = vmatprep.subr.bf16.mxu0 0
  %4669 = vmatpush1.bf16.msra.mxu0 %v4127
  %4670 = vmatprep.subr.bf16.mxu0 0
  %4671 = vmatpush2.bf16.msra.mxu0 %v4157
  %4672 = vmatprep.subr.bf16.mxu0 0
  %4673 = vmatpush2.bf16.msra.mxu0 %v4155
  %4674 = vmatprep.subr.bf16.mxu0 0
  %4675 = vmatpush2.bf16.msra.mxu0 %v4153
  %4676 = vmatprep.subr.bf16.mxu0 0
  %4677 = vmatpush2.bf16.msra.mxu0 %v4151
  %4678 = vmatprep.subr.bf16.mxu0 0
  %4679 = vmatpush2.bf16.msra.mxu0 %v4149
  %4680 = vmatprep.subr.bf16.mxu0 0
  %4681 = vmatpush2.bf16.msra.mxu0 %v4147
  %4682 = vmatprep.subr.bf16.mxu0 0
  %4683 = vmatpush2.bf16.msra.mxu0 %v4145
  %4684 = vmatprep.subr.bf16.mxu0 0
  %4685 = vmatpush2.bf16.msra.mxu0 %v4143
  %4686 = vmatprep.mubr.bf16.mxu0 %v3995
  %4687 = vmatmul.mubr.bf16.gmra.mxu0 %v3994
  %v4688 = vpop.f32.mrf.mxu0
  %v4689 = vadd.f32 %v4649, %v4688
  %v4690 = vpop.f32.mrf.mxu0
  %v4691 = vpop.f32.mrf.mxu0
  %v4692 = vpop.f32.mrf.mxu0
  %4693 = vdwg.mxu0
  %4694 = vmatprep.subr.bf16.mxu0 0
  %4695 = vmatpush1.bf16.msra.mxu0 %v4173
  %4696 = vmatprep.subr.bf16.mxu0 0
  %4697 = vmatpush1.bf16.msra.mxu0 %v4171
  %4698 = vmatprep.subr.bf16.mxu0 0
  %4699 = vmatpush1.bf16.msra.mxu0 %v4169
  %4700 = vmatprep.subr.bf16.mxu0 0
  %4701 = vmatpush1.bf16.msra.mxu0 %v4167
  %4702 = vmatprep.subr.bf16.mxu0 0
  %4703 = vmatpush1.bf16.msra.mxu0 %v4165
  %4704 = vmatprep.subr.bf16.mxu0 0
  %4705 = vmatpush1.bf16.msra.mxu0 %v4163
  %4706 = vmatprep.subr.bf16.mxu0 0
  %4707 = vmatpush1.bf16.msra.mxu0 %v4161
  %4708 = vmatprep.subr.bf16.mxu0 0
  %4709 = vmatpush1.bf16.msra.mxu0 %v4159
  %4710 = vmatprep.subr.bf16.mxu0 0
  %4711 = vmatpush2.bf16.msra.mxu0 %v4189
  %4712 = vmatprep.subr.bf16.mxu0 0
  %4713 = vmatpush2.bf16.msra.mxu0 %v4187
  %4714 = vmatprep.subr.bf16.mxu0 0
  %4715 = vmatpush2.bf16.msra.mxu0 %v4185
  %4716 = vmatprep.subr.bf16.mxu0 0
  %4717 = vmatpush2.bf16.msra.mxu0 %v4183
  %4718 = vmatprep.subr.bf16.mxu0 0
  %4719 = vmatpush2.bf16.msra.mxu0 %v4181
  %4720 = vmatprep.subr.bf16.mxu0 0
  %4721 = vmatpush2.bf16.msra.mxu0 %v4179
  %4722 = vmatprep.subr.bf16.mxu0 0
  %4723 = vmatpush2.bf16.msra.mxu0 %v4177
  %4724 = vmatprep.subr.bf16.mxu0 0
  %4725 = vmatpush2.bf16.msra.mxu0 %v4175
  %4726 = vmatprep.mubr.bf16.mxu0 %v3997
  %4727 = vmatmul.mubr.bf16.gmra.mxu0 %v3996
  %v4728 = vpop.f32.mrf.mxu0
  %v4729 = vadd.f32 %v4689, %v4728
  %v4730 = vpop.f32.mrf.mxu0
  %v4731 = vpop.f32.mrf.mxu0
  %v4732 = vpop.f32.mrf.mxu0
  %4733 = vdwg.mxu0
  %4734 = vmatprep.subr.bf16.mxu0 0
  %4735 = vmatpush1.bf16.msra.mxu0 %v4205
  %4736 = vmatprep.subr.bf16.mxu0 0
  %4737 = vmatpush1.bf16.msra.mxu0 %v4203
  %4738 = vmatprep.subr.bf16.mxu0 0
  %4739 = vmatpush1.bf16.msra.mxu0 %v4201
  %4740 = vmatprep.subr.bf16.mxu0 0
  %4741 = vmatpush1.bf16.msra.mxu0 %v4199
  %4742 = vmatprep.subr.bf16.mxu0 0
  %4743 = vmatpush1.bf16.msra.mxu0 %v4197
  %4744 = vmatprep.subr.bf16.mxu0 0
  %4745 = vmatpush1.bf16.msra.mxu0 %v4195
  %4746 = vmatprep.subr.bf16.mxu0 0
  %4747 = vmatpush1.bf16.msra.mxu0 %v4193
  %4748 = vmatprep.subr.bf16.mxu0 0
  %4749 = vmatpush1.bf16.msra.mxu0 %v4191
  %4750 = vmatprep.subr.bf16.mxu0 0
  %4751 = vmatpush2.bf16.msra.mxu0 %v4221
  %4752 = vmatprep.subr.bf16.mxu0 0
  %4753 = vmatpush2.bf16.msra.mxu0 %v4219
  %4754 = vmatprep.subr.bf16.mxu0 0
  %4755 = vmatpush2.bf16.msra.mxu0 %v4217
  %4756 = vmatprep.subr.bf16.mxu0 0
  %4757 = vmatpush2.bf16.msra.mxu0 %v4215
  %4758 = vmatprep.subr.bf16.mxu0 0
  %4759 = vmatpush2.bf16.msra.mxu0 %v4213
  %4760 = vmatprep.subr.bf16.mxu0 0
  %4761 = vmatpush2.bf16.msra.mxu0 %v4211
  %4762 = vmatprep.subr.bf16.mxu0 0
  %4763 = vmatpush2.bf16.msra.mxu0 %v4209
  %4764 = vmatprep.subr.bf16.mxu0 0
  %4765 = vmatpush2.bf16.msra.mxu0 %v4207
  %4766 = vmatprep.mubr.bf16.mxu0 %v3999
  %4767 = vmatmul.mubr.bf16.gmra.mxu0 %v3998
  %v4768 = vpop.f32.mrf.mxu0
  %v4769 = vadd.f32 %v4729, %v4768
  %v4770 = vpop.f32.mrf.mxu0
  %v4771 = vpop.f32.mrf.mxu0
  %v4772 = vpop.f32.mrf.mxu0
  %4773 = vdwg.mxu0
  %4774 = vmatprep.subr.bf16.mxu0 0
  %4775 = vmatpush1.bf16.msra.mxu0 %v4237
  %4776 = vmatprep.subr.bf16.mxu0 0
  %4777 = vmatpush1.bf16.msra.mxu0 %v4235
  %4778 = vmatprep.subr.bf16.mxu0 0
  %4779 = vmatpush1.bf16.msra.mxu0 %v4233
  %4780 = vmatprep.subr.bf16.mxu0 0
  %4781 = vmatpush1.bf16.msra.mxu0 %v4231
  %4782 = vmatprep.subr.bf16.mxu0 0
  %4783 = vmatpush1.bf16.msra.mxu0 %v4229
  %4784 = vmatprep.subr.bf16.mxu0 0
  %4785 = vmatpush1.bf16.msra.mxu0 %v4227
  %4786 = vmatprep.subr.bf16.mxu0 0
  %4787 = vmatpush1.bf16.msra.mxu0 %v4225
  %4788 = vmatprep.subr.bf16.mxu0 0
  %4789 = vmatpush1.bf16.msra.mxu0 %v4223
  %4790 = vmatprep.subr.bf16.mxu0 0
  %4791 = vmatpush2.bf16.msra.mxu0 %v4253
  %4792 = vmatprep.subr.bf16.mxu0 0
  %4793 = vmatpush2.bf16.msra.mxu0 %v4251
  %4794 = vmatprep.subr.bf16.mxu0 0
  %4795 = vmatpush2.bf16.msra.mxu0 %v4249
  %4796 = vmatprep.subr.bf16.mxu0 0
  %4797 = vmatpush2.bf16.msra.mxu0 %v4247
  %4798 = vmatprep.subr.bf16.mxu0 0
  %4799 = vmatpush2.bf16.msra.mxu0 %v4245
  %4800 = vmatprep.subr.bf16.mxu0 0
  %4801 = vmatpush2.bf16.msra.mxu0 %v4243
  %4802 = vmatprep.subr.bf16.mxu0 0
  %4803 = vmatpush2.bf16.msra.mxu0 %v4241
  %4804 = vmatprep.subr.bf16.mxu0 0
  %4805 = vmatpush2.bf16.msra.mxu0 %v4239
  %4806 = vmatprep.mubr.bf16.mxu0 %v4001
  %4807 = vmatmul.mubr.bf16.gmra.mxu0 %v4000
  %v4808 = vpop.f32.mrf.mxu0
  %v4809 = vadd.f32 %v4769, %v4808
  %v4810 = vpop.f32.mrf.mxu0
  %v4811 = vpop.f32.mrf.mxu0
  %v4812 = vpop.f32.mrf.mxu0
  %4813 = vdwg.mxu0
  %4814 = vmatprep.subr.bf16.mxu0 0
  %4815 = vmatpush1.bf16.msra.mxu0 %v4269
  %4816 = vmatprep.subr.bf16.mxu0 0
  %4817 = vmatpush1.bf16.msra.mxu0 %v4267
  %4818 = vmatprep.subr.bf16.mxu0 0
  %4819 = vmatpush1.bf16.msra.mxu0 %v4265
  %4820 = vmatprep.subr.bf16.mxu0 0
  %4821 = vmatpush1.bf16.msra.mxu0 %v4263
  %4822 = vmatprep.subr.bf16.mxu0 0
  %4823 = vmatpush1.bf16.msra.mxu0 %v4261
  %4824 = vmatprep.subr.bf16.mxu0 0
  %4825 = vmatpush1.bf16.msra.mxu0 %v4259
  %4826 = vmatprep.subr.bf16.mxu0 0
  %4827 = vmatpush1.bf16.msra.mxu0 %v4257
  %4828 = vmatprep.subr.bf16.mxu0 0
  %4829 = vmatpush1.bf16.msra.mxu0 %v4255
  %4830 = vmatprep.subr.bf16.mxu0 0
  %4831 = vmatpush2.bf16.msra.mxu0 %v4285
  %4832 = vmatprep.subr.bf16.mxu0 0
  %4833 = vmatpush2.bf16.msra.mxu0 %v4283
  %4834 = vmatprep.subr.bf16.mxu0 0
  %4835 = vmatpush2.bf16.msra.mxu0 %v4281
  %4836 = vmatprep.subr.bf16.mxu0 0
  %4837 = vmatpush2.bf16.msra.mxu0 %v4279
  %4838 = vmatprep.subr.bf16.mxu0 0
  %4839 = vmatpush2.bf16.msra.mxu0 %v4277
  %4840 = vmatprep.subr.bf16.mxu0 0
  %4841 = vmatpush2.bf16.msra.mxu0 %v4275
  %4842 = vmatprep.subr.bf16.mxu0 0
  %4843 = vmatpush2.bf16.msra.mxu0 %v4273
  %4844 = vmatprep.subr.bf16.mxu0 0
  %4845 = vmatpush2.bf16.msra.mxu0 %v4271
  %4846 = vmatprep.mubr.bf16.mxu0 %v4003
  %4847 = vmatmul.mubr.bf16.gmra.mxu0 %v4002
  %v4848 = vpop.f32.mrf.mxu0
  %v4849 = vadd.f32 %v4809, %v4848
  %v4850 = vpop.f32.mrf.mxu0
  %v4851 = vpop.f32.mrf.mxu0
  %v4852 = vpop.f32.mrf.mxu0
  %4853 = vdwg.mxu0
  %4854 = vmatprep.subr.bf16.mxu0 0
  %4855 = vmatpush1.bf16.msra.mxu0 %v4301
  %4856 = vmatprep.subr.bf16.mxu0 0
  %4857 = vmatpush1.bf16.msra.mxu0 %v4299
  %4858 = vmatprep.subr.bf16.mxu0 0
  %4859 = vmatpush1.bf16.msra.mxu0 %v4297
  %4860 = vmatprep.subr.bf16.mxu0 0
  %4861 = vmatpush1.bf16.msra.mxu0 %v4295
  %4862 = vmatprep.subr.bf16.mxu0 0
  %4863 = vmatpush1.bf16.msra.mxu0 %v4293
  %4864 = vmatprep.subr.bf16.mxu0 0
  %4865 = vmatpush1.bf16.msra.mxu0 %v4291
  %4866 = vmatprep.subr.bf16.mxu0 0
  %4867 = vmatpush1.bf16.msra.mxu0 %v4289
  %4868 = vmatprep.subr.bf16.mxu0 0
  %4869 = vmatpush1.bf16.msra.mxu0 %v4287
  %4870 = vmatprep.subr.bf16.mxu0 0
  %4871 = vmatpush2.bf16.msra.mxu0 %v4317
  %4872 = vmatprep.subr.bf16.mxu0 0
  %4873 = vmatpush2.bf16.msra.mxu0 %v4315
  %4874 = vmatprep.subr.bf16.mxu0 0
  %4875 = vmatpush2.bf16.msra.mxu0 %v4313
  %4876 = vmatprep.subr.bf16.mxu0 0
  %4877 = vmatpush2.bf16.msra.mxu0 %v4311
  %4878 = vmatprep.subr.bf16.mxu0 0
  %4879 = vmatpush2.bf16.msra.mxu0 %v4309
  %4880 = vmatprep.subr.bf16.mxu0 0
  %4881 = vmatpush2.bf16.msra.mxu0 %v4307
  %4882 = vmatprep.subr.bf16.mxu0 0
  %4883 = vmatpush2.bf16.msra.mxu0 %v4305
  %4884 = vmatprep.subr.bf16.mxu0 0
  %4885 = vmatpush2.bf16.msra.mxu0 %v4303
  %4886 = vmatprep.mubr.bf16.mxu0 %v4005
  %4887 = vmatmul.mubr.bf16.gmra.mxu0 %v4004
  %v4888 = vpop.f32.mrf.mxu0
  %v4889 = vadd.f32 %v4849, %v4888
  %v4890 = vpop.f32.mrf.mxu0
  %v4891 = vpop.f32.mrf.mxu0
  %v4892 = vpop.f32.mrf.mxu0
  %4893 = vdwg.mxu0
  %4894 = vmatprep.subr.bf16.mxu0 0
  %4895 = vmatpush1.bf16.msra.mxu0 %v4333
  %4896 = vmatprep.subr.bf16.mxu0 0
  %4897 = vmatpush1.bf16.msra.mxu0 %v4331
  %4898 = vmatprep.subr.bf16.mxu0 0
  %4899 = vmatpush1.bf16.msra.mxu0 %v4329
  %4900 = vmatprep.subr.bf16.mxu0 0
  %4901 = vmatpush1.bf16.msra.mxu0 %v4327
  %4902 = vmatprep.subr.bf16.mxu0 0
  %4903 = vmatpush1.bf16.msra.mxu0 %v4325
  %4904 = vmatprep.subr.bf16.mxu0 0
  %4905 = vmatpush1.bf16.msra.mxu0 %v4323
  %4906 = vmatprep.subr.bf16.mxu0 0
  %4907 = vmatpush1.bf16.msra.mxu0 %v4321
  %4908 = vmatprep.subr.bf16.mxu0 0
  %4909 = vmatpush1.bf16.msra.mxu0 %v4319
  %4910 = vmatprep.subr.bf16.mxu0 0
  %4911 = vmatpush2.bf16.msra.mxu0 %v4349
  %4912 = vmatprep.subr.bf16.mxu0 0
  %4913 = vmatpush2.bf16.msra.mxu0 %v4347
  %4914 = vmatprep.subr.bf16.mxu0 0
  %4915 = vmatpush2.bf16.msra.mxu0 %v4345
  %4916 = vmatprep.subr.bf16.mxu0 0
  %4917 = vmatpush2.bf16.msra.mxu0 %v4343
  %4918 = vmatprep.subr.bf16.mxu0 0
  %4919 = vmatpush2.bf16.msra.mxu0 %v4341
  %4920 = vmatprep.subr.bf16.mxu0 0
  %4921 = vmatpush2.bf16.msra.mxu0 %v4339
  %4922 = vmatprep.subr.bf16.mxu0 0
  %4923 = vmatpush2.bf16.msra.mxu0 %v4337
  %4924 = vmatprep.subr.bf16.mxu0 0
  %4925 = vmatpush2.bf16.msra.mxu0 %v4335
  %4926 = vmatprep.mubr.bf16.mxu0 %v4007
  %4927 = vmatmul.mubr.bf16.gmra.mxu0 %v4006
  %v4928 = vpop.f32.mrf.mxu0
  %v4929 = vadd.f32 %v4889, %v4928
  %v4930 = vpop.f32.mrf.mxu0
  %v4931 = vpop.f32.mrf.mxu0
  %v4932 = vpop.f32.mrf.mxu0
  %4933 = vdwg.mxu0
  %4934 = vmatprep.subr.bf16.mxu0 0
  %4935 = vmatpush1.bf16.msra.mxu0 %v4365
  %4936 = vmatprep.subr.bf16.mxu0 0
  %4937 = vmatpush1.bf16.msra.mxu0 %v4363
  %4938 = vmatprep.subr.bf16.mxu0 0
  %4939 = vmatpush1.bf16.msra.mxu0 %v4361
  %4940 = vmatprep.subr.bf16.mxu0 0
  %4941 = vmatpush1.bf16.msra.mxu0 %v4359
  %4942 = vmatprep.subr.bf16.mxu0 0
  %4943 = vmatpush1.bf16.msra.mxu0 %v4357
  %4944 = vmatprep.subr.bf16.mxu0 0
  %4945 = vmatpush1.bf16.msra.mxu0 %v4355
  %4946 = vmatprep.subr.bf16.mxu0 0
  %4947 = vmatpush1.bf16.msra.mxu0 %v4353
  %4948 = vmatprep.subr.bf16.mxu0 0
  %4949 = vmatpush1.bf16.msra.mxu0 %v4351
  %4950 = vmatprep.subr.bf16.mxu0 0
  %4951 = vmatpush2.bf16.msra.mxu0 0
  %4952 = vmatprep.subr.bf16.mxu0 0
  %4953 = vmatpush2.bf16.msra.mxu0 0
  %4954 = vmatprep.subr.bf16.mxu0 0
  %4955 = vmatpush2.bf16.msra.mxu0 0
  %4956 = vmatprep.subr.bf16.mxu0 0
  %4957 = vmatpush2.bf16.msra.mxu0 0
  %4958 = vmatprep.subr.bf16.mxu0 0
  %4959 = vmatpush2.bf16.msra.mxu0 0
  %4960 = vmatprep.subr.bf16.mxu0 0
  %4961 = vmatpush2.bf16.msra.mxu0 0
  %4962 = vmatprep.subr.bf16.mxu0 0
  %4963 = vmatpush2.bf16.msra.mxu0 0
  %4964 = vmatprep.subr.bf16.mxu0 0
  %4965 = vmatpush2.bf16.msra.mxu0 0
  %4966 = vmatprep.mubr.bf16.mxu0 0
  %4967 = vmatmul.mubr.bf16.gmra.mxu0 %v4008
  %v4968 = vpop.f32.mrf.mxu0
  %v4969 = vadd.f32 %v4929, %v4968
  %v4970 = vpop.f32.mrf.mxu0
  %v4971 = vpop.f32.mrf.mxu0
  %v4972 = vpop.f32.mrf.mxu0
  %4973 = vdwg.mxu0
  %s4974 = scalar_lea.vmem %s0, 336
  %v4975 = vld [vmem:[%s4974] sm:$0xff]
  %v4976 = vld [vmem:[%s4974 + $0x8] sm:$0xff]
  %v4977 = vld [vmem:[%s4974 + $0x10] sm:$0xff]
  %v4978 = vld [vmem:[%s4974 + $0x18] sm:$0xff]
  %v4979 = vld [vmem:[%s4974 + $0x20] sm:$0xff]
  %v4980 = vld [vmem:[%s4974 + $0x28] sm:$0xff]
  %v4981 = vld [vmem:[%s4974 + $0x30] sm:$0xff]
  %v4982 = vld [vmem:[%s4974 + $0x38] sm:$0xff]
  %v4983 = vld [vmem:[%s4974 + $0x40] sm:$0xff]
  %v4984 = vld [vmem:[%s4974 + $0x48] sm:$0xff]
  %v4985 = vld [vmem:[%s4974 + $0x50] sm:$0xf]
  %v4986 = vld [vmem:[%s1 + $0x4] sm:$0xf]
  %v4987 = vld [vmem:[%s1 + $0xc] sm:$0xf]
  %v4988 = vld [vmem:[%s1 + $0x14] sm:$0xf]
  %v4989 = vld [vmem:[%s1 + $0x1c] sm:$0xf]
  %v4990 = vld [vmem:[%s1 + $0x24] sm:$0xf]
  %v4991 = vld [vmem:[%s1 + $0x2c] sm:$0xf]
  %v4992 = vld [vmem:[%s1 + $0x34] sm:$0xf]
  %v4993 = vld [vmem:[%s1 + $0x3c] sm:$0xf]
  %v4994 = vld [vmem:[%s1 + $0x44] sm:$0xf]
  %v4995 = vld [vmem:[%s1 + $0x4c] sm:$0xf]
  %v4996 = vld [vmem:[%s1 + $0x54] sm:$0xf]
  %v4997 = vld [vmem:[%s1 + $0x5c] sm:$0xf]
  %v4998 = vld [vmem:[%s1 + $0x64] sm:$0xf]
  %v4999 = vld [vmem:[%s1 + $0x6c] sm:$0xf]
  %v5000 = vld [vmem:[%s1 + $0x74] sm:$0xf]
  %v5001 = vld [vmem:[%s1 + $0x7c] sm:$0xf]
  %v5002 = vld [vmem:[%s1 + $0x84] sm:$0xf]
  %v5003 = vld [vmem:[%s1 + $0x8c] sm:$0xf]
  %v5004 = vld [vmem:[%s1 + $0x94] sm:$0xf]
  %v5005 = vld [vmem:[%s1 + $0x9c] sm:$0xf]
  %v5006 = vld [vmem:[%s1 + $0xa4] sm:$0xf]
  %v5007 = vld [vmem:[%s1 + $0xac] sm:$0xf]
  %v5008 = vld [vmem:[%s1 + $0xb4] sm:$0xf]
  %v5009 = vld [vmem:[%s1 + $0xbc] sm:$0xf]
  %v5010 = vld [vmem:[%s1 + $0xc4] sm:$0xf]
  %v5011 = vld [vmem:[%s1 + $0xcc] sm:$0xf]
  %v5012 = vld [vmem:[%s1 + $0xd4] sm:$0xf]
  %v5013 = vld [vmem:[%s1 + $0xdc] sm:$0xf]
  %v5014 = vld [vmem:[%s1 + $0xe4] sm:$0xf]
  %v5015 = vld [vmem:[%s1 + $0xec] sm:$0xf]
  %v5016 = vld [vmem:[%s1 + $0xf4] sm:$0xf]
  %v5017 = vld [vmem:[%s1 + $0xfc] sm:$0xf]
  %v5018 = vld [vmem:[%s1 + $0x104] sm:$0xf]
  %v5019 = vld [vmem:[%s1 + $0x10c] sm:$0xf]
  %v5020 = vld [vmem:[%s1 + $0x114] sm:$0xf]
  %v5021 = vld [vmem:[%s1 + $0x11c] sm:$0xf]
  %v5022 = vld [vmem:[%s1 + $0x124] sm:$0xf]
  %v5023 = vld [vmem:[%s1 + $0x12c] sm:$0xf]
  %v5024 = vld [vmem:[%s1 + $0x134] sm:$0xf]
  %v5025 = vld [vmem:[%s1 + $0x13c] sm:$0xf]
  %v5026 = vld [vmem:[%s1 + $0x144] sm:$0xf]
  %v5027 = vld [vmem:[%s1 + $0x14c] sm:$0xf]
  %v5028 = vld [vmem:[%s1 + $0x154] sm:$0xf]
  %v5029 = vld [vmem:[%s1 + $0x15c] sm:$0xf]
  %v5030 = vld [vmem:[%s1 + $0x164] sm:$0xf]
  %v5031 = vld [vmem:[%s1 + $0x16c] sm:$0xf]
  %v5032 = vld [vmem:[%s1 + $0x174] sm:$0xf]
  %v5033 = vld [vmem:[%s1 + $0x17c] sm:$0xf]
  %v5034 = vld [vmem:[%s1 + $0x184] sm:$0xf]
  %v5035 = vld [vmem:[%s1 + $0x18c] sm:$0xf]
  %v5036 = vld [vmem:[%s1 + $0x194] sm:$0xf]
  %v5037 = vld [vmem:[%s1 + $0x19c] sm:$0xf]
  %v5038 = vld [vmem:[%s1 + $0x1a4] sm:$0xf]
  %v5039 = vld [vmem:[%s1 + $0x1ac] sm:$0xf]
  %v5040 = vld [vmem:[%s1 + $0x1b4] sm:$0xf]
  %v5041 = vld [vmem:[%s1 + $0x1bc] sm:$0xf]
  %v5042 = vld [vmem:[%s1 + $0x1c4] sm:$0xf]
  %v5043 = vld [vmem:[%s1 + $0x1cc] sm:$0xf]
  %v5044 = vld [vmem:[%s1 + $0x1d4] sm:$0xf]
  %v5045 = vld [vmem:[%s1 + $0x1dc] sm:$0xf]
  %v5046 = vld [vmem:[%s1 + $0x1e4] sm:$0xf]
  %v5047 = vld [vmem:[%s1 + $0x1ec] sm:$0xf]
  %v5048 = vld [vmem:[%s1 + $0x1f4] sm:$0xf]
  %v5049 = vld [vmem:[%s1 + $0x1fc] sm:$0xf]
  %v5050 = vld [vmem:[%s1 + $0x204] sm:$0xf]
  %v5051 = vld [vmem:[%s1 + $0x20c] sm:$0xf]
  %v5052 = vld [vmem:[%s1 + $0x214] sm:$0xf]
  %v5053 = vld [vmem:[%s1 + $0x21c] sm:$0xf]
  %v5054 = vld [vmem:[%s1 + $0x224] sm:$0xf]
  %v5055 = vld [vmem:[%s1 + $0x22c] sm:$0xf]
  %v5056 = vld [vmem:[%s1 + $0x234] sm:$0xf]
  %v5057 = vld [vmem:[%s1 + $0x23c] sm:$0xf]
  %v5058 = vld [vmem:[%s1 + $0x244] sm:$0xf]
  %v5059 = vld [vmem:[%s1 + $0x24c] sm:$0xf]
  %v5060 = vld [vmem:[%s1 + $0x254] sm:$0xf]
  %v5061 = vld [vmem:[%s1 + $0x25c] sm:$0xf]
  %v5062 = vld [vmem:[%s1 + $0x264] sm:$0xf]
  %v5063 = vld [vmem:[%s1 + $0x26c] sm:$0xf]
  %v5064 = vld [vmem:[%s1 + $0x274] sm:$0xf]
  %v5065 = vld [vmem:[%s1 + $0x27c] sm:$0xf]
  %v5066 = vld [vmem:[%s1 + $0x284] sm:$0xf]
  %v5067 = vld [vmem:[%s1 + $0x28c] sm:$0xf]
  %v5068 = vld [vmem:[%s1 + $0x294] sm:$0xf]
  %v5069 = vld [vmem:[%s1 + $0x29c] sm:$0xf]
  %v5070 = vld [vmem:[%s1 + $0x2a4] sm:$0xf]
  %v5071 = vld [vmem:[%s1 + $0x2ac] sm:$0xf]
  %v5072 = vld [vmem:[%s1 + $0x2b4] sm:$0xf]
  %v5073 = vld [vmem:[%s1 + $0x2bc] sm:$0xf]
  %v5074 = vld [vmem:[%s1 + $0x2c4] sm:$0xf]
  %v5075 = vld [vmem:[%s1 + $0x2cc] sm:$0xf]
  %v5076 = vld [vmem:[%s1 + $0x2d4] sm:$0xf]
  %v5077 = vld [vmem:[%s1 + $0x2dc] sm:$0xf]
  %v5078 = vld [vmem:[%s1 + $0x2e4] sm:$0xf]
  %v5079 = vld [vmem:[%s1 + $0x2ec] sm:$0xf]
  %v5080 = vld [vmem:[%s1 + $0x2f4] sm:$0xf]
  %v5081 = vld [vmem:[%s1 + $0x2fc] sm:$0xf]
  %v5082 = vld [vmem:[%s1 + $0x304] sm:$0xf]
  %v5083 = vld [vmem:[%s1 + $0x30c] sm:$0xf]
  %v5084 = vld [vmem:[%s1 + $0x314] sm:$0xf]
  %v5085 = vld [vmem:[%s1 + $0x31c] sm:$0xf]
  %v5086 = vld [vmem:[%s1 + $0x324] sm:$0xf]
  %v5087 = vld [vmem:[%s1 + $0x32c] sm:$0xf]
  %v5088 = vld [vmem:[%s1 + $0x334] sm:$0xf]
  %v5089 = vld [vmem:[%s1 + $0x33c] sm:$0xf]
  %v5090 = vld [vmem:[%s1 + $0x344] sm:$0xf]
  %v5091 = vld [vmem:[%s1 + $0x34c] sm:$0xf]
  %v5092 = vld [vmem:[%s1 + $0x354] sm:$0xf]
  %v5093 = vld [vmem:[%s1 + $0x35c] sm:$0xf]
  %v5094 = vld [vmem:[%s1 + $0x364] sm:$0xf]
  %v5095 = vld [vmem:[%s1 + $0x36c] sm:$0xf]
  %v5096 = vld [vmem:[%s1 + $0x374] sm:$0xf]
  %v5097 = vld [vmem:[%s1 + $0x37c] sm:$0xf]
  %v5098 = vld [vmem:[%s1 + $0x384] sm:$0xf]
  %v5099 = vld [vmem:[%s1 + $0x38c] sm:$0xf]
  %v5100 = vld [vmem:[%s1 + $0x394] sm:$0xf]
  %v5101 = vld [vmem:[%s1 + $0x39c] sm:$0xf]
  %v5102 = vld [vmem:[%s1 + $0x3a4] sm:$0xf]
  %v5103 = vld [vmem:[%s1 + $0x3ac] sm:$0xf]
  %v5104 = vld [vmem:[%s1 + $0x3b4] sm:$0xf]
  %v5105 = vld [vmem:[%s1 + $0x3bc] sm:$0xf]
  %v5106 = vld [vmem:[%s1 + $0x3c4] sm:$0xf]
  %v5107 = vld [vmem:[%s1 + $0x3cc] sm:$0xf]
  %v5108 = vld [vmem:[%s1 + $0x3d4] sm:$0xf]
  %v5109 = vld [vmem:[%s1 + $0x3dc] sm:$0xf]
  %v5110 = vld [vmem:[%s1 + $0x3e4] sm:$0xf]
  %v5111 = vld [vmem:[%s1 + $0x3ec] sm:$0xf]
  %v5112 = vld [vmem:[%s1 + $0x3f4] sm:$0xf]
  %v5113 = vld [vmem:[%s1 + $0x3fc] sm:$0xf]
  %v5114 = vld [vmem:[%s1 + $0x404] sm:$0xf]
  %v5115 = vld [vmem:[%s1 + $0x40c] sm:$0xf]
  %v5116 = vld [vmem:[%s1 + $0x414] sm:$0xf]
  %v5117 = vld [vmem:[%s1 + $0x41c] sm:$0xf]
  %v5118 = vld [vmem:[%s1 + $0x424] sm:$0xf]
  %v5119 = vld [vmem:[%s1 + $0x42c] sm:$0xf]
  %v5120 = vld [vmem:[%s1 + $0x434] sm:$0xf]
  %v5121 = vld [vmem:[%s1 + $0x43c] sm:$0xf]
  %v5122 = vld [vmem:[%s1 + $0x444] sm:$0xf]
  %v5123 = vld [vmem:[%s1 + $0x44c] sm:$0xf]
  %v5124 = vld [vmem:[%s1 + $0x454] sm:$0xf]
  %v5125 = vld [vmem:[%s1 + $0x45c] sm:$0xf]
  %v5126 = vld [vmem:[%s1 + $0x464] sm:$0xf]
  %v5127 = vld [vmem:[%s1 + $0x46c] sm:$0xf]
  %v5128 = vld [vmem:[%s1 + $0x474] sm:$0xf]
  %v5129 = vld [vmem:[%s1 + $0x47c] sm:$0xf]
  %v5130 = vld [vmem:[%s1 + $0x484] sm:$0xf]
  %v5131 = vld [vmem:[%s1 + $0x48c] sm:$0xf]
  %v5132 = vld [vmem:[%s1 + $0x494] sm:$0xf]
  %v5133 = vld [vmem:[%s1 + $0x49c] sm:$0xf]
  %v5134 = vld [vmem:[%s1 + $0x4a4] sm:$0xf]
  %v5135 = vld [vmem:[%s1 + $0x4ac] sm:$0xf]
  %v5136 = vld [vmem:[%s1 + $0x4b4] sm:$0xf]
  %v5137 = vld [vmem:[%s1 + $0x4bc] sm:$0xf]
  %v5138 = vld [vmem:[%s1 + $0x4c4] sm:$0xf]
  %v5139 = vld [vmem:[%s1 + $0x4cc] sm:$0xf]
  %v5140 = vld [vmem:[%s1 + $0x4d4] sm:$0xf]
  %v5141 = vld [vmem:[%s1 + $0x4dc] sm:$0xf]
  %v5142 = vld [vmem:[%s1 + $0x4e4] sm:$0xf]
  %v5143 = vld [vmem:[%s1 + $0x4ec] sm:$0xf]
  %v5144 = vld [vmem:[%s1 + $0x4f4] sm:$0xf]
  %v5145 = vld [vmem:[%s1 + $0x4fc] sm:$0xf]
  %v5146 = vld [vmem:[%s1 + $0x504] sm:$0xf]
  %v5147 = vld [vmem:[%s1 + $0x50c] sm:$0xf]
  %v5148 = vld [vmem:[%s1 + $0x514] sm:$0xf]
  %v5149 = vld [vmem:[%s1 + $0x51c] sm:$0xf]
  %v5150 = vld [vmem:[%s1 + $0x524] sm:$0xf]
  %v5151 = vld [vmem:[%s1 + $0x52c] sm:$0xf]
  %v5152 = vld [vmem:[%s1 + $0x534] sm:$0xf]
  %v5153 = vld [vmem:[%s1 + $0x53c] sm:$0xf]
  %v5154 = vld [vmem:[%s1 + $0x544] sm:$0xf]
  %v5155 = vld [vmem:[%s1 + $0x54c] sm:$0xf]
  %v5156 = vld [vmem:[%s1 + $0x554] sm:$0xf]
  %v5157 = vld [vmem:[%s1 + $0x55c] sm:$0xf]
  %v5158 = vld [vmem:[%s1 + $0x564] sm:$0xf]
  %v5159 = vld [vmem:[%s1 + $0x56c] sm:$0xf]
  %v5160 = vld [vmem:[%s1 + $0x574] sm:$0xf]
  %v5161 = vld [vmem:[%s1 + $0x57c] sm:$0xf]
  %v5162 = vld [vmem:[%s1 + $0x584] sm:$0xf]
  %v5163 = vld [vmem:[%s1 + $0x58c] sm:$0xf]
  %v5164 = vld [vmem:[%s1 + $0x594] sm:$0xf]
  %v5165 = vld [vmem:[%s1 + $0x59c] sm:$0xf]
  %v5166 = vld [vmem:[%s1 + $0x5a4] sm:$0xf]
  %v5167 = vld [vmem:[%s1 + $0x5ac] sm:$0xf]
  %v5168 = vld [vmem:[%s1 + $0x5b4] sm:$0xf]
  %v5169 = vld [vmem:[%s1 + $0x5bc] sm:$0xf]
  %v5170 = vld [vmem:[%s1 + $0x5c4] sm:$0xf]
  %v5171 = vld [vmem:[%s1 + $0x5cc] sm:$0xf]
  %v5172 = vld [vmem:[%s1 + $0x5d4] sm:$0xf]
  %v5173 = vld [vmem:[%s1 + $0x5dc] sm:$0xf]
  %v5174 = vld [vmem:[%s1 + $0x5e4] sm:$0xf]
  %v5175 = vld [vmem:[%s1 + $0x5ec] sm:$0xf]
  %v5176 = vld [vmem:[%s1 + $0x5f4] sm:$0xf]
  %v5177 = vld [vmem:[%s1 + $0x5fc] sm:$0xf]
  %v5178 = vld [vmem:[%s1 + $0x604] sm:$0xf]
  %v5179 = vld [vmem:[%s1 + $0x60c] sm:$0xf]
  %v5180 = vld [vmem:[%s1 + $0x614] sm:$0xf]
  %v5181 = vld [vmem:[%s1 + $0x61c] sm:$0xf]
  %v5182 = vld [vmem:[%s1 + $0x624] sm:$0xf]
  %v5183 = vld [vmem:[%s1 + $0x62c] sm:$0xf]
  %v5184 = vld [vmem:[%s1 + $0x634] sm:$0xf]
  %v5185 = vld [vmem:[%s1 + $0x63c] sm:$0xf]
  %v5186 = vld [vmem:[%s1 + $0x644] sm:$0xf]
  %v5187 = vld [vmem:[%s1 + $0x64c] sm:$0xf]
  %v5188 = vld [vmem:[%s1 + $0x654] sm:$0xf]
  %v5189 = vld [vmem:[%s1 + $0x65c] sm:$0xf]
  %v5190 = vld [vmem:[%s1 + $0x664] sm:$0xf]
  %v5191 = vld [vmem:[%s1 + $0x66c] sm:$0xf]
  %v5192 = vld [vmem:[%s1 + $0x674] sm:$0xf]
  %v5193 = vld [vmem:[%s1 + $0x67c] sm:$0xf]
  %v5194 = vld [vmem:[%s1 + $0x684] sm:$0xf]
  %v5195 = vld [vmem:[%s1 + $0x68c] sm:$0xf]
  %v5196 = vld [vmem:[%s1 + $0x694] sm:$0xf]
  %v5197 = vld [vmem:[%s1 + $0x69c] sm:$0xf]
  %v5198 = vld [vmem:[%s1 + $0x6a4] sm:$0xf]
  %v5199 = vld [vmem:[%s1 + $0x6ac] sm:$0xf]
  %v5200 = vld [vmem:[%s1 + $0x6b4] sm:$0xf]
  %v5201 = vld [vmem:[%s1 + $0x6bc] sm:$0xf]
  %v5202 = vld [vmem:[%s1 + $0x6c4] sm:$0xf]
  %v5203 = vld [vmem:[%s1 + $0x6cc] sm:$0xf]
  %v5204 = vld [vmem:[%s1 + $0x6d4] sm:$0xf]
  %v5205 = vld [vmem:[%s1 + $0x6dc] sm:$0xf]
  %v5206 = vld [vmem:[%s1 + $0x6e4] sm:$0xf]
  %v5207 = vld [vmem:[%s1 + $0x6ec] sm:$0xf]
  %v5208 = vld [vmem:[%s1 + $0x6f4] sm:$0xf]
  %v5209 = vld [vmem:[%s1 + $0x6fc] sm:$0xf]
  %v5210 = vld [vmem:[%s1 + $0x704] sm:$0xf]
  %v5211 = vld [vmem:[%s1 + $0x70c] sm:$0xf]
  %v5212 = vld [vmem:[%s1 + $0x714] sm:$0xf]
  %v5213 = vld [vmem:[%s1 + $0x71c] sm:$0xf]
  %v5214 = vld [vmem:[%s1 + $0x724] sm:$0xf]
  %v5215 = vld [vmem:[%s1 + $0x72c] sm:$0xf]
  %v5216 = vld [vmem:[%s1 + $0x734] sm:$0xf]
  %v5217 = vld [vmem:[%s1 + $0x73c] sm:$0xf]
  %v5218 = vld [vmem:[%s1 + $0x744] sm:$0xf]
  %v5219 = vld [vmem:[%s1 + $0x74c] sm:$0xf]
  %v5220 = vld [vmem:[%s1 + $0x754] sm:$0xf]
  %v5221 = vld [vmem:[%s1 + $0x75c] sm:$0xf]
  %v5222 = vld [vmem:[%s1 + $0x764] sm:$0xf]
  %v5223 = vld [vmem:[%s1 + $0x76c] sm:$0xf]
  %v5224 = vld [vmem:[%s1 + $0x774] sm:$0xf]
  %v5225 = vld [vmem:[%s1 + $0x77c] sm:$0xf]
  %v5226 = vld [vmem:[%s1 + $0x784] sm:$0xf]
  %v5227 = vld [vmem:[%s1 + $0x78c] sm:$0xf]
  %v5228 = vld [vmem:[%s1 + $0x794] sm:$0xf]
  %v5229 = vld [vmem:[%s1 + $0x79c] sm:$0xf]
  %v5230 = vld [vmem:[%s1 + $0x7a4] sm:$0xf]
  %v5231 = vld [vmem:[%s1 + $0x7ac] sm:$0xf]
  %v5232 = vld [vmem:[%s1 + $0x7b4] sm:$0xf]
  %v5233 = vld [vmem:[%s1 + $0x7bc] sm:$0xf]
  %v5234 = vld [vmem:[%s1 + $0x7c4] sm:$0xf]
  %v5235 = vld [vmem:[%s1 + $0x7cc] sm:$0xf]
  %v5236 = vld [vmem:[%s1 + $0x7d4] sm:$0xf]
  %v5237 = vld [vmem:[%s1 + $0x7dc] sm:$0xf]
  %v5238 = vld [vmem:[%s1 + $0x7e4] sm:$0xf]
  %v5239 = vld [vmem:[%s1 + $0x7ec] sm:$0xf]
  %v5240 = vld [vmem:[%s1 + $0x7f4] sm:$0xf]
  %v5241 = vld [vmem:[%s1 + $0x7fc] sm:$0xf]
  %v5242 = vld [vmem:[%s1 + $0x804] sm:$0xf]
  %v5243 = vld [vmem:[%s1 + $0x80c] sm:$0xf]
  %v5244 = vld [vmem:[%s1 + $0x814] sm:$0xf]
  %v5245 = vld [vmem:[%s1 + $0x81c] sm:$0xf]
  %v5246 = vld [vmem:[%s1 + $0x824] sm:$0xf]
  %v5247 = vld [vmem:[%s1 + $0x82c] sm:$0xf]
  %v5248 = vld [vmem:[%s1 + $0x834] sm:$0xf]
  %v5249 = vld [vmem:[%s1 + $0x83c] sm:$0xf]
  %v5250 = vld [vmem:[%s1 + $0x844] sm:$0xf]
  %v5251 = vld [vmem:[%s1 + $0x84c] sm:$0xf]
  %v5252 = vld [vmem:[%s1 + $0x854] sm:$0xf]
  %v5253 = vld [vmem:[%s1 + $0x85c] sm:$0xf]
  %v5254 = vld [vmem:[%s1 + $0x864] sm:$0xf]
  %v5255 = vld [vmem:[%s1 + $0x86c] sm:$0xf]
  %v5256 = vld [vmem:[%s1 + $0x874] sm:$0xf]
  %v5257 = vld [vmem:[%s1 + $0x87c] sm:$0xf]
  %v5258 = vld [vmem:[%s1 + $0x884] sm:$0xf]
  %v5259 = vld [vmem:[%s1 + $0x88c] sm:$0xf]
  %v5260 = vld [vmem:[%s1 + $0x894] sm:$0xf]
  %v5261 = vld [vmem:[%s1 + $0x89c] sm:$0xf]
  %v5262 = vld [vmem:[%s1 + $0x8a4] sm:$0xf]
  %v5263 = vld [vmem:[%s1 + $0x8ac] sm:$0xf]
  %v5264 = vld [vmem:[%s1 + $0x8b4] sm:$0xf]
  %v5265 = vld [vmem:[%s1 + $0x8bc] sm:$0xf]
  %v5266 = vld [vmem:[%s1 + $0x8c4] sm:$0xf]
  %v5267 = vld [vmem:[%s1 + $0x8cc] sm:$0xf]
  %v5268 = vld [vmem:[%s1 + $0x8d4] sm:$0xf]
  %v5269 = vld [vmem:[%s1 + $0x8dc] sm:$0xf]
  %v5270 = vld [vmem:[%s1 + $0x8e4] sm:$0xf]
  %v5271 = vld [vmem:[%s1 + $0x8ec] sm:$0xf]
  %v5272 = vld [vmem:[%s1 + $0x8f4] sm:$0xf]
  %v5273 = vld [vmem:[%s1 + $0x8fc] sm:$0xf]
  %v5274 = vld [vmem:[%s1 + $0x904] sm:$0xf]
  %v5275 = vld [vmem:[%s1 + $0x90c] sm:$0xf]
  %v5276 = vld [vmem:[%s1 + $0x914] sm:$0xf]
  %v5277 = vld [vmem:[%s1 + $0x91c] sm:$0xf]
  %v5278 = vld [vmem:[%s1 + $0x924] sm:$0xf]
  %v5279 = vld [vmem:[%s1 + $0x92c] sm:$0xf]
  %v5280 = vld [vmem:[%s1 + $0x934] sm:$0xf]
  %v5281 = vld [vmem:[%s1 + $0x93c] sm:$0xf]
  %v5282 = vld [vmem:[%s1 + $0x944] sm:$0xf]
  %v5283 = vld [vmem:[%s1 + $0x94c] sm:$0xf]
  %v5284 = vld [vmem:[%s1 + $0x954] sm:$0xf]
  %v5285 = vld [vmem:[%s1 + $0x95c] sm:$0xf]
  %v5286 = vld [vmem:[%s1 + $0x964] sm:$0xf]
  %v5287 = vld [vmem:[%s1 + $0x96c] sm:$0xf]
  %v5288 = vld [vmem:[%s1 + $0x974] sm:$0xf]
  %v5289 = vld [vmem:[%s1 + $0x97c] sm:$0xf]
  %v5290 = vld [vmem:[%s1 + $0x984] sm:$0xf]
  %v5291 = vld [vmem:[%s1 + $0x98c] sm:$0xf]
  %v5292 = vld [vmem:[%s1 + $0x994] sm:$0xf]
  %v5293 = vld [vmem:[%s1 + $0x99c] sm:$0xf]
  %v5294 = vld [vmem:[%s1 + $0x9a4] sm:$0xf]
  %v5295 = vld [vmem:[%s1 + $0x9ac] sm:$0xf]
  %v5296 = vld [vmem:[%s1 + $0x9b4] sm:$0xf]
  %v5297 = vld [vmem:[%s1 + $0x9bc] sm:$0xf]
  %v5298 = vld [vmem:[%s1 + $0x9c4] sm:$0xf]
  %v5299 = vld [vmem:[%s1 + $0x9cc] sm:$0xf]
  %v5300 = vld [vmem:[%s1 + $0x9d4] sm:$0xf]
  %v5301 = vld [vmem:[%s1 + $0x9dc] sm:$0xf]
  %v5302 = vld [vmem:[%s1 + $0x9e4] sm:$0xf]
  %v5303 = vld [vmem:[%s1 + $0x9ec] sm:$0xf]
  %v5304 = vld [vmem:[%s1 + $0x9f4] sm:$0xf]
  %v5305 = vld [vmem:[%s1 + $0x9fc] sm:$0xf]
  %v5306 = vld [vmem:[%s1 + $0xa04] sm:$0xf]
  %v5307 = vld [vmem:[%s1 + $0xa0c] sm:$0xf]
  %v5308 = vld [vmem:[%s1 + $0xa14] sm:$0xf]
  %v5309 = vld [vmem:[%s1 + $0xa1c] sm:$0xf]
  %v5310 = vld [vmem:[%s1 + $0xa24] sm:$0xf]
  %v5311 = vld [vmem:[%s1 + $0xa2c] sm:$0xf]
  %v5312 = vld [vmem:[%s1 + $0xa34] sm:$0xf]
  %v5313 = vld [vmem:[%s1 + $0xa3c] sm:$0xf]
  %v5314 = vld [vmem:[%s1 + $0xa44] sm:$0xf]
  %v5315 = vld [vmem:[%s1 + $0xa4c] sm:$0xf]
  %v5316 = vld [vmem:[%s1 + $0xa54] sm:$0xf]
  %v5317 = vld [vmem:[%s1 + $0xa5c] sm:$0xf]
  %v5318 = vld [vmem:[%s1 + $0xa64] sm:$0xf]
  %v5319 = vld [vmem:[%s1 + $0xa6c] sm:$0xf]
  %v5320 = vld [vmem:[%s1 + $0xa74] sm:$0xf]
  %v5321 = vld [vmem:[%s1 + $0xa7c] sm:$0xf]
  %v5333 = vunpack.c.l.b16 %v4975
  %v5334 = vunpack.c.h.b16 %v4975
  %v5335 = vunpack.c.l.b16 %v4976
  %v5336 = vunpack.c.h.b16 %v4976
  %v5337 = vunpack.c.l.b16 %v4977
  %v5338 = vunpack.c.h.b16 %v4977
  %v5339 = vunpack.c.l.b16 %v4978
  %v5340 = vunpack.c.h.b16 %v4978
  %v5341 = vunpack.c.l.b16 %v4979
  %v5342 = vunpack.c.h.b16 %v4979
  %v5343 = vunpack.c.l.b16 %v4980
  %v5344 = vunpack.c.h.b16 %v4980
  %v5345 = vunpack.c.l.b16 %v4981
  %v5346 = vunpack.c.h.b16 %v4981
  %v5347 = vunpack.c.l.b16 %v4982
  %v5348 = vunpack.c.h.b16 %v4982
  %v5349 = vunpack.c.l.b16 %v4983
  %v5350 = vunpack.c.h.b16 %v4983
  %v5351 = vunpack.c.l.b16 %v4984
  %v5352 = vunpack.c.h.b16 %v4984
  %v5353 = vunpack.c.l.b16 %v4985
  %v5354 = vpack.c.b16 %v5333, %v5333
  %v5355 = vpack.c.b16 %v5334, %v5334
  %v5356 = vpack.c.b16 %v5335, %v5335
  %v5357 = vpack.c.b16 %v5336, %v5336
  %v5358 = vpack.c.b16 %v5337, %v5337
  %v5359 = vpack.c.b16 %v5338, %v5338
  %v5360 = vpack.c.b16 %v5339, %v5339
  %v5361 = vpack.c.b16 %v5340, %v5340
  %v5362 = vpack.c.b16 %v5341, %v5341
  %v5363 = vpack.c.b16 %v5342, %v5342
  %v5364 = vpack.c.b16 %v5343, %v5343
  %v5365 = vpack.c.b16 %v5344, %v5344
  %v5366 = vpack.c.b16 %v5345, %v5345
  %v5367 = vpack.c.b16 %v5346, %v5346
  %v5368 = vpack.c.b16 %v5347, %v5347
  %v5369 = vpack.c.b16 %v5348, %v5348
  %v5370 = vpack.c.b16 %v5349, %v5349
  %v5371 = vpack.c.b16 %v5350, %v5350
  %v5372 = vpack.c.b16 %v5351, %v5351
  %v5373 = vpack.c.b16 %v5352, %v5352
  %v5374 = vpack.c.b16 %v5353, %v5353
  %v5732 = vunpack.c.l.b16 %v4986
  %v5733 = vunpack.c.l.b16 %v4987
  %v5734 = vunpack.c.l.b16 %v4988
  %v5735 = vunpack.c.l.b16 %v4989
  %v5736 = vunpack.c.l.b16 %v4990
  %v5737 = vunpack.c.l.b16 %v4991
  %v5738 = vunpack.c.l.b16 %v4992
  %v5739 = vunpack.c.l.b16 %v4993
  %v5740 = vunpack.c.l.b16 %v4994
  %v5741 = vunpack.c.l.b16 %v4995
  %v5742 = vunpack.c.l.b16 %v4996
  %v5743 = vunpack.c.l.b16 %v4997
  %v5744 = vunpack.c.l.b16 %v4998
  %v5745 = vunpack.c.l.b16 %v4999
  %v5746 = vunpack.c.l.b16 %v5000
  %v5747 = vunpack.c.l.b16 %v5001
  %v5748 = vunpack.c.l.b16 %v5002
  %v5749 = vunpack.c.l.b16 %v5003
  %v5750 = vunpack.c.l.b16 %v5004
  %v5751 = vunpack.c.l.b16 %v5005
  %v5752 = vunpack.c.l.b16 %v5006
  %v5753 = vunpack.c.l.b16 %v5007
  %v5754 = vunpack.c.l.b16 %v5008
  %v5755 = vunpack.c.l.b16 %v5009
  %v5756 = vunpack.c.l.b16 %v5010
  %v5757 = vunpack.c.l.b16 %v5011
  %v5758 = vunpack.c.l.b16 %v5012
  %v5759 = vunpack.c.l.b16 %v5013
  %v5760 = vunpack.c.l.b16 %v5014
  %v5761 = vunpack.c.l.b16 %v5015
  %v5762 = vunpack.c.l.b16 %v5016
  %v5763 = vunpack.c.l.b16 %v5017
  %v5764 = vunpack.c.l.b16 %v5018
  %v5765 = vunpack.c.l.b16 %v5019
  %v5766 = vunpack.c.l.b16 %v5020
  %v5767 = vunpack.c.l.b16 %v5021
  %v5768 = vunpack.c.l.b16 %v5022
  %v5769 = vunpack.c.l.b16 %v5023
  %v5770 = vunpack.c.l.b16 %v5024
  %v5771 = vunpack.c.l.b16 %v5025
  %v5772 = vunpack.c.l.b16 %v5026
  %v5773 = vunpack.c.l.b16 %v5027
  %v5774 = vunpack.c.l.b16 %v5028
  %v5775 = vunpack.c.l.b16 %v5029
  %v5776 = vunpack.c.l.b16 %v5030
  %v5777 = vunpack.c.l.b16 %v5031
  %v5778 = vunpack.c.l.b16 %v5032
  %v5779 = vunpack.c.l.b16 %v5033
  %v5780 = vunpack.c.l.b16 %v5034
  %v5781 = vunpack.c.l.b16 %v5035
  %v5782 = vunpack.c.l.b16 %v5036
  %v5783 = vunpack.c.l.b16 %v5037
  %v5784 = vunpack.c.l.b16 %v5038
  %v5785 = vunpack.c.l.b16 %v5039
  %v5786 = vunpack.c.l.b16 %v5040
  %v5787 = vunpack.c.l.b16 %v5041
  %v5788 = vunpack.c.l.b16 %v5042
  %v5789 = vunpack.c.l.b16 %v5043
  %v5790 = vunpack.c.l.b16 %v5044
  %v5791 = vunpack.c.l.b16 %v5045
  %v5792 = vunpack.c.l.b16 %v5046
  %v5793 = vunpack.c.l.b16 %v5047
  %v5794 = vunpack.c.l.b16 %v5048
  %v5795 = vunpack.c.l.b16 %v5049
  %v5796 = vunpack.c.l.b16 %v5050
  %v5797 = vunpack.c.l.b16 %v5051
  %v5798 = vunpack.c.l.b16 %v5052
  %v5799 = vunpack.c.l.b16 %v5053
  %v5800 = vunpack.c.l.b16 %v5054
  %v5801 = vunpack.c.l.b16 %v5055
  %v5802 = vunpack.c.l.b16 %v5056
  %v5803 = vunpack.c.l.b16 %v5057
  %v5804 = vunpack.c.l.b16 %v5058
  %v5805 = vunpack.c.l.b16 %v5059
  %v5806 = vunpack.c.l.b16 %v5060
  %v5807 = vunpack.c.l.b16 %v5061
  %v5808 = vunpack.c.l.b16 %v5062
  %v5809 = vunpack.c.l.b16 %v5063
  %v5810 = vunpack.c.l.b16 %v5064
  %v5811 = vunpack.c.l.b16 %v5065
  %v5812 = vunpack.c.l.b16 %v5066
  %v5813 = vunpack.c.l.b16 %v5067
  %v5814 = vunpack.c.l.b16 %v5068
  %v5815 = vunpack.c.l.b16 %v5069
  %v5816 = vunpack.c.l.b16 %v5070
  %v5817 = vunpack.c.l.b16 %v5071
  %v5818 = vunpack.c.l.b16 %v5072
  %v5819 = vunpack.c.l.b16 %v5073
  %v5820 = vunpack.c.l.b16 %v5074
  %v5821 = vunpack.c.l.b16 %v5075
  %v5822 = vunpack.c.l.b16 %v5076
  %v5823 = vunpack.c.l.b16 %v5077
  %v5824 = vunpack.c.l.b16 %v5078
  %v5825 = vunpack.c.l.b16 %v5079
  %v5826 = vunpack.c.l.b16 %v5080
  %v5827 = vunpack.c.l.b16 %v5081
  %v5828 = vunpack.c.l.b16 %v5082
  %v5829 = vunpack.c.l.b16 %v5083
  %v5830 = vunpack.c.l.b16 %v5084
  %v5831 = vunpack.c.l.b16 %v5085
  %v5832 = vunpack.c.l.b16 %v5086
  %v5833 = vunpack.c.l.b16 %v5087
  %v5834 = vunpack.c.l.b16 %v5088
  %v5835 = vunpack.c.l.b16 %v5089
  %v5836 = vunpack.c.l.b16 %v5090
  %v5837 = vunpack.c.l.b16 %v5091
  %v5838 = vunpack.c.l.b16 %v5092
  %v5839 = vunpack.c.l.b16 %v5093
  %v5840 = vunpack.c.l.b16 %v5094
  %v5841 = vunpack.c.l.b16 %v5095
  %v5842 = vunpack.c.l.b16 %v5096
  %v5843 = vunpack.c.l.b16 %v5097
  %v5844 = vunpack.c.l.b16 %v5098
  %v5845 = vunpack.c.l.b16 %v5099
  %v5846 = vunpack.c.l.b16 %v5100
  %v5847 = vunpack.c.l.b16 %v5101
  %v5848 = vunpack.c.l.b16 %v5102
  %v5849 = vunpack.c.l.b16 %v5103
  %v5850 = vunpack.c.l.b16 %v5104
  %v5851 = vunpack.c.l.b16 %v5105
  %v5852 = vunpack.c.l.b16 %v5106
  %v5853 = vunpack.c.l.b16 %v5107
  %v5854 = vunpack.c.l.b16 %v5108
  %v5855 = vunpack.c.l.b16 %v5109
  %v5856 = vunpack.c.l.b16 %v5110
  %v5857 = vunpack.c.l.b16 %v5111
  %v5858 = vunpack.c.l.b16 %v5112
  %v5859 = vunpack.c.l.b16 %v5113
  %v5860 = vunpack.c.l.b16 %v5114
  %v5861 = vunpack.c.l.b16 %v5115
  %v5862 = vunpack.c.l.b16 %v5116
  %v5863 = vunpack.c.l.b16 %v5117
  %v5864 = vunpack.c.l.b16 %v5118
  %v5865 = vunpack.c.l.b16 %v5119
  %v5866 = vunpack.c.l.b16 %v5120
  %v5867 = vunpack.c.l.b16 %v5121
  %v5868 = vunpack.c.l.b16 %v5122
  %v5869 = vunpack.c.l.b16 %v5123
  %v5870 = vunpack.c.l.b16 %v5124
  %v5871 = vunpack.c.l.b16 %v5125
  %v5872 = vunpack.c.l.b16 %v5126
  %v5873 = vunpack.c.l.b16 %v5127
  %v5874 = vunpack.c.l.b16 %v5128
  %v5875 = vunpack.c.l.b16 %v5129
  %v5876 = vunpack.c.l.b16 %v5130
  %v5877 = vunpack.c.l.b16 %v5131
  %v5878 = vunpack.c.l.b16 %v5132
  %v5879 = vunpack.c.l.b16 %v5133
  %v5880 = vunpack.c.l.b16 %v5134
  %v5881 = vunpack.c.l.b16 %v5135
  %v5882 = vunpack.c.l.b16 %v5136
  %v5883 = vunpack.c.l.b16 %v5137
  %v5884 = vunpack.c.l.b16 %v5138
  %v5885 = vunpack.c.l.b16 %v5139
  %v5886 = vunpack.c.l.b16 %v5140
  %v5887 = vunpack.c.l.b16 %v5141
  %v5888 = vunpack.c.l.b16 %v5142
  %v5889 = vunpack.c.l.b16 %v5143
  %v5890 = vunpack.c.l.b16 %v5144
  %v5891 = vunpack.c.l.b16 %v5145
  %v5892 = vunpack.c.l.b16 %v5146
  %v5893 = vunpack.c.l.b16 %v5147
  %v5894 = vunpack.c.l.b16 %v5148
  %v5895 = vunpack.c.l.b16 %v5149
  %v5896 = vunpack.c.l.b16 %v5150
  %v5897 = vunpack.c.l.b16 %v5151
  %v5898 = vunpack.c.l.b16 %v5152
  %v5899 = vunpack.c.l.b16 %v5153
  %v5900 = vunpack.c.l.b16 %v5154
  %v5901 = vunpack.c.l.b16 %v5155
  %v5902 = vunpack.c.l.b16 %v5156
  %v5903 = vunpack.c.l.b16 %v5157
  %v5904 = vunpack.c.l.b16 %v5158
  %v5905 = vunpack.c.l.b16 %v5159
  %v5906 = vunpack.c.l.b16 %v5160
  %v5907 = vunpack.c.l.b16 %v5161
  %v5908 = vunpack.c.l.b16 %v5162
  %v5909 = vunpack.c.l.b16 %v5163
  %v5910 = vunpack.c.l.b16 %v5164
  %v5911 = vunpack.c.l.b16 %v5165
  %v5912 = vunpack.c.l.b16 %v5166
  %v5913 = vunpack.c.l.b16 %v5167
  %v5914 = vunpack.c.l.b16 %v5168
  %v5915 = vunpack.c.l.b16 %v5169
  %v5916 = vunpack.c.l.b16 %v5170
  %v5917 = vunpack.c.l.b16 %v5171
  %v5918 = vunpack.c.l.b16 %v5172
  %v5919 = vunpack.c.l.b16 %v5173
  %v5920 = vunpack.c.l.b16 %v5174
  %v5921 = vunpack.c.l.b16 %v5175
  %v5922 = vunpack.c.l.b16 %v5176
  %v5923 = vunpack.c.l.b16 %v5177
  %v5924 = vunpack.c.l.b16 %v5178
  %v5925 = vunpack.c.l.b16 %v5179
  %v5926 = vunpack.c.l.b16 %v5180
  %v5927 = vunpack.c.l.b16 %v5181
  %v5928 = vunpack.c.l.b16 %v5182
  %v5929 = vunpack.c.l.b16 %v5183
  %v5930 = vunpack.c.l.b16 %v5184
  %v5931 = vunpack.c.l.b16 %v5185
  %v5932 = vunpack.c.l.b16 %v5186
  %v5933 = vunpack.c.l.b16 %v5187
  %v5934 = vunpack.c.l.b16 %v5188
  %v5935 = vunpack.c.l.b16 %v5189
  %v5936 = vunpack.c.l.b16 %v5190
  %v5937 = vunpack.c.l.b16 %v5191
  %v5938 = vunpack.c.l.b16 %v5192
  %v5939 = vunpack.c.l.b16 %v5193
  %v5940 = vunpack.c.l.b16 %v5194
  %v5941 = vunpack.c.l.b16 %v5195
  %v5942 = vunpack.c.l.b16 %v5196
  %v5943 = vunpack.c.l.b16 %v5197
  %v5944 = vunpack.c.l.b16 %v5198
  %v5945 = vunpack.c.l.b16 %v5199
  %v5946 = vunpack.c.l.b16 %v5200
  %v5947 = vunpack.c.l.b16 %v5201
  %v5948 = vunpack.c.l.b16 %v5202
  %v5949 = vunpack.c.l.b16 %v5203
  %v5950 = vunpack.c.l.b16 %v5204
  %v5951 = vunpack.c.l.b16 %v5205
  %v5952 = vunpack.c.l.b16 %v5206
  %v5953 = vunpack.c.l.b16 %v5207
  %v5954 = vunpack.c.l.b16 %v5208
  %v5955 = vunpack.c.l.b16 %v5209
  %v5956 = vunpack.c.l.b16 %v5210
  %v5957 = vunpack.c.l.b16 %v5211
  %v5958 = vunpack.c.l.b16 %v5212
  %v5959 = vunpack.c.l.b16 %v5213
  %v5960 = vunpack.c.l.b16 %v5214
  %v5961 = vunpack.c.l.b16 %v5215
  %v5962 = vunpack.c.l.b16 %v5216
  %v5963 = vunpack.c.l.b16 %v5217
  %v5964 = vunpack.c.l.b16 %v5218
  %v5965 = vunpack.c.l.b16 %v5219
  %v5966 = vunpack.c.l.b16 %v5220
  %v5967 = vunpack.c.l.b16 %v5221
  %v5968 = vunpack.c.l.b16 %v5222
  %v5969 = vunpack.c.l.b16 %v5223
  %v5970 = vunpack.c.l.b16 %v5224
  %v5971 = vunpack.c.l.b16 %v5225
  %v5972 = vunpack.c.l.b16 %v5226
  %v5973 = vunpack.c.l.b16 %v5227
  %v5974 = vunpack.c.l.b16 %v5228
  %v5975 = vunpack.c.l.b16 %v5229
  %v5976 = vunpack.c.l.b16 %v5230
  %v5977 = vunpack.c.l.b16 %v5231
  %v5978 = vunpack.c.l.b16 %v5232
  %v5979 = vunpack.c.l.b16 %v5233
  %v5980 = vunpack.c.l.b16 %v5234
  %v5981 = vunpack.c.l.b16 %v5235
  %v5982 = vunpack.c.l.b16 %v5236
  %v5983 = vunpack.c.l.b16 %v5237
  %v5984 = vunpack.c.l.b16 %v5238
  %v5985 = vunpack.c.l.b16 %v5239
  %v5986 = vunpack.c.l.b16 %v5240
  %v5987 = vunpack.c.l.b16 %v5241
  %v5988 = vunpack.c.l.b16 %v5242
  %v5989 = vunpack.c.l.b16 %v5243
  %v5990 = vunpack.c.l.b16 %v5244
  %v5991 = vunpack.c.l.b16 %v5245
  %v5992 = vunpack.c.l.b16 %v5246
  %v5993 = vunpack.c.l.b16 %v5247
  %v5994 = vunpack.c.l.b16 %v5248
  %v5995 = vunpack.c.l.b16 %v5249
  %v5996 = vunpack.c.l.b16 %v5250
  %v5997 = vunpack.c.l.b16 %v5251
  %v5998 = vunpack.c.l.b16 %v5252
  %v5999 = vunpack.c.l.b16 %v5253
  %v6000 = vunpack.c.l.b16 %v5254
  %v6001 = vunpack.c.l.b16 %v5255
  %v6002 = vunpack.c.l.b16 %v5256
  %v6003 = vunpack.c.l.b16 %v5257
  %v6004 = vunpack.c.l.b16 %v5258
  %v6005 = vunpack.c.l.b16 %v5259
  %v6006 = vunpack.c.l.b16 %v5260
  %v6007 = vunpack.c.l.b16 %v5261
  %v6008 = vunpack.c.l.b16 %v5262
  %v6009 = vunpack.c.l.b16 %v5263
  %v6010 = vunpack.c.l.b16 %v5264
  %v6011 = vunpack.c.l.b16 %v5265
  %v6012 = vunpack.c.l.b16 %v5266
  %v6013 = vunpack.c.l.b16 %v5267
  %v6014 = vunpack.c.l.b16 %v5268
  %v6015 = vunpack.c.l.b16 %v5269
  %v6016 = vunpack.c.l.b16 %v5270
  %v6017 = vunpack.c.l.b16 %v5271
  %v6018 = vunpack.c.l.b16 %v5272
  %v6019 = vunpack.c.l.b16 %v5273
  %v6020 = vunpack.c.l.b16 %v5274
  %v6021 = vunpack.c.l.b16 %v5275
  %v6022 = vunpack.c.l.b16 %v5276
  %v6023 = vunpack.c.l.b16 %v5277
  %v6024 = vunpack.c.l.b16 %v5278
  %v6025 = vunpack.c.l.b16 %v5279
  %v6026 = vunpack.c.l.b16 %v5280
  %v6027 = vunpack.c.l.b16 %v5281
  %v6028 = vunpack.c.l.b16 %v5282
  %v6029 = vunpack.c.l.b16 %v5283
  %v6030 = vunpack.c.l.b16 %v5284
  %v6031 = vunpack.c.l.b16 %v5285
  %v6032 = vunpack.c.l.b16 %v5286
  %v6033 = vunpack.c.l.b16 %v5287
  %v6034 = vunpack.c.l.b16 %v5288
  %v6035 = vunpack.c.l.b16 %v5289
  %v6036 = vunpack.c.l.b16 %v5290
  %v6037 = vunpack.c.l.b16 %v5291
  %v6038 = vunpack.c.l.b16 %v5292
  %v6039 = vunpack.c.l.b16 %v5293
  %v6040 = vunpack.c.l.b16 %v5294
  %v6041 = vunpack.c.l.b16 %v5295
  %v6042 = vunpack.c.l.b16 %v5296
  %v6043 = vunpack.c.l.b16 %v5297
  %v6044 = vunpack.c.l.b16 %v5298
  %v6045 = vunpack.c.l.b16 %v5299
  %v6046 = vunpack.c.l.b16 %v5300
  %v6047 = vunpack.c.l.b16 %v5301
  %v6048 = vunpack.c.l.b16 %v5302
  %v6049 = vunpack.c.l.b16 %v5303
  %v6050 = vunpack.c.l.b16 %v5304
  %v6051 = vunpack.c.l.b16 %v5305
  %v6052 = vunpack.c.l.b16 %v5306
  %v6053 = vunpack.c.l.b16 %v5307
  %v6054 = vunpack.c.l.b16 %v5308
  %v6055 = vunpack.c.l.b16 %v5309
  %v6056 = vunpack.c.l.b16 %v5310
  %v6057 = vunpack.c.l.b16 %v5311
  %v6058 = vunpack.c.l.b16 %v5312
  %v6059 = vunpack.c.l.b16 %v5313
  %v6060 = vunpack.c.l.b16 %v5314
  %v6061 = vunpack.c.l.b16 %v5315
  %v6062 = vunpack.c.l.b16 %v5316
  %v6063 = vunpack.c.l.b16 %v5317
  %v6064 = vunpack.c.l.b16 %v5318
  %v6065 = vunpack.c.l.b16 %v5319
  %v6066 = vunpack.c.l.b16 %v5320
  %v6067 = vunpack.c.l.b16 %v5321
  %v6068 = vpack.c.b16 %v5733, %v5732
  %v6069 = vpack.c.b16 %v5735, %v5734
  %v6070 = vpack.c.b16 %v5737, %v5736
  %v6071 = vpack.c.b16 %v5739, %v5738
  %v6072 = vpack.c.b16 %v5741, %v5740
  %v6073 = vpack.c.b16 %v5743, %v5742
  %v6074 = vpack.c.b16 %v5745, %v5744
  %v6075 = vpack.c.b16 %v5747, %v5746
  %v6076 = vpack.c.b16 %v5749, %v5748
  %v6077 = vpack.c.b16 %v5751, %v5750
  %v6078 = vpack.c.b16 %v5753, %v5752
  %v6079 = vpack.c.b16 %v5755, %v5754
  %v6080 = vpack.c.b16 %v5757, %v5756
  %v6081 = vpack.c.b16 %v5759, %v5758
  %v6082 = vpack.c.b16 %v5761, %v5760
  %v6083 = vpack.c.b16 %v5763, %v5762
  %v6084 = vpack.c.b16 %v5765, %v5764
  %v6085 = vpack.c.b16 %v5767, %v5766
  %v6086 = vpack.c.b16 %v5769, %v5768
  %v6087 = vpack.c.b16 %v5771, %v5770
  %v6088 = vpack.c.b16 %v5773, %v5772
  %v6089 = vpack.c.b16 %v5775, %v5774
  %v6090 = vpack.c.b16 %v5777, %v5776
  %v6091 = vpack.c.b16 %v5779, %v5778
  %v6092 = vpack.c.b16 %v5781, %v5780
  %v6093 = vpack.c.b16 %v5783, %v5782
  %v6094 = vpack.c.b16 %v5785, %v5784
  %v6095 = vpack.c.b16 %v5787, %v5786
  %v6096 = vpack.c.b16 %v5789, %v5788
  %v6097 = vpack.c.b16 %v5791, %v5790
  %v6098 = vpack.c.b16 %v5793, %v5792
  %v6099 = vpack.c.b16 %v5795, %v5794
  %v6100 = vpack.c.b16 %v5797, %v5796
  %v6101 = vpack.c.b16 %v5799, %v5798
  %v6102 = vpack.c.b16 %v5801, %v5800
  %v6103 = vpack.c.b16 %v5803, %v5802
  %v6104 = vpack.c.b16 %v5805, %v5804
  %v6105 = vpack.c.b16 %v5807, %v5806
  %v6106 = vpack.c.b16 %v5809, %v5808
  %v6107 = vpack.c.b16 %v5811, %v5810
  %v6108 = vpack.c.b16 %v5813, %v5812
  %v6109 = vpack.c.b16 %v5815, %v5814
  %v6110 = vpack.c.b16 %v5817, %v5816
  %v6111 = vpack.c.b16 %v5819, %v5818
  %v6112 = vpack.c.b16 %v5821, %v5820
  %v6113 = vpack.c.b16 %v5823, %v5822
  %v6114 = vpack.c.b16 %v5825, %v5824
  %v6115 = vpack.c.b16 %v5827, %v5826
  %v6116 = vpack.c.b16 %v5829, %v5828
  %v6117 = vpack.c.b16 %v5831, %v5830
  %v6118 = vpack.c.b16 %v5833, %v5832
  %v6119 = vpack.c.b16 %v5835, %v5834
  %v6120 = vpack.c.b16 %v5837, %v5836
  %v6121 = vpack.c.b16 %v5839, %v5838
  %v6122 = vpack.c.b16 %v5841, %v5840
  %v6123 = vpack.c.b16 %v5843, %v5842
  %v6124 = vpack.c.b16 %v5845, %v5844
  %v6125 = vpack.c.b16 %v5847, %v5846
  %v6126 = vpack.c.b16 %v5849, %v5848
  %v6127 = vpack.c.b16 %v5851, %v5850
  %v6128 = vpack.c.b16 %v5853, %v5852
  %v6129 = vpack.c.b16 %v5855, %v5854
  %v6130 = vpack.c.b16 %v5857, %v5856
  %v6131 = vpack.c.b16 %v5859, %v5858
  %v6132 = vpack.c.b16 %v5861, %v5860
  %v6133 = vpack.c.b16 %v5863, %v5862
  %v6134 = vpack.c.b16 %v5865, %v5864
  %v6135 = vpack.c.b16 %v5867, %v5866
  %v6136 = vpack.c.b16 %v5869, %v5868
  %v6137 = vpack.c.b16 %v5871, %v5870
  %v6138 = vpack.c.b16 %v5873, %v5872
  %v6139 = vpack.c.b16 %v5875, %v5874
  %v6140 = vpack.c.b16 %v5877, %v5876
  %v6141 = vpack.c.b16 %v5879, %v5878
  %v6142 = vpack.c.b16 %v5881, %v5880
  %v6143 = vpack.c.b16 %v5883, %v5882
  %v6144 = vpack.c.b16 %v5885, %v5884
  %v6145 = vpack.c.b16 %v5887, %v5886
  %v6146 = vpack.c.b16 %v5889, %v5888
  %v6147 = vpack.c.b16 %v5891, %v5890
  %v6148 = vpack.c.b16 %v5893, %v5892
  %v6149 = vpack.c.b16 %v5895, %v5894
  %v6150 = vpack.c.b16 %v5897, %v5896
  %v6151 = vpack.c.b16 %v5899, %v5898
  %v6152 = vpack.c.b16 %v5901, %v5900
  %v6153 = vpack.c.b16 %v5903, %v5902
  %v6154 = vpack.c.b16 %v5905, %v5904
  %v6155 = vpack.c.b16 %v5907, %v5906
  %v6156 = vpack.c.b16 %v5909, %v5908
  %v6157 = vpack.c.b16 %v5911, %v5910
  %v6158 = vpack.c.b16 %v5913, %v5912
  %v6159 = vpack.c.b16 %v5915, %v5914
  %v6160 = vpack.c.b16 %v5917, %v5916
  %v6161 = vpack.c.b16 %v5919, %v5918
  %v6162 = vpack.c.b16 %v5921, %v5920
  %v6163 = vpack.c.b16 %v5923, %v5922
  %v6164 = vpack.c.b16 %v5925, %v5924
  %v6165 = vpack.c.b16 %v5927, %v5926
  %v6166 = vpack.c.b16 %v5929, %v5928
  %v6167 = vpack.c.b16 %v5931, %v5930
  %v6168 = vpack.c.b16 %v5933, %v5932
  %v6169 = vpack.c.b16 %v5935, %v5934
  %v6170 = vpack.c.b16 %v5937, %v5936
  %v6171 = vpack.c.b16 %v5939, %v5938
  %v6172 = vpack.c.b16 %v5941, %v5940
  %v6173 = vpack.c.b16 %v5943, %v5942
  %v6174 = vpack.c.b16 %v5945, %v5944
  %v6175 = vpack.c.b16 %v5947, %v5946
  %v6176 = vpack.c.b16 %v5949, %v5948
  %v6177 = vpack.c.b16 %v5951, %v5950
  %v6178 = vpack.c.b16 %v5953, %v5952
  %v6179 = vpack.c.b16 %v5955, %v5954
  %v6180 = vpack.c.b16 %v5957, %v5956
  %v6181 = vpack.c.b16 %v5959, %v5958
  %v6182 = vpack.c.b16 %v5961, %v5960
  %v6183 = vpack.c.b16 %v5963, %v5962
  %v6184 = vpack.c.b16 %v5965, %v5964
  %v6185 = vpack.c.b16 %v5967, %v5966
  %v6186 = vpack.c.b16 %v5969, %v5968
  %v6187 = vpack.c.b16 %v5971, %v5970
  %v6188 = vpack.c.b16 %v5973, %v5972
  %v6189 = vpack.c.b16 %v5975, %v5974
  %v6190 = vpack.c.b16 %v5977, %v5976
  %v6191 = vpack.c.b16 %v5979, %v5978
  %v6192 = vpack.c.b16 %v5981, %v5980
  %v6193 = vpack.c.b16 %v5983, %v5982
  %v6194 = vpack.c.b16 %v5985, %v5984
  %v6195 = vpack.c.b16 %v5987, %v5986
  %v6196 = vpack.c.b16 %v5989, %v5988
  %v6197 = vpack.c.b16 %v5991, %v5990
  %v6198 = vpack.c.b16 %v5993, %v5992
  %v6199 = vpack.c.b16 %v5995, %v5994
  %v6200 = vpack.c.b16 %v5997, %v5996
  %v6201 = vpack.c.b16 %v5999, %v5998
  %v6202 = vpack.c.b16 %v6001, %v6000
  %v6203 = vpack.c.b16 %v6003, %v6002
  %v6204 = vpack.c.b16 %v6005, %v6004
  %v6205 = vpack.c.b16 %v6007, %v6006
  %v6206 = vpack.c.b16 %v6009, %v6008
  %v6207 = vpack.c.b16 %v6011, %v6010
  %v6208 = vpack.c.b16 %v6013, %v6012
  %v6209 = vpack.c.b16 %v6015, %v6014
  %v6210 = vpack.c.b16 %v6017, %v6016
  %v6211 = vpack.c.b16 %v6019, %v6018
  %v6212 = vpack.c.b16 %v6021, %v6020
  %v6213 = vpack.c.b16 %v6023, %v6022
  %v6214 = vpack.c.b16 %v6025, %v6024
  %v6215 = vpack.c.b16 %v6027, %v6026
  %v6216 = vpack.c.b16 %v6029, %v6028
  %v6217 = vpack.c.b16 %v6031, %v6030
  %v6218 = vpack.c.b16 %v6033, %v6032
  %v6219 = vpack.c.b16 %v6035, %v6034
  %v6220 = vpack.c.b16 %v6037, %v6036
  %v6221 = vpack.c.b16 %v6039, %v6038
  %v6222 = vpack.c.b16 %v6041, %v6040
  %v6223 = vpack.c.b16 %v6043, %v6042
  %v6224 = vpack.c.b16 %v6045, %v6044
  %v6225 = vpack.c.b16 %v6047, %v6046
  %v6226 = vpack.c.b16 %v6049, %v6048
  %v6227 = vpack.c.b16 %v6051, %v6050
  %v6228 = vpack.c.b16 %v6053, %v6052
  %v6229 = vpack.c.b16 %v6055, %v6054
  %v6230 = vpack.c.b16 %v6057, %v6056
  %v6231 = vpack.c.b16 %v6059, %v6058
  %v6232 = vpack.c.b16 %v6061, %v6060
  %v6233 = vpack.c.b16 %v6063, %v6062
  %v6234 = vpack.c.b16 %v6065, %v6064
  %v6235 = vpack.c.b16 %v6067, %v6066
  %6404 = vmatprep.subr.bf16.mxu0 0
  %6405 = vmatpush1.bf16.msra.mxu0 %v6075
  %6406 = vmatprep.subr.bf16.mxu0 0
  %6407 = vmatpush1.bf16.msra.mxu0 %v6074
  %6408 = vmatprep.subr.bf16.mxu0 0
  %6409 = vmatpush1.bf16.msra.mxu0 %v6073
  %6410 = vmatprep.subr.bf16.mxu0 0
  %6411 = vmatpush1.bf16.msra.mxu0 %v6072
  %6412 = vmatprep.subr.bf16.mxu0 0
  %6413 = vmatpush1.bf16.msra.mxu0 %v6071
  %6414 = vmatprep.subr.bf16.mxu0 0
  %6415 = vmatpush1.bf16.msra.mxu0 %v6070
  %6416 = vmatprep.subr.bf16.mxu0 0
  %6417 = vmatpush1.bf16.msra.mxu0 %v6069
  %6418 = vmatprep.subr.bf16.mxu0 0
  %6419 = vmatpush1.bf16.msra.mxu0 %v6068
  %6420 = vmatprep.subr.bf16.mxu0 0
  %6421 = vmatpush2.bf16.msra.mxu0 %v6083
  %6422 = vmatprep.subr.bf16.mxu0 0
  %6423 = vmatpush2.bf16.msra.mxu0 %v6082
  %6424 = vmatprep.subr.bf16.mxu0 0
  %6425 = vmatpush2.bf16.msra.mxu0 %v6081
  %6426 = vmatprep.subr.bf16.mxu0 0
  %6427 = vmatpush2.bf16.msra.mxu0 %v6080
  %6428 = vmatprep.subr.bf16.mxu0 0
  %6429 = vmatpush2.bf16.msra.mxu0 %v6079
  %6430 = vmatprep.subr.bf16.mxu0 0
  %6431 = vmatpush2.bf16.msra.mxu0 %v6078
  %6432 = vmatprep.subr.bf16.mxu0 0
  %6433 = vmatpush2.bf16.msra.mxu0 %v6077
  %6434 = vmatprep.subr.bf16.mxu0 0
  %6435 = vmatpush2.bf16.msra.mxu0 %v6076
  %6436 = vmatprep.mubr.bf16.mxu0 %v5355
  %6437 = vmatmul.mubr.bf16.gmra.mxu0 %v5354
  %v6438 = vpop.f32.mrf.mxu0
  %v6439 = vadd.f32 0.0, %v6438
  %v6440 = vpop.f32.mrf.mxu0
  %v6441 = vpop.f32.mrf.mxu0
  %v6442 = vpop.f32.mrf.mxu0
  %6443 = vdwg.mxu0
  %6444 = vmatprep.subr.bf16.mxu0 0
  %6445 = vmatpush1.bf16.msra.mxu0 %v6091
  %6446 = vmatprep.subr.bf16.mxu0 0
  %6447 = vmatpush1.bf16.msra.mxu0 %v6090
  %6448 = vmatprep.subr.bf16.mxu0 0
  %6449 = vmatpush1.bf16.msra.mxu0 %v6089
  %6450 = vmatprep.subr.bf16.mxu0 0
  %6451 = vmatpush1.bf16.msra.mxu0 %v6088
  %6452 = vmatprep.subr.bf16.mxu0 0
  %6453 = vmatpush1.bf16.msra.mxu0 %v6087
  %6454 = vmatprep.subr.bf16.mxu0 0
  %6455 = vmatpush1.bf16.msra.mxu0 %v6086
  %6456 = vmatprep.subr.bf16.mxu0 0
  %6457 = vmatpush1.bf16.msra.mxu0 %v6085
  %6458 = vmatprep.subr.bf16.mxu0 0
  %6459 = vmatpush1.bf16.msra.mxu0 %v6084
  %6460 = vmatprep.subr.bf16.mxu0 0
  %6461 = vmatpush2.bf16.msra.mxu0 %v6099
  %6462 = vmatprep.subr.bf16.mxu0 0
  %6463 = vmatpush2.bf16.msra.mxu0 %v6098
  %6464 = vmatprep.subr.bf16.mxu0 0
  %6465 = vmatpush2.bf16.msra.mxu0 %v6097
  %6466 = vmatprep.subr.bf16.mxu0 0
  %6467 = vmatpush2.bf16.msra.mxu0 %v6096
  %6468 = vmatprep.subr.bf16.mxu0 0
  %6469 = vmatpush2.bf16.msra.mxu0 %v6095
  %6470 = vmatprep.subr.bf16.mxu0 0
  %6471 = vmatpush2.bf16.msra.mxu0 %v6094
  %6472 = vmatprep.subr.bf16.mxu0 0
  %6473 = vmatpush2.bf16.msra.mxu0 %v6093
  %6474 = vmatprep.subr.bf16.mxu0 0
  %6475 = vmatpush2.bf16.msra.mxu0 %v6092
  %6476 = vmatprep.mubr.bf16.mxu0 %v5357
  %6477 = vmatmul.mubr.bf16.gmra.mxu0 %v5356
  %v6478 = vpop.f32.mrf.mxu0
  %v6479 = vadd.f32 %v6439, %v6478
  %v6480 = vpop.f32.mrf.mxu0
  %v6481 = vpop.f32.mrf.mxu0
  %v6482 = vpop.f32.mrf.mxu0
  %6483 = vdwg.mxu0
  %6484 = vmatprep.subr.bf16.mxu0 0
  %6485 = vmatpush1.bf16.msra.mxu0 %v6107
  %6486 = vmatprep.subr.bf16.mxu0 0
  %6487 = vmatpush1.bf16.msra.mxu0 %v6106
  %6488 = vmatprep.subr.bf16.mxu0 0
  %6489 = vmatpush1.bf16.msra.mxu0 %v6105
  %6490 = vmatprep.subr.bf16.mxu0 0
  %6491 = vmatpush1.bf16.msra.mxu0 %v6104
  %6492 = vmatprep.subr.bf16.mxu0 0
  %6493 = vmatpush1.bf16.msra.mxu0 %v6103
  %6494 = vmatprep.subr.bf16.mxu0 0
  %6495 = vmatpush1.bf16.msra.mxu0 %v6102
  %6496 = vmatprep.subr.bf16.mxu0 0
  %6497 = vmatpush1.bf16.msra.mxu0 %v6101
  %6498 = vmatprep.subr.bf16.mxu0 0
  %6499 = vmatpush1.bf16.msra.mxu0 %v6100
  %6500 = vmatprep.subr.bf16.mxu0 0
  %6501 = vmatpush2.bf16.msra.mxu0 %v6115
  %6502 = vmatprep.subr.bf16.mxu0 0
  %6503 = vmatpush2.bf16.msra.mxu0 %v6114
  %6504 = vmatprep.subr.bf16.mxu0 0
  %6505 = vmatpush2.bf16.msra.mxu0 %v6113
  %6506 = vmatprep.subr.bf16.mxu0 0
  %6507 = vmatpush2.bf16.msra.mxu0 %v6112
  %6508 = vmatprep.subr.bf16.mxu0 0
  %6509 = vmatpush2.bf16.msra.mxu0 %v6111
  %6510 = vmatprep.subr.bf16.mxu0 0
  %6511 = vmatpush2.bf16.msra.mxu0 %v6110
  %6512 = vmatprep.subr.bf16.mxu0 0
  %6513 = vmatpush2.bf16.msra.mxu0 %v6109
  %6514 = vmatprep.subr.bf16.mxu0 0
  %6515 = vmatpush2.bf16.msra.mxu0 %v6108
  %6516 = vmatprep.mubr.bf16.mxu0 %v5359
  %6517 = vmatmul.mubr.bf16.gmra.mxu0 %v5358
  %v6518 = vpop.f32.mrf.mxu0
  %v6519 = vadd.f32 %v6479, %v6518
  %v6520 = vpop.f32.mrf.mxu0
  %v6521 = vpop.f32.mrf.mxu0
  %v6522 = vpop.f32.mrf.mxu0
  %6523 = vdwg.mxu0
  %6524 = vmatprep.subr.bf16.mxu0 0
  %6525 = vmatpush1.bf16.msra.mxu0 %v6123
  %6526 = vmatprep.subr.bf16.mxu0 0
  %6527 = vmatpush1.bf16.msra.mxu0 %v6122
  %6528 = vmatprep.subr.bf16.mxu0 0
  %6529 = vmatpush1.bf16.msra.mxu0 %v6121
  %6530 = vmatprep.subr.bf16.mxu0 0
  %6531 = vmatpush1.bf16.msra.mxu0 %v6120
  %6532 = vmatprep.subr.bf16.mxu0 0
  %6533 = vmatpush1.bf16.msra.mxu0 %v6119
  %6534 = vmatprep.subr.bf16.mxu0 0
  %6535 = vmatpush1.bf16.msra.mxu0 %v6118
  %6536 = vmatprep.subr.bf16.mxu0 0
  %6537 = vmatpush1.bf16.msra.mxu0 %v6117
  %6538 = vmatprep.subr.bf16.mxu0 0
  %6539 = vmatpush1.bf16.msra.mxu0 %v6116
  %6540 = vmatprep.subr.bf16.mxu0 0
  %6541 = vmatpush2.bf16.msra.mxu0 %v6131
  %6542 = vmatprep.subr.bf16.mxu0 0
  %6543 = vmatpush2.bf16.msra.mxu0 %v6130
  %6544 = vmatprep.subr.bf16.mxu0 0
  %6545 = vmatpush2.bf16.msra.mxu0 %v6129
  %6546 = vmatprep.subr.bf16.mxu0 0
  %6547 = vmatpush2.bf16.msra.mxu0 %v6128
  %6548 = vmatprep.subr.bf16.mxu0 0
  %6549 = vmatpush2.bf16.msra.mxu0 %v6127
  %6550 = vmatprep.subr.bf16.mxu0 0
  %6551 = vmatpush2.bf16.msra.mxu0 %v6126
  %6552 = vmatprep.subr.bf16.mxu0 0
  %6553 = vmatpush2.bf16.msra.mxu0 %v6125
  %6554 = vmatprep.subr.bf16.mxu0 0
  %6555 = vmatpush2.bf16.msra.mxu0 %v6124
  %6556 = vmatprep.mubr.bf16.mxu0 %v5361
  %6557 = vmatmul.mubr.bf16.gmra.mxu0 %v5360
  %v6558 = vpop.f32.mrf.mxu0
  %v6559 = vadd.f32 %v6519, %v6558
  %v6560 = vpop.f32.mrf.mxu0
  %v6561 = vpop.f32.mrf.mxu0
  %v6562 = vpop.f32.mrf.mxu0
  %6563 = vdwg.mxu0
  %6564 = vmatprep.subr.bf16.mxu0 0
  %6565 = vmatpush1.bf16.msra.mxu0 %v6139
  %6566 = vmatprep.subr.bf16.mxu0 0
  %6567 = vmatpush1.bf16.msra.mxu0 %v6138
  %6568 = vmatprep.subr.bf16.mxu0 0
  %6569 = vmatpush1.bf16.msra.mxu0 %v6137
  %6570 = vmatprep.subr.bf16.mxu0 0
  %6571 = vmatpush1.bf16.msra.mxu0 %v6136
  %6572 = vmatprep.subr.bf16.mxu0 0
  %6573 = vmatpush1.bf16.msra.mxu0 %v6135
  %6574 = vmatprep.subr.bf16.mxu0 0
  %6575 = vmatpush1.bf16.msra.mxu0 %v6134
  %6576 = vmatprep.subr.bf16.mxu0 0
  %6577 = vmatpush1.bf16.msra.mxu0 %v6133
  %6578 = vmatprep.subr.bf16.mxu0 0
  %6579 = vmatpush1.bf16.msra.mxu0 %v6132
  %6580 = vmatprep.subr.bf16.mxu0 0
  %6581 = vmatpush2.bf16.msra.mxu0 %v6147
  %6582 = vmatprep.subr.bf16.mxu0 0
  %6583 = vmatpush2.bf16.msra.mxu0 %v6146
  %6584 = vmatprep.subr.bf16.mxu0 0
  %6585 = vmatpush2.bf16.msra.mxu0 %v6145
  %6586 = vmatprep.subr.bf16.mxu0 0
  %6587 = vmatpush2.bf16.msra.mxu0 %v6144
  %6588 = vmatprep.subr.bf16.mxu0 0
  %6589 = vmatpush2.bf16.msra.mxu0 %v6143
  %6590 = vmatprep.subr.bf16.mxu0 0
  %6591 = vmatpush2.bf16.msra.mxu0 %v6142
  %6592 = vmatprep.subr.bf16.mxu0 0
  %6593 = vmatpush2.bf16.msra.mxu0 %v6141
  %6594 = vmatprep.subr.bf16.mxu0 0
  %6595 = vmatpush2.bf16.msra.mxu0 %v6140
  %6596 = vmatprep.mubr.bf16.mxu0 %v5363
  %6597 = vmatmul.mubr.bf16.gmra.mxu0 %v5362
  %v6598 = vpop.f32.mrf.mxu0
  %v6599 = vadd.f32 %v6559, %v6598
  %v6600 = vpop.f32.mrf.mxu0
  %v6601 = vpop.f32.mrf.mxu0
  %v6602 = vpop.f32.mrf.mxu0
  %6603 = vdwg.mxu0
  %6604 = vmatprep.subr.bf16.mxu0 0
  %6605 = vmatpush1.bf16.msra.mxu0 %v6155
  %6606 = vmatprep.subr.bf16.mxu0 0
  %6607 = vmatpush1.bf16.msra.mxu0 %v6154
  %6608 = vmatprep.subr.bf16.mxu0 0
  %6609 = vmatpush1.bf16.msra.mxu0 %v6153
  %6610 = vmatprep.subr.bf16.mxu0 0
  %6611 = vmatpush1.bf16.msra.mxu0 %v6152
  %6612 = vmatprep.subr.bf16.mxu0 0
  %6613 = vmatpush1.bf16.msra.mxu0 %v6151
  %6614 = vmatprep.subr.bf16.mxu0 0
  %6615 = vmatpush1.bf16.msra.mxu0 %v6150
  %6616 = vmatprep.subr.bf16.mxu0 0
  %6617 = vmatpush1.bf16.msra.mxu0 %v6149
  %6618 = vmatprep.subr.bf16.mxu0 0
  %6619 = vmatpush1.bf16.msra.mxu0 %v6148
  %6620 = vmatprep.subr.bf16.mxu0 0
  %6621 = vmatpush2.bf16.msra.mxu0 %v6163
  %6622 = vmatprep.subr.bf16.mxu0 0
  %6623 = vmatpush2.bf16.msra.mxu0 %v6162
  %6624 = vmatprep.subr.bf16.mxu0 0
  %6625 = vmatpush2.bf16.msra.mxu0 %v6161
  %6626 = vmatprep.subr.bf16.mxu0 0
  %6627 = vmatpush2.bf16.msra.mxu0 %v6160
  %6628 = vmatprep.subr.bf16.mxu0 0
  %6629 = vmatpush2.bf16.msra.mxu0 %v6159
  %6630 = vmatprep.subr.bf16.mxu0 0
  %6631 = vmatpush2.bf16.msra.mxu0 %v6158
  %6632 = vmatprep.subr.bf16.mxu0 0
  %6633 = vmatpush2.bf16.msra.mxu0 %v6157
  %6634 = vmatprep.subr.bf16.mxu0 0
  %6635 = vmatpush2.bf16.msra.mxu0 %v6156
  %6636 = vmatprep.mubr.bf16.mxu0 %v5365
  %6637 = vmatmul.mubr.bf16.gmra.mxu0 %v5364
  %v6638 = vpop.f32.mrf.mxu0
  %v6639 = vadd.f32 %v6599, %v6638
  %v6640 = vpop.f32.mrf.mxu0
  %v6641 = vpop.f32.mrf.mxu0
  %v6642 = vpop.f32.mrf.mxu0
  %6643 = vdwg.mxu0
  %6644 = vmatprep.subr.bf16.mxu0 0
  %6645 = vmatpush1.bf16.msra.mxu0 %v6171
  %6646 = vmatprep.subr.bf16.mxu0 0
  %6647 = vmatpush1.bf16.msra.mxu0 %v6170
  %6648 = vmatprep.subr.bf16.mxu0 0
  %6649 = vmatpush1.bf16.msra.mxu0 %v6169
  %6650 = vmatprep.subr.bf16.mxu0 0
  %6651 = vmatpush1.bf16.msra.mxu0 %v6168
  %6652 = vmatprep.subr.bf16.mxu0 0
  %6653 = vmatpush1.bf16.msra.mxu0 %v6167
  %6654 = vmatprep.subr.bf16.mxu0 0
  %6655 = vmatpush1.bf16.msra.mxu0 %v6166
  %6656 = vmatprep.subr.bf16.mxu0 0
  %6657 = vmatpush1.bf16.msra.mxu0 %v6165
  %6658 = vmatprep.subr.bf16.mxu0 0
  %6659 = vmatpush1.bf16.msra.mxu0 %v6164
  %6660 = vmatprep.subr.bf16.mxu0 0
  %6661 = vmatpush2.bf16.msra.mxu0 %v6179
  %6662 = vmatprep.subr.bf16.mxu0 0
  %6663 = vmatpush2.bf16.msra.mxu0 %v6178
  %6664 = vmatprep.subr.bf16.mxu0 0
  %6665 = vmatpush2.bf16.msra.mxu0 %v6177
  %6666 = vmatprep.subr.bf16.mxu0 0
  %6667 = vmatpush2.bf16.msra.mxu0 %v6176
  %6668 = vmatprep.subr.bf16.mxu0 0
  %6669 = vmatpush2.bf16.msra.mxu0 %v6175
  %6670 = vmatprep.subr.bf16.mxu0 0
  %6671 = vmatpush2.bf16.msra.mxu0 %v6174
  %6672 = vmatprep.subr.bf16.mxu0 0
  %6673 = vmatpush2.bf16.msra.mxu0 %v6173
  %6674 = vmatprep.subr.bf16.mxu0 0
  %6675 = vmatpush2.bf16.msra.mxu0 %v6172
  %6676 = vmatprep.mubr.bf16.mxu0 %v5367
  %6677 = vmatmul.mubr.bf16.gmra.mxu0 %v5366
  %v6678 = vpop.f32.mrf.mxu0
  %v6679 = vadd.f32 %v6639, %v6678
  %v6680 = vpop.f32.mrf.mxu0
  %v6681 = vpop.f32.mrf.mxu0
  %v6682 = vpop.f32.mrf.mxu0
  %6683 = vdwg.mxu0
  %6684 = vmatprep.subr.bf16.mxu0 0
  %6685 = vmatpush1.bf16.msra.mxu0 %v6187
  %6686 = vmatprep.subr.bf16.mxu0 0
  %6687 = vmatpush1.bf16.msra.mxu0 %v6186
  %6688 = vmatprep.subr.bf16.mxu0 0
  %6689 = vmatpush1.bf16.msra.mxu0 %v6185
  %6690 = vmatprep.subr.bf16.mxu0 0
  %6691 = vmatpush1.bf16.msra.mxu0 %v6184
  %6692 = vmatprep.subr.bf16.mxu0 0
  %6693 = vmatpush1.bf16.msra.mxu0 %v6183
  %6694 = vmatprep.subr.bf16.mxu0 0
  %6695 = vmatpush1.bf16.msra.mxu0 %v6182
  %6696 = vmatprep.subr.bf16.mxu0 0
  %6697 = vmatpush1.bf16.msra.mxu0 %v6181
  %6698 = vmatprep.subr.bf16.mxu0 0
  %6699 = vmatpush1.bf16.msra.mxu0 %v6180
  %6700 = vmatprep.subr.bf16.mxu0 0
  %6701 = vmatpush2.bf16.msra.mxu0 %v6195
  %6702 = vmatprep.subr.bf16.mxu0 0
  %6703 = vmatpush2.bf16.msra.mxu0 %v6194
  %6704 = vmatprep.subr.bf16.mxu0 0
  %6705 = vmatpush2.bf16.msra.mxu0 %v6193
  %6706 = vmatprep.subr.bf16.mxu0 0
  %6707 = vmatpush2.bf16.msra.mxu0 %v6192
  %6708 = vmatprep.subr.bf16.mxu0 0
  %6709 = vmatpush2.bf16.msra.mxu0 %v6191
  %6710 = vmatprep.subr.bf16.mxu0 0
  %6711 = vmatpush2.bf16.msra.mxu0 %v6190
  %6712 = vmatprep.subr.bf16.mxu0 0
  %6713 = vmatpush2.bf16.msra.mxu0 %v6189
  %6714 = vmatprep.subr.bf16.mxu0 0
  %6715 = vmatpush2.bf16.msra.mxu0 %v6188
  %6716 = vmatprep.mubr.bf16.mxu0 %v5369
  %6717 = vmatmul.mubr.bf16.gmra.mxu0 %v5368
  %v6718 = vpop.f32.mrf.mxu0
  %v6719 = vadd.f32 %v6679, %v6718
  %v6720 = vpop.f32.mrf.mxu0
  %v6721 = vpop.f32.mrf.mxu0
  %v6722 = vpop.f32.mrf.mxu0
  %6723 = vdwg.mxu0
  %6724 = vmatprep.subr.bf16.mxu0 0
  %6725 = vmatpush1.bf16.msra.mxu0 %v6203
  %6726 = vmatprep.subr.bf16.mxu0 0
  %6727 = vmatpush1.bf16.msra.mxu0 %v6202
  %6728 = vmatprep.subr.bf16.mxu0 0
  %6729 = vmatpush1.bf16.msra.mxu0 %v6201
  %6730 = vmatprep.subr.bf16.mxu0 0
  %6731 = vmatpush1.bf16.msra.mxu0 %v6200
  %6732 = vmatprep.subr.bf16.mxu0 0
  %6733 = vmatpush1.bf16.msra.mxu0 %v6199
  %6734 = vmatprep.subr.bf16.mxu0 0
  %6735 = vmatpush1.bf16.msra.mxu0 %v6198
  %6736 = vmatprep.subr.bf16.mxu0 0
  %6737 = vmatpush1.bf16.msra.mxu0 %v6197
  %6738 = vmatprep.subr.bf16.mxu0 0
  %6739 = vmatpush1.bf16.msra.mxu0 %v6196
  %6740 = vmatprep.subr.bf16.mxu0 0
  %6741 = vmatpush2.bf16.msra.mxu0 %v6211
  %6742 = vmatprep.subr.bf16.mxu0 0
  %6743 = vmatpush2.bf16.msra.mxu0 %v6210
  %6744 = vmatprep.subr.bf16.mxu0 0
  %6745 = vmatpush2.bf16.msra.mxu0 %v6209
  %6746 = vmatprep.subr.bf16.mxu0 0
  %6747 = vmatpush2.bf16.msra.mxu0 %v6208
  %6748 = vmatprep.subr.bf16.mxu0 0
  %6749 = vmatpush2.bf16.msra.mxu0 %v6207
  %6750 = vmatprep.subr.bf16.mxu0 0
  %6751 = vmatpush2.bf16.msra.mxu0 %v6206
  %6752 = vmatprep.subr.bf16.mxu0 0
  %6753 = vmatpush2.bf16.msra.mxu0 %v6205
  %6754 = vmatprep.subr.bf16.mxu0 0
  %6755 = vmatpush2.bf16.msra.mxu0 %v6204
  %6756 = vmatprep.mubr.bf16.mxu0 %v5371
  %6757 = vmatmul.mubr.bf16.gmra.mxu0 %v5370
  %v6758 = vpop.f32.mrf.mxu0
  %v6759 = vadd.f32 %v6719, %v6758
  %v6760 = vpop.f32.mrf.mxu0
  %v6761 = vpop.f32.mrf.mxu0
  %v6762 = vpop.f32.mrf.mxu0
  %6763 = vdwg.mxu0
  %6764 = vmatprep.subr.bf16.mxu0 0
  %6765 = vmatpush1.bf16.msra.mxu0 %v6219
  %6766 = vmatprep.subr.bf16.mxu0 0
  %6767 = vmatpush1.bf16.msra.mxu0 %v6218
  %6768 = vmatprep.subr.bf16.mxu0 0
  %6769 = vmatpush1.bf16.msra.mxu0 %v6217
  %6770 = vmatprep.subr.bf16.mxu0 0
  %6771 = vmatpush1.bf16.msra.mxu0 %v6216
  %6772 = vmatprep.subr.bf16.mxu0 0
  %6773 = vmatpush1.bf16.msra.mxu0 %v6215
  %6774 = vmatprep.subr.bf16.mxu0 0
  %6775 = vmatpush1.bf16.msra.mxu0 %v6214
  %6776 = vmatprep.subr.bf16.mxu0 0
  %6777 = vmatpush1.bf16.msra.mxu0 %v6213
  %6778 = vmatprep.subr.bf16.mxu0 0
  %6779 = vmatpush1.bf16.msra.mxu0 %v6212
  %6780 = vmatprep.subr.bf16.mxu0 0
  %6781 = vmatpush2.bf16.msra.mxu0 %v6227
  %6782 = vmatprep.subr.bf16.mxu0 0
  %6783 = vmatpush2.bf16.msra.mxu0 %v6226
  %6784 = vmatprep.subr.bf16.mxu0 0
  %6785 = vmatpush2.bf16.msra.mxu0 %v6225
  %6786 = vmatprep.subr.bf16.mxu0 0
  %6787 = vmatpush2.bf16.msra.mxu0 %v6224
  %6788 = vmatprep.subr.bf16.mxu0 0
  %6789 = vmatpush2.bf16.msra.mxu0 %v6223
  %6790 = vmatprep.subr.bf16.mxu0 0
  %6791 = vmatpush2.bf16.msra.mxu0 %v6222
  %6792 = vmatprep.subr.bf16.mxu0 0
  %6793 = vmatpush2.bf16.msra.mxu0 %v6221
  %6794 = vmatprep.subr.bf16.mxu0 0
  %6795 = vmatpush2.bf16.msra.mxu0 %v6220
  %6796 = vmatprep.mubr.bf16.mxu0 %v5373
  %6797 = vmatmul.mubr.bf16.gmra.mxu0 %v5372
  %v6798 = vpop.f32.mrf.mxu0
  %v6799 = vadd.f32 %v6759, %v6798
  %v6800 = vpop.f32.mrf.mxu0
  %v6801 = vpop.f32.mrf.mxu0
  %v6802 = vpop.f32.mrf.mxu0
  %6803 = vdwg.mxu0
  %6804 = vmatprep.subr.bf16.mxu0 0
  %6805 = vmatpush1.bf16.msra.mxu0 %v6235
  %6806 = vmatprep.subr.bf16.mxu0 0
  %6807 = vmatpush1.bf16.msra.mxu0 %v6234
  %6808 = vmatprep.subr.bf16.mxu0 0
  %6809 = vmatpush1.bf16.msra.mxu0 %v6233
  %6810 = vmatprep.subr.bf16.mxu0 0
  %6811 = vmatpush1.bf16.msra.mxu0 %v6232
  %6812 = vmatprep.subr.bf16.mxu0 0
  %6813 = vmatpush1.bf16.msra.mxu0 %v6231
  %6814 = vmatprep.subr.bf16.mxu0 0
  %6815 = vmatpush1.bf16.msra.mxu0 %v6230
  %6816 = vmatprep.subr.bf16.mxu0 0
  %6817 = vmatpush1.bf16.msra.mxu0 %v6229
  %6818 = vmatprep.subr.bf16.mxu0 0
  %6819 = vmatpush1.bf16.msra.mxu0 %v6228
  %6820 = vmatprep.subr.bf16.mxu0 0
  %6821 = vmatpush2.bf16.msra.mxu0 0
  %6822 = vmatprep.subr.bf16.mxu0 0
  %6823 = vmatpush2.bf16.msra.mxu0 0
  %6824 = vmatprep.subr.bf16.mxu0 0
  %6825 = vmatpush2.bf16.msra.mxu0 0
  %6826 = vmatprep.subr.bf16.mxu0 0
  %6827 = vmatpush2.bf16.msra.mxu0 0
  %6828 = vmatprep.subr.bf16.mxu0 0
  %6829 = vmatpush2.bf16.msra.mxu0 0
  %6830 = vmatprep.subr.bf16.mxu0 0
  %6831 = vmatpush2.bf16.msra.mxu0 0
  %6832 = vmatprep.subr.bf16.mxu0 0
  %6833 = vmatpush2.bf16.msra.mxu0 0
  %6834 = vmatprep.subr.bf16.mxu0 0
  %6835 = vmatpush2.bf16.msra.mxu0 0
  %6836 = vmatprep.mubr.bf16.mxu0 0
  %6837 = vmatmul.mubr.bf16.gmra.mxu0 %v5374
  %v6838 = vpop.f32.mrf.mxu0
  %v6839 = vadd.f32 %v6799, %v6838
  %v6840 = vpop.f32.mrf.mxu0
  %v6841 = vpop.f32.mrf.mxu0
  %v6842 = vpop.f32.mrf.mxu0
  %6843 = vdwg.mxu0
  %s6844 = scalar_lea.vmem %s0, 420
  %v6845 = vld [vmem:[%s6844] sm:$0xff]
  %v6846 = vld [vmem:[%s6844 + $0x8] sm:$0xff]
  %v6847 = vld [vmem:[%s6844 + $0x10] sm:$0xff]
  %v6848 = vld [vmem:[%s6844 + $0x18] sm:$0xff]
  %v6849 = vld [vmem:[%s6844 + $0x20] sm:$0xff]
  %v6850 = vld [vmem:[%s6844 + $0x28] sm:$0xff]
  %v6851 = vld [vmem:[%s6844 + $0x30] sm:$0xff]
  %v6852 = vld [vmem:[%s6844 + $0x38] sm:$0xff]
  %v6853 = vld [vmem:[%s6844 + $0x40] sm:$0xff]
  %v6854 = vld [vmem:[%s6844 + $0x48] sm:$0xff]
  %v6855 = vld [vmem:[%s6844 + $0x50] sm:$0xf]
  %v6867 = vunpack.c.l.b16 %v6845
  %v6868 = vunpack.c.h.b16 %v6845
  %v6869 = vunpack.c.l.b16 %v6846
  %v6870 = vunpack.c.h.b16 %v6846
  %v6871 = vunpack.c.l.b16 %v6847
  %v6872 = vunpack.c.h.b16 %v6847
  %v6873 = vunpack.c.l.b16 %v6848
  %v6874 = vunpack.c.h.b16 %v6848
  %v6875 = vunpack.c.l.b16 %v6849
  %v6876 = vunpack.c.h.b16 %v6849
  %v6877 = vunpack.c.l.b16 %v6850
  %v6878 = vunpack.c.h.b16 %v6850
  %v6879 = vunpack.c.l.b16 %v6851
  %v6880 = vunpack.c.h.b16 %v6851
  %v6881 = vunpack.c.l.b16 %v6852
  %v6882 = vunpack.c.h.b16 %v6852
  %v6883 = vunpack.c.l.b16 %v6853
  %v6884 = vunpack.c.h.b16 %v6853
  %v6885 = vunpack.c.l.b16 %v6854
  %v6886 = vunpack.c.h.b16 %v6854
  %v6887 = vunpack.c.l.b16 %v6855
  %v6888 = vpack.c.b16 %v6867, %v6867
  %v6889 = vpack.c.b16 %v6868, %v6868
  %v6890 = vpack.c.b16 %v6869, %v6869
  %v6891 = vpack.c.b16 %v6870, %v6870
  %v6892 = vpack.c.b16 %v6871, %v6871
  %v6893 = vpack.c.b16 %v6872, %v6872
  %v6894 = vpack.c.b16 %v6873, %v6873
  %v6895 = vpack.c.b16 %v6874, %v6874
  %v6896 = vpack.c.b16 %v6875, %v6875
  %v6897 = vpack.c.b16 %v6876, %v6876
  %v6898 = vpack.c.b16 %v6877, %v6877
  %v6899 = vpack.c.b16 %v6878, %v6878
  %v6900 = vpack.c.b16 %v6879, %v6879
  %v6901 = vpack.c.b16 %v6880, %v6880
  %v6902 = vpack.c.b16 %v6881, %v6881
  %v6903 = vpack.c.b16 %v6882, %v6882
  %v6904 = vpack.c.b16 %v6883, %v6883
  %v6905 = vpack.c.b16 %v6884, %v6884
  %v6906 = vpack.c.b16 %v6885, %v6885
  %v6907 = vpack.c.b16 %v6886, %v6886
  %v6908 = vpack.c.b16 %v6887, %v6887
  %6930 = vrot.lane.b32.xlu0 %v6068, 96
  %v6931 = vpop.permute.xlu0 %6930
  %6932 = vrot.lane.b32.xlu0 %v6069, 96
  %v6933 = vpop.permute.xlu0 %6932
  %6934 = vrot.lane.b32.xlu0 %v6070, 96
  %v6935 = vpop.permute.xlu0 %6934
  %6936 = vrot.lane.b32.xlu0 %v6071, 96
  %v6937 = vpop.permute.xlu0 %6936
  %6938 = vrot.lane.b32.xlu0 %v6072, 96
  %v6939 = vpop.permute.xlu0 %6938
  %6940 = vrot.lane.b32.xlu0 %v6073, 96
  %v6941 = vpop.permute.xlu0 %6940
  %6942 = vrot.lane.b32.xlu0 %v6074, 96
  %v6943 = vpop.permute.xlu0 %6942
  %6944 = vrot.lane.b32.xlu0 %v6075, 96
  %v6945 = vpop.permute.xlu0 %6944
  %6946 = vrot.lane.b32.xlu0 %v6076, 96
  %v6947 = vpop.permute.xlu0 %6946
  %6948 = vrot.lane.b32.xlu0 %v6077, 96
  %v6949 = vpop.permute.xlu0 %6948
  %6950 = vrot.lane.b32.xlu0 %v6078, 96
  %v6951 = vpop.permute.xlu0 %6950
  %6952 = vrot.lane.b32.xlu0 %v6079, 96
  %v6953 = vpop.permute.xlu0 %6952
  %6954 = vrot.lane.b32.xlu0 %v6080, 96
  %v6955 = vpop.permute.xlu0 %6954
  %6956 = vrot.lane.b32.xlu0 %v6081, 96
  %v6957 = vpop.permute.xlu0 %6956
  %6958 = vrot.lane.b32.xlu0 %v6082, 96
  %v6959 = vpop.permute.xlu0 %6958
  %6960 = vrot.lane.b32.xlu0 %v6083, 96
  %v6961 = vpop.permute.xlu0 %6960
  %6962 = vrot.lane.b32.xlu0 %v6084, 96
  %v6963 = vpop.permute.xlu0 %6962
  %6964 = vrot.lane.b32.xlu0 %v6085, 96
  %v6965 = vpop.permute.xlu0 %6964
  %6966 = vrot.lane.b32.xlu0 %v6086, 96
  %v6967 = vpop.permute.xlu0 %6966
  %6968 = vrot.lane.b32.xlu0 %v6087, 96
  %v6969 = vpop.permute.xlu0 %6968
  %6970 = vrot.lane.b32.xlu0 %v6088, 96
  %v6971 = vpop.permute.xlu0 %6970
  %6972 = vrot.lane.b32.xlu0 %v6089, 96
  %v6973 = vpop.permute.xlu0 %6972
  %6974 = vrot.lane.b32.xlu0 %v6090, 96
  %v6975 = vpop.permute.xlu0 %6974
  %6976 = vrot.lane.b32.xlu0 %v6091, 96
  %v6977 = vpop.permute.xlu0 %6976
  %6978 = vrot.lane.b32.xlu0 %v6092, 96
  %v6979 = vpop.permute.xlu0 %6978
  %6980 = vrot.lane.b32.xlu0 %v6093, 96
  %v6981 = vpop.permute.xlu0 %6980
  %6982 = vrot.lane.b32.xlu0 %v6094, 96
  %v6983 = vpop.permute.xlu0 %6982
  %6984 = vrot.lane.b32.xlu0 %v6095, 96
  %v6985 = vpop.permute.xlu0 %6984
  %6986 = vrot.lane.b32.xlu0 %v6096, 96
  %v6987 = vpop.permute.xlu0 %6986
  %6988 = vrot.lane.b32.xlu0 %v6097, 96
  %v6989 = vpop.permute.xlu0 %6988
  %6990 = vrot.lane.b32.xlu0 %v6098, 96
  %v6991 = vpop.permute.xlu0 %6990
  %6992 = vrot.lane.b32.xlu0 %v6099, 96
  %v6993 = vpop.permute.xlu0 %6992
  %6994 = vrot.lane.b32.xlu0 %v6100, 96
  %v6995 = vpop.permute.xlu0 %6994
  %6996 = vrot.lane.b32.xlu0 %v6101, 96
  %v6997 = vpop.permute.xlu0 %6996
  %6998 = vrot.lane.b32.xlu0 %v6102, 96
  %v6999 = vpop.permute.xlu0 %6998
  %7000 = vrot.lane.b32.xlu0 %v6103, 96
  %v7001 = vpop.permute.xlu0 %7000
  %7002 = vrot.lane.b32.xlu0 %v6104, 96
  %v7003 = vpop.permute.xlu0 %7002
  %7004 = vrot.lane.b32.xlu0 %v6105, 96
  %v7005 = vpop.permute.xlu0 %7004
  %7006 = vrot.lane.b32.xlu0 %v6106, 96
  %v7007 = vpop.permute.xlu0 %7006
  %7008 = vrot.lane.b32.xlu0 %v6107, 96
  %v7009 = vpop.permute.xlu0 %7008
  %7010 = vrot.lane.b32.xlu0 %v6108, 96
  %v7011 = vpop.permute.xlu0 %7010
  %7012 = vrot.lane.b32.xlu0 %v6109, 96
  %v7013 = vpop.permute.xlu0 %7012
  %7014 = vrot.lane.b32.xlu0 %v6110, 96
  %v7015 = vpop.permute.xlu0 %7014
  %7016 = vrot.lane.b32.xlu0 %v6111, 96
  %v7017 = vpop.permute.xlu0 %7016
  %7018 = vrot.lane.b32.xlu0 %v6112, 96
  %v7019 = vpop.permute.xlu0 %7018
  %7020 = vrot.lane.b32.xlu0 %v6113, 96
  %v7021 = vpop.permute.xlu0 %7020
  %7022 = vrot.lane.b32.xlu0 %v6114, 96
  %v7023 = vpop.permute.xlu0 %7022
  %7024 = vrot.lane.b32.xlu0 %v6115, 96
  %v7025 = vpop.permute.xlu0 %7024
  %7026 = vrot.lane.b32.xlu0 %v6116, 96
  %v7027 = vpop.permute.xlu0 %7026
  %7028 = vrot.lane.b32.xlu0 %v6117, 96
  %v7029 = vpop.permute.xlu0 %7028
  %7030 = vrot.lane.b32.xlu0 %v6118, 96
  %v7031 = vpop.permute.xlu0 %7030
  %7032 = vrot.lane.b32.xlu0 %v6119, 96
  %v7033 = vpop.permute.xlu0 %7032
  %7034 = vrot.lane.b32.xlu0 %v6120, 96
  %v7035 = vpop.permute.xlu0 %7034
  %7036 = vrot.lane.b32.xlu0 %v6121, 96
  %v7037 = vpop.permute.xlu0 %7036
  %7038 = vrot.lane.b32.xlu0 %v6122, 96
  %v7039 = vpop.permute.xlu0 %7038
  %7040 = vrot.lane.b32.xlu0 %v6123, 96
  %v7041 = vpop.permute.xlu0 %7040
  %7042 = vrot.lane.b32.xlu0 %v6124, 96
  %v7043 = vpop.permute.xlu0 %7042
  %7044 = vrot.lane.b32.xlu0 %v6125, 96
  %v7045 = vpop.permute.xlu0 %7044
  %7046 = vrot.lane.b32.xlu0 %v6126, 96
  %v7047 = vpop.permute.xlu0 %7046
  %7048 = vrot.lane.b32.xlu0 %v6127, 96
  %v7049 = vpop.permute.xlu0 %7048
  %7050 = vrot.lane.b32.xlu0 %v6128, 96
  %v7051 = vpop.permute.xlu0 %7050
  %7052 = vrot.lane.b32.xlu0 %v6129, 96
  %v7053 = vpop.permute.xlu0 %7052
  %7054 = vrot.lane.b32.xlu0 %v6130, 96
  %v7055 = vpop.permute.xlu0 %7054
  %7056 = vrot.lane.b32.xlu0 %v6131, 96
  %v7057 = vpop.permute.xlu0 %7056
  %7058 = vrot.lane.b32.xlu0 %v6132, 96
  %v7059 = vpop.permute.xlu0 %7058
  %7060 = vrot.lane.b32.xlu0 %v6133, 96
  %v7061 = vpop.permute.xlu0 %7060
  %7062 = vrot.lane.b32.xlu0 %v6134, 96
  %v7063 = vpop.permute.xlu0 %7062
  %7064 = vrot.lane.b32.xlu0 %v6135, 96
  %v7065 = vpop.permute.xlu0 %7064
  %7066 = vrot.lane.b32.xlu0 %v6136, 96
  %v7067 = vpop.permute.xlu0 %7066
  %7068 = vrot.lane.b32.xlu0 %v6137, 96
  %v7069 = vpop.permute.xlu0 %7068
  %7070 = vrot.lane.b32.xlu0 %v6138, 96
  %v7071 = vpop.permute.xlu0 %7070
  %7072 = vrot.lane.b32.xlu0 %v6139, 96
  %v7073 = vpop.permute.xlu0 %7072
  %7074 = vrot.lane.b32.xlu0 %v6140, 96
  %v7075 = vpop.permute.xlu0 %7074
  %7076 = vrot.lane.b32.xlu0 %v6141, 96
  %v7077 = vpop.permute.xlu0 %7076
  %7078 = vrot.lane.b32.xlu0 %v6142, 96
  %v7079 = vpop.permute.xlu0 %7078
  %7080 = vrot.lane.b32.xlu0 %v6143, 96
  %v7081 = vpop.permute.xlu0 %7080
  %7082 = vrot.lane.b32.xlu0 %v6144, 96
  %v7083 = vpop.permute.xlu0 %7082
  %7084 = vrot.lane.b32.xlu0 %v6145, 96
  %v7085 = vpop.permute.xlu0 %7084
  %7086 = vrot.lane.b32.xlu0 %v6146, 96
  %v7087 = vpop.permute.xlu0 %7086
  %7088 = vrot.lane.b32.xlu0 %v6147, 96
  %v7089 = vpop.permute.xlu0 %7088
  %7090 = vrot.lane.b32.xlu0 %v6148, 96
  %v7091 = vpop.permute.xlu0 %7090
  %7092 = vrot.lane.b32.xlu0 %v6149, 96
  %v7093 = vpop.permute.xlu0 %7092
  %7094 = vrot.lane.b32.xlu0 %v6150, 96
  %v7095 = vpop.permute.xlu0 %7094
  %7096 = vrot.lane.b32.xlu0 %v6151, 96
  %v7097 = vpop.permute.xlu0 %7096
  %7098 = vrot.lane.b32.xlu0 %v6152, 96
  %v7099 = vpop.permute.xlu0 %7098
  %7100 = vrot.lane.b32.xlu0 %v6153, 96
  %v7101 = vpop.permute.xlu0 %7100
  %7102 = vrot.lane.b32.xlu0 %v6154, 96
  %v7103 = vpop.permute.xlu0 %7102
  %7104 = vrot.lane.b32.xlu0 %v6155, 96
  %v7105 = vpop.permute.xlu0 %7104
  %7106 = vrot.lane.b32.xlu0 %v6156, 96
  %v7107 = vpop.permute.xlu0 %7106
  %7108 = vrot.lane.b32.xlu0 %v6157, 96
  %v7109 = vpop.permute.xlu0 %7108
  %7110 = vrot.lane.b32.xlu0 %v6158, 96
  %v7111 = vpop.permute.xlu0 %7110
  %7112 = vrot.lane.b32.xlu0 %v6159, 96
  %v7113 = vpop.permute.xlu0 %7112
  %7114 = vrot.lane.b32.xlu0 %v6160, 96
  %v7115 = vpop.permute.xlu0 %7114
  %7116 = vrot.lane.b32.xlu0 %v6161, 96
  %v7117 = vpop.permute.xlu0 %7116
  %7118 = vrot.lane.b32.xlu0 %v6162, 96
  %v7119 = vpop.permute.xlu0 %7118
  %7120 = vrot.lane.b32.xlu0 %v6163, 96
  %v7121 = vpop.permute.xlu0 %7120
  %7122 = vrot.lane.b32.xlu0 %v6164, 96
  %v7123 = vpop.permute.xlu0 %7122
  %7124 = vrot.lane.b32.xlu0 %v6165, 96
  %v7125 = vpop.permute.xlu0 %7124
  %7126 = vrot.lane.b32.xlu0 %v6166, 96
  %v7127 = vpop.permute.xlu0 %7126
  %7128 = vrot.lane.b32.xlu0 %v6167, 96
  %v7129 = vpop.permute.xlu0 %7128
  %7130 = vrot.lane.b32.xlu0 %v6168, 96
  %v7131 = vpop.permute.xlu0 %7130
  %7132 = vrot.lane.b32.xlu0 %v6169, 96
  %v7133 = vpop.permute.xlu0 %7132
  %7134 = vrot.lane.b32.xlu0 %v6170, 96
  %v7135 = vpop.permute.xlu0 %7134
  %7136 = vrot.lane.b32.xlu0 %v6171, 96
  %v7137 = vpop.permute.xlu0 %7136
  %7138 = vrot.lane.b32.xlu0 %v6172, 96
  %v7139 = vpop.permute.xlu0 %7138
  %7140 = vrot.lane.b32.xlu0 %v6173, 96
  %v7141 = vpop.permute.xlu0 %7140
  %7142 = vrot.lane.b32.xlu0 %v6174, 96
  %v7143 = vpop.permute.xlu0 %7142
  %7144 = vrot.lane.b32.xlu0 %v6175, 96
  %v7145 = vpop.permute.xlu0 %7144
  %7146 = vrot.lane.b32.xlu0 %v6176, 96
  %v7147 = vpop.permute.xlu0 %7146
  %7148 = vrot.lane.b32.xlu0 %v6177, 96
  %v7149 = vpop.permute.xlu0 %7148
  %7150 = vrot.lane.b32.xlu0 %v6178, 96
  %v7151 = vpop.permute.xlu0 %7150
  %7152 = vrot.lane.b32.xlu0 %v6179, 96
  %v7153 = vpop.permute.xlu0 %7152
  %7154 = vrot.lane.b32.xlu0 %v6180, 96
  %v7155 = vpop.permute.xlu0 %7154
  %7156 = vrot.lane.b32.xlu0 %v6181, 96
  %v7157 = vpop.permute.xlu0 %7156
  %7158 = vrot.lane.b32.xlu0 %v6182, 96
  %v7159 = vpop.permute.xlu0 %7158
  %7160 = vrot.lane.b32.xlu0 %v6183, 96
  %v7161 = vpop.permute.xlu0 %7160
  %7162 = vrot.lane.b32.xlu0 %v6184, 96
  %v7163 = vpop.permute.xlu0 %7162
  %7164 = vrot.lane.b32.xlu0 %v6185, 96
  %v7165 = vpop.permute.xlu0 %7164
  %7166 = vrot.lane.b32.xlu0 %v6186, 96
  %v7167 = vpop.permute.xlu0 %7166
  %7168 = vrot.lane.b32.xlu0 %v6187, 96
  %v7169 = vpop.permute.xlu0 %7168
  %7170 = vrot.lane.b32.xlu0 %v6188, 96
  %v7171 = vpop.permute.xlu0 %7170
  %7172 = vrot.lane.b32.xlu0 %v6189, 96
  %v7173 = vpop.permute.xlu0 %7172
  %7174 = vrot.lane.b32.xlu0 %v6190, 96
  %v7175 = vpop.permute.xlu0 %7174
  %7176 = vrot.lane.b32.xlu0 %v6191, 96
  %v7177 = vpop.permute.xlu0 %7176
  %7178 = vrot.lane.b32.xlu0 %v6192, 96
  %v7179 = vpop.permute.xlu0 %7178
  %7180 = vrot.lane.b32.xlu0 %v6193, 96
  %v7181 = vpop.permute.xlu0 %7180
  %7182 = vrot.lane.b32.xlu0 %v6194, 96
  %v7183 = vpop.permute.xlu0 %7182
  %7184 = vrot.lane.b32.xlu0 %v6195, 96
  %v7185 = vpop.permute.xlu0 %7184
  %7186 = vrot.lane.b32.xlu0 %v6196, 96
  %v7187 = vpop.permute.xlu0 %7186
  %7188 = vrot.lane.b32.xlu0 %v6197, 96
  %v7189 = vpop.permute.xlu0 %7188
  %7190 = vrot.lane.b32.xlu0 %v6198, 96
  %v7191 = vpop.permute.xlu0 %7190
  %7192 = vrot.lane.b32.xlu0 %v6199, 96
  %v7193 = vpop.permute.xlu0 %7192
  %7194 = vrot.lane.b32.xlu0 %v6200, 96
  %v7195 = vpop.permute.xlu0 %7194
  %7196 = vrot.lane.b32.xlu0 %v6201, 96
  %v7197 = vpop.permute.xlu0 %7196
  %7198 = vrot.lane.b32.xlu0 %v6202, 96
  %v7199 = vpop.permute.xlu0 %7198
  %7200 = vrot.lane.b32.xlu0 %v6203, 96
  %v7201 = vpop.permute.xlu0 %7200
  %7202 = vrot.lane.b32.xlu0 %v6204, 96
  %v7203 = vpop.permute.xlu0 %7202
  %7204 = vrot.lane.b32.xlu0 %v6205, 96
  %v7205 = vpop.permute.xlu0 %7204
  %7206 = vrot.lane.b32.xlu0 %v6206, 96
  %v7207 = vpop.permute.xlu0 %7206
  %7208 = vrot.lane.b32.xlu0 %v6207, 96
  %v7209 = vpop.permute.xlu0 %7208
  %7210 = vrot.lane.b32.xlu0 %v6208, 96
  %v7211 = vpop.permute.xlu0 %7210
  %7212 = vrot.lane.b32.xlu0 %v6209, 96
  %v7213 = vpop.permute.xlu0 %7212
  %7214 = vrot.lane.b32.xlu0 %v6210, 96
  %v7215 = vpop.permute.xlu0 %7214
  %7216 = vrot.lane.b32.xlu0 %v6211, 96
  %v7217 = vpop.permute.xlu0 %7216
  %7218 = vrot.lane.b32.xlu0 %v6212, 96
  %v7219 = vpop.permute.xlu0 %7218
  %7220 = vrot.lane.b32.xlu0 %v6213, 96
  %v7221 = vpop.permute.xlu0 %7220
  %7222 = vrot.lane.b32.xlu0 %v6214, 96
  %v7223 = vpop.permute.xlu0 %7222
  %7224 = vrot.lane.b32.xlu0 %v6215, 96
  %v7225 = vpop.permute.xlu0 %7224
  %7226 = vrot.lane.b32.xlu0 %v6216, 96
  %v7227 = vpop.permute.xlu0 %7226
  %7228 = vrot.lane.b32.xlu0 %v6217, 96
  %v7229 = vpop.permute.xlu0 %7228
  %7230 = vrot.lane.b32.xlu0 %v6218, 96
  %v7231 = vpop.permute.xlu0 %7230
  %7232 = vrot.lane.b32.xlu0 %v6219, 96
  %v7233 = vpop.permute.xlu0 %7232
  %7234 = vrot.lane.b32.xlu0 %v6220, 96
  %v7235 = vpop.permute.xlu0 %7234
  %7236 = vrot.lane.b32.xlu0 %v6221, 96
  %v7237 = vpop.permute.xlu0 %7236
  %7238 = vrot.lane.b32.xlu0 %v6222, 96
  %v7239 = vpop.permute.xlu0 %7238
  %7240 = vrot.lane.b32.xlu0 %v6223, 96
  %v7241 = vpop.permute.xlu0 %7240
  %7242 = vrot.lane.b32.xlu0 %v6224, 96
  %v7243 = vpop.permute.xlu0 %7242
  %7244 = vrot.lane.b32.xlu0 %v6225, 96
  %v7245 = vpop.permute.xlu0 %7244
  %7246 = vrot.lane.b32.xlu0 %v6226, 96
  %v7247 = vpop.permute.xlu0 %7246
  %7248 = vrot.lane.b32.xlu0 %v6227, 96
  %v7249 = vpop.permute.xlu0 %7248
  %7250 = vrot.lane.b32.xlu0 %v6228, 96
  %v7251 = vpop.permute.xlu0 %7250
  %7252 = vrot.lane.b32.xlu0 %v6229, 96
  %v7253 = vpop.permute.xlu0 %7252
  %7254 = vrot.lane.b32.xlu0 %v6230, 96
  %v7255 = vpop.permute.xlu0 %7254
  %7256 = vrot.lane.b32.xlu0 %v6231, 96
  %v7257 = vpop.permute.xlu0 %7256
  %7258 = vrot.lane.b32.xlu0 %v6232, 96
  %v7259 = vpop.permute.xlu0 %7258
  %7260 = vrot.lane.b32.xlu0 %v6233, 96
  %v7261 = vpop.permute.xlu0 %7260
  %7262 = vrot.lane.b32.xlu0 %v6234, 96
  %v7263 = vpop.permute.xlu0 %7262
  %7264 = vrot.lane.b32.xlu0 %v6235, 96
  %v7265 = vpop.permute.xlu0 %7264
  %7434 = vmatprep.subr.bf16.mxu0 0
  %7435 = vmatpush1.bf16.msra.mxu0 %v6945
  %7436 = vmatprep.subr.bf16.mxu0 0
  %7437 = vmatpush1.bf16.msra.mxu0 %v6943
  %7438 = vmatprep.subr.bf16.mxu0 0
  %7439 = vmatpush1.bf16.msra.mxu0 %v6941
  %7440 = vmatprep.subr.bf16.mxu0 0
  %7441 = vmatpush1.bf16.msra.mxu0 %v6939
  %7442 = vmatprep.subr.bf16.mxu0 0
  %7443 = vmatpush1.bf16.msra.mxu0 %v6937
  %7444 = vmatprep.subr.bf16.mxu0 0
  %7445 = vmatpush1.bf16.msra.mxu0 %v6935
  %7446 = vmatprep.subr.bf16.mxu0 0
  %7447 = vmatpush1.bf16.msra.mxu0 %v6933
  %7448 = vmatprep.subr.bf16.mxu0 0
  %7449 = vmatpush1.bf16.msra.mxu0 %v6931
  %7450 = vmatprep.subr.bf16.mxu0 0
  %7451 = vmatpush2.bf16.msra.mxu0 %v6961
  %7452 = vmatprep.subr.bf16.mxu0 0
  %7453 = vmatpush2.bf16.msra.mxu0 %v6959
  %7454 = vmatprep.subr.bf16.mxu0 0
  %7455 = vmatpush2.bf16.msra.mxu0 %v6957
  %7456 = vmatprep.subr.bf16.mxu0 0
  %7457 = vmatpush2.bf16.msra.mxu0 %v6955
  %7458 = vmatprep.subr.bf16.mxu0 0
  %7459 = vmatpush2.bf16.msra.mxu0 %v6953
  %7460 = vmatprep.subr.bf16.mxu0 0
  %7461 = vmatpush2.bf16.msra.mxu0 %v6951
  %7462 = vmatprep.subr.bf16.mxu0 0
  %7463 = vmatpush2.bf16.msra.mxu0 %v6949
  %7464 = vmatprep.subr.bf16.mxu0 0
  %7465 = vmatpush2.bf16.msra.mxu0 %v6947
  %7466 = vmatprep.mubr.bf16.mxu0 %v6889
  %7467 = vmatmul.mubr.bf16.gmra.mxu0 %v6888
  %v7468 = vpop.f32.mrf.mxu0
  %v7469 = vadd.f32 0.0, %v7468
  %v7470 = vpop.f32.mrf.mxu0
  %v7471 = vpop.f32.mrf.mxu0
  %v7472 = vpop.f32.mrf.mxu0
  %7473 = vdwg.mxu0
  %7474 = vmatprep.subr.bf16.mxu0 0
  %7475 = vmatpush1.bf16.msra.mxu0 %v6977
  %7476 = vmatprep.subr.bf16.mxu0 0
  %7477 = vmatpush1.bf16.msra.mxu0 %v6975
  %7478 = vmatprep.subr.bf16.mxu0 0
  %7479 = vmatpush1.bf16.msra.mxu0 %v6973
  %7480 = vmatprep.subr.bf16.mxu0 0
  %7481 = vmatpush1.bf16.msra.mxu0 %v6971
  %7482 = vmatprep.subr.bf16.mxu0 0
  %7483 = vmatpush1.bf16.msra.mxu0 %v6969
  %7484 = vmatprep.subr.bf16.mxu0 0
  %7485 = vmatpush1.bf16.msra.mxu0 %v6967
  %7486 = vmatprep.subr.bf16.mxu0 0
  %7487 = vmatpush1.bf16.msra.mxu0 %v6965
  %7488 = vmatprep.subr.bf16.mxu0 0
  %7489 = vmatpush1.bf16.msra.mxu0 %v6963
  %7490 = vmatprep.subr.bf16.mxu0 0
  %7491 = vmatpush2.bf16.msra.mxu0 %v6993
  %7492 = vmatprep.subr.bf16.mxu0 0
  %7493 = vmatpush2.bf16.msra.mxu0 %v6991
  %7494 = vmatprep.subr.bf16.mxu0 0
  %7495 = vmatpush2.bf16.msra.mxu0 %v6989
  %7496 = vmatprep.subr.bf16.mxu0 0
  %7497 = vmatpush2.bf16.msra.mxu0 %v6987
  %7498 = vmatprep.subr.bf16.mxu0 0
  %7499 = vmatpush2.bf16.msra.mxu0 %v6985
  %7500 = vmatprep.subr.bf16.mxu0 0
  %7501 = vmatpush2.bf16.msra.mxu0 %v6983
  %7502 = vmatprep.subr.bf16.mxu0 0
  %7503 = vmatpush2.bf16.msra.mxu0 %v6981
  %7504 = vmatprep.subr.bf16.mxu0 0
  %7505 = vmatpush2.bf16.msra.mxu0 %v6979
  %7506 = vmatprep.mubr.bf16.mxu0 %v6891
  %7507 = vmatmul.mubr.bf16.gmra.mxu0 %v6890
  %v7508 = vpop.f32.mrf.mxu0
  %v7509 = vadd.f32 %v7469, %v7508
  %v7510 = vpop.f32.mrf.mxu0
  %v7511 = vpop.f32.mrf.mxu0
  %v7512 = vpop.f32.mrf.mxu0
  %7513 = vdwg.mxu0
  %7514 = vmatprep.subr.bf16.mxu0 0
  %7515 = vmatpush1.bf16.msra.mxu0 %v7009
  %7516 = vmatprep.subr.bf16.mxu0 0
  %7517 = vmatpush1.bf16.msra.mxu0 %v7007
  %7518 = vmatprep.subr.bf16.mxu0 0
  %7519 = vmatpush1.bf16.msra.mxu0 %v7005
  %7520 = vmatprep.subr.bf16.mxu0 0
  %7521 = vmatpush1.bf16.msra.mxu0 %v7003
  %7522 = vmatprep.subr.bf16.mxu0 0
  %7523 = vmatpush1.bf16.msra.mxu0 %v7001
  %7524 = vmatprep.subr.bf16.mxu0 0
  %7525 = vmatpush1.bf16.msra.mxu0 %v6999
  %7526 = vmatprep.subr.bf16.mxu0 0
  %7527 = vmatpush1.bf16.msra.mxu0 %v6997
  %7528 = vmatprep.subr.bf16.mxu0 0
  %7529 = vmatpush1.bf16.msra.mxu0 %v6995
  %7530 = vmatprep.subr.bf16.mxu0 0
  %7531 = vmatpush2.bf16.msra.mxu0 %v7025
  %7532 = vmatprep.subr.bf16.mxu0 0
  %7533 = vmatpush2.bf16.msra.mxu0 %v7023
  %7534 = vmatprep.subr.bf16.mxu0 0
  %7535 = vmatpush2.bf16.msra.mxu0 %v7021
  %7536 = vmatprep.subr.bf16.mxu0 0
  %7537 = vmatpush2.bf16.msra.mxu0 %v7019
  %7538 = vmatprep.subr.bf16.mxu0 0
  %7539 = vmatpush2.bf16.msra.mxu0 %v7017
  %7540 = vmatprep.subr.bf16.mxu0 0
  %7541 = vmatpush2.bf16.msra.mxu0 %v7015
  %7542 = vmatprep.subr.bf16.mxu0 0
  %7543 = vmatpush2.bf16.msra.mxu0 %v7013
  %7544 = vmatprep.subr.bf16.mxu0 0
  %7545 = vmatpush2.bf16.msra.mxu0 %v7011
  %7546 = vmatprep.mubr.bf16.mxu0 %v6893
  %7547 = vmatmul.mubr.bf16.gmra.mxu0 %v6892
  %v7548 = vpop.f32.mrf.mxu0
  %v7549 = vadd.f32 %v7509, %v7548
  %v7550 = vpop.f32.mrf.mxu0
  %v7551 = vpop.f32.mrf.mxu0
  %v7552 = vpop.f32.mrf.mxu0
  %7553 = vdwg.mxu0
  %7554 = vmatprep.subr.bf16.mxu0 0
  %7555 = vmatpush1.bf16.msra.mxu0 %v7041
  %7556 = vmatprep.subr.bf16.mxu0 0
  %7557 = vmatpush1.bf16.msra.mxu0 %v7039
  %7558 = vmatprep.subr.bf16.mxu0 0
  %7559 = vmatpush1.bf16.msra.mxu0 %v7037
  %7560 = vmatprep.subr.bf16.mxu0 0
  %7561 = vmatpush1.bf16.msra.mxu0 %v7035
  %7562 = vmatprep.subr.bf16.mxu0 0
  %7563 = vmatpush1.bf16.msra.mxu0 %v7033
  %7564 = vmatprep.subr.bf16.mxu0 0
  %7565 = vmatpush1.bf16.msra.mxu0 %v7031
  %7566 = vmatprep.subr.bf16.mxu0 0
  %7567 = vmatpush1.bf16.msra.mxu0 %v7029
  %7568 = vmatprep.subr.bf16.mxu0 0
  %7569 = vmatpush1.bf16.msra.mxu0 %v7027
  %7570 = vmatprep.subr.bf16.mxu0 0
  %7571 = vmatpush2.bf16.msra.mxu0 %v7057
  %7572 = vmatprep.subr.bf16.mxu0 0
  %7573 = vmatpush2.bf16.msra.mxu0 %v7055
  %7574 = vmatprep.subr.bf16.mxu0 0
  %7575 = vmatpush2.bf16.msra.mxu0 %v7053
  %7576 = vmatprep.subr.bf16.mxu0 0
  %7577 = vmatpush2.bf16.msra.mxu0 %v7051
  %7578 = vmatprep.subr.bf16.mxu0 0
  %7579 = vmatpush2.bf16.msra.mxu0 %v7049
  %7580 = vmatprep.subr.bf16.mxu0 0
  %7581 = vmatpush2.bf16.msra.mxu0 %v7047
  %7582 = vmatprep.subr.bf16.mxu0 0
  %7583 = vmatpush2.bf16.msra.mxu0 %v7045
  %7584 = vmatprep.subr.bf16.mxu0 0
  %7585 = vmatpush2.bf16.msra.mxu0 %v7043
  %7586 = vmatprep.mubr.bf16.mxu0 %v6895
  %7587 = vmatmul.mubr.bf16.gmra.mxu0 %v6894
  %v7588 = vpop.f32.mrf.mxu0
  %v7589 = vadd.f32 %v7549, %v7588
  %v7590 = vpop.f32.mrf.mxu0
  %v7591 = vpop.f32.mrf.mxu0
  %v7592 = vpop.f32.mrf.mxu0
  %7593 = vdwg.mxu0
  %7594 = vmatprep.subr.bf16.mxu0 0
  %7595 = vmatpush1.bf16.msra.mxu0 %v7073
  %7596 = vmatprep.subr.bf16.mxu0 0
  %7597 = vmatpush1.bf16.msra.mxu0 %v7071
  %7598 = vmatprep.subr.bf16.mxu0 0
  %7599 = vmatpush1.bf16.msra.mxu0 %v7069
  %7600 = vmatprep.subr.bf16.mxu0 0
  %7601 = vmatpush1.bf16.msra.mxu0 %v7067
  %7602 = vmatprep.subr.bf16.mxu0 0
  %7603 = vmatpush1.bf16.msra.mxu0 %v7065
  %7604 = vmatprep.subr.bf16.mxu0 0
  %7605 = vmatpush1.bf16.msra.mxu0 %v7063
  %7606 = vmatprep.subr.bf16.mxu0 0
  %7607 = vmatpush1.bf16.msra.mxu0 %v7061
  %7608 = vmatprep.subr.bf16.mxu0 0
  %7609 = vmatpush1.bf16.msra.mxu0 %v7059
  %7610 = vmatprep.subr.bf16.mxu0 0
  %7611 = vmatpush2.bf16.msra.mxu0 %v7089
  %7612 = vmatprep.subr.bf16.mxu0 0
  %7613 = vmatpush2.bf16.msra.mxu0 %v7087
  %7614 = vmatprep.subr.bf16.mxu0 0
  %7615 = vmatpush2.bf16.msra.mxu0 %v7085
  %7616 = vmatprep.subr.bf16.mxu0 0
  %7617 = vmatpush2.bf16.msra.mxu0 %v7083
  %7618 = vmatprep.subr.bf16.mxu0 0
  %7619 = vmatpush2.bf16.msra.mxu0 %v7081
  %7620 = vmatprep.subr.bf16.mxu0 0
  %7621 = vmatpush2.bf16.msra.mxu0 %v7079
  %7622 = vmatprep.subr.bf16.mxu0 0
  %7623 = vmatpush2.bf16.msra.mxu0 %v7077
  %7624 = vmatprep.subr.bf16.mxu0 0
  %7625 = vmatpush2.bf16.msra.mxu0 %v7075
  %7626 = vmatprep.mubr.bf16.mxu0 %v6897
  %7627 = vmatmul.mubr.bf16.gmra.mxu0 %v6896
  %v7628 = vpop.f32.mrf.mxu0
  %v7629 = vadd.f32 %v7589, %v7628
  %v7630 = vpop.f32.mrf.mxu0
  %v7631 = vpop.f32.mrf.mxu0
  %v7632 = vpop.f32.mrf.mxu0
  %7633 = vdwg.mxu0
  %7634 = vmatprep.subr.bf16.mxu0 0
  %7635 = vmatpush1.bf16.msra.mxu0 %v7105
  %7636 = vmatprep.subr.bf16.mxu0 0
  %7637 = vmatpush1.bf16.msra.mxu0 %v7103
  %7638 = vmatprep.subr.bf16.mxu0 0
  %7639 = vmatpush1.bf16.msra.mxu0 %v7101
  %7640 = vmatprep.subr.bf16.mxu0 0
  %7641 = vmatpush1.bf16.msra.mxu0 %v7099
  %7642 = vmatprep.subr.bf16.mxu0 0
  %7643 = vmatpush1.bf16.msra.mxu0 %v7097
  %7644 = vmatprep.subr.bf16.mxu0 0
  %7645 = vmatpush1.bf16.msra.mxu0 %v7095
  %7646 = vmatprep.subr.bf16.mxu0 0
  %7647 = vmatpush1.bf16.msra.mxu0 %v7093
  %7648 = vmatprep.subr.bf16.mxu0 0
  %7649 = vmatpush1.bf16.msra.mxu0 %v7091
  %7650 = vmatprep.subr.bf16.mxu0 0
  %7651 = vmatpush2.bf16.msra.mxu0 %v7121
  %7652 = vmatprep.subr.bf16.mxu0 0
  %7653 = vmatpush2.bf16.msra.mxu0 %v7119
  %7654 = vmatprep.subr.bf16.mxu0 0
  %7655 = vmatpush2.bf16.msra.mxu0 %v7117
  %7656 = vmatprep.subr.bf16.mxu0 0
  %7657 = vmatpush2.bf16.msra.mxu0 %v7115
  %7658 = vmatprep.subr.bf16.mxu0 0
  %7659 = vmatpush2.bf16.msra.mxu0 %v7113
  %7660 = vmatprep.subr.bf16.mxu0 0
  %7661 = vmatpush2.bf16.msra.mxu0 %v7111
  %7662 = vmatprep.subr.bf16.mxu0 0
  %7663 = vmatpush2.bf16.msra.mxu0 %v7109
  %7664 = vmatprep.subr.bf16.mxu0 0
  %7665 = vmatpush2.bf16.msra.mxu0 %v7107
  %7666 = vmatprep.mubr.bf16.mxu0 %v6899
  %7667 = vmatmul.mubr.bf16.gmra.mxu0 %v6898
  %v7668 = vpop.f32.mrf.mxu0
  %v7669 = vadd.f32 %v7629, %v7668
  %v7670 = vpop.f32.mrf.mxu0
  %v7671 = vpop.f32.mrf.mxu0
  %v7672 = vpop.f32.mrf.mxu0
  %7673 = vdwg.mxu0
  %7674 = vmatprep.subr.bf16.mxu0 0
  %7675 = vmatpush1.bf16.msra.mxu0 %v7137
  %7676 = vmatprep.subr.bf16.mxu0 0
  %7677 = vmatpush1.bf16.msra.mxu0 %v7135
  %7678 = vmatprep.subr.bf16.mxu0 0
  %7679 = vmatpush1.bf16.msra.mxu0 %v7133
  %7680 = vmatprep.subr.bf16.mxu0 0
  %7681 = vmatpush1.bf16.msra.mxu0 %v7131
  %7682 = vmatprep.subr.bf16.mxu0 0
  %7683 = vmatpush1.bf16.msra.mxu0 %v7129
  %7684 = vmatprep.subr.bf16.mxu0 0
  %7685 = vmatpush1.bf16.msra.mxu0 %v7127
  %7686 = vmatprep.subr.bf16.mxu0 0
  %7687 = vmatpush1.bf16.msra.mxu0 %v7125
  %7688 = vmatprep.subr.bf16.mxu0 0
  %7689 = vmatpush1.bf16.msra.mxu0 %v7123
  %7690 = vmatprep.subr.bf16.mxu0 0
  %7691 = vmatpush2.bf16.msra.mxu0 %v7153
  %7692 = vmatprep.subr.bf16.mxu0 0
  %7693 = vmatpush2.bf16.msra.mxu0 %v7151
  %7694 = vmatprep.subr.bf16.mxu0 0
  %7695 = vmatpush2.bf16.msra.mxu0 %v7149
  %7696 = vmatprep.subr.bf16.mxu0 0
  %7697 = vmatpush2.bf16.msra.mxu0 %v7147
  %7698 = vmatprep.subr.bf16.mxu0 0
  %7699 = vmatpush2.bf16.msra.mxu0 %v7145
  %7700 = vmatprep.subr.bf16.mxu0 0
  %7701 = vmatpush2.bf16.msra.mxu0 %v7143
  %7702 = vmatprep.subr.bf16.mxu0 0
  %7703 = vmatpush2.bf16.msra.mxu0 %v7141
  %7704 = vmatprep.subr.bf16.mxu0 0
  %7705 = vmatpush2.bf16.msra.mxu0 %v7139
  %7706 = vmatprep.mubr.bf16.mxu0 %v6901
  %7707 = vmatmul.mubr.bf16.gmra.mxu0 %v6900
  %v7708 = vpop.f32.mrf.mxu0
  %v7709 = vadd.f32 %v7669, %v7708
  %v7710 = vpop.f32.mrf.mxu0
  %v7711 = vpop.f32.mrf.mxu0
  %v7712 = vpop.f32.mrf.mxu0
  %7713 = vdwg.mxu0
  %7714 = vmatprep.subr.bf16.mxu0 0
  %7715 = vmatpush1.bf16.msra.mxu0 %v7169
  %7716 = vmatprep.subr.bf16.mxu0 0
  %7717 = vmatpush1.bf16.msra.mxu0 %v7167
  %7718 = vmatprep.subr.bf16.mxu0 0
  %7719 = vmatpush1.bf16.msra.mxu0 %v7165
  %7720 = vmatprep.subr.bf16.mxu0 0
  %7721 = vmatpush1.bf16.msra.mxu0 %v7163
  %7722 = vmatprep.subr.bf16.mxu0 0
  %7723 = vmatpush1.bf16.msra.mxu0 %v7161
  %7724 = vmatprep.subr.bf16.mxu0 0
  %7725 = vmatpush1.bf16.msra.mxu0 %v7159
  %7726 = vmatprep.subr.bf16.mxu0 0
  %7727 = vmatpush1.bf16.msra.mxu0 %v7157
  %7728 = vmatprep.subr.bf16.mxu0 0
  %7729 = vmatpush1.bf16.msra.mxu0 %v7155
  %7730 = vmatprep.subr.bf16.mxu0 0
  %7731 = vmatpush2.bf16.msra.mxu0 %v7185
  %7732 = vmatprep.subr.bf16.mxu0 0
  %7733 = vmatpush2.bf16.msra.mxu0 %v7183
  %7734 = vmatprep.subr.bf16.mxu0 0
  %7735 = vmatpush2.bf16.msra.mxu0 %v7181
  %7736 = vmatprep.subr.bf16.mxu0 0
  %7737 = vmatpush2.bf16.msra.mxu0 %v7179
  %7738 = vmatprep.subr.bf16.mxu0 0
  %7739 = vmatpush2.bf16.msra.mxu0 %v7177
  %7740 = vmatprep.subr.bf16.mxu0 0
  %7741 = vmatpush2.bf16.msra.mxu0 %v7175
  %7742 = vmatprep.subr.bf16.mxu0 0
  %7743 = vmatpush2.bf16.msra.mxu0 %v7173
  %7744 = vmatprep.subr.bf16.mxu0 0
  %7745 = vmatpush2.bf16.msra.mxu0 %v7171
  %7746 = vmatprep.mubr.bf16.mxu0 %v6903
  %7747 = vmatmul.mubr.bf16.gmra.mxu0 %v6902
  %v7748 = vpop.f32.mrf.mxu0
  %v7749 = vadd.f32 %v7709, %v7748
  %v7750 = vpop.f32.mrf.mxu0
  %v7751 = vpop.f32.mrf.mxu0
  %v7752 = vpop.f32.mrf.mxu0
  %7753 = vdwg.mxu0
  %7754 = vmatprep.subr.bf16.mxu0 0
  %7755 = vmatpush1.bf16.msra.mxu0 %v7201
  %7756 = vmatprep.subr.bf16.mxu0 0
  %7757 = vmatpush1.bf16.msra.mxu0 %v7199
  %7758 = vmatprep.subr.bf16.mxu0 0
  %7759 = vmatpush1.bf16.msra.mxu0 %v7197
  %7760 = vmatprep.subr.bf16.mxu0 0
  %7761 = vmatpush1.bf16.msra.mxu0 %v7195
  %7762 = vmatprep.subr.bf16.mxu0 0
  %7763 = vmatpush1.bf16.msra.mxu0 %v7193
  %7764 = vmatprep.subr.bf16.mxu0 0
  %7765 = vmatpush1.bf16.msra.mxu0 %v7191
  %7766 = vmatprep.subr.bf16.mxu0 0
  %7767 = vmatpush1.bf16.msra.mxu0 %v7189
  %7768 = vmatprep.subr.bf16.mxu0 0
  %7769 = vmatpush1.bf16.msra.mxu0 %v7187
  %7770 = vmatprep.subr.bf16.mxu0 0
  %7771 = vmatpush2.bf16.msra.mxu0 %v7217
  %7772 = vmatprep.subr.bf16.mxu0 0
  %7773 = vmatpush2.bf16.msra.mxu0 %v7215
  %7774 = vmatprep.subr.bf16.mxu0 0
  %7775 = vmatpush2.bf16.msra.mxu0 %v7213
  %7776 = vmatprep.subr.bf16.mxu0 0
  %7777 = vmatpush2.bf16.msra.mxu0 %v7211
  %7778 = vmatprep.subr.bf16.mxu0 0
  %7779 = vmatpush2.bf16.msra.mxu0 %v7209
  %7780 = vmatprep.subr.bf16.mxu0 0
  %7781 = vmatpush2.bf16.msra.mxu0 %v7207
  %7782 = vmatprep.subr.bf16.mxu0 0
  %7783 = vmatpush2.bf16.msra.mxu0 %v7205
  %7784 = vmatprep.subr.bf16.mxu0 0
  %7785 = vmatpush2.bf16.msra.mxu0 %v7203
  %7786 = vmatprep.mubr.bf16.mxu0 %v6905
  %7787 = vmatmul.mubr.bf16.gmra.mxu0 %v6904
  %v7788 = vpop.f32.mrf.mxu0
  %v7789 = vadd.f32 %v7749, %v7788
  %v7790 = vpop.f32.mrf.mxu0
  %v7791 = vpop.f32.mrf.mxu0
  %v7792 = vpop.f32.mrf.mxu0
  %7793 = vdwg.mxu0
  %7794 = vmatprep.subr.bf16.mxu0 0
  %7795 = vmatpush1.bf16.msra.mxu0 %v7233
  %7796 = vmatprep.subr.bf16.mxu0 0
  %7797 = vmatpush1.bf16.msra.mxu0 %v7231
  %7798 = vmatprep.subr.bf16.mxu0 0
  %7799 = vmatpush1.bf16.msra.mxu0 %v7229
  %7800 = vmatprep.subr.bf16.mxu0 0
  %7801 = vmatpush1.bf16.msra.mxu0 %v7227
  %7802 = vmatprep.subr.bf16.mxu0 0
  %7803 = vmatpush1.bf16.msra.mxu0 %v7225
  %7804 = vmatprep.subr.bf16.mxu0 0
  %7805 = vmatpush1.bf16.msra.mxu0 %v7223
  %7806 = vmatprep.subr.bf16.mxu0 0
  %7807 = vmatpush1.bf16.msra.mxu0 %v7221
  %7808 = vmatprep.subr.bf16.mxu0 0
  %7809 = vmatpush1.bf16.msra.mxu0 %v7219
  %7810 = vmatprep.subr.bf16.mxu0 0
  %7811 = vmatpush2.bf16.msra.mxu0 %v7249
  %7812 = vmatprep.subr.bf16.mxu0 0
  %7813 = vmatpush2.bf16.msra.mxu0 %v7247
  %7814 = vmatprep.subr.bf16.mxu0 0
  %7815 = vmatpush2.bf16.msra.mxu0 %v7245
  %7816 = vmatprep.subr.bf16.mxu0 0
  %7817 = vmatpush2.bf16.msra.mxu0 %v7243
  %7818 = vmatprep.subr.bf16.mxu0 0
  %7819 = vmatpush2.bf16.msra.mxu0 %v7241
  %7820 = vmatprep.subr.bf16.mxu0 0
  %7821 = vmatpush2.bf16.msra.mxu0 %v7239
  %7822 = vmatprep.subr.bf16.mxu0 0
  %7823 = vmatpush2.bf16.msra.mxu0 %v7237
  %7824 = vmatprep.subr.bf16.mxu0 0
  %7825 = vmatpush2.bf16.msra.mxu0 %v7235
  %7826 = vmatprep.mubr.bf16.mxu0 %v6907
  %7827 = vmatmul.mubr.bf16.gmra.mxu0 %v6906
  %v7828 = vpop.f32.mrf.mxu0
  %v7829 = vadd.f32 %v7789, %v7828
  %v7830 = vpop.f32.mrf.mxu0
  %v7831 = vpop.f32.mrf.mxu0
  %v7832 = vpop.f32.mrf.mxu0
  %7833 = vdwg.mxu0
  %7834 = vmatprep.subr.bf16.mxu0 0
  %7835 = vmatpush1.bf16.msra.mxu0 %v7265
  %7836 = vmatprep.subr.bf16.mxu0 0
  %7837 = vmatpush1.bf16.msra.mxu0 %v7263
  %7838 = vmatprep.subr.bf16.mxu0 0
  %7839 = vmatpush1.bf16.msra.mxu0 %v7261
  %7840 = vmatprep.subr.bf16.mxu0 0
  %7841 = vmatpush1.bf16.msra.mxu0 %v7259
  %7842 = vmatprep.subr.bf16.mxu0 0
  %7843 = vmatpush1.bf16.msra.mxu0 %v7257
  %7844 = vmatprep.subr.bf16.mxu0 0
  %7845 = vmatpush1.bf16.msra.mxu0 %v7255
  %7846 = vmatprep.subr.bf16.mxu0 0
  %7847 = vmatpush1.bf16.msra.mxu0 %v7253
  %7848 = vmatprep.subr.bf16.mxu0 0
  %7849 = vmatpush1.bf16.msra.mxu0 %v7251
  %7850 = vmatprep.subr.bf16.mxu0 0
  %7851 = vmatpush2.bf16.msra.mxu0 0
  %7852 = vmatprep.subr.bf16.mxu0 0
  %7853 = vmatpush2.bf16.msra.mxu0 0
  %7854 = vmatprep.subr.bf16.mxu0 0
  %7855 = vmatpush2.bf16.msra.mxu0 0
  %7856 = vmatprep.subr.bf16.mxu0 0
  %7857 = vmatpush2.bf16.msra.mxu0 0
  %7858 = vmatprep.subr.bf16.mxu0 0
  %7859 = vmatpush2.bf16.msra.mxu0 0
  %7860 = vmatprep.subr.bf16.mxu0 0
  %7861 = vmatpush2.bf16.msra.mxu0 0
  %7862 = vmatprep.subr.bf16.mxu0 0
  %7863 = vmatpush2.bf16.msra.mxu0 0
  %7864 = vmatprep.subr.bf16.mxu0 0
  %7865 = vmatpush2.bf16.msra.mxu0 0
  %7866 = vmatprep.mubr.bf16.mxu0 0
  %7867 = vmatmul.mubr.bf16.gmra.mxu0 %v6908
  %v7868 = vpop.f32.mrf.mxu0
  %v7869 = vadd.f32 %v7829, %v7868
  %v7870 = vpop.f32.mrf.mxu0
  %v7871 = vpop.f32.mrf.mxu0
  %v7872 = vpop.f32.mrf.mxu0
  %7873 = vdwg.mxu0
  %s7874 = scalar_lea.vmem %s0, 504
  %v7875 = vld [vmem:[%s7874] sm:$0xff]
  %v7876 = vld [vmem:[%s7874 + $0x8] sm:$0xff]
  %v7877 = vld [vmem:[%s7874 + $0x10] sm:$0xff]
  %v7878 = vld [vmem:[%s7874 + $0x18] sm:$0xff]
  %v7879 = vld [vmem:[%s7874 + $0x20] sm:$0xff]
  %v7880 = vld [vmem:[%s7874 + $0x28] sm:$0xff]
  %v7881 = vld [vmem:[%s7874 + $0x30] sm:$0xff]
  %v7882 = vld [vmem:[%s7874 + $0x38] sm:$0xff]
  %v7883 = vld [vmem:[%s7874 + $0x40] sm:$0xff]
  %v7884 = vld [vmem:[%s7874 + $0x48] sm:$0xff]
  %v7885 = vld [vmem:[%s7874 + $0x50] sm:$0xf]
  %v7897 = vunpack.c.l.b16 %v7875
  %v7898 = vunpack.c.h.b16 %v7875
  %v7899 = vunpack.c.l.b16 %v7876
  %v7900 = vunpack.c.h.b16 %v7876
  %v7901 = vunpack.c.l.b16 %v7877
  %v7902 = vunpack.c.h.b16 %v7877
  %v7903 = vunpack.c.l.b16 %v7878
  %v7904 = vunpack.c.h.b16 %v7878
  %v7905 = vunpack.c.l.b16 %v7879
  %v7906 = vunpack.c.h.b16 %v7879
  %v7907 = vunpack.c.l.b16 %v7880
  %v7908 = vunpack.c.h.b16 %v7880
  %v7909 = vunpack.c.l.b16 %v7881
  %v7910 = vunpack.c.h.b16 %v7881
  %v7911 = vunpack.c.l.b16 %v7882
  %v7912 = vunpack.c.h.b16 %v7882
  %v7913 = vunpack.c.l.b16 %v7883
  %v7914 = vunpack.c.h.b16 %v7883
  %v7915 = vunpack.c.l.b16 %v7884
  %v7916 = vunpack.c.h.b16 %v7884
  %v7917 = vunpack.c.l.b16 %v7885
  %v7918 = vpack.c.b16 %v7897, %v7897
  %v7919 = vpack.c.b16 %v7898, %v7898
  %v7920 = vpack.c.b16 %v7899, %v7899
  %v7921 = vpack.c.b16 %v7900, %v7900
  %v7922 = vpack.c.b16 %v7901, %v7901
  %v7923 = vpack.c.b16 %v7902, %v7902
  %v7924 = vpack.c.b16 %v7903, %v7903
  %v7925 = vpack.c.b16 %v7904, %v7904
  %v7926 = vpack.c.b16 %v7905, %v7905
  %v7927 = vpack.c.b16 %v7906, %v7906
  %v7928 = vpack.c.b16 %v7907, %v7907
  %v7929 = vpack.c.b16 %v7908, %v7908
  %v7930 = vpack.c.b16 %v7909, %v7909
  %v7931 = vpack.c.b16 %v7910, %v7910
  %v7932 = vpack.c.b16 %v7911, %v7911
  %v7933 = vpack.c.b16 %v7912, %v7912
  %v7934 = vpack.c.b16 %v7913, %v7913
  %v7935 = vpack.c.b16 %v7914, %v7914
  %v7936 = vpack.c.b16 %v7915, %v7915
  %v7937 = vpack.c.b16 %v7916, %v7916
  %v7938 = vpack.c.b16 %v7917, %v7917
  %7960 = vrot.lane.b32.xlu0 %v6068, 64
  %v7961 = vpop.permute.xlu0 %7960
  %7962 = vrot.lane.b32.xlu0 %v6069, 64
  %v7963 = vpop.permute.xlu0 %7962
  %7964 = vrot.lane.b32.xlu0 %v6070, 64
  %v7965 = vpop.permute.xlu0 %7964
  %7966 = vrot.lane.b32.xlu0 %v6071, 64
  %v7967 = vpop.permute.xlu0 %7966
  %7968 = vrot.lane.b32.xlu0 %v6072, 64
  %v7969 = vpop.permute.xlu0 %7968
  %7970 = vrot.lane.b32.xlu0 %v6073, 64
  %v7971 = vpop.permute.xlu0 %7970
  %7972 = vrot.lane.b32.xlu0 %v6074, 64
  %v7973 = vpop.permute.xlu0 %7972
  %7974 = vrot.lane.b32.xlu0 %v6075, 64
  %v7975 = vpop.permute.xlu0 %7974
  %7976 = vrot.lane.b32.xlu0 %v6076, 64
  %v7977 = vpop.permute.xlu0 %7976
  %7978 = vrot.lane.b32.xlu0 %v6077, 64
  %v7979 = vpop.permute.xlu0 %7978
  %7980 = vrot.lane.b32.xlu0 %v6078, 64
  %v7981 = vpop.permute.xlu0 %7980
  %7982 = vrot.lane.b32.xlu0 %v6079, 64
  %v7983 = vpop.permute.xlu0 %7982
  %7984 = vrot.lane.b32.xlu0 %v6080, 64
  %v7985 = vpop.permute.xlu0 %7984
  %7986 = vrot.lane.b32.xlu0 %v6081, 64
  %v7987 = vpop.permute.xlu0 %7986
  %7988 = vrot.lane.b32.xlu0 %v6082, 64
  %v7989 = vpop.permute.xlu0 %7988
  %7990 = vrot.lane.b32.xlu0 %v6083, 64
  %v7991 = vpop.permute.xlu0 %7990
  %7992 = vrot.lane.b32.xlu0 %v6084, 64
  %v7993 = vpop.permute.xlu0 %7992
  %7994 = vrot.lane.b32.xlu0 %v6085, 64
  %v7995 = vpop.permute.xlu0 %7994
  %7996 = vrot.lane.b32.xlu0 %v6086, 64
  %v7997 = vpop.permute.xlu0 %7996
  %7998 = vrot.lane.b32.xlu0 %v6087, 64
  %v7999 = vpop.permute.xlu0 %7998
  %8000 = vrot.lane.b32.xlu0 %v6088, 64
  %v8001 = vpop.permute.xlu0 %8000
  %8002 = vrot.lane.b32.xlu0 %v6089, 64
  %v8003 = vpop.permute.xlu0 %8002
  %8004 = vrot.lane.b32.xlu0 %v6090, 64
  %v8005 = vpop.permute.xlu0 %8004
  %8006 = vrot.lane.b32.xlu0 %v6091, 64
  %v8007 = vpop.permute.xlu0 %8006
  %8008 = vrot.lane.b32.xlu0 %v6092, 64
  %v8009 = vpop.permute.xlu0 %8008
  %8010 = vrot.lane.b32.xlu0 %v6093, 64
  %v8011 = vpop.permute.xlu0 %8010
  %8012 = vrot.lane.b32.xlu0 %v6094, 64
  %v8013 = vpop.permute.xlu0 %8012
  %8014 = vrot.lane.b32.xlu0 %v6095, 64
  %v8015 = vpop.permute.xlu0 %8014
  %8016 = vrot.lane.b32.xlu0 %v6096, 64
  %v8017 = vpop.permute.xlu0 %8016
  %8018 = vrot.lane.b32.xlu0 %v6097, 64
  %v8019 = vpop.permute.xlu0 %8018
  %8020 = vrot.lane.b32.xlu0 %v6098, 64
  %v8021 = vpop.permute.xlu0 %8020
  %8022 = vrot.lane.b32.xlu0 %v6099, 64
  %v8023 = vpop.permute.xlu0 %8022
  %8024 = vrot.lane.b32.xlu0 %v6100, 64
  %v8025 = vpop.permute.xlu0 %8024
  %8026 = vrot.lane.b32.xlu0 %v6101, 64
  %v8027 = vpop.permute.xlu0 %8026
  %8028 = vrot.lane.b32.xlu0 %v6102, 64
  %v8029 = vpop.permute.xlu0 %8028
  %8030 = vrot.lane.b32.xlu0 %v6103, 64
  %v8031 = vpop.permute.xlu0 %8030
  %8032 = vrot.lane.b32.xlu0 %v6104, 64
  %v8033 = vpop.permute.xlu0 %8032
  %8034 = vrot.lane.b32.xlu0 %v6105, 64
  %v8035 = vpop.permute.xlu0 %8034
  %8036 = vrot.lane.b32.xlu0 %v6106, 64
  %v8037 = vpop.permute.xlu0 %8036
  %8038 = vrot.lane.b32.xlu0 %v6107, 64
  %v8039 = vpop.permute.xlu0 %8038
  %8040 = vrot.lane.b32.xlu0 %v6108, 64
  %v8041 = vpop.permute.xlu0 %8040
  %8042 = vrot.lane.b32.xlu0 %v6109, 64
  %v8043 = vpop.permute.xlu0 %8042
  %8044 = vrot.lane.b32.xlu0 %v6110, 64
  %v8045 = vpop.permute.xlu0 %8044
  %8046 = vrot.lane.b32.xlu0 %v6111, 64
  %v8047 = vpop.permute.xlu0 %8046
  %8048 = vrot.lane.b32.xlu0 %v6112, 64
  %v8049 = vpop.permute.xlu0 %8048
  %8050 = vrot.lane.b32.xlu0 %v6113, 64
  %v8051 = vpop.permute.xlu0 %8050
  %8052 = vrot.lane.b32.xlu0 %v6114, 64
  %v8053 = vpop.permute.xlu0 %8052
  %8054 = vrot.lane.b32.xlu0 %v6115, 64
  %v8055 = vpop.permute.xlu0 %8054
  %8056 = vrot.lane.b32.xlu0 %v6116, 64
  %v8057 = vpop.permute.xlu0 %8056
  %8058 = vrot.lane.b32.xlu0 %v6117, 64
  %v8059 = vpop.permute.xlu0 %8058
  %8060 = vrot.lane.b32.xlu0 %v6118, 64
  %v8061 = vpop.permute.xlu0 %8060
  %8062 = vrot.lane.b32.xlu0 %v6119, 64
  %v8063 = vpop.permute.xlu0 %8062
  %8064 = vrot.lane.b32.xlu0 %v6120, 64
  %v8065 = vpop.permute.xlu0 %8064
  %8066 = vrot.lane.b32.xlu0 %v6121, 64
  %v8067 = vpop.permute.xlu0 %8066
  %8068 = vrot.lane.b32.xlu0 %v6122, 64
  %v8069 = vpop.permute.xlu0 %8068
  %8070 = vrot.lane.b32.xlu0 %v6123, 64
  %v8071 = vpop.permute.xlu0 %8070
  %8072 = vrot.lane.b32.xlu0 %v6124, 64
  %v8073 = vpop.permute.xlu0 %8072
  %8074 = vrot.lane.b32.xlu0 %v6125, 64
  %v8075 = vpop.permute.xlu0 %8074
  %8076 = vrot.lane.b32.xlu0 %v6126, 64
  %v8077 = vpop.permute.xlu0 %8076
  %8078 = vrot.lane.b32.xlu0 %v6127, 64
  %v8079 = vpop.permute.xlu0 %8078
  %8080 = vrot.lane.b32.xlu0 %v6128, 64
  %v8081 = vpop.permute.xlu0 %8080
  %8082 = vrot.lane.b32.xlu0 %v6129, 64
  %v8083 = vpop.permute.xlu0 %8082
  %8084 = vrot.lane.b32.xlu0 %v6130, 64
  %v8085 = vpop.permute.xlu0 %8084
  %8086 = vrot.lane.b32.xlu0 %v6131, 64
  %v8087 = vpop.permute.xlu0 %8086
  %8088 = vrot.lane.b32.xlu0 %v6132, 64
  %v8089 = vpop.permute.xlu0 %8088
  %8090 = vrot.lane.b32.xlu0 %v6133, 64
  %v8091 = vpop.permute.xlu0 %8090
  %8092 = vrot.lane.b32.xlu0 %v6134, 64
  %v8093 = vpop.permute.xlu0 %8092
  %8094 = vrot.lane.b32.xlu0 %v6135, 64
  %v8095 = vpop.permute.xlu0 %8094
  %8096 = vrot.lane.b32.xlu0 %v6136, 64
  %v8097 = vpop.permute.xlu0 %8096
  %8098 = vrot.lane.b32.xlu0 %v6137, 64
  %v8099 = vpop.permute.xlu0 %8098
  %8100 = vrot.lane.b32.xlu0 %v6138, 64
  %v8101 = vpop.permute.xlu0 %8100
  %8102 = vrot.lane.b32.xlu0 %v6139, 64
  %v8103 = vpop.permute.xlu0 %8102
  %8104 = vrot.lane.b32.xlu0 %v6140, 64
  %v8105 = vpop.permute.xlu0 %8104
  %8106 = vrot.lane.b32.xlu0 %v6141, 64
  %v8107 = vpop.permute.xlu0 %8106
  %8108 = vrot.lane.b32.xlu0 %v6142, 64
  %v8109 = vpop.permute.xlu0 %8108
  %8110 = vrot.lane.b32.xlu0 %v6143, 64
  %v8111 = vpop.permute.xlu0 %8110
  %8112 = vrot.lane.b32.xlu0 %v6144, 64
  %v8113 = vpop.permute.xlu0 %8112
  %8114 = vrot.lane.b32.xlu0 %v6145, 64
  %v8115 = vpop.permute.xlu0 %8114
  %8116 = vrot.lane.b32.xlu0 %v6146, 64
  %v8117 = vpop.permute.xlu0 %8116
  %8118 = vrot.lane.b32.xlu0 %v6147, 64
  %v8119 = vpop.permute.xlu0 %8118
  %8120 = vrot.lane.b32.xlu0 %v6148, 64
  %v8121 = vpop.permute.xlu0 %8120
  %8122 = vrot.lane.b32.xlu0 %v6149, 64
  %v8123 = vpop.permute.xlu0 %8122
  %8124 = vrot.lane.b32.xlu0 %v6150, 64
  %v8125 = vpop.permute.xlu0 %8124
  %8126 = vrot.lane.b32.xlu0 %v6151, 64
  %v8127 = vpop.permute.xlu0 %8126
  %8128 = vrot.lane.b32.xlu0 %v6152, 64
  %v8129 = vpop.permute.xlu0 %8128
  %8130 = vrot.lane.b32.xlu0 %v6153, 64
  %v8131 = vpop.permute.xlu0 %8130
  %8132 = vrot.lane.b32.xlu0 %v6154, 64
  %v8133 = vpop.permute.xlu0 %8132
  %8134 = vrot.lane.b32.xlu0 %v6155, 64
  %v8135 = vpop.permute.xlu0 %8134
  %8136 = vrot.lane.b32.xlu0 %v6156, 64
  %v8137 = vpop.permute.xlu0 %8136
  %8138 = vrot.lane.b32.xlu0 %v6157, 64
  %v8139 = vpop.permute.xlu0 %8138
  %8140 = vrot.lane.b32.xlu0 %v6158, 64
  %v8141 = vpop.permute.xlu0 %8140
  %8142 = vrot.lane.b32.xlu0 %v6159, 64
  %v8143 = vpop.permute.xlu0 %8142
  %8144 = vrot.lane.b32.xlu0 %v6160, 64
  %v8145 = vpop.permute.xlu0 %8144
  %8146 = vrot.lane.b32.xlu0 %v6161, 64
  %v8147 = vpop.permute.xlu0 %8146
  %8148 = vrot.lane.b32.xlu0 %v6162, 64
  %v8149 = vpop.permute.xlu0 %8148
  %8150 = vrot.lane.b32.xlu0 %v6163, 64
  %v8151 = vpop.permute.xlu0 %8150
  %8152 = vrot.lane.b32.xlu0 %v6164, 64
  %v8153 = vpop.permute.xlu0 %8152
  %8154 = vrot.lane.b32.xlu0 %v6165, 64
  %v8155 = vpop.permute.xlu0 %8154
  %8156 = vrot.lane.b32.xlu0 %v6166, 64
  %v8157 = vpop.permute.xlu0 %8156
  %8158 = vrot.lane.b32.xlu0 %v6167, 64
  %v8159 = vpop.permute.xlu0 %8158
  %8160 = vrot.lane.b32.xlu0 %v6168, 64
  %v8161 = vpop.permute.xlu0 %8160
  %8162 = vrot.lane.b32.xlu0 %v6169, 64
  %v8163 = vpop.permute.xlu0 %8162
  %8164 = vrot.lane.b32.xlu0 %v6170, 64
  %v8165 = vpop.permute.xlu0 %8164
  %8166 = vrot.lane.b32.xlu0 %v6171, 64
  %v8167 = vpop.permute.xlu0 %8166
  %8168 = vrot.lane.b32.xlu0 %v6172, 64
  %v8169 = vpop.permute.xlu0 %8168
  %8170 = vrot.lane.b32.xlu0 %v6173, 64
  %v8171 = vpop.permute.xlu0 %8170
  %8172 = vrot.lane.b32.xlu0 %v6174, 64
  %v8173 = vpop.permute.xlu0 %8172
  %8174 = vrot.lane.b32.xlu0 %v6175, 64
  %v8175 = vpop.permute.xlu0 %8174
  %8176 = vrot.lane.b32.xlu0 %v6176, 64
  %v8177 = vpop.permute.xlu0 %8176
  %8178 = vrot.lane.b32.xlu0 %v6177, 64
  %v8179 = vpop.permute.xlu0 %8178
  %8180 = vrot.lane.b32.xlu0 %v6178, 64
  %v8181 = vpop.permute.xlu0 %8180
  %8182 = vrot.lane.b32.xlu0 %v6179, 64
  %v8183 = vpop.permute.xlu0 %8182
  %8184 = vrot.lane.b32.xlu0 %v6180, 64
  %v8185 = vpop.permute.xlu0 %8184
  %8186 = vrot.lane.b32.xlu0 %v6181, 64
  %v8187 = vpop.permute.xlu0 %8186
  %8188 = vrot.lane.b32.xlu0 %v6182, 64
  %v8189 = vpop.permute.xlu0 %8188
  %8190 = vrot.lane.b32.xlu0 %v6183, 64
  %v8191 = vpop.permute.xlu0 %8190
  %8192 = vrot.lane.b32.xlu0 %v6184, 64
  %v8193 = vpop.permute.xlu0 %8192
  %8194 = vrot.lane.b32.xlu0 %v6185, 64
  %v8195 = vpop.permute.xlu0 %8194
  %8196 = vrot.lane.b32.xlu0 %v6186, 64
  %v8197 = vpop.permute.xlu0 %8196
  %8198 = vrot.lane.b32.xlu0 %v6187, 64
  %v8199 = vpop.permute.xlu0 %8198
  %8200 = vrot.lane.b32.xlu0 %v6188, 64
  %v8201 = vpop.permute.xlu0 %8200
  %8202 = vrot.lane.b32.xlu0 %v6189, 64
  %v8203 = vpop.permute.xlu0 %8202
  %8204 = vrot.lane.b32.xlu0 %v6190, 64
  %v8205 = vpop.permute.xlu0 %8204
  %8206 = vrot.lane.b32.xlu0 %v6191, 64
  %v8207 = vpop.permute.xlu0 %8206
  %8208 = vrot.lane.b32.xlu0 %v6192, 64
  %v8209 = vpop.permute.xlu0 %8208
  %8210 = vrot.lane.b32.xlu0 %v6193, 64
  %v8211 = vpop.permute.xlu0 %8210
  %8212 = vrot.lane.b32.xlu0 %v6194, 64
  %v8213 = vpop.permute.xlu0 %8212
  %8214 = vrot.lane.b32.xlu0 %v6195, 64
  %v8215 = vpop.permute.xlu0 %8214
  %8216 = vrot.lane.b32.xlu0 %v6196, 64
  %v8217 = vpop.permute.xlu0 %8216
  %8218 = vrot.lane.b32.xlu0 %v6197, 64
  %v8219 = vpop.permute.xlu0 %8218
  %8220 = vrot.lane.b32.xlu0 %v6198, 64
  %v8221 = vpop.permute.xlu0 %8220
  %8222 = vrot.lane.b32.xlu0 %v6199, 64
  %v8223 = vpop.permute.xlu0 %8222
  %8224 = vrot.lane.b32.xlu0 %v6200, 64
  %v8225 = vpop.permute.xlu0 %8224
  %8226 = vrot.lane.b32.xlu0 %v6201, 64
  %v8227 = vpop.permute.xlu0 %8226
  %8228 = vrot.lane.b32.xlu0 %v6202, 64
  %v8229 = vpop.permute.xlu0 %8228
  %8230 = vrot.lane.b32.xlu0 %v6203, 64
  %v8231 = vpop.permute.xlu0 %8230
  %8232 = vrot.lane.b32.xlu0 %v6204, 64
  %v8233 = vpop.permute.xlu0 %8232
  %8234 = vrot.lane.b32.xlu0 %v6205, 64
  %v8235 = vpop.permute.xlu0 %8234
  %8236 = vrot.lane.b32.xlu0 %v6206, 64
  %v8237 = vpop.permute.xlu0 %8236
  %8238 = vrot.lane.b32.xlu0 %v6207, 64
  %v8239 = vpop.permute.xlu0 %8238
  %8240 = vrot.lane.b32.xlu0 %v6208, 64
  %v8241 = vpop.permute.xlu0 %8240
  %8242 = vrot.lane.b32.xlu0 %v6209, 64
  %v8243 = vpop.permute.xlu0 %8242
  %8244 = vrot.lane.b32.xlu0 %v6210, 64
  %v8245 = vpop.permute.xlu0 %8244
  %8246 = vrot.lane.b32.xlu0 %v6211, 64
  %v8247 = vpop.permute.xlu0 %8246
  %8248 = vrot.lane.b32.xlu0 %v6212, 64
  %v8249 = vpop.permute.xlu0 %8248
  %8250 = vrot.lane.b32.xlu0 %v6213, 64
  %v8251 = vpop.permute.xlu0 %8250
  %8252 = vrot.lane.b32.xlu0 %v6214, 64
  %v8253 = vpop.permute.xlu0 %8252
  %8254 = vrot.lane.b32.xlu0 %v6215, 64
  %v8255 = vpop.permute.xlu0 %8254
  %8256 = vrot.lane.b32.xlu0 %v6216, 64
  %v8257 = vpop.permute.xlu0 %8256
  %8258 = vrot.lane.b32.xlu0 %v6217, 64
  %v8259 = vpop.permute.xlu0 %8258
  %8260 = vrot.lane.b32.xlu0 %v6218, 64
  %v8261 = vpop.permute.xlu0 %8260
  %8262 = vrot.lane.b32.xlu0 %v6219, 64
  %v8263 = vpop.permute.xlu0 %8262
  %8264 = vrot.lane.b32.xlu0 %v6220, 64
  %v8265 = vpop.permute.xlu0 %8264
  %8266 = vrot.lane.b32.xlu0 %v6221, 64
  %v8267 = vpop.permute.xlu0 %8266
  %8268 = vrot.lane.b32.xlu0 %v6222, 64
  %v8269 = vpop.permute.xlu0 %8268
  %8270 = vrot.lane.b32.xlu0 %v6223, 64
  %v8271 = vpop.permute.xlu0 %8270
  %8272 = vrot.lane.b32.xlu0 %v6224, 64
  %v8273 = vpop.permute.xlu0 %8272
  %8274 = vrot.lane.b32.xlu0 %v6225, 64
  %v8275 = vpop.permute.xlu0 %8274
  %8276 = vrot.lane.b32.xlu0 %v6226, 64
  %v8277 = vpop.permute.xlu0 %8276
  %8278 = vrot.lane.b32.xlu0 %v6227, 64
  %v8279 = vpop.permute.xlu0 %8278
  %8280 = vrot.lane.b32.xlu0 %v6228, 64
  %v8281 = vpop.permute.xlu0 %8280
  %8282 = vrot.lane.b32.xlu0 %v6229, 64
  %v8283 = vpop.permute.xlu0 %8282
  %8284 = vrot.lane.b32.xlu0 %v6230, 64
  %v8285 = vpop.permute.xlu0 %8284
  %8286 = vrot.lane.b32.xlu0 %v6231, 64
  %v8287 = vpop.permute.xlu0 %8286
  %8288 = vrot.lane.b32.xlu0 %v6232, 64
  %v8289 = vpop.permute.xlu0 %8288
  %8290 = vrot.lane.b32.xlu0 %v6233, 64
  %v8291 = vpop.permute.xlu0 %8290
  %8292 = vrot.lane.b32.xlu0 %v6234, 64
  %v8293 = vpop.permute.xlu0 %8292
  %8294 = vrot.lane.b32.xlu0 %v6235, 64
  %v8295 = vpop.permute.xlu0 %8294
  %8464 = vmatprep.subr.bf16.mxu0 0
  %8465 = vmatpush1.bf16.msra.mxu0 %v7975
  %8466 = vmatprep.subr.bf16.mxu0 0
  %8467 = vmatpush1.bf16.msra.mxu0 %v7973
  %8468 = vmatprep.subr.bf16.mxu0 0
  %8469 = vmatpush1.bf16.msra.mxu0 %v7971
  %8470 = vmatprep.subr.bf16.mxu0 0
  %8471 = vmatpush1.bf16.msra.mxu0 %v7969
  %8472 = vmatprep.subr.bf16.mxu0 0
  %8473 = vmatpush1.bf16.msra.mxu0 %v7967
  %8474 = vmatprep.subr.bf16.mxu0 0
  %8475 = vmatpush1.bf16.msra.mxu0 %v7965
  %8476 = vmatprep.subr.bf16.mxu0 0
  %8477 = vmatpush1.bf16.msra.mxu0 %v7963
  %8478 = vmatprep.subr.bf16.mxu0 0
  %8479 = vmatpush1.bf16.msra.mxu0 %v7961
  %8480 = vmatprep.subr.bf16.mxu0 0
  %8481 = vmatpush2.bf16.msra.mxu0 %v7991
  %8482 = vmatprep.subr.bf16.mxu0 0
  %8483 = vmatpush2.bf16.msra.mxu0 %v7989
  %8484 = vmatprep.subr.bf16.mxu0 0
  %8485 = vmatpush2.bf16.msra.mxu0 %v7987
  %8486 = vmatprep.subr.bf16.mxu0 0
  %8487 = vmatpush2.bf16.msra.mxu0 %v7985
  %8488 = vmatprep.subr.bf16.mxu0 0
  %8489 = vmatpush2.bf16.msra.mxu0 %v7983
  %8490 = vmatprep.subr.bf16.mxu0 0
  %8491 = vmatpush2.bf16.msra.mxu0 %v7981
  %8492 = vmatprep.subr.bf16.mxu0 0
  %8493 = vmatpush2.bf16.msra.mxu0 %v7979
  %8494 = vmatprep.subr.bf16.mxu0 0
  %8495 = vmatpush2.bf16.msra.mxu0 %v7977
  %8496 = vmatprep.mubr.bf16.mxu0 %v7919
  %8497 = vmatmul.mubr.bf16.gmra.mxu0 %v7918
  %v8498 = vpop.f32.mrf.mxu0
  %v8499 = vadd.f32 0.0, %v8498
  %v8500 = vpop.f32.mrf.mxu0
  %v8501 = vpop.f32.mrf.mxu0
  %v8502 = vpop.f32.mrf.mxu0
  %8503 = vdwg.mxu0
  %8504 = vmatprep.subr.bf16.mxu0 0
  %8505 = vmatpush1.bf16.msra.mxu0 %v8007
  %8506 = vmatprep.subr.bf16.mxu0 0
  %8507 = vmatpush1.bf16.msra.mxu0 %v8005
  %8508 = vmatprep.subr.bf16.mxu0 0
  %8509 = vmatpush1.bf16.msra.mxu0 %v8003
  %8510 = vmatprep.subr.bf16.mxu0 0
  %8511 = vmatpush1.bf16.msra.mxu0 %v8001
  %8512 = vmatprep.subr.bf16.mxu0 0
  %8513 = vmatpush1.bf16.msra.mxu0 %v7999
  %8514 = vmatprep.subr.bf16.mxu0 0
  %8515 = vmatpush1.bf16.msra.mxu0 %v7997
  %8516 = vmatprep.subr.bf16.mxu0 0
  %8517 = vmatpush1.bf16.msra.mxu0 %v7995
  %8518 = vmatprep.subr.bf16.mxu0 0
  %8519 = vmatpush1.bf16.msra.mxu0 %v7993
  %8520 = vmatprep.subr.bf16.mxu0 0
  %8521 = vmatpush2.bf16.msra.mxu0 %v8023
  %8522 = vmatprep.subr.bf16.mxu0 0
  %8523 = vmatpush2.bf16.msra.mxu0 %v8021
  %8524 = vmatprep.subr.bf16.mxu0 0
  %8525 = vmatpush2.bf16.msra.mxu0 %v8019
  %8526 = vmatprep.subr.bf16.mxu0 0
  %8527 = vmatpush2.bf16.msra.mxu0 %v8017
  %8528 = vmatprep.subr.bf16.mxu0 0
  %8529 = vmatpush2.bf16.msra.mxu0 %v8015
  %8530 = vmatprep.subr.bf16.mxu0 0
  %8531 = vmatpush2.bf16.msra.mxu0 %v8013
  %8532 = vmatprep.subr.bf16.mxu0 0
  %8533 = vmatpush2.bf16.msra.mxu0 %v8011
  %8534 = vmatprep.subr.bf16.mxu0 0
  %8535 = vmatpush2.bf16.msra.mxu0 %v8009
  %8536 = vmatprep.mubr.bf16.mxu0 %v7921
  %8537 = vmatmul.mubr.bf16.gmra.mxu0 %v7920
  %v8538 = vpop.f32.mrf.mxu0
  %v8539 = vadd.f32 %v8499, %v8538
  %v8540 = vpop.f32.mrf.mxu0
  %v8541 = vpop.f32.mrf.mxu0
  %v8542 = vpop.f32.mrf.mxu0
  %8543 = vdwg.mxu0
  %8544 = vmatprep.subr.bf16.mxu0 0
  %8545 = vmatpush1.bf16.msra.mxu0 %v8039
  %8546 = vmatprep.subr.bf16.mxu0 0
  %8547 = vmatpush1.bf16.msra.mxu0 %v8037
  %8548 = vmatprep.subr.bf16.mxu0 0
  %8549 = vmatpush1.bf16.msra.mxu0 %v8035
  %8550 = vmatprep.subr.bf16.mxu0 0
  %8551 = vmatpush1.bf16.msra.mxu0 %v8033
  %8552 = vmatprep.subr.bf16.mxu0 0
  %8553 = vmatpush1.bf16.msra.mxu0 %v8031
  %8554 = vmatprep.subr.bf16.mxu0 0
  %8555 = vmatpush1.bf16.msra.mxu0 %v8029
  %8556 = vmatprep.subr.bf16.mxu0 0
  %8557 = vmatpush1.bf16.msra.mxu0 %v8027
  %8558 = vmatprep.subr.bf16.mxu0 0
  %8559 = vmatpush1.bf16.msra.mxu0 %v8025
  %8560 = vmatprep.subr.bf16.mxu0 0
  %8561 = vmatpush2.bf16.msra.mxu0 %v8055
  %8562 = vmatprep.subr.bf16.mxu0 0
  %8563 = vmatpush2.bf16.msra.mxu0 %v8053
  %8564 = vmatprep.subr.bf16.mxu0 0
  %8565 = vmatpush2.bf16.msra.mxu0 %v8051
  %8566 = vmatprep.subr.bf16.mxu0 0
  %8567 = vmatpush2.bf16.msra.mxu0 %v8049
  %8568 = vmatprep.subr.bf16.mxu0 0
  %8569 = vmatpush2.bf16.msra.mxu0 %v8047
  %8570 = vmatprep.subr.bf16.mxu0 0
  %8571 = vmatpush2.bf16.msra.mxu0 %v8045
  %8572 = vmatprep.subr.bf16.mxu0 0
  %8573 = vmatpush2.bf16.msra.mxu0 %v8043
  %8574 = vmatprep.subr.bf16.mxu0 0
  %8575 = vmatpush2.bf16.msra.mxu0 %v8041
  %8576 = vmatprep.mubr.bf16.mxu0 %v7923
  %8577 = vmatmul.mubr.bf16.gmra.mxu0 %v7922
  %v8578 = vpop.f32.mrf.mxu0
  %v8579 = vadd.f32 %v8539, %v8578
  %v8580 = vpop.f32.mrf.mxu0
  %v8581 = vpop.f32.mrf.mxu0
  %v8582 = vpop.f32.mrf.mxu0
  %8583 = vdwg.mxu0
  %8584 = vmatprep.subr.bf16.mxu0 0
  %8585 = vmatpush1.bf16.msra.mxu0 %v8071
  %8586 = vmatprep.subr.bf16.mxu0 0
  %8587 = vmatpush1.bf16.msra.mxu0 %v8069
  %8588 = vmatprep.subr.bf16.mxu0 0
  %8589 = vmatpush1.bf16.msra.mxu0 %v8067
  %8590 = vmatprep.subr.bf16.mxu0 0
  %8591 = vmatpush1.bf16.msra.mxu0 %v8065
  %8592 = vmatprep.subr.bf16.mxu0 0
  %8593 = vmatpush1.bf16.msra.mxu0 %v8063
  %8594 = vmatprep.subr.bf16.mxu0 0
  %8595 = vmatpush1.bf16.msra.mxu0 %v8061
  %8596 = vmatprep.subr.bf16.mxu0 0
  %8597 = vmatpush1.bf16.msra.mxu0 %v8059
  %8598 = vmatprep.subr.bf16.mxu0 0
  %8599 = vmatpush1.bf16.msra.mxu0 %v8057
  %8600 = vmatprep.subr.bf16.mxu0 0
  %8601 = vmatpush2.bf16.msra.mxu0 %v8087
  %8602 = vmatprep.subr.bf16.mxu0 0
  %8603 = vmatpush2.bf16.msra.mxu0 %v8085
  %8604 = vmatprep.subr.bf16.mxu0 0
  %8605 = vmatpush2.bf16.msra.mxu0 %v8083
  %8606 = vmatprep.subr.bf16.mxu0 0
  %8607 = vmatpush2.bf16.msra.mxu0 %v8081
  %8608 = vmatprep.subr.bf16.mxu0 0
  %8609 = vmatpush2.bf16.msra.mxu0 %v8079
  %8610 = vmatprep.subr.bf16.mxu0 0
  %8611 = vmatpush2.bf16.msra.mxu0 %v8077
  %8612 = vmatprep.subr.bf16.mxu0 0
  %8613 = vmatpush2.bf16.msra.mxu0 %v8075
  %8614 = vmatprep.subr.bf16.mxu0 0
  %8615 = vmatpush2.bf16.msra.mxu0 %v8073
  %8616 = vmatprep.mubr.bf16.mxu0 %v7925
  %8617 = vmatmul.mubr.bf16.gmra.mxu0 %v7924
  %v8618 = vpop.f32.mrf.mxu0
  %v8619 = vadd.f32 %v8579, %v8618
  %v8620 = vpop.f32.mrf.mxu0
  %v8621 = vpop.f32.mrf.mxu0
  %v8622 = vpop.f32.mrf.mxu0
  %8623 = vdwg.mxu0
  %8624 = vmatprep.subr.bf16.mxu0 0
  %8625 = vmatpush1.bf16.msra.mxu0 %v8103
  %8626 = vmatprep.subr.bf16.mxu0 0
  %8627 = vmatpush1.bf16.msra.mxu0 %v8101
  %8628 = vmatprep.subr.bf16.mxu0 0
  %8629 = vmatpush1.bf16.msra.mxu0 %v8099
  %8630 = vmatprep.subr.bf16.mxu0 0
  %8631 = vmatpush1.bf16.msra.mxu0 %v8097
  %8632 = vmatprep.subr.bf16.mxu0 0
  %8633 = vmatpush1.bf16.msra.mxu0 %v8095
  %8634 = vmatprep.subr.bf16.mxu0 0
  %8635 = vmatpush1.bf16.msra.mxu0 %v8093
  %8636 = vmatprep.subr.bf16.mxu0 0
  %8637 = vmatpush1.bf16.msra.mxu0 %v8091
  %8638 = vmatprep.subr.bf16.mxu0 0
  %8639 = vmatpush1.bf16.msra.mxu0 %v8089
  %8640 = vmatprep.subr.bf16.mxu0 0
  %8641 = vmatpush2.bf16.msra.mxu0 %v8119
  %8642 = vmatprep.subr.bf16.mxu0 0
  %8643 = vmatpush2.bf16.msra.mxu0 %v8117
  %8644 = vmatprep.subr.bf16.mxu0 0
  %8645 = vmatpush2.bf16.msra.mxu0 %v8115
  %8646 = vmatprep.subr.bf16.mxu0 0
  %8647 = vmatpush2.bf16.msra.mxu0 %v8113
  %8648 = vmatprep.subr.bf16.mxu0 0
  %8649 = vmatpush2.bf16.msra.mxu0 %v8111
  %8650 = vmatprep.subr.bf16.mxu0 0
  %8651 = vmatpush2.bf16.msra.mxu0 %v8109
  %8652 = vmatprep.subr.bf16.mxu0 0
  %8653 = vmatpush2.bf16.msra.mxu0 %v8107
  %8654 = vmatprep.subr.bf16.mxu0 0
  %8655 = vmatpush2.bf16.msra.mxu0 %v8105
  %8656 = vmatprep.mubr.bf16.mxu0 %v7927
  %8657 = vmatmul.mubr.bf16.gmra.mxu0 %v7926
  %v8658 = vpop.f32.mrf.mxu0
  %v8659 = vadd.f32 %v8619, %v8658
  %v8660 = vpop.f32.mrf.mxu0
  %v8661 = vpop.f32.mrf.mxu0
  %v8662 = vpop.f32.mrf.mxu0
  %8663 = vdwg.mxu0
  %8664 = vmatprep.subr.bf16.mxu0 0
  %8665 = vmatpush1.bf16.msra.mxu0 %v8135
  %8666 = vmatprep.subr.bf16.mxu0 0
  %8667 = vmatpush1.bf16.msra.mxu0 %v8133
  %8668 = vmatprep.subr.bf16.mxu0 0
  %8669 = vmatpush1.bf16.msra.mxu0 %v8131
  %8670 = vmatprep.subr.bf16.mxu0 0
  %8671 = vmatpush1.bf16.msra.mxu0 %v8129
  %8672 = vmatprep.subr.bf16.mxu0 0
  %8673 = vmatpush1.bf16.msra.mxu0 %v8127
  %8674 = vmatprep.subr.bf16.mxu0 0
  %8675 = vmatpush1.bf16.msra.mxu0 %v8125
  %8676 = vmatprep.subr.bf16.mxu0 0
  %8677 = vmatpush1.bf16.msra.mxu0 %v8123
  %8678 = vmatprep.subr.bf16.mxu0 0
  %8679 = vmatpush1.bf16.msra.mxu0 %v8121
  %8680 = vmatprep.subr.bf16.mxu0 0
  %8681 = vmatpush2.bf16.msra.mxu0 %v8151
  %8682 = vmatprep.subr.bf16.mxu0 0
  %8683 = vmatpush2.bf16.msra.mxu0 %v8149
  %8684 = vmatprep.subr.bf16.mxu0 0
  %8685 = vmatpush2.bf16.msra.mxu0 %v8147
  %8686 = vmatprep.subr.bf16.mxu0 0
  %8687 = vmatpush2.bf16.msra.mxu0 %v8145
  %8688 = vmatprep.subr.bf16.mxu0 0
  %8689 = vmatpush2.bf16.msra.mxu0 %v8143
  %8690 = vmatprep.subr.bf16.mxu0 0
  %8691 = vmatpush2.bf16.msra.mxu0 %v8141
  %8692 = vmatprep.subr.bf16.mxu0 0
  %8693 = vmatpush2.bf16.msra.mxu0 %v8139
  %8694 = vmatprep.subr.bf16.mxu0 0
  %8695 = vmatpush2.bf16.msra.mxu0 %v8137
  %8696 = vmatprep.mubr.bf16.mxu0 %v7929
  %8697 = vmatmul.mubr.bf16.gmra.mxu0 %v7928
  %v8698 = vpop.f32.mrf.mxu0
  %v8699 = vadd.f32 %v8659, %v8698
  %v8700 = vpop.f32.mrf.mxu0
  %v8701 = vpop.f32.mrf.mxu0
  %v8702 = vpop.f32.mrf.mxu0
  %8703 = vdwg.mxu0
  %8704 = vmatprep.subr.bf16.mxu0 0
  %8705 = vmatpush1.bf16.msra.mxu0 %v8167
  %8706 = vmatprep.subr.bf16.mxu0 0
  %8707 = vmatpush1.bf16.msra.mxu0 %v8165
  %8708 = vmatprep.subr.bf16.mxu0 0
  %8709 = vmatpush1.bf16.msra.mxu0 %v8163
  %8710 = vmatprep.subr.bf16.mxu0 0
  %8711 = vmatpush1.bf16.msra.mxu0 %v8161
  %8712 = vmatprep.subr.bf16.mxu0 0
  %8713 = vmatpush1.bf16.msra.mxu0 %v8159
  %8714 = vmatprep.subr.bf16.mxu0 0
  %8715 = vmatpush1.bf16.msra.mxu0 %v8157
  %8716 = vmatprep.subr.bf16.mxu0 0
  %8717 = vmatpush1.bf16.msra.mxu0 %v8155
  %8718 = vmatprep.subr.bf16.mxu0 0
  %8719 = vmatpush1.bf16.msra.mxu0 %v8153
  %8720 = vmatprep.subr.bf16.mxu0 0
  %8721 = vmatpush2.bf16.msra.mxu0 %v8183
  %8722 = vmatprep.subr.bf16.mxu0 0
  %8723 = vmatpush2.bf16.msra.mxu0 %v8181
  %8724 = vmatprep.subr.bf16.mxu0 0
  %8725 = vmatpush2.bf16.msra.mxu0 %v8179
  %8726 = vmatprep.subr.bf16.mxu0 0
  %8727 = vmatpush2.bf16.msra.mxu0 %v8177
  %8728 = vmatprep.subr.bf16.mxu0 0
  %8729 = vmatpush2.bf16.msra.mxu0 %v8175
  %8730 = vmatprep.subr.bf16.mxu0 0
  %8731 = vmatpush2.bf16.msra.mxu0 %v8173
  %8732 = vmatprep.subr.bf16.mxu0 0
  %8733 = vmatpush2.bf16.msra.mxu0 %v8171
  %8734 = vmatprep.subr.bf16.mxu0 0
  %8735 = vmatpush2.bf16.msra.mxu0 %v8169
  %8736 = vmatprep.mubr.bf16.mxu0 %v7931
  %8737 = vmatmul.mubr.bf16.gmra.mxu0 %v7930
  %v8738 = vpop.f32.mrf.mxu0
  %v8739 = vadd.f32 %v8699, %v8738
  %v8740 = vpop.f32.mrf.mxu0
  %v8741 = vpop.f32.mrf.mxu0
  %v8742 = vpop.f32.mrf.mxu0
  %8743 = vdwg.mxu0
  %8744 = vmatprep.subr.bf16.mxu0 0
  %8745 = vmatpush1.bf16.msra.mxu0 %v8199
  %8746 = vmatprep.subr.bf16.mxu0 0
  %8747 = vmatpush1.bf16.msra.mxu0 %v8197
  %8748 = vmatprep.subr.bf16.mxu0 0
  %8749 = vmatpush1.bf16.msra.mxu0 %v8195
  %8750 = vmatprep.subr.bf16.mxu0 0
  %8751 = vmatpush1.bf16.msra.mxu0 %v8193
  %8752 = vmatprep.subr.bf16.mxu0 0
  %8753 = vmatpush1.bf16.msra.mxu0 %v8191
  %8754 = vmatprep.subr.bf16.mxu0 0
  %8755 = vmatpush1.bf16.msra.mxu0 %v8189
  %8756 = vmatprep.subr.bf16.mxu0 0
  %8757 = vmatpush1.bf16.msra.mxu0 %v8187
  %8758 = vmatprep.subr.bf16.mxu0 0
  %8759 = vmatpush1.bf16.msra.mxu0 %v8185
  %8760 = vmatprep.subr.bf16.mxu0 0
  %8761 = vmatpush2.bf16.msra.mxu0 %v8215
  %8762 = vmatprep.subr.bf16.mxu0 0
  %8763 = vmatpush2.bf16.msra.mxu0 %v8213
  %8764 = vmatprep.subr.bf16.mxu0 0
  %8765 = vmatpush2.bf16.msra.mxu0 %v8211
  %8766 = vmatprep.subr.bf16.mxu0 0
  %8767 = vmatpush2.bf16.msra.mxu0 %v8209
  %8768 = vmatprep.subr.bf16.mxu0 0
  %8769 = vmatpush2.bf16.msra.mxu0 %v8207
  %8770 = vmatprep.subr.bf16.mxu0 0
  %8771 = vmatpush2.bf16.msra.mxu0 %v8205
  %8772 = vmatprep.subr.bf16.mxu0 0
  %8773 = vmatpush2.bf16.msra.mxu0 %v8203
  %8774 = vmatprep.subr.bf16.mxu0 0
  %8775 = vmatpush2.bf16.msra.mxu0 %v8201
  %8776 = vmatprep.mubr.bf16.mxu0 %v7933
  %8777 = vmatmul.mubr.bf16.gmra.mxu0 %v7932
  %v8778 = vpop.f32.mrf.mxu0
  %v8779 = vadd.f32 %v8739, %v8778
  %v8780 = vpop.f32.mrf.mxu0
  %v8781 = vpop.f32.mrf.mxu0
  %v8782 = vpop.f32.mrf.mxu0
  %8783 = vdwg.mxu0
  %8784 = vmatprep.subr.bf16.mxu0 0
  %8785 = vmatpush1.bf16.msra.mxu0 %v8231
  %8786 = vmatprep.subr.bf16.mxu0 0
  %8787 = vmatpush1.bf16.msra.mxu0 %v8229
  %8788 = vmatprep.subr.bf16.mxu0 0
  %8789 = vmatpush1.bf16.msra.mxu0 %v8227
  %8790 = vmatprep.subr.bf16.mxu0 0
  %8791 = vmatpush1.bf16.msra.mxu0 %v8225
  %8792 = vmatprep.subr.bf16.mxu0 0
  %8793 = vmatpush1.bf16.msra.mxu0 %v8223
  %8794 = vmatprep.subr.bf16.mxu0 0
  %8795 = vmatpush1.bf16.msra.mxu0 %v8221
  %8796 = vmatprep.subr.bf16.mxu0 0
  %8797 = vmatpush1.bf16.msra.mxu0 %v8219
  %8798 = vmatprep.subr.bf16.mxu0 0
  %8799 = vmatpush1.bf16.msra.mxu0 %v8217
  %8800 = vmatprep.subr.bf16.mxu0 0
  %8801 = vmatpush2.bf16.msra.mxu0 %v8247
  %8802 = vmatprep.subr.bf16.mxu0 0
  %8803 = vmatpush2.bf16.msra.mxu0 %v8245
  %8804 = vmatprep.subr.bf16.mxu0 0
  %8805 = vmatpush2.bf16.msra.mxu0 %v8243
  %8806 = vmatprep.subr.bf16.mxu0 0
  %8807 = vmatpush2.bf16.msra.mxu0 %v8241
  %8808 = vmatprep.subr.bf16.mxu0 0
  %8809 = vmatpush2.bf16.msra.mxu0 %v8239
  %8810 = vmatprep.subr.bf16.mxu0 0
  %8811 = vmatpush2.bf16.msra.mxu0 %v8237
  %8812 = vmatprep.subr.bf16.mxu0 0
  %8813 = vmatpush2.bf16.msra.mxu0 %v8235
  %8814 = vmatprep.subr.bf16.mxu0 0
  %8815 = vmatpush2.bf16.msra.mxu0 %v8233
  %8816 = vmatprep.mubr.bf16.mxu0 %v7935
  %8817 = vmatmul.mubr.bf16.gmra.mxu0 %v7934
  %v8818 = vpop.f32.mrf.mxu0
  %v8819 = vadd.f32 %v8779, %v8818
  %v8820 = vpop.f32.mrf.mxu0
  %v8821 = vpop.f32.mrf.mxu0
  %v8822 = vpop.f32.mrf.mxu0
  %8823 = vdwg.mxu0
  %8824 = vmatprep.subr.bf16.mxu0 0
  %8825 = vmatpush1.bf16.msra.mxu0 %v8263
  %8826 = vmatprep.subr.bf16.mxu0 0
  %8827 = vmatpush1.bf16.msra.mxu0 %v8261
  %8828 = vmatprep.subr.bf16.mxu0 0
  %8829 = vmatpush1.bf16.msra.mxu0 %v8259
  %8830 = vmatprep.subr.bf16.mxu0 0
  %8831 = vmatpush1.bf16.msra.mxu0 %v8257
  %8832 = vmatprep.subr.bf16.mxu0 0
  %8833 = vmatpush1.bf16.msra.mxu0 %v8255
  %8834 = vmatprep.subr.bf16.mxu0 0
  %8835 = vmatpush1.bf16.msra.mxu0 %v8253
  %8836 = vmatprep.subr.bf16.mxu0 0
  %8837 = vmatpush1.bf16.msra.mxu0 %v8251
  %8838 = vmatprep.subr.bf16.mxu0 0
  %8839 = vmatpush1.bf16.msra.mxu0 %v8249
  %8840 = vmatprep.subr.bf16.mxu0 0
  %8841 = vmatpush2.bf16.msra.mxu0 %v8279
  %8842 = vmatprep.subr.bf16.mxu0 0
  %8843 = vmatpush2.bf16.msra.mxu0 %v8277
  %8844 = vmatprep.subr.bf16.mxu0 0
  %8845 = vmatpush2.bf16.msra.mxu0 %v8275
  %8846 = vmatprep.subr.bf16.mxu0 0
  %8847 = vmatpush2.bf16.msra.mxu0 %v8273
  %8848 = vmatprep.subr.bf16.mxu0 0
  %8849 = vmatpush2.bf16.msra.mxu0 %v8271
  %8850 = vmatprep.subr.bf16.mxu0 0
  %8851 = vmatpush2.bf16.msra.mxu0 %v8269
  %8852 = vmatprep.subr.bf16.mxu0 0
  %8853 = vmatpush2.bf16.msra.mxu0 %v8267
  %8854 = vmatprep.subr.bf16.mxu0 0
  %8855 = vmatpush2.bf16.msra.mxu0 %v8265
  %8856 = vmatprep.mubr.bf16.mxu0 %v7937
  %8857 = vmatmul.mubr.bf16.gmra.mxu0 %v7936
  %v8858 = vpop.f32.mrf.mxu0
  %v8859 = vadd.f32 %v8819, %v8858
  %v8860 = vpop.f32.mrf.mxu0
  %v8861 = vpop.f32.mrf.mxu0
  %v8862 = vpop.f32.mrf.mxu0
  %8863 = vdwg.mxu0
  %8864 = vmatprep.subr.bf16.mxu0 0
  %8865 = vmatpush1.bf16.msra.mxu0 %v8295
  %8866 = vmatprep.subr.bf16.mxu0 0
  %8867 = vmatpush1.bf16.msra.mxu0 %v8293
  %8868 = vmatprep.subr.bf16.mxu0 0
  %8869 = vmatpush1.bf16.msra.mxu0 %v8291
  %8870 = vmatprep.subr.bf16.mxu0 0
  %8871 = vmatpush1.bf16.msra.mxu0 %v8289
  %8872 = vmatprep.subr.bf16.mxu0 0
  %8873 = vmatpush1.bf16.msra.mxu0 %v8287
  %8874 = vmatprep.subr.bf16.mxu0 0
  %8875 = vmatpush1.bf16.msra.mxu0 %v8285
  %8876 = vmatprep.subr.bf16.mxu0 0
  %8877 = vmatpush1.bf16.msra.mxu0 %v8283
  %8878 = vmatprep.subr.bf16.mxu0 0
  %8879 = vmatpush1.bf16.msra.mxu0 %v8281
  %8880 = vmatprep.subr.bf16.mxu0 0
  %8881 = vmatpush2.bf16.msra.mxu0 0
  %8882 = vmatprep.subr.bf16.mxu0 0
  %8883 = vmatpush2.bf16.msra.mxu0 0
  %8884 = vmatprep.subr.bf16.mxu0 0
  %8885 = vmatpush2.bf16.msra.mxu0 0
  %8886 = vmatprep.subr.bf16.mxu0 0
  %8887 = vmatpush2.bf16.msra.mxu0 0
  %8888 = vmatprep.subr.bf16.mxu0 0
  %8889 = vmatpush2.bf16.msra.mxu0 0
  %8890 = vmatprep.subr.bf16.mxu0 0
  %8891 = vmatpush2.bf16.msra.mxu0 0
  %8892 = vmatprep.subr.bf16.mxu0 0
  %8893 = vmatpush2.bf16.msra.mxu0 0
  %8894 = vmatprep.subr.bf16.mxu0 0
  %8895 = vmatpush2.bf16.msra.mxu0 0
  %8896 = vmatprep.mubr.bf16.mxu0 0
  %8897 = vmatmul.mubr.bf16.gmra.mxu0 %v7938
  %v8898 = vpop.f32.mrf.mxu0
  %v8899 = vadd.f32 %v8859, %v8898
  %v8900 = vpop.f32.mrf.mxu0
  %v8901 = vpop.f32.mrf.mxu0
  %v8902 = vpop.f32.mrf.mxu0
  %8903 = vdwg.mxu0
  %s8904 = scalar_lea.vmem %s0, 588
  %v8905 = vld [vmem:[%s8904] sm:$0xff]
  %v8906 = vld [vmem:[%s8904 + $0x8] sm:$0xff]
  %v8907 = vld [vmem:[%s8904 + $0x10] sm:$0xff]
  %v8908 = vld [vmem:[%s8904 + $0x18] sm:$0xff]
  %v8909 = vld [vmem:[%s8904 + $0x20] sm:$0xff]
  %v8910 = vld [vmem:[%s8904 + $0x28] sm:$0xff]
  %v8911 = vld [vmem:[%s8904 + $0x30] sm:$0xff]
  %v8912 = vld [vmem:[%s8904 + $0x38] sm:$0xff]
  %v8913 = vld [vmem:[%s8904 + $0x40] sm:$0xff]
  %v8914 = vld [vmem:[%s8904 + $0x48] sm:$0xff]
  %v8915 = vld [vmem:[%s8904 + $0x50] sm:$0xf]
  %v8927 = vunpack.c.l.b16 %v8905
  %v8928 = vunpack.c.h.b16 %v8905
  %v8929 = vunpack.c.l.b16 %v8906
  %v8930 = vunpack.c.h.b16 %v8906
  %v8931 = vunpack.c.l.b16 %v8907
  %v8932 = vunpack.c.h.b16 %v8907
  %v8933 = vunpack.c.l.b16 %v8908
  %v8934 = vunpack.c.h.b16 %v8908
  %v8935 = vunpack.c.l.b16 %v8909
  %v8936 = vunpack.c.h.b16 %v8909
  %v8937 = vunpack.c.l.b16 %v8910
  %v8938 = vunpack.c.h.b16 %v8910
  %v8939 = vunpack.c.l.b16 %v8911
  %v8940 = vunpack.c.h.b16 %v8911
  %v8941 = vunpack.c.l.b16 %v8912
  %v8942 = vunpack.c.h.b16 %v8912
  %v8943 = vunpack.c.l.b16 %v8913
  %v8944 = vunpack.c.h.b16 %v8913
  %v8945 = vunpack.c.l.b16 %v8914
  %v8946 = vunpack.c.h.b16 %v8914
  %v8947 = vunpack.c.l.b16 %v8915
  %v8948 = vpack.c.b16 %v8927, %v8927
  %v8949 = vpack.c.b16 %v8928, %v8928
  %v8950 = vpack.c.b16 %v8929, %v8929
  %v8951 = vpack.c.b16 %v8930, %v8930
  %v8952 = vpack.c.b16 %v8931, %v8931
  %v8953 = vpack.c.b16 %v8932, %v8932
  %v8954 = vpack.c.b16 %v8933, %v8933
  %v8955 = vpack.c.b16 %v8934, %v8934
  %v8956 = vpack.c.b16 %v8935, %v8935
  %v8957 = vpack.c.b16 %v8936, %v8936
  %v8958 = vpack.c.b16 %v8937, %v8937
  %v8959 = vpack.c.b16 %v8938, %v8938
  %v8960 = vpack.c.b16 %v8939, %v8939
  %v8961 = vpack.c.b16 %v8940, %v8940
  %v8962 = vpack.c.b16 %v8941, %v8941
  %v8963 = vpack.c.b16 %v8942, %v8942
  %v8964 = vpack.c.b16 %v8943, %v8943
  %v8965 = vpack.c.b16 %v8944, %v8944
  %v8966 = vpack.c.b16 %v8945, %v8945
  %v8967 = vpack.c.b16 %v8946, %v8946
  %v8968 = vpack.c.b16 %v8947, %v8947
  %8990 = vrot.lane.b32.xlu0 %v6068, 32
  %v8991 = vpop.permute.xlu0 %8990
  %8992 = vrot.lane.b32.xlu0 %v6069, 32
  %v8993 = vpop.permute.xlu0 %8992
  %8994 = vrot.lane.b32.xlu0 %v6070, 32
  %v8995 = vpop.permute.xlu0 %8994
  %8996 = vrot.lane.b32.xlu0 %v6071, 32
  %v8997 = vpop.permute.xlu0 %8996
  %8998 = vrot.lane.b32.xlu0 %v6072, 32
  %v8999 = vpop.permute.xlu0 %8998
  %9000 = vrot.lane.b32.xlu0 %v6073, 32
  %v9001 = vpop.permute.xlu0 %9000
  %9002 = vrot.lane.b32.xlu0 %v6074, 32
  %v9003 = vpop.permute.xlu0 %9002
  %9004 = vrot.lane.b32.xlu0 %v6075, 32
  %v9005 = vpop.permute.xlu0 %9004
  %9006 = vrot.lane.b32.xlu0 %v6076, 32
  %v9007 = vpop.permute.xlu0 %9006
  %9008 = vrot.lane.b32.xlu0 %v6077, 32
  %v9009 = vpop.permute.xlu0 %9008
  %9010 = vrot.lane.b32.xlu0 %v6078, 32
  %v9011 = vpop.permute.xlu0 %9010
  %9012 = vrot.lane.b32.xlu0 %v6079, 32
  %v9013 = vpop.permute.xlu0 %9012
  %9014 = vrot.lane.b32.xlu0 %v6080, 32
  %v9015 = vpop.permute.xlu0 %9014
  %9016 = vrot.lane.b32.xlu0 %v6081, 32
  %v9017 = vpop.permute.xlu0 %9016
  %9018 = vrot.lane.b32.xlu0 %v6082, 32
  %v9019 = vpop.permute.xlu0 %9018
  %9020 = vrot.lane.b32.xlu0 %v6083, 32
  %v9021 = vpop.permute.xlu0 %9020
  %9022 = vrot.lane.b32.xlu0 %v6084, 32
  %v9023 = vpop.permute.xlu0 %9022
  %9024 = vrot.lane.b32.xlu0 %v6085, 32
  %v9025 = vpop.permute.xlu0 %9024
  %9026 = vrot.lane.b32.xlu0 %v6086, 32
  %v9027 = vpop.permute.xlu0 %9026
  %9028 = vrot.lane.b32.xlu0 %v6087, 32
  %v9029 = vpop.permute.xlu0 %9028
  %9030 = vrot.lane.b32.xlu0 %v6088, 32
  %v9031 = vpop.permute.xlu0 %9030
  %9032 = vrot.lane.b32.xlu0 %v6089, 32
  %v9033 = vpop.permute.xlu0 %9032
  %9034 = vrot.lane.b32.xlu0 %v6090, 32
  %v9035 = vpop.permute.xlu0 %9034
  %9036 = vrot.lane.b32.xlu0 %v6091, 32
  %v9037 = vpop.permute.xlu0 %9036
  %9038 = vrot.lane.b32.xlu0 %v6092, 32
  %v9039 = vpop.permute.xlu0 %9038
  %9040 = vrot.lane.b32.xlu0 %v6093, 32
  %v9041 = vpop.permute.xlu0 %9040
  %9042 = vrot.lane.b32.xlu0 %v6094, 32
  %v9043 = vpop.permute.xlu0 %9042
  %9044 = vrot.lane.b32.xlu0 %v6095, 32
  %v9045 = vpop.permute.xlu0 %9044
  %9046 = vrot.lane.b32.xlu0 %v6096, 32
  %v9047 = vpop.permute.xlu0 %9046
  %9048 = vrot.lane.b32.xlu0 %v6097, 32
  %v9049 = vpop.permute.xlu0 %9048
  %9050 = vrot.lane.b32.xlu0 %v6098, 32
  %v9051 = vpop.permute.xlu0 %9050
  %9052 = vrot.lane.b32.xlu0 %v6099, 32
  %v9053 = vpop.permute.xlu0 %9052
  %9054 = vrot.lane.b32.xlu0 %v6100, 32
  %v9055 = vpop.permute.xlu0 %9054
  %9056 = vrot.lane.b32.xlu0 %v6101, 32
  %v9057 = vpop.permute.xlu0 %9056
  %9058 = vrot.lane.b32.xlu0 %v6102, 32
  %v9059 = vpop.permute.xlu0 %9058
  %9060 = vrot.lane.b32.xlu0 %v6103, 32
  %v9061 = vpop.permute.xlu0 %9060
  %9062 = vrot.lane.b32.xlu0 %v6104, 32
  %v9063 = vpop.permute.xlu0 %9062
  %9064 = vrot.lane.b32.xlu0 %v6105, 32
  %v9065 = vpop.permute.xlu0 %9064
  %9066 = vrot.lane.b32.xlu0 %v6106, 32
  %v9067 = vpop.permute.xlu0 %9066
  %9068 = vrot.lane.b32.xlu0 %v6107, 32
  %v9069 = vpop.permute.xlu0 %9068
  %9070 = vrot.lane.b32.xlu0 %v6108, 32
  %v9071 = vpop.permute.xlu0 %9070
  %9072 = vrot.lane.b32.xlu0 %v6109, 32
  %v9073 = vpop.permute.xlu0 %9072
  %9074 = vrot.lane.b32.xlu0 %v6110, 32
  %v9075 = vpop.permute.xlu0 %9074
  %9076 = vrot.lane.b32.xlu0 %v6111, 32
  %v9077 = vpop.permute.xlu0 %9076
  %9078 = vrot.lane.b32.xlu0 %v6112, 32
  %v9079 = vpop.permute.xlu0 %9078
  %9080 = vrot.lane.b32.xlu0 %v6113, 32
  %v9081 = vpop.permute.xlu0 %9080
  %9082 = vrot.lane.b32.xlu0 %v6114, 32
  %v9083 = vpop.permute.xlu0 %9082
  %9084 = vrot.lane.b32.xlu0 %v6115, 32
  %v9085 = vpop.permute.xlu0 %9084
  %9086 = vrot.lane.b32.xlu0 %v6116, 32
  %v9087 = vpop.permute.xlu0 %9086
  %9088 = vrot.lane.b32.xlu0 %v6117, 32
  %v9089 = vpop.permute.xlu0 %9088
  %9090 = vrot.lane.b32.xlu0 %v6118, 32
  %v9091 = vpop.permute.xlu0 %9090
  %9092 = vrot.lane.b32.xlu0 %v6119, 32
  %v9093 = vpop.permute.xlu0 %9092
  %9094 = vrot.lane.b32.xlu0 %v6120, 32
  %v9095 = vpop.permute.xlu0 %9094
  %9096 = vrot.lane.b32.xlu0 %v6121, 32
  %v9097 = vpop.permute.xlu0 %9096
  %9098 = vrot.lane.b32.xlu0 %v6122, 32
  %v9099 = vpop.permute.xlu0 %9098
  %9100 = vrot.lane.b32.xlu0 %v6123, 32
  %v9101 = vpop.permute.xlu0 %9100
  %9102 = vrot.lane.b32.xlu0 %v6124, 32
  %v9103 = vpop.permute.xlu0 %9102
  %9104 = vrot.lane.b32.xlu0 %v6125, 32
  %v9105 = vpop.permute.xlu0 %9104
  %9106 = vrot.lane.b32.xlu0 %v6126, 32
  %v9107 = vpop.permute.xlu0 %9106
  %9108 = vrot.lane.b32.xlu0 %v6127, 32
  %v9109 = vpop.permute.xlu0 %9108
  %9110 = vrot.lane.b32.xlu0 %v6128, 32
  %v9111 = vpop.permute.xlu0 %9110
  %9112 = vrot.lane.b32.xlu0 %v6129, 32
  %v9113 = vpop.permute.xlu0 %9112
  %9114 = vrot.lane.b32.xlu0 %v6130, 32
  %v9115 = vpop.permute.xlu0 %9114
  %9116 = vrot.lane.b32.xlu0 %v6131, 32
  %v9117 = vpop.permute.xlu0 %9116
  %9118 = vrot.lane.b32.xlu0 %v6132, 32
  %v9119 = vpop.permute.xlu0 %9118
  %9120 = vrot.lane.b32.xlu0 %v6133, 32
  %v9121 = vpop.permute.xlu0 %9120
  %9122 = vrot.lane.b32.xlu0 %v6134, 32
  %v9123 = vpop.permute.xlu0 %9122
  %9124 = vrot.lane.b32.xlu0 %v6135, 32
  %v9125 = vpop.permute.xlu0 %9124
  %9126 = vrot.lane.b32.xlu0 %v6136, 32
  %v9127 = vpop.permute.xlu0 %9126
  %9128 = vrot.lane.b32.xlu0 %v6137, 32
  %v9129 = vpop.permute.xlu0 %9128
  %9130 = vrot.lane.b32.xlu0 %v6138, 32
  %v9131 = vpop.permute.xlu0 %9130
  %9132 = vrot.lane.b32.xlu0 %v6139, 32
  %v9133 = vpop.permute.xlu0 %9132
  %9134 = vrot.lane.b32.xlu0 %v6140, 32
  %v9135 = vpop.permute.xlu0 %9134
  %9136 = vrot.lane.b32.xlu0 %v6141, 32
  %v9137 = vpop.permute.xlu0 %9136
  %9138 = vrot.lane.b32.xlu0 %v6142, 32
  %v9139 = vpop.permute.xlu0 %9138
  %9140 = vrot.lane.b32.xlu0 %v6143, 32
  %v9141 = vpop.permute.xlu0 %9140
  %9142 = vrot.lane.b32.xlu0 %v6144, 32
  %v9143 = vpop.permute.xlu0 %9142
  %9144 = vrot.lane.b32.xlu0 %v6145, 32
  %v9145 = vpop.permute.xlu0 %9144
  %9146 = vrot.lane.b32.xlu0 %v6146, 32
  %v9147 = vpop.permute.xlu0 %9146
  %9148 = vrot.lane.b32.xlu0 %v6147, 32
  %v9149 = vpop.permute.xlu0 %9148
  %9150 = vrot.lane.b32.xlu0 %v6148, 32
  %v9151 = vpop.permute.xlu0 %9150
  %9152 = vrot.lane.b32.xlu0 %v6149, 32
  %v9153 = vpop.permute.xlu0 %9152
  %9154 = vrot.lane.b32.xlu0 %v6150, 32
  %v9155 = vpop.permute.xlu0 %9154
  %9156 = vrot.lane.b32.xlu0 %v6151, 32
  %v9157 = vpop.permute.xlu0 %9156
  %9158 = vrot.lane.b32.xlu0 %v6152, 32
  %v9159 = vpop.permute.xlu0 %9158
  %9160 = vrot.lane.b32.xlu0 %v6153, 32
  %v9161 = vpop.permute.xlu0 %9160
  %9162 = vrot.lane.b32.xlu0 %v6154, 32
  %v9163 = vpop.permute.xlu0 %9162
  %9164 = vrot.lane.b32.xlu0 %v6155, 32
  %v9165 = vpop.permute.xlu0 %9164
  %9166 = vrot.lane.b32.xlu0 %v6156, 32
  %v9167 = vpop.permute.xlu0 %9166
  %9168 = vrot.lane.b32.xlu0 %v6157, 32
  %v9169 = vpop.permute.xlu0 %9168
  %9170 = vrot.lane.b32.xlu0 %v6158, 32
  %v9171 = vpop.permute.xlu0 %9170
  %9172 = vrot.lane.b32.xlu0 %v6159, 32
  %v9173 = vpop.permute.xlu0 %9172
  %9174 = vrot.lane.b32.xlu0 %v6160, 32
  %v9175 = vpop.permute.xlu0 %9174
  %9176 = vrot.lane.b32.xlu0 %v6161, 32
  %v9177 = vpop.permute.xlu0 %9176
  %9178 = vrot.lane.b32.xlu0 %v6162, 32
  %v9179 = vpop.permute.xlu0 %9178
  %9180 = vrot.lane.b32.xlu0 %v6163, 32
  %v9181 = vpop.permute.xlu0 %9180
  %9182 = vrot.lane.b32.xlu0 %v6164, 32
  %v9183 = vpop.permute.xlu0 %9182
  %9184 = vrot.lane.b32.xlu0 %v6165, 32
  %v9185 = vpop.permute.xlu0 %9184
  %9186 = vrot.lane.b32.xlu0 %v6166, 32
  %v9187 = vpop.permute.xlu0 %9186
  %9188 = vrot.lane.b32.xlu0 %v6167, 32
  %v9189 = vpop.permute.xlu0 %9188
  %9190 = vrot.lane.b32.xlu0 %v6168, 32
  %v9191 = vpop.permute.xlu0 %9190
  %9192 = vrot.lane.b32.xlu0 %v6169, 32
  %v9193 = vpop.permute.xlu0 %9192
  %9194 = vrot.lane.b32.xlu0 %v6170, 32
  %v9195 = vpop.permute.xlu0 %9194
  %9196 = vrot.lane.b32.xlu0 %v6171, 32
  %v9197 = vpop.permute.xlu0 %9196
  %9198 = vrot.lane.b32.xlu0 %v6172, 32
  %v9199 = vpop.permute.xlu0 %9198
  %9200 = vrot.lane.b32.xlu0 %v6173, 32
  %v9201 = vpop.permute.xlu0 %9200
  %9202 = vrot.lane.b32.xlu0 %v6174, 32
  %v9203 = vpop.permute.xlu0 %9202
  %9204 = vrot.lane.b32.xlu0 %v6175, 32
  %v9205 = vpop.permute.xlu0 %9204
  %9206 = vrot.lane.b32.xlu0 %v6176, 32
  %v9207 = vpop.permute.xlu0 %9206
  %9208 = vrot.lane.b32.xlu0 %v6177, 32
  %v9209 = vpop.permute.xlu0 %9208
  %9210 = vrot.lane.b32.xlu0 %v6178, 32
  %v9211 = vpop.permute.xlu0 %9210
  %9212 = vrot.lane.b32.xlu0 %v6179, 32
  %v9213 = vpop.permute.xlu0 %9212
  %9214 = vrot.lane.b32.xlu0 %v6180, 32
  %v9215 = vpop.permute.xlu0 %9214
  %9216 = vrot.lane.b32.xlu0 %v6181, 32
  %v9217 = vpop.permute.xlu0 %9216
  %9218 = vrot.lane.b32.xlu0 %v6182, 32
  %v9219 = vpop.permute.xlu0 %9218
  %9220 = vrot.lane.b32.xlu0 %v6183, 32
  %v9221 = vpop.permute.xlu0 %9220
  %9222 = vrot.lane.b32.xlu0 %v6184, 32
  %v9223 = vpop.permute.xlu0 %9222
  %9224 = vrot.lane.b32.xlu0 %v6185, 32
  %v9225 = vpop.permute.xlu0 %9224
  %9226 = vrot.lane.b32.xlu0 %v6186, 32
  %v9227 = vpop.permute.xlu0 %9226
  %9228 = vrot.lane.b32.xlu0 %v6187, 32
  %v9229 = vpop.permute.xlu0 %9228
  %9230 = vrot.lane.b32.xlu0 %v6188, 32
  %v9231 = vpop.permute.xlu0 %9230
  %9232 = vrot.lane.b32.xlu0 %v6189, 32
  %v9233 = vpop.permute.xlu0 %9232
  %9234 = vrot.lane.b32.xlu0 %v6190, 32
  %v9235 = vpop.permute.xlu0 %9234
  %9236 = vrot.lane.b32.xlu0 %v6191, 32
  %v9237 = vpop.permute.xlu0 %9236
  %9238 = vrot.lane.b32.xlu0 %v6192, 32
  %v9239 = vpop.permute.xlu0 %9238
  %9240 = vrot.lane.b32.xlu0 %v6193, 32
  %v9241 = vpop.permute.xlu0 %9240
  %9242 = vrot.lane.b32.xlu0 %v6194, 32
  %v9243 = vpop.permute.xlu0 %9242
  %9244 = vrot.lane.b32.xlu0 %v6195, 32
  %v9245 = vpop.permute.xlu0 %9244
  %9246 = vrot.lane.b32.xlu0 %v6196, 32
  %v9247 = vpop.permute.xlu0 %9246
  %9248 = vrot.lane.b32.xlu0 %v6197, 32
  %v9249 = vpop.permute.xlu0 %9248
  %9250 = vrot.lane.b32.xlu0 %v6198, 32
  %v9251 = vpop.permute.xlu0 %9250
  %9252 = vrot.lane.b32.xlu0 %v6199, 32
  %v9253 = vpop.permute.xlu0 %9252
  %9254 = vrot.lane.b32.xlu0 %v6200, 32
  %v9255 = vpop.permute.xlu0 %9254
  %9256 = vrot.lane.b32.xlu0 %v6201, 32
  %v9257 = vpop.permute.xlu0 %9256
  %9258 = vrot.lane.b32.xlu0 %v6202, 32
  %v9259 = vpop.permute.xlu0 %9258
  %9260 = vrot.lane.b32.xlu0 %v6203, 32
  %v9261 = vpop.permute.xlu0 %9260
  %9262 = vrot.lane.b32.xlu0 %v6204, 32
  %v9263 = vpop.permute.xlu0 %9262
  %9264 = vrot.lane.b32.xlu0 %v6205, 32
  %v9265 = vpop.permute.xlu0 %9264
  %9266 = vrot.lane.b32.xlu0 %v6206, 32
  %v9267 = vpop.permute.xlu0 %9266
  %9268 = vrot.lane.b32.xlu0 %v6207, 32
  %v9269 = vpop.permute.xlu0 %9268
  %9270 = vrot.lane.b32.xlu0 %v6208, 32
  %v9271 = vpop.permute.xlu0 %9270
  %9272 = vrot.lane.b32.xlu0 %v6209, 32
  %v9273 = vpop.permute.xlu0 %9272
  %9274 = vrot.lane.b32.xlu0 %v6210, 32
  %v9275 = vpop.permute.xlu0 %9274
  %9276 = vrot.lane.b32.xlu0 %v6211, 32
  %v9277 = vpop.permute.xlu0 %9276
  %9278 = vrot.lane.b32.xlu0 %v6212, 32
  %v9279 = vpop.permute.xlu0 %9278
  %9280 = vrot.lane.b32.xlu0 %v6213, 32
  %v9281 = vpop.permute.xlu0 %9280
  %9282 = vrot.lane.b32.xlu0 %v6214, 32
  %v9283 = vpop.permute.xlu0 %9282
  %9284 = vrot.lane.b32.xlu0 %v6215, 32
  %v9285 = vpop.permute.xlu0 %9284
  %9286 = vrot.lane.b32.xlu0 %v6216, 32
  %v9287 = vpop.permute.xlu0 %9286
  %9288 = vrot.lane.b32.xlu0 %v6217, 32
  %v9289 = vpop.permute.xlu0 %9288
  %9290 = vrot.lane.b32.xlu0 %v6218, 32
  %v9291 = vpop.permute.xlu0 %9290
  %9292 = vrot.lane.b32.xlu0 %v6219, 32
  %v9293 = vpop.permute.xlu0 %9292
  %9294 = vrot.lane.b32.xlu0 %v6220, 32
  %v9295 = vpop.permute.xlu0 %9294
  %9296 = vrot.lane.b32.xlu0 %v6221, 32
  %v9297 = vpop.permute.xlu0 %9296
  %9298 = vrot.lane.b32.xlu0 %v6222, 32
  %v9299 = vpop.permute.xlu0 %9298
  %9300 = vrot.lane.b32.xlu0 %v6223, 32
  %v9301 = vpop.permute.xlu0 %9300
  %9302 = vrot.lane.b32.xlu0 %v6224, 32
  %v9303 = vpop.permute.xlu0 %9302
  %9304 = vrot.lane.b32.xlu0 %v6225, 32
  %v9305 = vpop.permute.xlu0 %9304
  %9306 = vrot.lane.b32.xlu0 %v6226, 32
  %v9307 = vpop.permute.xlu0 %9306
  %9308 = vrot.lane.b32.xlu0 %v6227, 32
  %v9309 = vpop.permute.xlu0 %9308
  %9310 = vrot.lane.b32.xlu0 %v6228, 32
  %v9311 = vpop.permute.xlu0 %9310
  %9312 = vrot.lane.b32.xlu0 %v6229, 32
  %v9313 = vpop.permute.xlu0 %9312
  %9314 = vrot.lane.b32.xlu0 %v6230, 32
  %v9315 = vpop.permute.xlu0 %9314
  %9316 = vrot.lane.b32.xlu0 %v6231, 32
  %v9317 = vpop.permute.xlu0 %9316
  %9318 = vrot.lane.b32.xlu0 %v6232, 32
  %v9319 = vpop.permute.xlu0 %9318
  %9320 = vrot.lane.b32.xlu0 %v6233, 32
  %v9321 = vpop.permute.xlu0 %9320
  %9322 = vrot.lane.b32.xlu0 %v6234, 32
  %v9323 = vpop.permute.xlu0 %9322
  %9324 = vrot.lane.b32.xlu0 %v6235, 32
  %v9325 = vpop.permute.xlu0 %9324
  %9494 = vmatprep.subr.bf16.mxu0 0
  %9495 = vmatpush1.bf16.msra.mxu0 %v9005
  %9496 = vmatprep.subr.bf16.mxu0 0
  %9497 = vmatpush1.bf16.msra.mxu0 %v9003
  %9498 = vmatprep.subr.bf16.mxu0 0
  %9499 = vmatpush1.bf16.msra.mxu0 %v9001
  %9500 = vmatprep.subr.bf16.mxu0 0
  %9501 = vmatpush1.bf16.msra.mxu0 %v8999
  %9502 = vmatprep.subr.bf16.mxu0 0
  %9503 = vmatpush1.bf16.msra.mxu0 %v8997
  %9504 = vmatprep.subr.bf16.mxu0 0
  %9505 = vmatpush1.bf16.msra.mxu0 %v8995
  %9506 = vmatprep.subr.bf16.mxu0 0
  %9507 = vmatpush1.bf16.msra.mxu0 %v8993
  %9508 = vmatprep.subr.bf16.mxu0 0
  %9509 = vmatpush1.bf16.msra.mxu0 %v8991
  %9510 = vmatprep.subr.bf16.mxu0 0
  %9511 = vmatpush2.bf16.msra.mxu0 %v9021
  %9512 = vmatprep.subr.bf16.mxu0 0
  %9513 = vmatpush2.bf16.msra.mxu0 %v9019
  %9514 = vmatprep.subr.bf16.mxu0 0
  %9515 = vmatpush2.bf16.msra.mxu0 %v9017
  %9516 = vmatprep.subr.bf16.mxu0 0
  %9517 = vmatpush2.bf16.msra.mxu0 %v9015
  %9518 = vmatprep.subr.bf16.mxu0 0
  %9519 = vmatpush2.bf16.msra.mxu0 %v9013
  %9520 = vmatprep.subr.bf16.mxu0 0
  %9521 = vmatpush2.bf16.msra.mxu0 %v9011
  %9522 = vmatprep.subr.bf16.mxu0 0
  %9523 = vmatpush2.bf16.msra.mxu0 %v9009
  %9524 = vmatprep.subr.bf16.mxu0 0
  %9525 = vmatpush2.bf16.msra.mxu0 %v9007
  %9526 = vmatprep.mubr.bf16.mxu0 %v8949
  %9527 = vmatmul.mubr.bf16.gmra.mxu0 %v8948
  %v9528 = vpop.f32.mrf.mxu0
  %v9529 = vadd.f32 0.0, %v9528
  %v9530 = vpop.f32.mrf.mxu0
  %v9531 = vpop.f32.mrf.mxu0
  %v9532 = vpop.f32.mrf.mxu0
  %9533 = vdwg.mxu0
  %9534 = vmatprep.subr.bf16.mxu0 0
  %9535 = vmatpush1.bf16.msra.mxu0 %v9037
  %9536 = vmatprep.subr.bf16.mxu0 0
  %9537 = vmatpush1.bf16.msra.mxu0 %v9035
  %9538 = vmatprep.subr.bf16.mxu0 0
  %9539 = vmatpush1.bf16.msra.mxu0 %v9033
  %9540 = vmatprep.subr.bf16.mxu0 0
  %9541 = vmatpush1.bf16.msra.mxu0 %v9031
  %9542 = vmatprep.subr.bf16.mxu0 0
  %9543 = vmatpush1.bf16.msra.mxu0 %v9029
  %9544 = vmatprep.subr.bf16.mxu0 0
  %9545 = vmatpush1.bf16.msra.mxu0 %v9027
  %9546 = vmatprep.subr.bf16.mxu0 0
  %9547 = vmatpush1.bf16.msra.mxu0 %v9025
  %9548 = vmatprep.subr.bf16.mxu0 0
  %9549 = vmatpush1.bf16.msra.mxu0 %v9023
  %9550 = vmatprep.subr.bf16.mxu0 0
  %9551 = vmatpush2.bf16.msra.mxu0 %v9053
  %9552 = vmatprep.subr.bf16.mxu0 0
  %9553 = vmatpush2.bf16.msra.mxu0 %v9051
  %9554 = vmatprep.subr.bf16.mxu0 0
  %9555 = vmatpush2.bf16.msra.mxu0 %v9049
  %9556 = vmatprep.subr.bf16.mxu0 0
  %9557 = vmatpush2.bf16.msra.mxu0 %v9047
  %9558 = vmatprep.subr.bf16.mxu0 0
  %9559 = vmatpush2.bf16.msra.mxu0 %v9045
  %9560 = vmatprep.subr.bf16.mxu0 0
  %9561 = vmatpush2.bf16.msra.mxu0 %v9043
  %9562 = vmatprep.subr.bf16.mxu0 0
  %9563 = vmatpush2.bf16.msra.mxu0 %v9041
  %9564 = vmatprep.subr.bf16.mxu0 0
  %9565 = vmatpush2.bf16.msra.mxu0 %v9039
  %9566 = vmatprep.mubr.bf16.mxu0 %v8951
  %9567 = vmatmul.mubr.bf16.gmra.mxu0 %v8950
  %v9568 = vpop.f32.mrf.mxu0
  %v9569 = vadd.f32 %v9529, %v9568
  %v9570 = vpop.f32.mrf.mxu0
  %v9571 = vpop.f32.mrf.mxu0
  %v9572 = vpop.f32.mrf.mxu0
  %9573 = vdwg.mxu0
  %9574 = vmatprep.subr.bf16.mxu0 0
  %9575 = vmatpush1.bf16.msra.mxu0 %v9069
  %9576 = vmatprep.subr.bf16.mxu0 0
  %9577 = vmatpush1.bf16.msra.mxu0 %v9067
  %9578 = vmatprep.subr.bf16.mxu0 0
  %9579 = vmatpush1.bf16.msra.mxu0 %v9065
  %9580 = vmatprep.subr.bf16.mxu0 0
  %9581 = vmatpush1.bf16.msra.mxu0 %v9063
  %9582 = vmatprep.subr.bf16.mxu0 0
  %9583 = vmatpush1.bf16.msra.mxu0 %v9061
  %9584 = vmatprep.subr.bf16.mxu0 0
  %9585 = vmatpush1.bf16.msra.mxu0 %v9059
  %9586 = vmatprep.subr.bf16.mxu0 0
  %9587 = vmatpush1.bf16.msra.mxu0 %v9057
  %9588 = vmatprep.subr.bf16.mxu0 0
  %9589 = vmatpush1.bf16.msra.mxu0 %v9055
  %9590 = vmatprep.subr.bf16.mxu0 0
  %9591 = vmatpush2.bf16.msra.mxu0 %v9085
  %9592 = vmatprep.subr.bf16.mxu0 0
  %9593 = vmatpush2.bf16.msra.mxu0 %v9083
  %9594 = vmatprep.subr.bf16.mxu0 0
  %9595 = vmatpush2.bf16.msra.mxu0 %v9081
  %9596 = vmatprep.subr.bf16.mxu0 0
  %9597 = vmatpush2.bf16.msra.mxu0 %v9079
  %9598 = vmatprep.subr.bf16.mxu0 0
  %9599 = vmatpush2.bf16.msra.mxu0 %v9077
  %9600 = vmatprep.subr.bf16.mxu0 0
  %9601 = vmatpush2.bf16.msra.mxu0 %v9075
  %9602 = vmatprep.subr.bf16.mxu0 0
  %9603 = vmatpush2.bf16.msra.mxu0 %v9073
  %9604 = vmatprep.subr.bf16.mxu0 0
  %9605 = vmatpush2.bf16.msra.mxu0 %v9071
  %9606 = vmatprep.mubr.bf16.mxu0 %v8953
  %9607 = vmatmul.mubr.bf16.gmra.mxu0 %v8952
  %v9608 = vpop.f32.mrf.mxu0
  %v9609 = vadd.f32 %v9569, %v9608
  %v9610 = vpop.f32.mrf.mxu0
  %v9611 = vpop.f32.mrf.mxu0
  %v9612 = vpop.f32.mrf.mxu0
  %9613 = vdwg.mxu0
  %9614 = vmatprep.subr.bf16.mxu0 0
  %9615 = vmatpush1.bf16.msra.mxu0 %v9101
  %9616 = vmatprep.subr.bf16.mxu0 0
  %9617 = vmatpush1.bf16.msra.mxu0 %v9099
  %9618 = vmatprep.subr.bf16.mxu0 0
  %9619 = vmatpush1.bf16.msra.mxu0 %v9097
  %9620 = vmatprep.subr.bf16.mxu0 0
  %9621 = vmatpush1.bf16.msra.mxu0 %v9095
  %9622 = vmatprep.subr.bf16.mxu0 0
  %9623 = vmatpush1.bf16.msra.mxu0 %v9093
  %9624 = vmatprep.subr.bf16.mxu0 0
  %9625 = vmatpush1.bf16.msra.mxu0 %v9091
  %9626 = vmatprep.subr.bf16.mxu0 0
  %9627 = vmatpush1.bf16.msra.mxu0 %v9089
  %9628 = vmatprep.subr.bf16.mxu0 0
  %9629 = vmatpush1.bf16.msra.mxu0 %v9087
  %9630 = vmatprep.subr.bf16.mxu0 0
  %9631 = vmatpush2.bf16.msra.mxu0 %v9117
  %9632 = vmatprep.subr.bf16.mxu0 0
  %9633 = vmatpush2.bf16.msra.mxu0 %v9115
  %9634 = vmatprep.subr.bf16.mxu0 0
  %9635 = vmatpush2.bf16.msra.mxu0 %v9113
  %9636 = vmatprep.subr.bf16.mxu0 0
  %9637 = vmatpush2.bf16.msra.mxu0 %v9111
  %9638 = vmatprep.subr.bf16.mxu0 0
  %9639 = vmatpush2.bf16.msra.mxu0 %v9109
  %9640 = vmatprep.subr.bf16.mxu0 0
  %9641 = vmatpush2.bf16.msra.mxu0 %v9107
  %9642 = vmatprep.subr.bf16.mxu0 0
  %9643 = vmatpush2.bf16.msra.mxu0 %v9105
  %9644 = vmatprep.subr.bf16.mxu0 0
  %9645 = vmatpush2.bf16.msra.mxu0 %v9103
  %9646 = vmatprep.mubr.bf16.mxu0 %v8955
  %9647 = vmatmul.mubr.bf16.gmra.mxu0 %v8954
  %v9648 = vpop.f32.mrf.mxu0
  %v9649 = vadd.f32 %v9609, %v9648
  %v9650 = vpop.f32.mrf.mxu0
  %v9651 = vpop.f32.mrf.mxu0
  %v9652 = vpop.f32.mrf.mxu0
  %9653 = vdwg.mxu0
  %9654 = vmatprep.subr.bf16.mxu0 0
  %9655 = vmatpush1.bf16.msra.mxu0 %v9133
  %9656 = vmatprep.subr.bf16.mxu0 0
  %9657 = vmatpush1.bf16.msra.mxu0 %v9131
  %9658 = vmatprep.subr.bf16.mxu0 0
  %9659 = vmatpush1.bf16.msra.mxu0 %v9129
  %9660 = vmatprep.subr.bf16.mxu0 0
  %9661 = vmatpush1.bf16.msra.mxu0 %v9127
  %9662 = vmatprep.subr.bf16.mxu0 0
  %9663 = vmatpush1.bf16.msra.mxu0 %v9125
  %9664 = vmatprep.subr.bf16.mxu0 0
  %9665 = vmatpush1.bf16.msra.mxu0 %v9123
  %9666 = vmatprep.subr.bf16.mxu0 0
  %9667 = vmatpush1.bf16.msra.mxu0 %v9121
  %9668 = vmatprep.subr.bf16.mxu0 0
  %9669 = vmatpush1.bf16.msra.mxu0 %v9119
  %9670 = vmatprep.subr.bf16.mxu0 0
  %9671 = vmatpush2.bf16.msra.mxu0 %v9149
  %9672 = vmatprep.subr.bf16.mxu0 0
  %9673 = vmatpush2.bf16.msra.mxu0 %v9147
  %9674 = vmatprep.subr.bf16.mxu0 0
  %9675 = vmatpush2.bf16.msra.mxu0 %v9145
  %9676 = vmatprep.subr.bf16.mxu0 0
  %9677 = vmatpush2.bf16.msra.mxu0 %v9143
  %9678 = vmatprep.subr.bf16.mxu0 0
  %9679 = vmatpush2.bf16.msra.mxu0 %v9141
  %9680 = vmatprep.subr.bf16.mxu0 0
  %9681 = vmatpush2.bf16.msra.mxu0 %v9139
  %9682 = vmatprep.subr.bf16.mxu0 0
  %9683 = vmatpush2.bf16.msra.mxu0 %v9137
  %9684 = vmatprep.subr.bf16.mxu0 0
  %9685 = vmatpush2.bf16.msra.mxu0 %v9135
  %9686 = vmatprep.mubr.bf16.mxu0 %v8957
  %9687 = vmatmul.mubr.bf16.gmra.mxu0 %v8956
  %v9688 = vpop.f32.mrf.mxu0
  %v9689 = vadd.f32 %v9649, %v9688
  %v9690 = vpop.f32.mrf.mxu0
  %v9691 = vpop.f32.mrf.mxu0
  %v9692 = vpop.f32.mrf.mxu0
  %9693 = vdwg.mxu0
  %9694 = vmatprep.subr.bf16.mxu0 0
  %9695 = vmatpush1.bf16.msra.mxu0 %v9165
  %9696 = vmatprep.subr.bf16.mxu0 0
  %9697 = vmatpush1.bf16.msra.mxu0 %v9163
  %9698 = vmatprep.subr.bf16.mxu0 0
  %9699 = vmatpush1.bf16.msra.mxu0 %v9161
  %9700 = vmatprep.subr.bf16.mxu0 0
  %9701 = vmatpush1.bf16.msra.mxu0 %v9159
  %9702 = vmatprep.subr.bf16.mxu0 0
  %9703 = vmatpush1.bf16.msra.mxu0 %v9157
  %9704 = vmatprep.subr.bf16.mxu0 0
  %9705 = vmatpush1.bf16.msra.mxu0 %v9155
  %9706 = vmatprep.subr.bf16.mxu0 0
  %9707 = vmatpush1.bf16.msra.mxu0 %v9153
  %9708 = vmatprep.subr.bf16.mxu0 0
  %9709 = vmatpush1.bf16.msra.mxu0 %v9151
  %9710 = vmatprep.subr.bf16.mxu0 0
  %9711 = vmatpush2.bf16.msra.mxu0 %v9181
  %9712 = vmatprep.subr.bf16.mxu0 0
  %9713 = vmatpush2.bf16.msra.mxu0 %v9179
  %9714 = vmatprep.subr.bf16.mxu0 0
  %9715 = vmatpush2.bf16.msra.mxu0 %v9177
  %9716 = vmatprep.subr.bf16.mxu0 0
  %9717 = vmatpush2.bf16.msra.mxu0 %v9175
  %9718 = vmatprep.subr.bf16.mxu0 0
  %9719 = vmatpush2.bf16.msra.mxu0 %v9173
  %9720 = vmatprep.subr.bf16.mxu0 0
  %9721 = vmatpush2.bf16.msra.mxu0 %v9171
  %9722 = vmatprep.subr.bf16.mxu0 0
  %9723 = vmatpush2.bf16.msra.mxu0 %v9169
  %9724 = vmatprep.subr.bf16.mxu0 0
  %9725 = vmatpush2.bf16.msra.mxu0 %v9167
  %9726 = vmatprep.mubr.bf16.mxu0 %v8959
  %9727 = vmatmul.mubr.bf16.gmra.mxu0 %v8958
  %v9728 = vpop.f32.mrf.mxu0
  %v9729 = vadd.f32 %v9689, %v9728
  %v9730 = vpop.f32.mrf.mxu0
  %v9731 = vpop.f32.mrf.mxu0
  %v9732 = vpop.f32.mrf.mxu0
  %9733 = vdwg.mxu0
  %9734 = vmatprep.subr.bf16.mxu0 0
  %9735 = vmatpush1.bf16.msra.mxu0 %v9197
  %9736 = vmatprep.subr.bf16.mxu0 0
  %9737 = vmatpush1.bf16.msra.mxu0 %v9195
  %9738 = vmatprep.subr.bf16.mxu0 0
  %9739 = vmatpush1.bf16.msra.mxu0 %v9193
  %9740 = vmatprep.subr.bf16.mxu0 0
  %9741 = vmatpush1.bf16.msra.mxu0 %v9191
  %9742 = vmatprep.subr.bf16.mxu0 0
  %9743 = vmatpush1.bf16.msra.mxu0 %v9189
  %9744 = vmatprep.subr.bf16.mxu0 0
  %9745 = vmatpush1.bf16.msra.mxu0 %v9187
  %9746 = vmatprep.subr.bf16.mxu0 0
  %9747 = vmatpush1.bf16.msra.mxu0 %v9185
  %9748 = vmatprep.subr.bf16.mxu0 0
  %9749 = vmatpush1.bf16.msra.mxu0 %v9183
  %9750 = vmatprep.subr.bf16.mxu0 0
  %9751 = vmatpush2.bf16.msra.mxu0 %v9213
  %9752 = vmatprep.subr.bf16.mxu0 0
  %9753 = vmatpush2.bf16.msra.mxu0 %v9211
  %9754 = vmatprep.subr.bf16.mxu0 0
  %9755 = vmatpush2.bf16.msra.mxu0 %v9209
  %9756 = vmatprep.subr.bf16.mxu0 0
  %9757 = vmatpush2.bf16.msra.mxu0 %v9207
  %9758 = vmatprep.subr.bf16.mxu0 0
  %9759 = vmatpush2.bf16.msra.mxu0 %v9205
  %9760 = vmatprep.subr.bf16.mxu0 0
  %9761 = vmatpush2.bf16.msra.mxu0 %v9203
  %9762 = vmatprep.subr.bf16.mxu0 0
  %9763 = vmatpush2.bf16.msra.mxu0 %v9201
  %9764 = vmatprep.subr.bf16.mxu0 0
  %9765 = vmatpush2.bf16.msra.mxu0 %v9199
  %9766 = vmatprep.mubr.bf16.mxu0 %v8961
  %9767 = vmatmul.mubr.bf16.gmra.mxu0 %v8960
  %v9768 = vpop.f32.mrf.mxu0
  %v9769 = vadd.f32 %v9729, %v9768
  %v9770 = vpop.f32.mrf.mxu0
  %v9771 = vpop.f32.mrf.mxu0
  %v9772 = vpop.f32.mrf.mxu0
  %9773 = vdwg.mxu0
  %9774 = vmatprep.subr.bf16.mxu0 0
  %9775 = vmatpush1.bf16.msra.mxu0 %v9229
  %9776 = vmatprep.subr.bf16.mxu0 0
  %9777 = vmatpush1.bf16.msra.mxu0 %v9227
  %9778 = vmatprep.subr.bf16.mxu0 0
  %9779 = vmatpush1.bf16.msra.mxu0 %v9225
  %9780 = vmatprep.subr.bf16.mxu0 0
  %9781 = vmatpush1.bf16.msra.mxu0 %v9223
  %9782 = vmatprep.subr.bf16.mxu0 0
  %9783 = vmatpush1.bf16.msra.mxu0 %v9221
  %9784 = vmatprep.subr.bf16.mxu0 0
  %9785 = vmatpush1.bf16.msra.mxu0 %v9219
  %9786 = vmatprep.subr.bf16.mxu0 0
  %9787 = vmatpush1.bf16.msra.mxu0 %v9217
  %9788 = vmatprep.subr.bf16.mxu0 0
  %9789 = vmatpush1.bf16.msra.mxu0 %v9215
  %9790 = vmatprep.subr.bf16.mxu0 0
  %9791 = vmatpush2.bf16.msra.mxu0 %v9245
  %9792 = vmatprep.subr.bf16.mxu0 0
  %9793 = vmatpush2.bf16.msra.mxu0 %v9243
  %9794 = vmatprep.subr.bf16.mxu0 0
  %9795 = vmatpush2.bf16.msra.mxu0 %v9241
  %9796 = vmatprep.subr.bf16.mxu0 0
  %9797 = vmatpush2.bf16.msra.mxu0 %v9239
  %9798 = vmatprep.subr.bf16.mxu0 0
  %9799 = vmatpush2.bf16.msra.mxu0 %v9237
  %9800 = vmatprep.subr.bf16.mxu0 0
  %9801 = vmatpush2.bf16.msra.mxu0 %v9235
  %9802 = vmatprep.subr.bf16.mxu0 0
  %9803 = vmatpush2.bf16.msra.mxu0 %v9233
  %9804 = vmatprep.subr.bf16.mxu0 0
  %9805 = vmatpush2.bf16.msra.mxu0 %v9231
  %9806 = vmatprep.mubr.bf16.mxu0 %v8963
  %9807 = vmatmul.mubr.bf16.gmra.mxu0 %v8962
  %v9808 = vpop.f32.mrf.mxu0
  %v9809 = vadd.f32 %v9769, %v9808
  %v9810 = vpop.f32.mrf.mxu0
  %v9811 = vpop.f32.mrf.mxu0
  %v9812 = vpop.f32.mrf.mxu0
  %9813 = vdwg.mxu0
  %9814 = vmatprep.subr.bf16.mxu0 0
  %9815 = vmatpush1.bf16.msra.mxu0 %v9261
  %9816 = vmatprep.subr.bf16.mxu0 0
  %9817 = vmatpush1.bf16.msra.mxu0 %v9259
  %9818 = vmatprep.subr.bf16.mxu0 0
  %9819 = vmatpush1.bf16.msra.mxu0 %v9257
  %9820 = vmatprep.subr.bf16.mxu0 0
  %9821 = vmatpush1.bf16.msra.mxu0 %v9255
  %9822 = vmatprep.subr.bf16.mxu0 0
  %9823 = vmatpush1.bf16.msra.mxu0 %v9253
  %9824 = vmatprep.subr.bf16.mxu0 0
  %9825 = vmatpush1.bf16.msra.mxu0 %v9251
  %9826 = vmatprep.subr.bf16.mxu0 0
  %9827 = vmatpush1.bf16.msra.mxu0 %v9249
  %9828 = vmatprep.subr.bf16.mxu0 0
  %9829 = vmatpush1.bf16.msra.mxu0 %v9247
  %9830 = vmatprep.subr.bf16.mxu0 0
  %9831 = vmatpush2.bf16.msra.mxu0 %v9277
  %9832 = vmatprep.subr.bf16.mxu0 0
  %9833 = vmatpush2.bf16.msra.mxu0 %v9275
  %9834 = vmatprep.subr.bf16.mxu0 0
  %9835 = vmatpush2.bf16.msra.mxu0 %v9273
  %9836 = vmatprep.subr.bf16.mxu0 0
  %9837 = vmatpush2.bf16.msra.mxu0 %v9271
  %9838 = vmatprep.subr.bf16.mxu0 0
  %9839 = vmatpush2.bf16.msra.mxu0 %v9269
  %9840 = vmatprep.subr.bf16.mxu0 0
  %9841 = vmatpush2.bf16.msra.mxu0 %v9267
  %9842 = vmatprep.subr.bf16.mxu0 0
  %9843 = vmatpush2.bf16.msra.mxu0 %v9265
  %9844 = vmatprep.subr.bf16.mxu0 0
  %9845 = vmatpush2.bf16.msra.mxu0 %v9263
  %9846 = vmatprep.mubr.bf16.mxu0 %v8965
  %9847 = vmatmul.mubr.bf16.gmra.mxu0 %v8964
  %v9848 = vpop.f32.mrf.mxu0
  %v9849 = vadd.f32 %v9809, %v9848
  %v9850 = vpop.f32.mrf.mxu0
  %v9851 = vpop.f32.mrf.mxu0
  %v9852 = vpop.f32.mrf.mxu0
  %9853 = vdwg.mxu0
  %9854 = vmatprep.subr.bf16.mxu0 0
  %9855 = vmatpush1.bf16.msra.mxu0 %v9293
  %9856 = vmatprep.subr.bf16.mxu0 0
  %9857 = vmatpush1.bf16.msra.mxu0 %v9291
  %9858 = vmatprep.subr.bf16.mxu0 0
  %9859 = vmatpush1.bf16.msra.mxu0 %v9289
  %9860 = vmatprep.subr.bf16.mxu0 0
  %9861 = vmatpush1.bf16.msra.mxu0 %v9287
  %9862 = vmatprep.subr.bf16.mxu0 0
  %9863 = vmatpush1.bf16.msra.mxu0 %v9285
  %9864 = vmatprep.subr.bf16.mxu0 0
  %9865 = vmatpush1.bf16.msra.mxu0 %v9283
  %9866 = vmatprep.subr.bf16.mxu0 0
  %9867 = vmatpush1.bf16.msra.mxu0 %v9281
  %9868 = vmatprep.subr.bf16.mxu0 0
  %9869 = vmatpush1.bf16.msra.mxu0 %v9279
  %9870 = vmatprep.subr.bf16.mxu0 0
  %9871 = vmatpush2.bf16.msra.mxu0 %v9309
  %9872 = vmatprep.subr.bf16.mxu0 0
  %9873 = vmatpush2.bf16.msra.mxu0 %v9307
  %9874 = vmatprep.subr.bf16.mxu0 0
  %9875 = vmatpush2.bf16.msra.mxu0 %v9305
  %9876 = vmatprep.subr.bf16.mxu0 0
  %9877 = vmatpush2.bf16.msra.mxu0 %v9303
  %9878 = vmatprep.subr.bf16.mxu0 0
  %9879 = vmatpush2.bf16.msra.mxu0 %v9301
  %9880 = vmatprep.subr.bf16.mxu0 0
  %9881 = vmatpush2.bf16.msra.mxu0 %v9299
  %9882 = vmatprep.subr.bf16.mxu0 0
  %9883 = vmatpush2.bf16.msra.mxu0 %v9297
  %9884 = vmatprep.subr.bf16.mxu0 0
  %9885 = vmatpush2.bf16.msra.mxu0 %v9295
  %9886 = vmatprep.mubr.bf16.mxu0 %v8967
  %9887 = vmatmul.mubr.bf16.gmra.mxu0 %v8966
  %v9888 = vpop.f32.mrf.mxu0
  %v9889 = vadd.f32 %v9849, %v9888
  %v9890 = vpop.f32.mrf.mxu0
  %v9891 = vpop.f32.mrf.mxu0
  %v9892 = vpop.f32.mrf.mxu0
  %9893 = vdwg.mxu0
  %9894 = vmatprep.subr.bf16.mxu0 0
  %9895 = vmatpush1.bf16.msra.mxu0 %v9325
  %9896 = vmatprep.subr.bf16.mxu0 0
  %9897 = vmatpush1.bf16.msra.mxu0 %v9323
  %9898 = vmatprep.subr.bf16.mxu0 0
  %9899 = vmatpush1.bf16.msra.mxu0 %v9321
  %9900 = vmatprep.subr.bf16.mxu0 0
  %9901 = vmatpush1.bf16.msra.mxu0 %v9319
  %9902 = vmatprep.subr.bf16.mxu0 0
  %9903 = vmatpush1.bf16.msra.mxu0 %v9317
  %9904 = vmatprep.subr.bf16.mxu0 0
  %9905 = vmatpush1.bf16.msra.mxu0 %v9315
  %9906 = vmatprep.subr.bf16.mxu0 0
  %9907 = vmatpush1.bf16.msra.mxu0 %v9313
  %9908 = vmatprep.subr.bf16.mxu0 0
  %9909 = vmatpush1.bf16.msra.mxu0 %v9311
  %9910 = vmatprep.subr.bf16.mxu0 0
  %9911 = vmatpush2.bf16.msra.mxu0 0
  %9912 = vmatprep.subr.bf16.mxu0 0
  %9913 = vmatpush2.bf16.msra.mxu0 0
  %9914 = vmatprep.subr.bf16.mxu0 0
  %9915 = vmatpush2.bf16.msra.mxu0 0
  %9916 = vmatprep.subr.bf16.mxu0 0
  %9917 = vmatpush2.bf16.msra.mxu0 0
  %9918 = vmatprep.subr.bf16.mxu0 0
  %9919 = vmatpush2.bf16.msra.mxu0 0
  %9920 = vmatprep.subr.bf16.mxu0 0
  %9921 = vmatpush2.bf16.msra.mxu0 0
  %9922 = vmatprep.subr.bf16.mxu0 0
  %9923 = vmatpush2.bf16.msra.mxu0 0
  %9924 = vmatprep.subr.bf16.mxu0 0
  %9925 = vmatpush2.bf16.msra.mxu0 0
  %9926 = vmatprep.mubr.bf16.mxu0 0
  %9927 = vmatmul.mubr.bf16.gmra.mxu0 %v8968
  %v9928 = vpop.f32.mrf.mxu0
  %v9929 = vadd.f32 %v9889, %v9928
  %v9930 = vpop.f32.mrf.mxu0
  %v9931 = vpop.f32.mrf.mxu0
  %v9932 = vpop.f32.mrf.mxu0
  %9933 = vdwg.mxu0
  %9935 = vrot.lane.b32.xlu0 %v2909, 32
  %v9936 = vpop.permute.xlu0 %9935
  %9939 = vrot.lane.b32.xlu0 %v3939, 64
  %v9940 = vpop.permute.xlu0 %9939
  %9943 = vrot.lane.b32.xlu0 %v4969, 96
  %v9944 = vpop.permute.xlu0 %9943
  %9947 = vrot.lane.b32.xlu0 %v7869, 32
  %v9948 = vpop.permute.xlu0 %9947
  %9951 = vrot.lane.b32.xlu0 %v8899, 64
  %v9952 = vpop.permute.xlu0 %9951
  %9955 = vrot.lane.b32.xlu0 %v9929, 96
  %v9956 = vpop.permute.xlu0 %9955
  %vm9958 = vcmask 261120
  %v9959 = vsel %vm9958, %v1879, %v9936
  %vm9960 = vcmask 523264
  %v9961 = vsel %vm9960, %v9959, %v9940
  %vm9962 = vcmask 785408
  %v9963 = vsel %vm9962, %v9961, %v9944
  %v9964 = vsel %vm9958, %v6839, %v9948
  %v9965 = vsel %vm9960, %v9964, %v9952
  %v9966 = vsel %vm9962, %v9965, %v9956
  %v9967 = vld [vmem:[%s2] sm:$0x3]
  %v9969 = vlaneseq
  %v9970 = vshrl.u32 %v9969, 7
  %v9971 = vsub.s32 0, %v9970
  %v9972 = vrot.slane %v9967, %v9971
  %v9973 = vlaneseq
  %v9974 = vshrl.u32 %v9973, 7
  %v9975 = vsub.s32 1, %v9974
  %v9976 = vrot.slane %v9967, %v9975
  %v9979 = vadd.f32 %v9963, %v9972
  %v9980 = vadd.f32 %v9966, %v9976
  %9981 = vst [vmem:[%s3] sm:$0xff] %v9979
  %9982 = vst [vmem:[%s3 + $0x8] sm:$0xff] %v9980
  // Predicated region
  $region14: #{_lambda_.4} parent=0 // pred_check
    _
  $region15: #{_lambda_.4} parent=0 // pred_check_branch
    %9984 = sbr.rel (0) target = $region17
  $region16: #{_lambda_.4} parent=0 // pred_region
    _
  $region17: #{_lambda_.4} parent=0 // pred_fallthru
    _
  // Predicated region
  $region18: #{_lambda_.4} parent=0 // pred_check
    _
  $region19: #{_lambda_.4} parent=0 // pred_check_branch
    %9986 = sbr.rel (0) target = $region21
  $region20: #{_lambda_.4} parent=0 // pred_region
    _
  $region21: #{_lambda_.4} parent=0 // pred_fallthru
    _

</llo_original>
